<compile_context>
chip_gen: v7x
topology: tpu7x:2x2x1
jax: 0.10.0
libtpu: 0.0.40
codegen_flags: <defaults>
</compile_context>

<pallas_src>
import functools

import numpy as np

import jax
import jax.numpy as jnp
from jax.experimental import pallas as pl
from jax.experimental.pallas import tpu as pltpu


# ----------------------------------------------------------------------------
# Activations (traced statically inside the kernels, computed in f32)
# ----------------------------------------------------------------------------
def _apply_act(y, act):
    if act == "identity":
        return y
    if act == "ReLU":
        return jnp.maximum(y, 0.0)
    if act == "GELU":  # exact (erf) form, matching nn.GELU default
        return 0.5 * y * (1.0 + jax.lax.erf(y * (1.0 / jnp.sqrt(2.0))))
    if act == "SiLU":
        return y * (1.0 / (1.0 + jnp.exp(-y)))
    if act == "Mish":
        sp = jnp.log1p(jnp.exp(-jnp.abs(y))) + jnp.maximum(y, 0.0)  # softplus
        return y * jnp.tanh(sp)
    raise ValueError(f"unsupported activation: {act}")


def _round_up(x, m):
    return ((x + m - 1) // m) * m


# ----------------------------------------------------------------------------
# Pallas kernels
# ----------------------------------------------------------------------------
def _conv_block_kernel(x_ref, w_ref, s_ref, b_ref, o_ref, *,
                       KH, p, PH, L_pad, OHp, act):
    """Fused Conv2d + folded-BN + activation + MaxPool2d for one image.

    x_ref: (H, Win)            bf16  input rows, lane layout w*Cin + c
    w_ref: (KH, Win, Nout_pad) bf16  banded conv weight (BN scale folded in),
                                     output lanes laid out (px, pw, Cout)
    s_ref: (p, PH, OHp)        bf16  0/1 row-selection matrices (height pool)
    b_ref: (1, Nout_pad)       f32   folded bias per output lane
    o_ref: (PH, L_pad)         bf16  pooled output, lane layout pw*Cout + co
    """
    # Convolution: KH matmuls over contiguous row windows of the input.
    # (static Python unroll over KH: short fixed trip-count, LLO-visible)
    acc = jnp.dot(x_ref[pl.ds(0, OHp), :], w_ref[0],
                  preferred_element_type=jnp.float32)
    for kh in range(1, KH):
        acc = acc + jnp.dot(x_ref[pl.ds(kh, OHp), :], w_ref[kh],
                            preferred_element_type=jnp.float32)

    # Folded BatchNorm bias + activation (f32 epilogue).
    y = _apply_act(acc + b_ref[...], act)                 # (OHp, p*L_pad)

    # Width max-pool: max over the p contiguous 128-aligned lane chunks.
    yc = y[:, 0:L_pad]
    for px in range(1, p):
        yc = jnp.maximum(yc, y[:, px * L_pad:(px + 1) * L_pad])
    yc = yc.astype(jnp.bfloat16)                          # (OHp, L_pad)

    # Height max-pool: max over p row-selection matmuls (pure MXU, no strides).
    out = jnp.dot(s_ref[0], yc, preferred_element_type=jnp.float32)
    for q in range(1, p):
        out = jnp.maximum(
            out, jnp.dot(s_ref[q], yc, preferred_element_type=jnp.float32))

    o_ref[...] = out.astype(o_ref.dtype)                  # (PH, L_pad)


def _dense_head_kernel(x_ref, w1_ref, b1_ref, w2_ref, b2_ref, o_ref, *, act):
    """Fused fc1 + activation + (dropout=identity) + output Linear."""
    h = jnp.dot(x_ref[...], w1_ref[...], preferred_element_type=jnp.float32)
    h = _apply_act(h + b1_ref[...], act)
    # TODO(synk): Dropout is identity here (eval mode).
    h = h.astype(w2_ref.dtype)
    o = jnp.dot(h, w2_ref[...], preferred_element_type=jnp.float32)
    o_ref[...] = (o + b2_ref[...]).astype(o_ref.dtype)


# ----------------------------------------------------------------------------
# pallas_call wrappers
# ----------------------------------------------------------------------------
def conv_block(x, w_band, sel, bias, meta, act):
    """x: (N, H, Win) bf16 -> (N, PH, L_pad) bf16 (conv+bn+act+pool fused)."""
    N, H, Win = x.shape
    KH, p, PH, L_pad = meta["KH"], meta["p"], meta["PH"], meta["L_pad"]
    OHp = meta["OHp"]
    Nout_pad = p * L_pad
    kern = functools.partial(_conv_block_kernel, KH=KH, p=p, PH=PH,
                             L_pad=L_pad, OHp=OHp, act=act)
    return pl.pallas_call(
        kern,
        out_shape=jax.ShapeDtypeStruct((N, PH, L_pad), jnp.bfloat16),
        grid=(N,),
        in_specs=[
            pl.BlockSpec((None, H, Win), lambda n: (n, 0, 0)),
            # constant index maps -> weights stay resident in VMEM across steps
            pl.BlockSpec((KH, Win, Nout_pad), lambda n: (0, 0, 0)),
            pl.BlockSpec((p, PH, OHp), lambda n: (0, 0, 0)),
            pl.BlockSpec((1, Nout_pad), lambda n: (0, 0)),
        ],
        out_specs=pl.BlockSpec((None, PH, L_pad), lambda n: (n, 0, 0)),
        compiler_params=pltpu.CompilerParams(
            dimension_semantics=("parallel",)),
    )(x, w_band, sel, bias)


def dense_head(x, w1, b1, w2, b2, act):
    """x: (N, F) bf16 -> (N, 128) f32 logits (first 10 columns are real)."""
    N = x.shape[0]
    No = w2.shape[1]
    return pl.pallas_call(
        functools.partial(_dense_head_kernel, act=act),
        out_shape=jax.ShapeDtypeStruct((N, No), jnp.float32),
    )(x, w1, b1, w2, b2)


# ----------------------------------------------------------------------------
# Static layer geometry (Python ints only -> closed over, never traced)
# ----------------------------------------------------------------------------
def compute_metas(img_dim, in_ch, filters, kernel_sizes, pool_sizes):
    metas = []
    H = W = img_dim
    Cin = in_ch
    Win = W * Cin                       # lane width of the stored input rows
    for f, k, p in zip(filters, kernel_sizes, pool_sizes):
        OH, OW = H - k + 1, W - k + 1
        PH, PW = OH // p, OW // p
        L_pad = _round_up(PW * f, 128)  # lane-dense pooled row width
        metas.append(dict(H=H, W=W, Cin=Cin, Win=Win, KH=k, KW=k, p=p,
                          OH=OH, OW=OW, PH=PH, PW=PW, Cout=f,
                          L_pad=L_pad, Nout_pad=p * L_pad, OHp=PH * p))
        H, W, Cin, Win = PH, PW, f, L_pad
    return metas


# ----------------------------------------------------------------------------
# Parameter preparation (host-side, once): fold BN, build banded weights
# ----------------------------------------------------------------------------
def prepare_block(raw_blk, meta, eps=1e-5):
    w = np.asarray(raw_blk["w"], np.float32)        # (Cout, Cin, KH, KW)
    b = np.asarray(raw_blk["b"], np.float32)
    gamma = np.asarray(raw_blk["gamma"], np.float32)
    beta = np.asarray(raw_blk["beta"], np.float32)
    rmean = np.asarray(raw_blk["rmean"], np.float32)
    rvar = np.asarray(raw_blk["rvar"], np.float32)

    scale = gamma / np.sqrt(rvar + eps)             # BN eval-mode fold
    bias_fold = beta + (b - rmean) * scale
    ws = w * scale[:, None, None, None]             # scale folded into weights

    Cout, Cin, KH, KW = w.shape
    p, PW = meta["p"], meta["PW"]
    L_pad, Nout_pad, Win = meta["L_pad"], meta["Nout_pad"], meta["Win"]

    # Banded weight: rows indexed by input lane (w_in*Cin + c), columns by the
    # conv-output lane layout (px*L_pad + pw*Cout + co) with ow = pw*p + px.
    Wb = np.zeros((KH, Win, Nout_pad), np.float32)
    bb = np.zeros((1, Nout_pad), np.float32)
    for kh in range(KH):
        for kw in range(KW):
            blk = np.transpose(ws[:, :, kh, kw])    # (Cin, Cout)
            for px in range(p):
                for pw_ in range(PW):
                    ow = pw_ * p + px
                    r0 = (ow + kw) * Cin
                    c0 = px * L_pad + pw_ * Cout
                    Wb[kh, r0:r0 + Cin, c0:c0 + Cout] = blk
    for px in range(p):
        for pw_ in range(PW):
            c0 = px * L_pad + pw_ * Cout
            bb[0, c0:c0 + Cout] = bias_fold

    # Height-pool row-selection matrices: S[q, j, p*j+q] = 1.
    PH, OHp = meta["PH"], meta["OHp"]
    S = np.zeros((p, PH, OHp), np.float32)
    for q in range(p):
        for j in range(PH):
            S[q, j, p * j + q] = 1.0

    return dict(w_band=jnp.asarray(Wb, jnp.bfloat16),
                bias=jnp.asarray(bb, jnp.float32),
                sel=jnp.asarray(S, jnp.bfloat16))


def prepare_fc(raw, meta_last, n_neurons, n_classes=10):
    PH, PW = meta_last["PH"], meta_last["PW"]
    C, L_pad = meta_last["Cout"], meta_last["L_pad"]
    Hpad = _round_up(n_neurons, 128)
    Opad = _round_up(n_classes, 128)

    w1 = np.asarray(raw["fc1_w"], np.float32)       # (n_neurons, C*PH*PW)
    b1 = np.asarray(raw["fc1_b"], np.float32)
    w2 = np.asarray(raw["out_w"], np.float32)       # (n_classes, n_neurons)
    b2 = np.asarray(raw["out_b"], np.float32)

    # Remap fc1 columns from PyTorch NCHW-flatten order to our padded
    # (h, w, c)-in-lanes layout, so no runtime transpose is needed.
    W1 = np.zeros((PH * L_pad, Hpad), np.float32)
    for c in range(C):
        for h in range(PH):
            for w_ in range(PW):
                src_col = c * PH * PW + h * PW + w_
                dst_row = h * L_pad + w_ * C + c
                W1[dst_row, :n_neurons] = w1[:, src_col]
    B1 = np.zeros((1, Hpad), np.float32)
    B1[0, :n_neurons] = b1
    W2 = np.zeros((Hpad, Opad), np.float32)
    W2[:n_neurons, :n_classes] = w2.T
    B2 = np.zeros((1, Opad), np.float32)
    B2[0, :n_classes] = b2

    return dict(fc1_w=jnp.asarray(W1, jnp.bfloat16),
                fc1_b=jnp.asarray(B1, jnp.float32),
                out_w=jnp.asarray(W2, jnp.bfloat16),
                out_b=jnp.asarray(B2, jnp.float32))


def init_raw_params(key, metas, n_neurons, n_classes=10):
    raw = {"blocks": []}
    for m in metas:
        key, k1, k2, k3, k4 = jax.random.split(key, 5)
        raw["blocks"].append(dict(
            w=0.1 * jax.random.normal(k1, (m["Cout"], m["Cin"], m["KH"], m["KW"]),
                                      jnp.float32),
            b=0.1 * jax.random.normal(k2, (m["Cout"],), jnp.float32),
            gamma=1.0 + 0.1 * jax.random.normal(k3, (m["Cout"],), jnp.float32),
            beta=0.1 * jax.random.normal(k4, (m["Cout"],), jnp.float32),
            rmean=jnp.zeros((m["Cout"],), jnp.float32),   # BatchNorm2d defaults
            rvar=jnp.ones((m["Cout"],), jnp.float32),
        ))
    mL = metas[-1]
    flattened = mL["Cout"] * mL["PH"] * mL["PW"]
    key, k1, k2, k3, k4 = jax.random.split(key, 5)
    raw["fc1_w"] = 0.1 * jax.random.normal(k1, (n_neurons, flattened), jnp.float32)
    raw["fc1_b"] = 0.1 * jax.random.normal(k2, (n_neurons,), jnp.float32)
    raw["out_w"] = 0.1 * jax.random.normal(k3, (n_classes, n_neurons), jnp.float32)
    raw["out_b"] = 0.1 * jax.random.normal(k4, (n_classes,), jnp.float32)
    return raw


def prepare_params(raw, metas, n_neurons, n_classes=10):
    params = {"blocks": [prepare_block(b, m)
                         for b, m in zip(raw["blocks"], metas)]}
    params.update(prepare_fc(raw, metas[-1], n_neurons, n_classes))
    return params


# ----------------------------------------------------------------------------
# Forward pass (all static geometry closed over -> nothing shape-like traced)
# ----------------------------------------------------------------------------
def make_forward(metas, conv_act, dense_act, n_classes=10):
    def forward(x_nchw, params):
        n = x_nchw.shape[0]
        m0 = metas[0]
        # NCHW (PyTorch) -> NHWC -> (N, H, W*Cin), lanes = w*Cin + c, bf16.
        x = jnp.transpose(x_nchw, (0, 2, 3, 1))
        x = x.reshape(n, m0["H"], m0["Win"]).astype(jnp.bfloat16)
        for m, blk in zip(metas, params["blocks"]):
            x = conv_block(x, blk["w_band"], blk["sel"], blk["bias"], m, conv_act)
        x = x.reshape(n, -1)                      # (N, PH_last * L_pad_last)
        logits = dense_head(x, params["fc1_w"], params["fc1_b"],
                            params["out_w"], params["out_b"], dense_act)
        return logits[:, :n_classes]
    return forward


# ----------------------------------------------------------------------------
# Pure-JAX reference (same folded-BN math & bf16 rounding points) for checking
# ----------------------------------------------------------------------------
def reference_forward(x_nchw, raw, metas, conv_act, dense_act, eps=1e-5):
    def bf(v):
        return v.astype(jnp.bfloat16).astype(jnp.float32)

    x = jnp.asarray(x_nchw, jnp.float32)
    for blk, m in zip(raw["blocks"], metas):
        scale = blk["gamma"] / jnp.sqrt(blk["rvar"] + eps)
        bias = blk["beta"] + (blk["b"] - blk["rmean"]) * scale
        w = bf(blk["w"] * scale[:, None, None, None])
        x = bf(x)
        y = jax.lax.conv_general_dilated(
            x, w, window_strides=(1, 1), padding="VALID",
            dimension_numbers=("NCHW", "OIHW", "NCHW"))
        y = _apply_act(y + bias[None, :, None, None], conv_act)
        p, PH, PW = m["p"], m["PH"], m["PW"]
        y = y[:, :, :PH * p, :PW * p]
        N, C = y.shape[0], y.shape[1]
        y = y.reshape(N, C, PH, p, PW, p).max(axis=(3, 5))
        x = y
    x = bf(x).reshape(x.shape[0], -1)             # NCHW flatten, like torch
    h = x @ bf(raw["fc1_w"]).T + raw["fc1_b"]
    h = bf(_apply_act(h, dense_act))
    return h @ bf(raw["out_w"]).T + raw["out_b"]


# ----------------------------------------------------------------------------
# Main
# ----------------------------------------------------------------------------
if __name__ == "__main__":
    # Small, self-consistent config (5 conv blocks need enough spatial extent).
    filters = [8, 8, 16, 16, 32]
    kernel_sizes = [3, 3, 3, 3, 3]
    pool_sizes = [2, 2, 2, 2, 2]
    n_neurons = 32
    conv_activation = "ReLU"
    dense_activation = "ReLU"
    batch = 2
    img_dim = 96  # small stand-in for the module's 224 (same forward math)

    metas = compute_metas(img_dim, 3, filters, kernel_sizes, pool_sizes)

    key = jax.random.PRNGKey(0)
    key, pkey, xkey = jax.random.split(key, 3)
    raw = init_raw_params(pkey, metas, n_neurons)
    params = prepare_params(raw, metas, n_neurons)
    x = jax.random.normal(xkey, (batch, 3, img_dim, img_dim), jnp.float32)

    fwd = jax.jit(make_forward(metas, conv_activation, dense_activation))
    out = jax.block_until_ready(fwd(x, params))

    assert out.shape == (batch, 10), out.shape
    assert bool(jnp.all(jnp.isfinite(out)))

    # Correctness check against a pure-JAX reference (bf16-matched rounding).
    ref = jax.block_until_ready(
        reference_forward(x, raw, metas, conv_activation, dense_activation))
    np.testing.assert_allclose(np.asarray(out), np.asarray(ref),
                               rtol=5e-2, atol=5e-2)

    print("KERNEL_OK")
</pallas_src>

<mosaic_0001>
module attributes {stable_mosaic.version = 11 : i64} {
  func.func @_conv_block_kernel(%arg0: i32, %arg1: memref<1x96x288xbf16, #tpu.memory_space<vmem>>, %arg2: memref<3x288x768xbf16, #tpu.memory_space<vmem>>, %arg3: memref<2x47x94xbf16, #tpu.memory_space<vmem>>, %arg4: memref<1x768xf32, #tpu.memory_space<vmem>>, %arg5: memref<1x47x384xbf16, #tpu.memory_space<vmem>>) attributes {dimension_semantics = [#tpu.dimension_semantics<parallel>], iteration_bounds = array<i64: 2>, scalar_prefetch = 0 : i64, scratch_operands = 0 : i64, tpu.core_type = #tpu.core_type<tc>, window_params = [{transform_indices = @transform_0, window_bounds = array<i64: 1, 96, 288>}, {pipeline_mode = #tpu.pipeline_mode<synchronous>, transform_indices = @transform_1, window_bounds = array<i64: 3, 288, 768>}, {pipeline_mode = #tpu.pipeline_mode<synchronous>, transform_indices = @transform_2, window_bounds = array<i64: 2, 47, 94>}, {pipeline_mode = #tpu.pipeline_mode<synchronous>, transform_indices = @transform_3, window_bounds = array<i64: 1, 768>}, {transform_indices = @transform_4, window_bounds = array<i64: 1, 47, 384>}]} {
    %c0 = arith.constant 0 : index
    %c0_0 = arith.constant 0 : index
    %c0_1 = arith.constant 0 : index
    %0 = vector.load %arg1[%c0, %c0_0, %c0_1] : memref<1x96x288xbf16, #tpu.memory_space<vmem>>, vector<1x94x288xbf16>
    %1 = vector.shape_cast %0 : vector<1x94x288xbf16> to vector<94x288xbf16>
    %c0_2 = arith.constant 0 : index
    %c0_3 = arith.constant 0 : index
    %c0_4 = arith.constant 0 : index
    %2 = vector.load %arg2[%c0_2, %c0_3, %c0_4] : memref<3x288x768xbf16, #tpu.memory_space<vmem>>, vector<1x288x768xbf16>
    %3 = vector.shape_cast %2 : vector<1x288x768xbf16> to vector<288x768xbf16>
    %cst = arith.constant dense<0.000000e+00> : vector<94x768xf32>
    %4 = tpu.matmul %1, %3, %cst {dimension_numbers = #tpu.dot_dimension_numbers<[1], [0], [0], [1], [0, 0, 1, 1], [], []>} : vector<94x288xbf16>, vector<288x768xbf16>, vector<94x768xf32> -> vector<94x768xf32>
    %c0_5 = arith.constant 0 : index
    %c1 = arith.constant 1 : index
    %c0_6 = arith.constant 0 : index
    %5 = vector.load %arg1[%c0_5, %c1, %c0_6] : memref<1x96x288xbf16, #tpu.memory_space<vmem>>, vector<1x94x288xbf16>
    %6 = vector.shape_cast %5 : vector<1x94x288xbf16> to vector<94x288xbf16>
    %c1_7 = arith.constant 1 : index
    %c0_8 = arith.constant 0 : index
    %c0_9 = arith.constant 0 : index
    %7 = vector.load %arg2[%c1_7, %c0_8, %c0_9] : memref<3x288x768xbf16, #tpu.memory_space<vmem>>, vector<1x288x768xbf16>
    %8 = vector.shape_cast %7 : vector<1x288x768xbf16> to vector<288x768xbf16>
    %cst_10 = arith.constant dense<0.000000e+00> : vector<94x768xf32>
    %9 = tpu.matmul %6, %8, %cst_10 {dimension_numbers = #tpu.dot_dimension_numbers<[1], [0], [0], [1], [0, 0, 1, 1], [], []>} : vector<94x288xbf16>, vector<288x768xbf16>, vector<94x768xf32> -> vector<94x768xf32>
    %10 = arith.addf %4, %9 : vector<94x768xf32>
    %c0_11 = arith.constant 0 : index
    %c2 = arith.constant 2 : index
    %c0_12 = arith.constant 0 : index
    %11 = vector.load %arg1[%c0_11, %c2, %c0_12] : memref<1x96x288xbf16, #tpu.memory_space<vmem>>, vector<1x94x288xbf16>
    %12 = vector.shape_cast %11 : vector<1x94x288xbf16> to vector<94x288xbf16>
    %c2_13 = arith.constant 2 : index
    %c0_14 = arith.constant 0 : index
    %c0_15 = arith.constant 0 : index
    %13 = vector.load %arg2[%c2_13, %c0_14, %c0_15] : memref<3x288x768xbf16, #tpu.memory_space<vmem>>, vector<1x288x768xbf16>
    %14 = vector.shape_cast %13 : vector<1x288x768xbf16> to vector<288x768xbf16>
    %cst_16 = arith.constant dense<0.000000e+00> : vector<94x768xf32>
    %15 = tpu.matmul %12, %14, %cst_16 {dimension_numbers = #tpu.dot_dimension_numbers<[1], [0], [0], [1], [0, 0, 1, 1], [], []>} : vector<94x288xbf16>, vector<288x768xbf16>, vector<94x768xf32> -> vector<94x768xf32>
    %16 = arith.addf %10, %15 : vector<94x768xf32>
    %c0_17 = arith.constant 0 : index
    %c0_18 = arith.constant 0 : index
    %17 = vector.load %arg4[%c0_17, %c0_18] : memref<1x768xf32, #tpu.memory_space<vmem>>, vector<1x768xf32>
    %18 = vector.broadcast %17 : vector<1x768xf32> to vector<94x768xf32>
    %19 = arith.addf %16, %18 : vector<94x768xf32>
    %cst_19 = arith.constant 0.000000e+00 : f32
    %20 = vector.broadcast %cst_19 : f32 to vector<94x768xf32>
    %21 = arith.maximumf %19, %20 : vector<94x768xf32>
    %22 = vector.extract_strided_slice %21 {offsets = [0, 0], sizes = [94, 384], strides = [1, 1]} : vector<94x768xf32> to vector<94x384xf32>
    %23 = vector.extract_strided_slice %21 {offsets = [0, 384], sizes = [94, 384], strides = [1, 1]} : vector<94x768xf32> to vector<94x384xf32>
    %24 = arith.maximumf %22, %23 : vector<94x384xf32>
    %25 = arith.truncf %24 : vector<94x384xf32> to vector<94x384xbf16>
    %c0_20 = arith.constant 0 : index
    %c0_21 = arith.constant 0 : index
    %c0_22 = arith.constant 0 : index
    %26 = vector.load %arg3[%c0_20, %c0_21, %c0_22] : memref<2x47x94xbf16, #tpu.memory_space<vmem>>, vector<1x47x94xbf16>
    %27 = vector.shape_cast %26 : vector<1x47x94xbf16> to vector<47x94xbf16>
    %cst_23 = arith.constant dense<0.000000e+00> : vector<47x384xf32>
    %28 = tpu.matmul %27, %25, %cst_23 {dimension_numbers = #tpu.dot_dimension_numbers<[1], [0], [0], [1], [0, 0, 1, 1], [], []>} : vector<47x94xbf16>, vector<94x384xbf16>, vector<47x384xf32> -> vector<47x384xf32>
    %c1_24 = arith.constant 1 : index
    %c0_25 = arith.constant 0 : index
    %c0_26 = arith.constant 0 : index
    %29 = vector.load %arg3[%c1_24, %c0_25, %c0_26] : memref<2x47x94xbf16, #tpu.memory_space<vmem>>, vector<1x47x94xbf16>
    %30 = vector.shape_cast %29 : vector<1x47x94xbf16> to vector<47x94xbf16>
    %cst_27 = arith.constant dense<0.000000e+00> : vector<47x384xf32>
    %31 = tpu.matmul %30, %25, %cst_27 {dimension_numbers = #tpu.dot_dimension_numbers<[1], [0], [0], [1], [0, 0, 1, 1], [], []>} : vector<47x94xbf16>, vector<94x384xbf16>, vector<47x384xf32> -> vector<47x384xf32>
    %32 = arith.maximumf %28, %31 : vector<47x384xf32>
    %33 = arith.truncf %32 : vector<47x384xf32> to vector<47x384xbf16>
    %c0_28 = arith.constant 0 : index
    %c0_29 = arith.constant 0 : index
    %c0_30 = arith.constant 0 : index
    %34 = vector.load %arg5[%c0_28, %c0_29, %c0_30] : memref<1x47x384xbf16, #tpu.memory_space<vmem>>, vector<1x47x384xbf16>
    %35 = vector.shape_cast %34 : vector<1x47x384xbf16> to vector<47x384xbf16>
    %36 = vector.shape_cast %33 : vector<47x384xbf16> to vector<1x47x384xbf16>
    tpu.vector_store %arg5[%c0_28, %c0_29, %c0_30], %36 {strides = array<i32>} : memref<1x47x384xbf16, #tpu.memory_space<vmem>>, vector<1x47x384xbf16>,
    return
  }
  func.func @transform_0(%arg0: i32) -> (i32, i32, i32) {
    %c0_i32 = arith.constant 0 : i32
    %c0_i32_0 = arith.constant 0 : i32
    %c0_i32_1 = arith.constant 0 : i32
    return %arg0, %c0_i32, %c0_i32_0 : i32, i32, i32
  }
  func.func @transform_1(%arg0: i32) -> (i32, i32, i32) {
    %c0_i32 = arith.constant 0 : i32
    %c0_i32_0 = arith.constant 0 : i32
    %c0_i32_1 = arith.constant 0 : i32
    %c0_i32_2 = arith.constant 0 : i32
    return %c0_i32, %c0_i32_0, %c0_i32_1 : i32, i32, i32
  }
  func.func @transform_2(%arg0: i32) -> (i32, i32, i32) {
    %c0_i32 = arith.constant 0 : i32
    %c0_i32_0 = arith.constant 0 : i32
    %c0_i32_1 = arith.constant 0 : i32
    %c0_i32_2 = arith.constant 0 : i32
    return %c0_i32, %c0_i32_0, %c0_i32_1 : i32, i32, i32
  }
  func.func @transform_3(%arg0: i32) -> (i32, i32) {
    %c0_i32 = arith.constant 0 : i32
    %c0_i32_0 = arith.constant 0 : i32
    %c0_i32_1 = arith.constant 0 : i32
    return %c0_i32, %c0_i32_0 : i32, i32
  }
  func.func @transform_4(%arg0: i32) -> (i32, i32, i32) {
    %c0_i32 = arith.constant 0 : i32
    %c0_i32_0 = arith.constant 0 : i32
    %c0_i32_1 = arith.constant 0 : i32
    return %arg0, %c0_i32, %c0_i32_0 : i32, i32, i32
  }
}

module attributes {stable_mosaic.version = 11 : i64} {
  func.func @_conv_block_kernel(%arg0: i32, %arg1: memref<1x47x384xbf16, #tpu.memory_space<vmem>>, %arg2: memref<3x384x512xbf16, #tpu.memory_space<vmem>>, %arg3: memref<2x22x44xbf16, #tpu.memory_space<vmem>>, %arg4: memref<1x512xf32, #tpu.memory_space<vmem>>, %arg5: memref<1x22x256xbf16, #tpu.memory_space<vmem>>) attributes {dimension_semantics = [#tpu.dimension_semantics<parallel>], iteration_bounds = array<i64: 2>, scalar_prefetch = 0 : i64, scratch_operands = 0 : i64, tpu.core_type = #tpu.core_type<tc>, window_params = [{transform_indices = @transform_0, window_bounds = array<i64: 1, 47, 384>}, {pipeline_mode = #tpu.pipeline_mode<synchronous>, transform_indices = @transform_1, window_bounds = array<i64: 3, 384, 512>}, {pipeline_mode = #tpu.pipeline_mode<synchronous>, transform_indices = @transform_2, window_bounds = array<i64: 2, 22, 44>}, {pipeline_mode = #tpu.pipeline_mode<synchronous>, transform_indices = @transform_3, window_bounds = array<i64: 1, 512>}, {transform_indices = @transform_4, window_bounds = array<i64: 1, 22, 256>}]} {
    %c0 = arith.constant 0 : index
    %c0_0 = arith.constant 0 : index
    %c0_1 = arith.constant 0 : index
    %0 = vector.load %arg1[%c0, %c0_0, %c0_1] : memref<1x47x384xbf16, #tpu.memory_space<vmem>>, vector<1x44x384xbf16>
    %1 = vector.shape_cast %0 : vector<1x44x384xbf16> to vector<44x384xbf16>
    %c0_2 = arith.constant 0 : index
    %c0_3 = arith.constant 0 : index
    %c0_4 = arith.constant 0 : index
    %2 = vector.load %arg2[%c0_2, %c0_3, %c0_4] : memref<3x384x512xbf16, #tpu.memory_space<vmem>>, vector<1x384x512xbf16>
    %3 = vector.shape_cast %2 : vector<1x384x512xbf16> to vector<384x512xbf16>
    %cst = arith.constant dense<0.000000e+00> : vector<44x512xf32>
    %4 = tpu.matmul %1, %3, %cst {dimension_numbers = #tpu.dot_dimension_numbers<[1], [0], [0], [1], [0, 0, 1, 1], [], []>} : vector<44x384xbf16>, vector<384x512xbf16>, vector<44x512xf32> -> vector<44x512xf32>
    %c0_5 = arith.constant 0 : index
    %c1 = arith.constant 1 : index
    %c0_6 = arith.constant 0 : index
    %5 = vector.load %arg1[%c0_5, %c1, %c0_6] : memref<1x47x384xbf16, #tpu.memory_space<vmem>>, vector<1x44x384xbf16>
    %6 = vector.shape_cast %5 : vector<1x44x384xbf16> to vector<44x384xbf16>
    %c1_7 = arith.constant 1 : index
    %c0_8 = arith.constant 0 : index
    %c0_9 = arith.constant 0 : index
    %7 = vector.load %arg2[%c1_7, %c0_8, %c0_9] : memref<3x384x512xbf16, #tpu.memory_space<vmem>>, vector<1x384x512xbf16>
    %8 = vector.shape_cast %7 : vector<1x384x512xbf16> to vector<384x512xbf16>
    %cst_10 = arith.constant dense<0.000000e+00> : vector<44x512xf32>
    %9 = tpu.matmul %6, %8, %cst_10 {dimension_numbers = #tpu.dot_dimension_numbers<[1], [0], [0], [1], [0, 0, 1, 1], [], []>} : vector<44x384xbf16>, vector<384x512xbf16>, vector<44x512xf32> -> vector<44x512xf32>
    %10 = arith.addf %4, %9 : vector<44x512xf32>
    %c0_11 = arith.constant 0 : index
    %c2 = arith.constant 2 : index
    %c0_12 = arith.constant 0 : index
    %11 = vector.load %arg1[%c0_11, %c2, %c0_12] : memref<1x47x384xbf16, #tpu.memory_space<vmem>>, vector<1x44x384xbf16>
    %12 = vector.shape_cast %11 : vector<1x44x384xbf16> to vector<44x384xbf16>
    %c2_13 = arith.constant 2 : index
    %c0_14 = arith.constant 0 : index
    %c0_15 = arith.constant 0 : index
    %13 = vector.load %arg2[%c2_13, %c0_14, %c0_15] : memref<3x384x512xbf16, #tpu.memory_space<vmem>>, vector<1x384x512xbf16>
    %14 = vector.shape_cast %13 : vector<1x384x512xbf16> to vector<384x512xbf16>
    %cst_16 = arith.constant dense<0.000000e+00> : vector<44x512xf32>
    %15 = tpu.matmul %12, %14, %cst_16 {dimension_numbers = #tpu.dot_dimension_numbers<[1], [0], [0], [1], [0, 0, 1, 1], [], []>} : vector<44x384xbf16>, vector<384x512xbf16>, vector<44x512xf32> -> vector<44x512xf32>
    %16 = arith.addf %10, %15 : vector<44x512xf32>
    %c0_17 = arith.constant 0 : index
    %c0_18 = arith.constant 0 : index
    %17 = vector.load %arg4[%c0_17, %c0_18] : memref<1x512xf32, #tpu.memory_space<vmem>>, vector<1x512xf32>
    %18 = vector.broadcast %17 : vector<1x512xf32> to vector<44x512xf32>
    %19 = arith.addf %16, %18 : vector<44x512xf32>
    %cst_19 = arith.constant 0.000000e+00 : f32
    %20 = vector.broadcast %cst_19 : f32 to vector<44x512xf32>
    %21 = arith.maximumf %19, %20 : vector<44x512xf32>
    %22 = vector.extract_strided_slice %21 {offsets = [0, 0], sizes = [44, 256], strides = [1, 1]} : vector<44x512xf32> to vector<44x256xf32>
    %23 = vector.extract_strided_slice %21 {offsets = [0, 256], sizes = [44, 256], strides = [1, 1]} : vector<44x512xf32> to vector<44x256xf32>
    %24 = arith.maximumf %22, %23 : vector<44x256xf32>
    %25 = arith.truncf %24 : vector<44x256xf32> to vector<44x256xbf16>
    %c0_20 = arith.constant 0 : index
    %c0_21 = arith.constant 0 : index
    %c0_22 = arith.constant 0 : index
    %26 = vector.load %arg3[%c0_20, %c0_21, %c0_22] : memref<2x22x44xbf16, #tpu.memory_space<vmem>>, vector<1x22x44xbf16>
    %27 = vector.shape_cast %26 : vector<1x22x44xbf16> to vector<22x44xbf16>
    %cst_23 = arith.constant dense<0.000000e+00> : vector<22x256xf32>
    %28 = tpu.matmul %27, %25, %cst_23 {dimension_numbers = #tpu.dot_dimension_numbers<[1], [0], [0], [1], [0, 0, 1, 1], [], []>} : vector<22x44xbf16>, vector<44x256xbf16>, vector<22x256xf32> -> vector<22x256xf32>
    %c1_24 = arith.constant 1 : index
    %c0_25 = arith.constant 0 : index
    %c0_26 = arith.constant 0 : index
    %29 = vector.load %arg3[%c1_24, %c0_25, %c0_26] : memref<2x22x44xbf16, #tpu.memory_space<vmem>>, vector<1x22x44xbf16>
    %30 = vector.shape_cast %29 : vector<1x22x44xbf16> to vector<22x44xbf16>
    %cst_27 = arith.constant dense<0.000000e+00> : vector<22x256xf32>
    %31 = tpu.matmul %30, %25, %cst_27 {dimension_numbers = #tpu.dot_dimension_numbers<[1], [0], [0], [1], [0, 0, 1, 1], [], []>} : vector<22x44xbf16>, vector<44x256xbf16>, vector<22x256xf32> -> vector<22x256xf32>
    %32 = arith.maximumf %28, %31 : vector<22x256xf32>
    %33 = arith.truncf %32 : vector<22x256xf32> to vector<22x256xbf16>
    %c0_28 = arith.constant 0 : index
    %c0_29 = arith.constant 0 : index
    %c0_30 = arith.constant 0 : index
    %34 = vector.load %arg5[%c0_28, %c0_29, %c0_30] : memref<1x22x256xbf16, #tpu.memory_space<vmem>>, vector<1x22x256xbf16>
    %35 = vector.shape_cast %34 : vector<1x22x256xbf16> to vector<22x256xbf16>
    %36 = vector.shape_cast %33 : vector<22x256xbf16> to vector<1x22x256xbf16>
    tpu.vector_store %arg5[%c0_28, %c0_29, %c0_30], %36 {strides = array<i32>} : memref<1x22x256xbf16, #tpu.memory_space<vmem>>, vector<1x22x256xbf16>,
    return
  }
  func.func @transform_0(%arg0: i32) -> (i32, i32, i32) {
    %c0_i32 = arith.constant 0 : i32
    %c0_i32_0 = arith.constant 0 : i32
    %c0_i32_1 = arith.constant 0 : i32
    return %arg0, %c0_i32, %c0_i32_0 : i32, i32, i32
  }
  func.func @transform_1(%arg0: i32) -> (i32, i32, i32) {
    %c0_i32 = arith.constant 0 : i32
    %c0_i32_0 = arith.constant 0 : i32
    %c0_i32_1 = arith.constant 0 : i32
    %c0_i32_2 = arith.constant 0 : i32
    return %c0_i32, %c0_i32_0, %c0_i32_1 : i32, i32, i32
  }
  func.func @transform_2(%arg0: i32) -> (i32, i32, i32) {
    %c0_i32 = arith.constant 0 : i32
    %c0_i32_0 = arith.constant 0 : i32
    %c0_i32_1 = arith.constant 0 : i32
    %c0_i32_2 = arith.constant 0 : i32
    return %c0_i32, %c0_i32_0, %c0_i32_1 : i32, i32, i32
  }
  func.func @transform_3(%arg0: i32) -> (i32, i32) {
    %c0_i32 = arith.constant 0 : i32
    %c0_i32_0 = arith.constant 0 : i32
    %c0_i32_1 = arith.constant 0 : i32
    return %c0_i32, %c0_i32_0 : i32, i32
  }
  func.func @transform_4(%arg0: i32) -> (i32, i32, i32) {
    %c0_i32 = arith.constant 0 : i32
    %c0_i32_0 = arith.constant 0 : i32
    %c0_i32_1 = arith.constant 0 : i32
    return %arg0, %c0_i32, %c0_i32_0 : i32, i32, i32
  }
}

module attributes {stable_mosaic.version = 11 : i64} {
  func.func @_conv_block_kernel(%arg0: i32, %arg1: memref<1x22x256xbf16, #tpu.memory_space<vmem>>, %arg2: memref<3x256x512xbf16, #tpu.memory_space<vmem>>, %arg3: memref<2x10x20xbf16, #tpu.memory_space<vmem>>, %arg4: memref<1x512xf32, #tpu.memory_space<vmem>>, %arg5: memref<1x10x256xbf16, #tpu.memory_space<vmem>>) attributes {dimension_semantics = [#tpu.dimension_semantics<parallel>], iteration_bounds = array<i64: 2>, scalar_prefetch = 0 : i64, scratch_operands = 0 : i64, tpu.core_type = #tpu.core_type<tc>, window_params = [{transform_indices = @transform_0, window_bounds = array<i64: 1, 22, 256>}, {pipeline_mode = #tpu.pipeline_mode<synchronous>, transform_indices = @transform_1, window_bounds = array<i64: 3, 256, 512>}, {pipeline_mode = #tpu.pipeline_mode<synchronous>, transform_indices = @transform_2, window_bounds = array<i64: 2, 10, 20>}, {pipeline_mode = #tpu.pipeline_mode<synchronous>, transform_indices = @transform_3, window_bounds = array<i64: 1, 512>}, {transform_indices = @transform_4, window_bounds = array<i64: 1, 10, 256>}]} {
    %c0 = arith.constant 0 : index
    %c0_0 = arith.constant 0 : index
    %c0_1 = arith.constant 0 : index
    %0 = vector.load %arg1[%c0, %c0_0, %c0_1] : memref<1x22x256xbf16, #tpu.memory_space<vmem>>, vector<1x20x256xbf16>
    %1 = vector.shape_cast %0 : vector<1x20x256xbf16> to vector<20x256xbf16>
    %c0_2 = arith.constant 0 : index
    %c0_3 = arith.constant 0 : index
    %c0_4 = arith.constant 0 : index
    %2 = vector.load %arg2[%c0_2, %c0_3, %c0_4] : memref<3x256x512xbf16, #tpu.memory_space<vmem>>, vector<1x256x512xbf16>
    %3 = vector.shape_cast %2 : vector<1x256x512xbf16> to vector<256x512xbf16>
    %cst = arith.constant dense<0.000000e+00> : vector<20x512xf32>
    %4 = tpu.matmul %1, %3, %cst {dimension_numbers = #tpu.dot_dimension_numbers<[1], [0], [0], [1], [0, 0, 1, 1], [], []>} : vector<20x256xbf16>, vector<256x512xbf16>, vector<20x512xf32> -> vector<20x512xf32>
    %c0_5 = arith.constant 0 : index
    %c1 = arith.constant 1 : index
    %c0_6 = arith.constant 0 : index
    %5 = vector.load %arg1[%c0_5, %c1, %c0_6] : memref<1x22x256xbf16, #tpu.memory_space<vmem>>, vector<1x20x256xbf16>
    %6 = vector.shape_cast %5 : vector<1x20x256xbf16> to vector<20x256xbf16>
    %c1_7 = arith.constant 1 : index
    %c0_8 = arith.constant 0 : index
    %c0_9 = arith.constant 0 : index
    %7 = vector.load %arg2[%c1_7, %c0_8, %c0_9] : memref<3x256x512xbf16, #tpu.memory_space<vmem>>, vector<1x256x512xbf16>
    %8 = vector.shape_cast %7 : vector<1x256x512xbf16> to vector<256x512xbf16>
    %cst_10 = arith.constant dense<0.000000e+00> : vector<20x512xf32>
    %9 = tpu.matmul %6, %8, %cst_10 {dimension_numbers = #tpu.dot_dimension_numbers<[1], [0], [0], [1], [0, 0, 1, 1], [], []>} : vector<20x256xbf16>, vector<256x512xbf16>, vector<20x512xf32> -> vector<20x512xf32>
    %10 = arith.addf %4, %9 : vector<20x512xf32>
    %c0_11 = arith.constant 0 : index
    %c2 = arith.constant 2 : index
    %c0_12 = arith.constant 0 : index
    %11 = vector.load %arg1[%c0_11, %c2, %c0_12] : memref<1x22x256xbf16, #tpu.memory_space<vmem>>, vector<1x20x256xbf16>
    %12 = vector.shape_cast %11 : vector<1x20x256xbf16> to vector<20x256xbf16>
    %c2_13 = arith.constant 2 : index
    %c0_14 = arith.constant 0 : index
    %c0_15 = arith.constant 0 : index
    %13 = vector.load %arg2[%c2_13, %c0_14, %c0_15] : memref<3x256x512xbf16, #tpu.memory_space<vmem>>, vector<1x256x512xbf16>
    %14 = vector.shape_cast %13 : vector<1x256x512xbf16> to vector<256x512xbf16>
    %cst_16 = arith.constant dense<0.000000e+00> : vector<20x512xf32>
    %15 = tpu.matmul %12, %14, %cst_16 {dimension_numbers = #tpu.dot_dimension_numbers<[1], [0], [0], [1], [0, 0, 1, 1], [], []>} : vector<20x256xbf16>, vector<256x512xbf16>, vector<20x512xf32> -> vector<20x512xf32>
    %16 = arith.addf %10, %15 : vector<20x512xf32>
    %c0_17 = arith.constant 0 : index
    %c0_18 = arith.constant 0 : index
    %17 = vector.load %arg4[%c0_17, %c0_18] : memref<1x512xf32, #tpu.memory_space<vmem>>, vector<1x512xf32>
    %18 = vector.broadcast %17 : vector<1x512xf32> to vector<20x512xf32>
    %19 = arith.addf %16, %18 : vector<20x512xf32>
    %cst_19 = arith.constant 0.000000e+00 : f32
    %20 = vector.broadcast %cst_19 : f32 to vector<20x512xf32>
    %21 = arith.maximumf %19, %20 : vector<20x512xf32>
    %22 = vector.extract_strided_slice %21 {offsets = [0, 0], sizes = [20, 256], strides = [1, 1]} : vector<20x512xf32> to vector<20x256xf32>
    %23 = vector.extract_strided_slice %21 {offsets = [0, 256], sizes = [20, 256], strides = [1, 1]} : vector<20x512xf32> to vector<20x256xf32>
    %24 = arith.maximumf %22, %23 : vector<20x256xf32>
    %25 = arith.truncf %24 : vector<20x256xf32> to vector<20x256xbf16>
    %c0_20 = arith.constant 0 : index
    %c0_21 = arith.constant 0 : index
    %c0_22 = arith.constant 0 : index
    %26 = vector.load %arg3[%c0_20, %c0_21, %c0_22] : memref<2x10x20xbf16, #tpu.memory_space<vmem>>, vector<1x10x20xbf16>
    %27 = vector.shape_cast %26 : vector<1x10x20xbf16> to vector<10x20xbf16>
    %cst_23 = arith.constant dense<0.000000e+00> : vector<10x256xf32>
    %28 = tpu.matmul %27, %25, %cst_23 {dimension_numbers = #tpu.dot_dimension_numbers<[1], [0], [0], [1], [0, 0, 1, 1], [], []>} : vector<10x20xbf16>, vector<20x256xbf16>, vector<10x256xf32> -> vector<10x256xf32>
    %c1_24 = arith.constant 1 : index
    %c0_25 = arith.constant 0 : index
    %c0_26 = arith.constant 0 : index
    %29 = vector.load %arg3[%c1_24, %c0_25, %c0_26] : memref<2x10x20xbf16, #tpu.memory_space<vmem>>, vector<1x10x20xbf16>
    %30 = vector.shape_cast %29 : vector<1x10x20xbf16> to vector<10x20xbf16>
    %cst_27 = arith.constant dense<0.000000e+00> : vector<10x256xf32>
    %31 = tpu.matmul %30, %25, %cst_27 {dimension_numbers = #tpu.dot_dimension_numbers<[1], [0], [0], [1], [0, 0, 1, 1], [], []>} : vector<10x20xbf16>, vector<20x256xbf16>, vector<10x256xf32> -> vector<10x256xf32>
    %32 = arith.maximumf %28, %31 : vector<10x256xf32>
    %33 = arith.truncf %32 : vector<10x256xf32> to vector<10x256xbf16>
    %c0_28 = arith.constant 0 : index
    %c0_29 = arith.constant 0 : index
    %c0_30 = arith.constant 0 : index
    %34 = vector.load %arg5[%c0_28, %c0_29, %c0_30] : memref<1x10x256xbf16, #tpu.memory_space<vmem>>, vector<1x10x256xbf16>
    %35 = vector.shape_cast %34 : vector<1x10x256xbf16> to vector<10x256xbf16>
    %36 = vector.shape_cast %33 : vector<10x256xbf16> to vector<1x10x256xbf16>
    tpu.vector_store %arg5[%c0_28, %c0_29, %c0_30], %36 {strides = array<i32>} : memref<1x10x256xbf16, #tpu.memory_space<vmem>>, vector<1x10x256xbf16>,
    return
  }
  func.func @transform_0(%arg0: i32) -> (i32, i32, i32) {
    %c0_i32 = arith.constant 0 : i32
    %c0_i32_0 = arith.constant 0 : i32
    %c0_i32_1 = arith.constant 0 : i32
    return %arg0, %c0_i32, %c0_i32_0 : i32, i32, i32
  }
  func.func @transform_1(%arg0: i32) -> (i32, i32, i32) {
    %c0_i32 = arith.constant 0 : i32
    %c0_i32_0 = arith.constant 0 : i32
    %c0_i32_1 = arith.constant 0 : i32
    %c0_i32_2 = arith.constant 0 : i32
    return %c0_i32, %c0_i32_0, %c0_i32_1 : i32, i32, i32
  }
  func.func @transform_2(%arg0: i32) -> (i32, i32, i32) {
    %c0_i32 = arith.constant 0 : i32
    %c0_i32_0 = arith.constant 0 : i32
    %c0_i32_1 = arith.constant 0 : i32
    %c0_i32_2 = arith.constant 0 : i32
    return %c0_i32, %c0_i32_0, %c0_i32_1 : i32, i32, i32
  }
  func.func @transform_3(%arg0: i32) -> (i32, i32) {
    %c0_i32 = arith.constant 0 : i32
    %c0_i32_0 = arith.constant 0 : i32
    %c0_i32_1 = arith.constant 0 : i32
    return %c0_i32, %c0_i32_0 : i32, i32
  }
  func.func @transform_4(%arg0: i32) -> (i32, i32, i32) {
    %c0_i32 = arith.constant 0 : i32
    %c0_i32_0 = arith.constant 0 : i32
    %c0_i32_1 = arith.constant 0 : i32
    return %arg0, %c0_i32, %c0_i32_0 : i32, i32, i32
  }
}

module attributes {stable_mosaic.version = 11 : i64} {
  func.func @_conv_block_kernel(%arg0: i32, %arg1: memref<1x10x256xbf16, #tpu.memory_space<vmem>>, %arg2: memref<3x256x256xbf16, #tpu.memory_space<vmem>>, %arg3: memref<2x4x8xbf16, #tpu.memory_space<vmem>>, %arg4: memref<1x256xf32, #tpu.memory_space<vmem>>, %arg5: memref<1x4x128xbf16, #tpu.memory_space<vmem>>) attributes {dimension_semantics = [#tpu.dimension_semantics<parallel>], iteration_bounds = array<i64: 2>, scalar_prefetch = 0 : i64, scratch_operands = 0 : i64, tpu.core_type = #tpu.core_type<tc>, window_params = [{transform_indices = @transform_0, window_bounds = array<i64: 1, 10, 256>}, {pipeline_mode = #tpu.pipeline_mode<synchronous>, transform_indices = @transform_1, window_bounds = array<i64: 3, 256, 256>}, {pipeline_mode = #tpu.pipeline_mode<synchronous>, transform_indices = @transform_2, window_bounds = array<i64: 2, 4, 8>}, {pipeline_mode = #tpu.pipeline_mode<synchronous>, transform_indices = @transform_3, window_bounds = array<i64: 1, 256>}, {transform_indices = @transform_4, window_bounds = array<i64: 1, 4, 128>}]} {
    %c0 = arith.constant 0 : index
    %c0_0 = arith.constant 0 : index
    %c0_1 = arith.constant 0 : index
    %0 = vector.load %arg1[%c0, %c0_0, %c0_1] : memref<1x10x256xbf16, #tpu.memory_space<vmem>>, vector<1x8x256xbf16>
    %1 = vector.shape_cast %0 : vector<1x8x256xbf16> to vector<8x256xbf16>
    %c0_2 = arith.constant 0 : index
    %c0_3 = arith.constant 0 : index
    %c0_4 = arith.constant 0 : index
    %2 = vector.load %arg2[%c0_2, %c0_3, %c0_4] : memref<3x256x256xbf16, #tpu.memory_space<vmem>>, vector<1x256x256xbf16>
    %3 = vector.shape_cast %2 : vector<1x256x256xbf16> to vector<256x256xbf16>
    %cst = arith.constant dense<0.000000e+00> : vector<8x256xf32>
    %4 = tpu.matmul %1, %3, %cst {dimension_numbers = #tpu.dot_dimension_numbers<[1], [0], [0], [1], [0, 0, 1, 1], [], []>} : vector<8x256xbf16>, vector<256x256xbf16>, vector<8x256xf32> -> vector<8x256xf32>
    %c0_5 = arith.constant 0 : index
    %c1 = arith.constant 1 : index
    %c0_6 = arith.constant 0 : index
    %5 = vector.load %arg1[%c0_5, %c1, %c0_6] : memref<1x10x256xbf16, #tpu.memory_space<vmem>>, vector<1x8x256xbf16>
    %6 = vector.shape_cast %5 : vector<1x8x256xbf16> to vector<8x256xbf16>
    %c1_7 = arith.constant 1 : index
    %c0_8 = arith.constant 0 : index
    %c0_9 = arith.constant 0 : index
    %7 = vector.load %arg2[%c1_7, %c0_8, %c0_9] : memref<3x256x256xbf16, #tpu.memory_space<vmem>>, vector<1x256x256xbf16>
    %8 = vector.shape_cast %7 : vector<1x256x256xbf16> to vector<256x256xbf16>
    %cst_10 = arith.constant dense<0.000000e+00> : vector<8x256xf32>
    %9 = tpu.matmul %6, %8, %cst_10 {dimension_numbers = #tpu.dot_dimension_numbers<[1], [0], [0], [1], [0, 0, 1, 1], [], []>} : vector<8x256xbf16>, vector<256x256xbf16>, vector<8x256xf32> -> vector<8x256xf32>
    %10 = arith.addf %4, %9 : vector<8x256xf32>
    %c0_11 = arith.constant 0 : index
    %c2 = arith.constant 2 : index
    %c0_12 = arith.constant 0 : index
    %11 = vector.load %arg1[%c0_11, %c2, %c0_12] : memref<1x10x256xbf16, #tpu.memory_space<vmem>>, vector<1x8x256xbf16>
    %12 = vector.shape_cast %11 : vector<1x8x256xbf16> to vector<8x256xbf16>
    %c2_13 = arith.constant 2 : index
    %c0_14 = arith.constant 0 : index
    %c0_15 = arith.constant 0 : index
    %13 = vector.load %arg2[%c2_13, %c0_14, %c0_15] : memref<3x256x256xbf16, #tpu.memory_space<vmem>>, vector<1x256x256xbf16>
    %14 = vector.shape_cast %13 : vector<1x256x256xbf16> to vector<256x256xbf16>
    %cst_16 = arith.constant dense<0.000000e+00> : vector<8x256xf32>
    %15 = tpu.matmul %12, %14, %cst_16 {dimension_numbers = #tpu.dot_dimension_numbers<[1], [0], [0], [1], [0, 0, 1, 1], [], []>} : vector<8x256xbf16>, vector<256x256xbf16>, vector<8x256xf32> -> vector<8x256xf32>
    %16 = arith.addf %10, %15 : vector<8x256xf32>
    %c0_17 = arith.constant 0 : index
    %c0_18 = arith.constant 0 : index
    %17 = vector.load %arg4[%c0_17, %c0_18] : memref<1x256xf32, #tpu.memory_space<vmem>>, vector<1x256xf32>
    %18 = vector.broadcast %17 : vector<1x256xf32> to vector<8x256xf32>
    %19 = arith.addf %16, %18 : vector<8x256xf32>
    %cst_19 = arith.constant 0.000000e+00 : f32
    %20 = vector.broadcast %cst_19 : f32 to vector<8x256xf32>
    %21 = arith.maximumf %19, %20 : vector<8x256xf32>
    %22 = vector.extract_strided_slice %21 {offsets = [0, 0], sizes = [8, 128], strides = [1, 1]} : vector<8x256xf32> to vector<8x128xf32>
    %23 = vector.extract_strided_slice %21 {offsets = [0, 128], sizes = [8, 128], strides = [1, 1]} : vector<8x256xf32> to vector<8x128xf32>
    %24 = arith.maximumf %22, %23 : vector<8x128xf32>
    %25 = arith.truncf %24 : vector<8x128xf32> to vector<8x128xbf16>
    %c0_20 = arith.constant 0 : index
    %c0_21 = arith.constant 0 : index
    %c0_22 = arith.constant 0 : index
    %26 = vector.load %arg3[%c0_20, %c0_21, %c0_22] : memref<2x4x8xbf16, #tpu.memory_space<vmem>>, vector<1x4x8xbf16>
    %27 = vector.shape_cast %26 : vector<1x4x8xbf16> to vector<4x8xbf16>
    %cst_23 = arith.constant dense<0.000000e+00> : vector<4x128xf32>
    %28 = tpu.matmul %27, %25, %cst_23 {dimension_numbers = #tpu.dot_dimension_numbers<[1], [0], [0], [1], [0, 0, 1, 1], [], []>} : vector<4x8xbf16>, vector<8x128xbf16>, vector<4x128xf32> -> vector<4x128xf32>
    %c1_24 = arith.constant 1 : index
    %c0_25 = arith.constant 0 : index
    %c0_26 = arith.constant 0 : index
    %29 = vector.load %arg3[%c1_24, %c0_25, %c0_26] : memref<2x4x8xbf16, #tpu.memory_space<vmem>>, vector<1x4x8xbf16>
    %30 = vector.shape_cast %29 : vector<1x4x8xbf16> to vector<4x8xbf16>
    %cst_27 = arith.constant dense<0.000000e+00> : vector<4x128xf32>
    %31 = tpu.matmul %30, %25, %cst_27 {dimension_numbers = #tpu.dot_dimension_numbers<[1], [0], [0], [1], [0, 0, 1, 1], [], []>} : vector<4x8xbf16>, vector<8x128xbf16>, vector<4x128xf32> -> vector<4x128xf32>
    %32 = arith.maximumf %28, %31 : vector<4x128xf32>
    %33 = arith.truncf %32 : vector<4x128xf32> to vector<4x128xbf16>
    %c0_28 = arith.constant 0 : index
    %c0_29 = arith.constant 0 : index
    %c0_30 = arith.constant 0 : index
    %34 = vector.load %arg5[%c0_28, %c0_29, %c0_30] : memref<1x4x128xbf16, #tpu.memory_space<vmem>>, vector<1x4x128xbf16>
    %35 = vector.shape_cast %34 : vector<1x4x128xbf16> to vector<4x128xbf16>
    %36 = vector.shape_cast %33 : vector<4x128xbf16> to vector<1x4x128xbf16>
    tpu.vector_store %arg5[%c0_28, %c0_29, %c0_30], %36 {strides = array<i32>} : memref<1x4x128xbf16, #tpu.memory_space<vmem>>, vector<1x4x128xbf16>,
    return
  }
  func.func @transform_0(%arg0: i32) -> (i32, i32, i32) {
    %c0_i32 = arith.constant 0 : i32
    %c0_i32_0 = arith.constant 0 : i32
    %c0_i32_1 = arith.constant 0 : i32
    return %arg0, %c0_i32, %c0_i32_0 : i32, i32, i32
  }
  func.func @transform_1(%arg0: i32) -> (i32, i32, i32) {
    %c0_i32 = arith.constant 0 : i32
    %c0_i32_0 = arith.constant 0 : i32
    %c0_i32_1 = arith.constant 0 : i32
    %c0_i32_2 = arith.constant 0 : i32
    return %c0_i32, %c0_i32_0, %c0_i32_1 : i32, i32, i32
  }
  func.func @transform_2(%arg0: i32) -> (i32, i32, i32) {
    %c0_i32 = arith.constant 0 : i32
    %c0_i32_0 = arith.constant 0 : i32
    %c0_i32_1 = arith.constant 0 : i32
    %c0_i32_2 = arith.constant 0 : i32
    return %c0_i32, %c0_i32_0, %c0_i32_1 : i32, i32, i32
  }
  func.func @transform_3(%arg0: i32) -> (i32, i32) {
    %c0_i32 = arith.constant 0 : i32
    %c0_i32_0 = arith.constant 0 : i32
    %c0_i32_1 = arith.constant 0 : i32
    return %c0_i32, %c0_i32_0 : i32, i32
  }
  func.func @transform_4(%arg0: i32) -> (i32, i32, i32) {
    %c0_i32 = arith.constant 0 : i32
    %c0_i32_0 = arith.constant 0 : i32
    %c0_i32_1 = arith.constant 0 : i32
    return %arg0, %c0_i32, %c0_i32_0 : i32, i32, i32
  }
}

module attributes {stable_mosaic.version = 11 : i64} {
  func.func @_conv_block_kernel(%arg0: i32, %arg1: memref<1x4x128xbf16, #tpu.memory_space<vmem>>, %arg2: memref<3x128x256xbf16, #tpu.memory_space<vmem>>, %arg3: memref<2x1x2xbf16, #tpu.memory_space<vmem>>, %arg4: memref<1x256xf32, #tpu.memory_space<vmem>>, %arg5: memref<1x1x128xbf16, #tpu.memory_space<vmem>>) attributes {dimension_semantics = [#tpu.dimension_semantics<parallel>], iteration_bounds = array<i64: 2>, scalar_prefetch = 0 : i64, scratch_operands = 0 : i64, tpu.core_type = #tpu.core_type<tc>, window_params = [{transform_indices = @transform_0, window_bounds = array<i64: 1, 4, 128>}, {pipeline_mode = #tpu.pipeline_mode<synchronous>, transform_indices = @transform_1, window_bounds = array<i64: 3, 128, 256>}, {pipeline_mode = #tpu.pipeline_mode<synchronous>, transform_indices = @transform_2, window_bounds = array<i64: 2, 1, 2>}, {pipeline_mode = #tpu.pipeline_mode<synchronous>, transform_indices = @transform_3, window_bounds = array<i64: 1, 256>}, {transform_indices = @transform_4, window_bounds = array<i64: 1, 1, 128>}]} {
    %c0 = arith.constant 0 : index
    %c0_0 = arith.constant 0 : index
    %c0_1 = arith.constant 0 : index
    %0 = vector.load %arg1[%c0, %c0_0, %c0_1] : memref<1x4x128xbf16, #tpu.memory_space<vmem>>, vector<1x2x128xbf16>
    %1 = vector.shape_cast %0 : vector<1x2x128xbf16> to vector<2x128xbf16>
    %c0_2 = arith.constant 0 : index
    %c0_3 = arith.constant 0 : index
    %c0_4 = arith.constant 0 : index
    %2 = vector.load %arg2[%c0_2, %c0_3, %c0_4] : memref<3x128x256xbf16, #tpu.memory_space<vmem>>, vector<1x128x256xbf16>
    %3 = vector.shape_cast %2 : vector<1x128x256xbf16> to vector<128x256xbf16>
    %cst = arith.constant dense<0.000000e+00> : vector<2x256xf32>
    %4 = tpu.matmul %1, %3, %cst {dimension_numbers = #tpu.dot_dimension_numbers<[1], [0], [0], [1], [0, 0, 1, 1], [], []>} : vector<2x128xbf16>, vector<128x256xbf16>, vector<2x256xf32> -> vector<2x256xf32>
    %c0_5 = arith.constant 0 : index
    %c1 = arith.constant 1 : index
    %c0_6 = arith.constant 0 : index
    %5 = vector.load %arg1[%c0_5, %c1, %c0_6] : memref<1x4x128xbf16, #tpu.memory_space<vmem>>, vector<1x2x128xbf16>
    %6 = vector.shape_cast %5 : vector<1x2x128xbf16> to vector<2x128xbf16>
    %c1_7 = arith.constant 1 : index
    %c0_8 = arith.constant 0 : index
    %c0_9 = arith.constant 0 : index
    %7 = vector.load %arg2[%c1_7, %c0_8, %c0_9] : memref<3x128x256xbf16, #tpu.memory_space<vmem>>, vector<1x128x256xbf16>
    %8 = vector.shape_cast %7 : vector<1x128x256xbf16> to vector<128x256xbf16>
    %cst_10 = arith.constant dense<0.000000e+00> : vector<2x256xf32>
    %9 = tpu.matmul %6, %8, %cst_10 {dimension_numbers = #tpu.dot_dimension_numbers<[1], [0], [0], [1], [0, 0, 1, 1], [], []>} : vector<2x128xbf16>, vector<128x256xbf16>, vector<2x256xf32> -> vector<2x256xf32>
    %10 = arith.addf %4, %9 : vector<2x256xf32>
    %c0_11 = arith.constant 0 : index
    %c2 = arith.constant 2 : index
    %c0_12 = arith.constant 0 : index
    %11 = vector.load %arg1[%c0_11, %c2, %c0_12] : memref<1x4x128xbf16, #tpu.memory_space<vmem>>, vector<1x2x128xbf16>
    %12 = vector.shape_cast %11 : vector<1x2x128xbf16> to vector<2x128xbf16>
    %c2_13 = arith.constant 2 : index
    %c0_14 = arith.constant 0 : index
    %c0_15 = arith.constant 0 : index
    %13 = vector.load %arg2[%c2_13, %c0_14, %c0_15] : memref<3x128x256xbf16, #tpu.memory_space<vmem>>, vector<1x128x256xbf16>
    %14 = vector.shape_cast %13 : vector<1x128x256xbf16> to vector<128x256xbf16>
    %cst_16 = arith.constant dense<0.000000e+00> : vector<2x256xf32>
    %15 = tpu.matmul %12, %14, %cst_16 {dimension_numbers = #tpu.dot_dimension_numbers<[1], [0], [0], [1], [0, 0, 1, 1], [], []>} : vector<2x128xbf16>, vector<128x256xbf16>, vector<2x256xf32> -> vector<2x256xf32>
    %16 = arith.addf %10, %15 : vector<2x256xf32>
    %c0_17 = arith.constant 0 : index
    %c0_18 = arith.constant 0 : index
    %17 = vector.load %arg4[%c0_17, %c0_18] : memref<1x256xf32, #tpu.memory_space<vmem>>, vector<1x256xf32>
    %18 = vector.broadcast %17 : vector<1x256xf32> to vector<2x256xf32>
    %19 = arith.addf %16, %18 : vector<2x256xf32>
    %cst_19 = arith.constant 0.000000e+00 : f32
    %20 = vector.broadcast %cst_19 : f32 to vector<2x256xf32>
    %21 = arith.maximumf %19, %20 : vector<2x256xf32>
    %22 = vector.extract_strided_slice %21 {offsets = [0, 0], sizes = [2, 128], strides = [1, 1]} : vector<2x256xf32> to vector<2x128xf32>
    %23 = vector.extract_strided_slice %21 {offsets = [0, 128], sizes = [2, 128], strides = [1, 1]} : vector<2x256xf32> to vector<2x128xf32>
    %24 = arith.maximumf %22, %23 : vector<2x128xf32>
    %25 = arith.truncf %24 : vector<2x128xf32> to vector<2x128xbf16>
    %c0_20 = arith.constant 0 : index
    %c0_21 = arith.constant 0 : index
    %c0_22 = arith.constant 0 : index
    %26 = vector.load %arg3[%c0_20, %c0_21, %c0_22] : memref<2x1x2xbf16, #tpu.memory_space<vmem>>, vector<1x1x2xbf16>
    %27 = vector.shape_cast %26 : vector<1x1x2xbf16> to vector<1x2xbf16>
    %cst_23 = arith.constant dense<0.000000e+00> : vector<1x128xf32>
    %28 = tpu.matmul %27, %25, %cst_23 {dimension_numbers = #tpu.dot_dimension_numbers<[1], [0], [0], [1], [0, 0, 1, 1], [], []>} : vector<1x2xbf16>, vector<2x128xbf16>, vector<1x128xf32> -> vector<1x128xf32>
    %c1_24 = arith.constant 1 : index
    %c0_25 = arith.constant 0 : index
    %c0_26 = arith.constant 0 : index
    %29 = vector.load %arg3[%c1_24, %c0_25, %c0_26] : memref<2x1x2xbf16, #tpu.memory_space<vmem>>, vector<1x1x2xbf16>
    %30 = vector.shape_cast %29 : vector<1x1x2xbf16> to vector<1x2xbf16>
    %cst_27 = arith.constant dense<0.000000e+00> : vector<1x128xf32>
    %31 = tpu.matmul %30, %25, %cst_27 {dimension_numbers = #tpu.dot_dimension_numbers<[1], [0], [0], [1], [0, 0, 1, 1], [], []>} : vector<1x2xbf16>, vector<2x128xbf16>, vector<1x128xf32> -> vector<1x128xf32>
    %32 = arith.maximumf %28, %31 : vector<1x128xf32>
    %33 = arith.truncf %32 : vector<1x128xf32> to vector<1x128xbf16>
    %c0_28 = arith.constant 0 : index
    %c0_29 = arith.constant 0 : index
    %c0_30 = arith.constant 0 : index
    %34 = vector.load %arg5[%c0_28, %c0_29, %c0_30] : memref<1x1x128xbf16, #tpu.memory_space<vmem>>, vector<1x1x128xbf16>
    %35 = vector.shape_cast %34 : vector<1x1x128xbf16> to vector<1x128xbf16>
    %36 = vector.shape_cast %33 : vector<1x128xbf16> to vector<1x1x128xbf16>
    tpu.vector_store %arg5[%c0_28, %c0_29, %c0_30], %36 {strides = array<i32>} : memref<1x1x128xbf16, #tpu.memory_space<vmem>>, vector<1x1x128xbf16>,
    return
  }
  func.func @transform_0(%arg0: i32) -> (i32, i32, i32) {
    %c0_i32 = arith.constant 0 : i32
    %c0_i32_0 = arith.constant 0 : i32
    %c0_i32_1 = arith.constant 0 : i32
    return %arg0, %c0_i32, %c0_i32_0 : i32, i32, i32
  }
  func.func @transform_1(%arg0: i32) -> (i32, i32, i32) {
    %c0_i32 = arith.constant 0 : i32
    %c0_i32_0 = arith.constant 0 : i32
    %c0_i32_1 = arith.constant 0 : i32
    %c0_i32_2 = arith.constant 0 : i32
    return %c0_i32, %c0_i32_0, %c0_i32_1 : i32, i32, i32
  }
  func.func @transform_2(%arg0: i32) -> (i32, i32, i32) {
    %c0_i32 = arith.constant 0 : i32
    %c0_i32_0 = arith.constant 0 : i32
    %c0_i32_1 = arith.constant 0 : i32
    %c0_i32_2 = arith.constant 0 : i32
    return %c0_i32, %c0_i32_0, %c0_i32_1 : i32, i32, i32
  }
  func.func @transform_3(%arg0: i32) -> (i32, i32) {
    %c0_i32 = arith.constant 0 : i32
    %c0_i32_0 = arith.constant 0 : i32
    %c0_i32_1 = arith.constant 0 : i32
    return %c0_i32, %c0_i32_0 : i32, i32
  }
  func.func @transform_4(%arg0: i32) -> (i32, i32, i32) {
    %c0_i32 = arith.constant 0 : i32
    %c0_i32_0 = arith.constant 0 : i32
    %c0_i32_1 = arith.constant 0 : i32
    return %arg0, %c0_i32, %c0_i32_0 : i32, i32, i32
  }
}

module attributes {stable_mosaic.version = 11 : i64} {
  func.func @_dense_head_kernel(%arg0: memref<2x128xbf16, #tpu.memory_space<vmem>>, %arg1: memref<128x128xbf16, #tpu.memory_space<vmem>>, %arg2: memref<1x128xf32, #tpu.memory_space<vmem>>, %arg3: memref<128x128xbf16, #tpu.memory_space<vmem>>, %arg4: memref<1x128xf32, #tpu.memory_space<vmem>>, %arg5: memref<2x128xf32, #tpu.memory_space<vmem>>) attributes {dimension_semantics = [], scalar_prefetch = 0 : i64, scratch_operands = 0 : i64, tpu.core_type = #tpu.core_type<tc>} {
    %c0 = arith.constant 0 : index
    %c0_0 = arith.constant 0 : index
    %0 = vector.load %arg0[%c0, %c0_0] : memref<2x128xbf16, #tpu.memory_space<vmem>>, vector<2x128xbf16>
    %c0_1 = arith.constant 0 : index
    %c0_2 = arith.constant 0 : index
    %1 = vector.load %arg1[%c0_1, %c0_2] : memref<128x128xbf16, #tpu.memory_space<vmem>>, vector<128x128xbf16>
    %cst = arith.constant dense<0.000000e+00> : vector<2x128xf32>
    %2 = tpu.matmul %0, %1, %cst {dimension_numbers = #tpu.dot_dimension_numbers<[1], [0], [0], [1], [0, 0, 1, 1], [], []>} : vector<2x128xbf16>, vector<128x128xbf16>, vector<2x128xf32> -> vector<2x128xf32>
    %c0_3 = arith.constant 0 : index
    %c0_4 = arith.constant 0 : index
    %3 = vector.load %arg2[%c0_3, %c0_4] : memref<1x128xf32, #tpu.memory_space<vmem>>, vector<1x128xf32>
    %4 = vector.broadcast %3 : vector<1x128xf32> to vector<2x128xf32>
    %5 = arith.addf %2, %4 : vector<2x128xf32>
    %cst_5 = arith.constant 0.000000e+00 : f32
    %6 = vector.broadcast %cst_5 : f32 to vector<2x128xf32>
    %7 = arith.maximumf %5, %6 : vector<2x128xf32>
    %8 = arith.truncf %7 : vector<2x128xf32> to vector<2x128xbf16>
    %c0_6 = arith.constant 0 : index
    %c0_7 = arith.constant 0 : index
    %9 = vector.load %arg3[%c0_6, %c0_7] : memref<128x128xbf16, #tpu.memory_space<vmem>>, vector<128x128xbf16>
    %cst_8 = arith.constant dense<0.000000e+00> : vector<2x128xf32>
    %10 = tpu.matmul %8, %9, %cst_8 {dimension_numbers = #tpu.dot_dimension_numbers<[1], [0], [0], [1], [0, 0, 1, 1], [], []>} : vector<2x128xbf16>, vector<128x128xbf16>, vector<2x128xf32> -> vector<2x128xf32>
    %c0_9 = arith.constant 0 : index
    %c0_10 = arith.constant 0 : index
    %11 = vector.load %arg4[%c0_9, %c0_10] : memref<1x128xf32, #tpu.memory_space<vmem>>, vector<1x128xf32>
    %12 = vector.broadcast %11 : vector<1x128xf32> to vector<2x128xf32>
    %13 = arith.addf %10, %12 : vector<2x128xf32>
    %c0_11 = arith.constant 0 : index
    %c0_12 = arith.constant 0 : index
    %14 = vector.load %arg5[%c0_11, %c0_12] : memref<2x128xf32, #tpu.memory_space<vmem>>, vector<2x128xf32>
    tpu.vector_store %arg5[%c0_11, %c0_12], %13 {strides = array<i32>} : memref<2x128xf32, #tpu.memory_space<vmem>>, vector<2x128xf32>,
    return
  }
}

</mosaic_0001>

<llo_original>
// kernel: forward.9
$region0: #{forward.9}
  #allocation0 [shape = 'u32[]', space=smem, size = 0x4, offset = 0x4, fixed_abs, tag = 'smem constant byte address 0x4 - core index']
  #allocation1 [shape = 'u32[144,128]{1,0:T(1,128)}', space=vmem, size = 0x12000, scoped, tag = 'internal scratch']
  %s0 = inlined_call_operand.vmem [shape: bf16[2,10,256], index: 0, kind: input, shape index: {}]
  %s1 = inlined_call_operand.vmem [shape: bf16[3,256,256], index: 1, kind: input, shape index: {}]
  %s2 = inlined_call_operand.vmem [shape: bf16[2,4,8], index: 2, kind: input, shape index: {}]
  %s3 = inlined_call_operand.vmem [shape: f32[1,256], index: 3, kind: input, shape index: {}]
  %s4 = inlined_call_operand.vmem [shape: bf16[2,4,128], index: 4, kind: output, shape index: {}]
  %s5 = sld [smem:[#allocation0]]
  $region49: #{forward.9} parent=0
    _
  %s7 = ssub.s32 1, %s5
  %s8 = scalar_select 0, %s7, %s5
  loop: start=0, step=1, limit=4
  $region2: #{forward.9} parent=0 // loop_pre_header
    _
  $region3: #{forward.9} parent=0 // loop_header
    %s10 = sphi 0, %s14
    %p11 = scmp.ge.s32.totalorder %s10, 4
    %s20 = sphi 0, %s22
    %s23 = sphi 0, %s20
    %s24 = sphi 0, %s23
    %s40 = sphi 0, %s24
    %s44 = sphi 0, %s44
    %s46 = sphi 0, %s44
    %s47 = sphi 0, %s46
    %s61 = sphi 0, %s47
    %s65 = sphi 0, %s65
    %s67 = sphi 0, %s65
    %s68 = sphi 0, %s67
    %s82 = sphi 0, %s68
    %s86 = sphi 0, %s86
    %s88 = sphi 0, %s86
    %s89 = sphi 0, %s88
    %s103 = sphi 0, %s89
    %s109 = sphi 0, %s111
    %s112 = sphi 0, %s109
    %s113 = sphi 0, %s112
    %s129 = sphi 0, %s113
  $region4: #{forward.9} parent=0 // loop_header_branch
    %13 = sbr.rel (%p11) target = $region8
  $region5: #{forward.9} parent=0 // loop_body
    %s15 = ssub.s32 %s10, 1
    %s16 = ssub.s32 %s10, 2
    %s17 = sadd.s32 %s10, 1
    %s18 = ssub.s32 %s10, %s17
    %p19 = scmp.eq.s32.totalorder %s18, 0
    %s21 = sadd.s32 %s20, 1
    %s22 = scalar_select %p19, %s20, %s21
    %p25 = pneg %p19
    %p26 = scmp.eq.s32.totalorder %s10, 1
    %p27 = por %p25, %p26
    %p28 = scmp.ne.s32.totalorder %s20, %s23
    %p29 = scmp.eq.s32.totalorder %s10, 0
    %p30 = por %p28, %p29
    %p31 = scmp.ne.s32.totalorder %s20, %s23
    %p32 = scmp.eq.s32.totalorder %s15, 1
    %p33 = por %p31, %p32
    %p34 = scmp.ne.s32.totalorder %s23, %s24
    %p35 = scmp.eq.s32.totalorder %s15, 0
    %p36 = por %p34, %p35
    %p37 = scmp.ne.s32.totalorder %s23, %s24
    %p38 = scmp.eq.s32.totalorder %s16, 1
    %p39 = por %p37, %p38
    %p41 = scmp.ne.s32.totalorder %s24, %s40
    %p42 = scmp.eq.s32.totalorder %s16, 0
    %p43 = por %p41, %p42
    %s45 = sadd.s32 %s44, 1
    %p48 = scmp.eq.s32.totalorder %s10, 1
    %p49 = scmp.ne.s32.totalorder %s44, %s46
    %p50 = scmp.eq.s32.totalorder %s10, 0
    %p51 = por %p49, %p50
    %p52 = scmp.ne.s32.totalorder %s44, %s46
    %p53 = scmp.eq.s32.totalorder %s15, 1
    %p54 = por %p52, %p53
    %p55 = scmp.ne.s32.totalorder %s46, %s47
    %p56 = scmp.eq.s32.totalorder %s15, 0
    %p57 = por %p55, %p56
    %p58 = scmp.ne.s32.totalorder %s46, %s47
    %p59 = scmp.eq.s32.totalorder %s16, 1
    %p60 = por %p58, %p59
    %p62 = scmp.ne.s32.totalorder %s47, %s61
    %p63 = scmp.eq.s32.totalorder %s16, 0
    %p64 = por %p62, %p63
    %s66 = sadd.s32 %s65, 1
    %p69 = scmp.eq.s32.totalorder %s10, 1
    %p70 = scmp.ne.s32.totalorder %s65, %s67
    %p71 = scmp.eq.s32.totalorder %s10, 0
    %p72 = por %p70, %p71
    %p73 = scmp.ne.s32.totalorder %s65, %s67
    %p74 = scmp.eq.s32.totalorder %s15, 1
    %p75 = por %p73, %p74
    %p76 = scmp.ne.s32.totalorder %s67, %s68
    %p77 = scmp.eq.s32.totalorder %s15, 0
    %p78 = por %p76, %p77
    %p79 = scmp.ne.s32.totalorder %s67, %s68
    %p80 = scmp.eq.s32.totalorder %s16, 1
    %p81 = por %p79, %p80
    %p83 = scmp.ne.s32.totalorder %s68, %s82
    %p84 = scmp.eq.s32.totalorder %s16, 0
    %p85 = por %p83, %p84
    %s87 = sadd.s32 %s86, 1
    %p90 = scmp.eq.s32.totalorder %s10, 1
    %p91 = scmp.ne.s32.totalorder %s86, %s88
    %p92 = scmp.eq.s32.totalorder %s10, 0
    %p93 = por %p91, %p92
    %p94 = scmp.ne.s32.totalorder %s86, %s88
    %p95 = scmp.eq.s32.totalorder %s15, 1
    %p96 = por %p94, %p95
    %p97 = scmp.ne.s32.totalorder %s88, %s89
    %p98 = scmp.eq.s32.totalorder %s15, 0
    %p99 = por %p97, %p98
    %p100 = scmp.ne.s32.totalorder %s88, %s89
    %p101 = scmp.eq.s32.totalorder %s16, 1
    %p102 = por %p100, %p101
    %p104 = scmp.ne.s32.totalorder %s89, %s103
    %p105 = scmp.eq.s32.totalorder %s16, 0
    %p106 = por %p104, %p105
    %s107 = ssub.s32 %s10, %s17
    %p108 = scmp.eq.s32.totalorder %s107, 0
    %s110 = sadd.s32 %s109, 1
    %s111 = scalar_select %p108, %s109, %s110
    %p114 = pneg %p108
    %p115 = scmp.eq.s32.totalorder %s10, 1
    %p116 = por %p114, %p115
    %p117 = scmp.ne.s32.totalorder %s109, %s112
    %p118 = scmp.eq.s32.totalorder %s10, 0
    %p119 = por %p117, %p118
    %p120 = scmp.ne.s32.totalorder %s109, %s112
    %p121 = scmp.eq.s32.totalorder %s15, 1
    %p122 = por %p120, %p121
    %p123 = scmp.ne.s32.totalorder %s112, %s113
    %p124 = scmp.eq.s32.totalorder %s15, 0
    %p125 = por %p123, %p124
    %p126 = scmp.ne.s32.totalorder %s112, %s113
    %p127 = scmp.eq.s32.totalorder %s16, 1
    %p128 = por %p126, %p127
    %p130 = scmp.ne.s32.totalorder %s113, %s129
    %p131 = scmp.eq.s32.totalorder %s16, 0
    %p132 = por %p130, %p131
    %p133 = scmp.le.s32.totalorder 1, %s10
    %p134 = scmp.lt.s32.totalorder %s10, 3
    %p135 = pnand %p133, %p134
    %p136 = pneg %p135
    // Predicated region
    $region9: #{forward.9} parent=5 // pred_check
      _
    $region10: #{forward.9} parent=5 // pred_check_branch
      %138 = sbr.rel (%p135) target = $region12
    $region11: #{forward.9} parent=5 // pred_region
      %s139 = ssub.s32 %s10, 1
      // Predicated region
      $region13: #{forward.9} parent=11 // pred_check
        %p140 = pneg %p57
      $region14: #{forward.9} parent=11 // pred_check_branch
        %142 = sbr.rel (%p140) target = $region16
      $region15: #{forward.9} parent=11 // pred_region
        _
      $region16: #{forward.9} parent=11 // pred_fallthru
        _
      // Predicated region
      $region17: #{forward.9} parent=11 // pred_check
        %p143 = pneg %p78
      $region18: #{forward.9} parent=11 // pred_check_branch
        %145 = sbr.rel (%p143) target = $region20
      $region19: #{forward.9} parent=11 // pred_region
        _
      $region20: #{forward.9} parent=11 // pred_fallthru
        _
      // Predicated region
      $region21: #{forward.9} parent=11 // pred_check
        %p146 = pneg %p99
      $region22: #{forward.9} parent=11 // pred_check_branch
        %148 = sbr.rel (%p146) target = $region24
      $region23: #{forward.9} parent=11 // pred_region
        _
      $region24: #{forward.9} parent=11 // pred_fallthru
        _
    $region12: #{forward.9} parent=5 // pred_fallthru
      _
    %p149 = scmp.lt.s32.totalorder %s10, 2
    // Predicated region
    $region25: #{forward.9} parent=5 // pred_check
      %p150 = pneg %p149
    $region26: #{forward.9} parent=5 // pred_check_branch
      %152 = sbr.rel (%p150) target = $region28
    $region27: #{forward.9} parent=5 // pred_region
      // Predicated region
      $region29: #{forward.9} parent=27 // pred_check
        %p153 = pneg %p30
      $region30: #{forward.9} parent=27 // pred_check_branch
        %155 = sbr.rel (%p153) target = $region32
      $region31: #{forward.9} parent=27 // pred_region
        %p156 = scmp.lt.s32.totalorder %s10, 1
        %s157 = scalar_select %p156, %s10, 1
        %s158 = smul.addr %s157, 4
        %s159 = smul.addr %s158, 4
        %s160 = scalar_lea.vmem %s0, %s159
      $region32: #{forward.9} parent=27 // pred_fallthru
        _
    $region28: #{forward.9} parent=5 // pred_fallthru
      _
    %p161 = scmp.le.s32.totalorder 1, %s10
    %p162 = scmp.lt.s32.totalorder %s10, 3
    %p163 = pnand %p161, %p162
    %p164 = pneg %p163
    // Predicated region
    $region33: #{forward.9} parent=5 // pred_check
      _
    $region34: #{forward.9} parent=5 // pred_check_branch
      %166 = sbr.rel (%p163) target = $region36
    $region35: #{forward.9} parent=5 // pred_region
      %s167 = ssub.s32 %s10, 1
      %p168 = scmp.lt.s32.totalorder %s15, 1
      %s169 = scalar_select %p168, %s15, 1
      %s170 = smul.addr %s169, 4
      %s171 = smul.addr %s170, 4
      %s172 = scalar_lea.vmem %s0, %s171
      %p173 = pneg %p36
      %p174 = pneg %p33
      %p175 = pneg %p57
      %p176 = pneg %p54
      %p177 = pneg %p78
      %p178 = pneg %p75
      %p179 = pneg %p99
      %p180 = pneg %p96
      %p181 = pneg %p125
      %p182 = pneg %p122
      %p183 = scmp.lt.s32.totalorder %s15, 1
      %s184 = scalar_select %p183, %s15, 1
      %s185 = smul.addr %s184, 2
      %s186 = scalar_lea.vmem %s4, %s185
      %p187 = scmp.lt.s32.totalorder %s15, 1
      %s188 = scalar_select %p187, %s15, 1
      %s189 = smul.addr %s188, 4
      %s190 = smul.addr %s189, 4
      %s191 = scalar_lea.vmem %s0, %s190
      %p192 = scmp.lt.s32.totalorder %s15, 1
      %s193 = scalar_select %p192, %s15, 1
      %s194 = smul.addr %s193, 2
      %s195 = scalar_lea.vmem %s4, %s194
      %v197 = vld [vmem:[%s191] sm:$0xff]
      %v198 = vld [vmem:[%s1] sm:$0xff]
      %v199 = vld [vmem:[%s1 + $0x8] sm:$0xff]
      %v200 = vld [vmem:[%s1 + $0x10] sm:$0xff]
      %v201 = vld [vmem:[%s1 + $0x18] sm:$0xff]
      %v202 = vld [vmem:[%s1 + $0x20] sm:$0xff]
      %v203 = vld [vmem:[%s1 + $0x28] sm:$0xff]
      %v204 = vld [vmem:[%s1 + $0x30] sm:$0xff]
      %v205 = vld [vmem:[%s1 + $0x38] sm:$0xff]
      %v206 = vld [vmem:[%s1 + $0x40] sm:$0xff]
      %v207 = vld [vmem:[%s1 + $0x48] sm:$0xff]
      %v208 = vld [vmem:[%s1 + $0x50] sm:$0xff]
      %v209 = vld [vmem:[%s1 + $0x58] sm:$0xff]
      %v210 = vld [vmem:[%s1 + $0x60] sm:$0xff]
      %v211 = vld [vmem:[%s1 + $0x68] sm:$0xff]
      %v212 = vld [vmem:[%s1 + $0x70] sm:$0xff]
      %v213 = vld [vmem:[%s1 + $0x78] sm:$0xff]
      %v214 = vld [vmem:[%s1 + $0x80] sm:$0xff]
      %v215 = vld [vmem:[%s1 + $0x88] sm:$0xff]
      %v216 = vld [vmem:[%s1 + $0x90] sm:$0xff]
      %v217 = vld [vmem:[%s1 + $0x98] sm:$0xff]
      %v218 = vld [vmem:[%s1 + $0xa0] sm:$0xff]
      %v219 = vld [vmem:[%s1 + $0xa8] sm:$0xff]
      %v220 = vld [vmem:[%s1 + $0xb0] sm:$0xff]
      %v221 = vld [vmem:[%s1 + $0xb8] sm:$0xff]
      %v222 = vld [vmem:[%s1 + $0xc0] sm:$0xff]
      %v223 = vld [vmem:[%s1 + $0xc8] sm:$0xff]
      %v224 = vld [vmem:[%s1 + $0xd0] sm:$0xff]
      %v225 = vld [vmem:[%s1 + $0xd8] sm:$0xff]
      %v226 = vld [vmem:[%s1 + $0xe0] sm:$0xff]
      %v227 = vld [vmem:[%s1 + $0xe8] sm:$0xff]
      %v228 = vld [vmem:[%s1 + $0xf0] sm:$0xff]
      %v229 = vld [vmem:[%s1 + $0xf8] sm:$0xff]
      %v230 = vld [vmem:[%s191 + $0x8] sm:$0x11]
      %s231 = scalar_lea.vmem %s1, 256
      %v232 = vld [vmem:[%s231] sm:$0xff]
      %v233 = vld [vmem:[%s231 + $0x8] sm:$0xff]
      %v234 = vld [vmem:[%s231 + $0x10] sm:$0xff]
      %v235 = vld [vmem:[%s231 + $0x18] sm:$0xff]
      %v236 = vld [vmem:[%s231 + $0x20] sm:$0xff]
      %v237 = vld [vmem:[%s231 + $0x28] sm:$0xff]
      %v238 = vld [vmem:[%s231 + $0x30] sm:$0xff]
      %v239 = vld [vmem:[%s231 + $0x38] sm:$0xff]
      %v240 = vld [vmem:[%s231 + $0x40] sm:$0xff]
      %v241 = vld [vmem:[%s231 + $0x48] sm:$0xff]
      %v242 = vld [vmem:[%s231 + $0x50] sm:$0xff]
      %v243 = vld [vmem:[%s231 + $0x58] sm:$0xff]
      %v244 = vld [vmem:[%s231 + $0x60] sm:$0xff]
      %v245 = vld [vmem:[%s231 + $0x68] sm:$0xff]
      %v246 = vld [vmem:[%s231 + $0x70] sm:$0xff]
      %v247 = vld [vmem:[%s231 + $0x78] sm:$0xff]
      %v248 = vld [vmem:[%s231 + $0x80] sm:$0xff]
      %v249 = vld [vmem:[%s231 + $0x88] sm:$0xff]
      %v250 = vld [vmem:[%s231 + $0x90] sm:$0xff]
      %v251 = vld [vmem:[%s231 + $0x98] sm:$0xff]
      %v252 = vld [vmem:[%s231 + $0xa0] sm:$0xff]
      %v253 = vld [vmem:[%s231 + $0xa8] sm:$0xff]
      %v254 = vld [vmem:[%s231 + $0xb0] sm:$0xff]
      %v255 = vld [vmem:[%s231 + $0xb8] sm:$0xff]
      %v256 = vld [vmem:[%s231 + $0xc0] sm:$0xff]
      %v257 = vld [vmem:[%s231 + $0xc8] sm:$0xff]
      %v258 = vld [vmem:[%s231 + $0xd0] sm:$0xff]
      %v259 = vld [vmem:[%s231 + $0xd8] sm:$0xff]
      %v260 = vld [vmem:[%s231 + $0xe0] sm:$0xff]
      %v261 = vld [vmem:[%s231 + $0xe8] sm:$0xff]
      %v262 = vld [vmem:[%s231 + $0xf0] sm:$0xff]
      %v263 = vld [vmem:[%s231 + $0xf8] sm:$0xff]
      %v266 = vunpack.c.l.b16 %v197
      %v267 = vunpack.c.h.b16 %v197
      %v268 = vunpack.c.l.b16 %v230
      %v269 = vunpack.c.h.b16 %v230
      %v270 = vpack.c.b16 %v268, %v266
      %v271 = vpack.c.b16 %v269, %v267
      %v273 = vshrl.u32 %v270, 16
      %v275 = vshll.u32 %v270, 16
      %v277 = vrot.slane %v275, 1
      %v278 = vor.u32 %v273, %v277
      %v280 = vshrl.u32 %v271, 16
      %v282 = vshll.u32 %v271, 16
      %v284 = vrot.slane %v282, 1
      %v285 = vor.u32 %v280, %v284
      %v320 = vunpack.c.l.b16 %v232
      %v321 = vunpack.c.h.b16 %v232
      %v322 = vunpack.c.l.b16 %v233
      %v323 = vunpack.c.h.b16 %v233
      %v324 = vunpack.c.l.b16 %v234
      %v325 = vunpack.c.h.b16 %v234
      %v326 = vunpack.c.l.b16 %v235
      %v327 = vunpack.c.h.b16 %v235
      %v328 = vunpack.c.l.b16 %v236
      %v329 = vunpack.c.h.b16 %v236
      %v330 = vunpack.c.l.b16 %v237
      %v331 = vunpack.c.h.b16 %v237
      %v332 = vunpack.c.l.b16 %v238
      %v333 = vunpack.c.h.b16 %v238
      %v334 = vunpack.c.l.b16 %v239
      %v335 = vunpack.c.h.b16 %v239
      %v336 = vunpack.c.l.b16 %v240
      %v337 = vunpack.c.h.b16 %v240
      %v338 = vunpack.c.l.b16 %v241
      %v339 = vunpack.c.h.b16 %v241
      %v340 = vunpack.c.l.b16 %v242
      %v341 = vunpack.c.h.b16 %v242
      %v342 = vunpack.c.l.b16 %v243
      %v343 = vunpack.c.h.b16 %v243
      %v344 = vunpack.c.l.b16 %v244
      %v345 = vunpack.c.h.b16 %v244
      %v346 = vunpack.c.l.b16 %v245
      %v347 = vunpack.c.h.b16 %v245
      %v348 = vunpack.c.l.b16 %v246
      %v349 = vunpack.c.h.b16 %v246
      %v350 = vunpack.c.l.b16 %v247
      %v351 = vunpack.c.h.b16 %v247
      %v352 = vunpack.c.l.b16 %v248
      %v353 = vunpack.c.h.b16 %v248
      %v354 = vunpack.c.l.b16 %v249
      %v355 = vunpack.c.h.b16 %v249
      %v356 = vunpack.c.l.b16 %v250
      %v357 = vunpack.c.h.b16 %v250
      %v358 = vunpack.c.l.b16 %v251
      %v359 = vunpack.c.h.b16 %v251
      %v360 = vunpack.c.l.b16 %v252
      %v361 = vunpack.c.h.b16 %v252
      %v362 = vunpack.c.l.b16 %v253
      %v363 = vunpack.c.h.b16 %v253
      %v364 = vunpack.c.l.b16 %v254
      %v365 = vunpack.c.h.b16 %v254
      %v366 = vunpack.c.l.b16 %v255
      %v367 = vunpack.c.h.b16 %v255
      %v368 = vunpack.c.l.b16 %v256
      %v369 = vunpack.c.h.b16 %v256
      %v370 = vunpack.c.l.b16 %v257
      %v371 = vunpack.c.h.b16 %v257
      %v372 = vunpack.c.l.b16 %v258
      %v373 = vunpack.c.h.b16 %v258
      %v374 = vunpack.c.l.b16 %v259
      %v375 = vunpack.c.h.b16 %v259
      %v376 = vunpack.c.l.b16 %v260
      %v377 = vunpack.c.h.b16 %v260
      %v378 = vunpack.c.l.b16 %v261
      %v379 = vunpack.c.h.b16 %v261
      %v380 = vunpack.c.l.b16 %v262
      %v381 = vunpack.c.h.b16 %v262
      %v382 = vunpack.c.l.b16 %v263
      %v383 = vunpack.c.h.b16 %v263
      %v384 = vpack.c.b16 %v322, %v320
      %v385 = vpack.c.b16 %v323, %v321
      %v386 = vpack.c.b16 %v326, %v324
      %v387 = vpack.c.b16 %v327, %v325
      %v388 = vpack.c.b16 %v330, %v328
      %v389 = vpack.c.b16 %v331, %v329
      %v390 = vpack.c.b16 %v334, %v332
      %v391 = vpack.c.b16 %v335, %v333
      %v392 = vpack.c.b16 %v338, %v336
      %v393 = vpack.c.b16 %v339, %v337
      %v394 = vpack.c.b16 %v342, %v340
      %v395 = vpack.c.b16 %v343, %v341
      %v396 = vpack.c.b16 %v346, %v344
      %v397 = vpack.c.b16 %v347, %v345
      %v398 = vpack.c.b16 %v350, %v348
      %v399 = vpack.c.b16 %v351, %v349
      %v400 = vpack.c.b16 %v354, %v352
      %v401 = vpack.c.b16 %v355, %v353
      %v402 = vpack.c.b16 %v358, %v356
      %v403 = vpack.c.b16 %v359, %v357
      %v404 = vpack.c.b16 %v362, %v360
      %v405 = vpack.c.b16 %v363, %v361
      %v406 = vpack.c.b16 %v366, %v364
      %v407 = vpack.c.b16 %v367, %v365
      %v408 = vpack.c.b16 %v370, %v368
      %v409 = vpack.c.b16 %v371, %v369
      %v410 = vpack.c.b16 %v374, %v372
      %v411 = vpack.c.b16 %v375, %v373
      %v412 = vpack.c.b16 %v378, %v376
      %v413 = vpack.c.b16 %v379, %v377
      %v414 = vpack.c.b16 %v382, %v380
      %v415 = vpack.c.b16 %v383, %v381
      %448 = vmatprep.subr.bf16.mxu0 %v385
      %449 = vmatpush1.bf16.msra.mxu0 %v384
      %450 = vmatprep.subr.bf16.mxu0 %v387
      %451 = vmatpush1.bf16.msra.mxu0 %v386
      %452 = vmatprep.subr.bf16.mxu0 %v389
      %453 = vmatpush1.bf16.msra.mxu0 %v388
      %454 = vmatprep.subr.bf16.mxu0 %v391
      %455 = vmatpush1.bf16.msra.mxu0 %v390
      %456 = vmatprep.subr.bf16.mxu0 %v393
      %457 = vmatpush1.bf16.msra.mxu0 %v392
      %458 = vmatprep.subr.bf16.mxu0 %v395
      %459 = vmatpush1.bf16.msra.mxu0 %v394
      %460 = vmatprep.subr.bf16.mxu0 %v397
      %461 = vmatpush1.bf16.msra.mxu0 %v396
      %462 = vmatprep.subr.bf16.mxu0 %v399
      %463 = vmatpush1.bf16.msra.mxu0 %v398
      %464 = vmatprep.subr.bf16.mxu0 %v401
      %465 = vmatpush1.bf16.msra.mxu0 %v400
      %466 = vmatprep.subr.bf16.mxu0 %v403
      %467 = vmatpush1.bf16.msra.mxu0 %v402
      %468 = vmatprep.subr.bf16.mxu0 %v405
      %469 = vmatpush1.bf16.msra.mxu0 %v404
      %470 = vmatprep.subr.bf16.mxu0 %v407
      %471 = vmatpush1.bf16.msra.mxu0 %v406
      %472 = vmatprep.subr.bf16.mxu0 %v409
      %473 = vmatpush1.bf16.msra.mxu0 %v408
      %474 = vmatprep.subr.bf16.mxu0 %v411
      %475 = vmatpush1.bf16.msra.mxu0 %v410
      %476 = vmatprep.subr.bf16.mxu0 %v413
      %477 = vmatpush1.bf16.msra.mxu0 %v412
      %478 = vmatprep.subr.bf16.mxu0 %v415
      %479 = vmatpush1.bf16.msra.mxu0 %v414
      %480 = vmatprep.mubr.bf16.mxu0 %v285
      %481 = vmatmul.mubr.bf16.gmra.mrb[0].mxu0 %v278
      %v482 = vpop.f32.mrb[0].mxu0
      %v483 = vadd.f32 0.0, %v482
      %v484 = vpop.f32.mrb[0].mxu0
      %v485 = vadd.f32 0.0, %v484
      %v486 = vpop.f32.mrb[0].mxu0
      %v487 = vpop.f32.mrb[0].mxu0
      %488 = vdwg.mxu0
      %v489 = vpack.c.b16 %v266, %v266
      %v490 = vpack.c.b16 %v267, %v267
      %v525 = vunpack.c.l.b16 %v198
      %v526 = vunpack.c.h.b16 %v198
      %v527 = vunpack.c.l.b16 %v199
      %v528 = vunpack.c.h.b16 %v199
      %v529 = vunpack.c.l.b16 %v200
      %v530 = vunpack.c.h.b16 %v200
      %v531 = vunpack.c.l.b16 %v201
      %v532 = vunpack.c.h.b16 %v201
      %v533 = vunpack.c.l.b16 %v202
      %v534 = vunpack.c.h.b16 %v202
      %v535 = vunpack.c.l.b16 %v203
      %v536 = vunpack.c.h.b16 %v203
      %v537 = vunpack.c.l.b16 %v204
      %v538 = vunpack.c.h.b16 %v204
      %v539 = vunpack.c.l.b16 %v205
      %v540 = vunpack.c.h.b16 %v205
      %v541 = vunpack.c.l.b16 %v206
      %v542 = vunpack.c.h.b16 %v206
      %v543 = vunpack.c.l.b16 %v207
      %v544 = vunpack.c.h.b16 %v207
      %v545 = vunpack.c.l.b16 %v208
      %v546 = vunpack.c.h.b16 %v208
      %v547 = vunpack.c.l.b16 %v209
      %v548 = vunpack.c.h.b16 %v209
      %v549 = vunpack.c.l.b16 %v210
      %v550 = vunpack.c.h.b16 %v210
      %v551 = vunpack.c.l.b16 %v211
      %v552 = vunpack.c.h.b16 %v211
      %v553 = vunpack.c.l.b16 %v212
      %v554 = vunpack.c.h.b16 %v212
      %v555 = vunpack.c.l.b16 %v213
      %v556 = vunpack.c.h.b16 %v213
      %v557 = vunpack.c.l.b16 %v214
      %v558 = vunpack.c.h.b16 %v214
      %v559 = vunpack.c.l.b16 %v215
      %v560 = vunpack.c.h.b16 %v215
      %v561 = vunpack.c.l.b16 %v216
      %v562 = vunpack.c.h.b16 %v216
      %v563 = vunpack.c.l.b16 %v217
      %v564 = vunpack.c.h.b16 %v217
      %v565 = vunpack.c.l.b16 %v218
      %v566 = vunpack.c.h.b16 %v218
      %v567 = vunpack.c.l.b16 %v219
      %v568 = vunpack.c.h.b16 %v219
      %v569 = vunpack.c.l.b16 %v220
      %v570 = vunpack.c.h.b16 %v220
      %v571 = vunpack.c.l.b16 %v221
      %v572 = vunpack.c.h.b16 %v221
      %v573 = vunpack.c.l.b16 %v222
      %v574 = vunpack.c.h.b16 %v222
      %v575 = vunpack.c.l.b16 %v223
      %v576 = vunpack.c.h.b16 %v223
      %v577 = vunpack.c.l.b16 %v224
      %v578 = vunpack.c.h.b16 %v224
      %v579 = vunpack.c.l.b16 %v225
      %v580 = vunpack.c.h.b16 %v225
      %v581 = vunpack.c.l.b16 %v226
      %v582 = vunpack.c.h.b16 %v226
      %v583 = vunpack.c.l.b16 %v227
      %v584 = vunpack.c.h.b16 %v227
      %v585 = vunpack.c.l.b16 %v228
      %v586 = vunpack.c.h.b16 %v228
      %v587 = vunpack.c.l.b16 %v229
      %v588 = vunpack.c.h.b16 %v229
      %v589 = vpack.c.b16 %v527, %v525
      %v590 = vpack.c.b16 %v528, %v526
      %v591 = vpack.c.b16 %v531, %v529
      %v592 = vpack.c.b16 %v532, %v530
      %v593 = vpack.c.b16 %v535, %v533
      %v594 = vpack.c.b16 %v536, %v534
      %v595 = vpack.c.b16 %v539, %v537
      %v596 = vpack.c.b16 %v540, %v538
      %v597 = vpack.c.b16 %v543, %v541
      %v598 = vpack.c.b16 %v544, %v542
      %v599 = vpack.c.b16 %v547, %v545
      %v600 = vpack.c.b16 %v548, %v546
      %v601 = vpack.c.b16 %v551, %v549
      %v602 = vpack.c.b16 %v552, %v550
      %v603 = vpack.c.b16 %v555, %v553
      %v604 = vpack.c.b16 %v556, %v554
      %v605 = vpack.c.b16 %v559, %v557
      %v606 = vpack.c.b16 %v560, %v558
      %v607 = vpack.c.b16 %v563, %v561
      %v608 = vpack.c.b16 %v564, %v562
      %v609 = vpack.c.b16 %v567, %v565
      %v610 = vpack.c.b16 %v568, %v566
      %v611 = vpack.c.b16 %v571, %v569
      %v612 = vpack.c.b16 %v572, %v570
      %v613 = vpack.c.b16 %v575, %v573
      %v614 = vpack.c.b16 %v576, %v574
      %v615 = vpack.c.b16 %v579, %v577
      %v616 = vpack.c.b16 %v580, %v578
      %v617 = vpack.c.b16 %v583, %v581
      %v618 = vpack.c.b16 %v584, %v582
      %v619 = vpack.c.b16 %v587, %v585
      %v620 = vpack.c.b16 %v588, %v586
      %653 = vmatprep.subr.bf16.mxu0 %v590
      %654 = vmatpush1.bf16.msra.mxu0 %v589
      %655 = vmatprep.subr.bf16.mxu0 %v592
      %656 = vmatpush1.bf16.msra.mxu0 %v591
      %657 = vmatprep.subr.bf16.mxu0 %v594
      %658 = vmatpush1.bf16.msra.mxu0 %v593
      %659 = vmatprep.subr.bf16.mxu0 %v596
      %660 = vmatpush1.bf16.msra.mxu0 %v595
      %661 = vmatprep.subr.bf16.mxu0 %v598
      %662 = vmatpush1.bf16.msra.mxu0 %v597
      %663 = vmatprep.subr.bf16.mxu0 %v600
      %664 = vmatpush1.bf16.msra.mxu0 %v599
      %665 = vmatprep.subr.bf16.mxu0 %v602
      %666 = vmatpush1.bf16.msra.mxu0 %v601
      %667 = vmatprep.subr.bf16.mxu0 %v604
      %668 = vmatpush1.bf16.msra.mxu0 %v603
      %669 = vmatprep.subr.bf16.mxu0 %v606
      %670 = vmatpush1.bf16.msra.mxu0 %v605
      %671 = vmatprep.subr.bf16.mxu0 %v608
      %672 = vmatpush1.bf16.msra.mxu0 %v607
      %673 = vmatprep.subr.bf16.mxu0 %v610
      %674 = vmatpush1.bf16.msra.mxu0 %v609
      %675 = vmatprep.subr.bf16.mxu0 %v612
      %676 = vmatpush1.bf16.msra.mxu0 %v611
      %677 = vmatprep.subr.bf16.mxu0 %v614
      %678 = vmatpush1.bf16.msra.mxu0 %v613
      %679 = vmatprep.subr.bf16.mxu0 %v616
      %680 = vmatpush1.bf16.msra.mxu0 %v615
      %681 = vmatprep.subr.bf16.mxu0 %v618
      %682 = vmatpush1.bf16.msra.mxu0 %v617
      %683 = vmatprep.subr.bf16.mxu0 %v620
      %684 = vmatpush1.bf16.msra.mxu0 %v619
      %685 = vmatprep.mubr.bf16.mxu0 %v490
      %686 = vmatmul.mubr.bf16.gmra.mrb[0].mxu0 %v489
      %v687 = vpop.f32.mrb[0].mxu0
      %v688 = vadd.f32 %v483, %v687
      %v689 = vpop.f32.mrb[0].mxu0
      %v690 = vadd.f32 %v485, %v689
      %v691 = vpop.f32.mrb[0].mxu0
      %v692 = vpop.f32.mrb[0].mxu0
      %693 = vdwg.mxu0
      %v694 = vld [vmem:[%s191] sm:$0xee]
      %s695 = scalar_lea.vmem %s1, 512
      %v696 = vld [vmem:[%s695] sm:$0xff]
      %v697 = vld [vmem:[%s695 + $0x8] sm:$0xff]
      %v698 = vld [vmem:[%s695 + $0x10] sm:$0xff]
      %v699 = vld [vmem:[%s695 + $0x18] sm:$0xff]
      %v700 = vld [vmem:[%s695 + $0x20] sm:$0xff]
      %v701 = vld [vmem:[%s695 + $0x28] sm:$0xff]
      %v702 = vld [vmem:[%s695 + $0x30] sm:$0xff]
      %v703 = vld [vmem:[%s695 + $0x38] sm:$0xff]
      %v704 = vld [vmem:[%s695 + $0x40] sm:$0xff]
      %v705 = vld [vmem:[%s695 + $0x48] sm:$0xff]
      %v706 = vld [vmem:[%s695 + $0x50] sm:$0xff]
      %v707 = vld [vmem:[%s695 + $0x58] sm:$0xff]
      %v708 = vld [vmem:[%s695 + $0x60] sm:$0xff]
      %v709 = vld [vmem:[%s695 + $0x68] sm:$0xff]
      %v710 = vld [vmem:[%s695 + $0x70] sm:$0xff]
      %v711 = vld [vmem:[%s695 + $0x78] sm:$0xff]
      %v712 = vld [vmem:[%s695 + $0x80] sm:$0xff]
      %v713 = vld [vmem:[%s695 + $0x88] sm:$0xff]
      %v714 = vld [vmem:[%s695 + $0x90] sm:$0xff]
      %v715 = vld [vmem:[%s695 + $0x98] sm:$0xff]
      %v716 = vld [vmem:[%s695 + $0xa0] sm:$0xff]
      %v717 = vld [vmem:[%s695 + $0xa8] sm:$0xff]
      %v718 = vld [vmem:[%s695 + $0xb0] sm:$0xff]
      %v719 = vld [vmem:[%s695 + $0xb8] sm:$0xff]
      %v720 = vld [vmem:[%s695 + $0xc0] sm:$0xff]
      %v721 = vld [vmem:[%s695 + $0xc8] sm:$0xff]
      %v722 = vld [vmem:[%s695 + $0xd0] sm:$0xff]
      %v723 = vld [vmem:[%s695 + $0xd8] sm:$0xff]
      %v724 = vld [vmem:[%s695 + $0xe0] sm:$0xff]
      %v725 = vld [vmem:[%s695 + $0xe8] sm:$0xff]
      %v726 = vld [vmem:[%s695 + $0xf0] sm:$0xff]
      %v727 = vld [vmem:[%s695 + $0xf8] sm:$0xff]
      %v729 = vunpack.c.l.b16 %v694
      %v730 = vunpack.c.h.b16 %v694
      %v731 = vpack.c.b16 %v268, %v729
      %v732 = vpack.c.b16 %v269, %v730
      %v733 = vrot.slane %v731, 1
      %v734 = vrot.slane %v732, 1
      %v769 = vunpack.c.l.b16 %v696
      %v770 = vunpack.c.h.b16 %v696
      %v771 = vunpack.c.l.b16 %v697
      %v772 = vunpack.c.h.b16 %v697
      %v773 = vunpack.c.l.b16 %v698
      %v774 = vunpack.c.h.b16 %v698
      %v775 = vunpack.c.l.b16 %v699
      %v776 = vunpack.c.h.b16 %v699
      %v777 = vunpack.c.l.b16 %v700
      %v778 = vunpack.c.h.b16 %v700
      %v779 = vunpack.c.l.b16 %v701
      %v780 = vunpack.c.h.b16 %v701
      %v781 = vunpack.c.l.b16 %v702
      %v782 = vunpack.c.h.b16 %v702
      %v783 = vunpack.c.l.b16 %v703
      %v784 = vunpack.c.h.b16 %v703
      %v785 = vunpack.c.l.b16 %v704
      %v786 = vunpack.c.h.b16 %v704
      %v787 = vunpack.c.l.b16 %v705
      %v788 = vunpack.c.h.b16 %v705
      %v789 = vunpack.c.l.b16 %v706
      %v790 = vunpack.c.h.b16 %v706
      %v791 = vunpack.c.l.b16 %v707
      %v792 = vunpack.c.h.b16 %v707
      %v793 = vunpack.c.l.b16 %v708
      %v794 = vunpack.c.h.b16 %v708
      %v795 = vunpack.c.l.b16 %v709
      %v796 = vunpack.c.h.b16 %v709
      %v797 = vunpack.c.l.b16 %v710
      %v798 = vunpack.c.h.b16 %v710
      %v799 = vunpack.c.l.b16 %v711
      %v800 = vunpack.c.h.b16 %v711
      %v801 = vunpack.c.l.b16 %v712
      %v802 = vunpack.c.h.b16 %v712
      %v803 = vunpack.c.l.b16 %v713
      %v804 = vunpack.c.h.b16 %v713
      %v805 = vunpack.c.l.b16 %v714
      %v806 = vunpack.c.h.b16 %v714
      %v807 = vunpack.c.l.b16 %v715
      %v808 = vunpack.c.h.b16 %v715
      %v809 = vunpack.c.l.b16 %v716
      %v810 = vunpack.c.h.b16 %v716
      %v811 = vunpack.c.l.b16 %v717
      %v812 = vunpack.c.h.b16 %v717
      %v813 = vunpack.c.l.b16 %v718
      %v814 = vunpack.c.h.b16 %v718
      %v815 = vunpack.c.l.b16 %v719
      %v816 = vunpack.c.h.b16 %v719
      %v817 = vunpack.c.l.b16 %v720
      %v818 = vunpack.c.h.b16 %v720
      %v819 = vunpack.c.l.b16 %v721
      %v820 = vunpack.c.h.b16 %v721
      %v821 = vunpack.c.l.b16 %v722
      %v822 = vunpack.c.h.b16 %v722
      %v823 = vunpack.c.l.b16 %v723
      %v824 = vunpack.c.h.b16 %v723
      %v825 = vunpack.c.l.b16 %v724
      %v826 = vunpack.c.h.b16 %v724
      %v827 = vunpack.c.l.b16 %v725
      %v828 = vunpack.c.h.b16 %v725
      %v829 = vunpack.c.l.b16 %v726
      %v830 = vunpack.c.h.b16 %v726
      %v831 = vunpack.c.l.b16 %v727
      %v832 = vunpack.c.h.b16 %v727
      %v833 = vpack.c.b16 %v771, %v769
      %v834 = vpack.c.b16 %v772, %v770
      %v835 = vpack.c.b16 %v775, %v773
      %v836 = vpack.c.b16 %v776, %v774
      %v837 = vpack.c.b16 %v779, %v777
      %v838 = vpack.c.b16 %v780, %v778
      %v839 = vpack.c.b16 %v783, %v781
      %v840 = vpack.c.b16 %v784, %v782
      %v841 = vpack.c.b16 %v787, %v785
      %v842 = vpack.c.b16 %v788, %v786
      %v843 = vpack.c.b16 %v791, %v789
      %v844 = vpack.c.b16 %v792, %v790
      %v845 = vpack.c.b16 %v795, %v793
      %v846 = vpack.c.b16 %v796, %v794
      %v847 = vpack.c.b16 %v799, %v797
      %v848 = vpack.c.b16 %v800, %v798
      %v849 = vpack.c.b16 %v803, %v801
      %v850 = vpack.c.b16 %v804, %v802
      %v851 = vpack.c.b16 %v807, %v805
      %v852 = vpack.c.b16 %v808, %v806
      %v853 = vpack.c.b16 %v811, %v809
      %v854 = vpack.c.b16 %v812, %v810
      %v855 = vpack.c.b16 %v815, %v813
      %v856 = vpack.c.b16 %v816, %v814
      %v857 = vpack.c.b16 %v819, %v817
      %v858 = vpack.c.b16 %v820, %v818
      %v859 = vpack.c.b16 %v823, %v821
      %v860 = vpack.c.b16 %v824, %v822
      %v861 = vpack.c.b16 %v827, %v825
      %v862 = vpack.c.b16 %v828, %v826
      %v863 = vpack.c.b16 %v831, %v829
      %v864 = vpack.c.b16 %v832, %v830
      %897 = vmatprep.subr.bf16.mxu0 %v834
      %898 = vmatpush1.bf16.msra.mxu0 %v833
      %899 = vmatprep.subr.bf16.mxu0 %v836
      %900 = vmatpush1.bf16.msra.mxu0 %v835
      %901 = vmatprep.subr.bf16.mxu0 %v838
      %902 = vmatpush1.bf16.msra.mxu0 %v837
      %903 = vmatprep.subr.bf16.mxu0 %v840
      %904 = vmatpush1.bf16.msra.mxu0 %v839
      %905 = vmatprep.subr.bf16.mxu0 %v842
      %906 = vmatpush1.bf16.msra.mxu0 %v841
      %907 = vmatprep.subr.bf16.mxu0 %v844
      %908 = vmatpush1.bf16.msra.mxu0 %v843
      %909 = vmatprep.subr.bf16.mxu0 %v846
      %910 = vmatpush1.bf16.msra.mxu0 %v845
      %911 = vmatprep.subr.bf16.mxu0 %v848
      %912 = vmatpush1.bf16.msra.mxu0 %v847
      %913 = vmatprep.subr.bf16.mxu0 %v850
      %914 = vmatpush1.bf16.msra.mxu0 %v849
      %915 = vmatprep.subr.bf16.mxu0 %v852
      %916 = vmatpush1.bf16.msra.mxu0 %v851
      %917 = vmatprep.subr.bf16.mxu0 %v854
      %918 = vmatpush1.bf16.msra.mxu0 %v853
      %919 = vmatprep.subr.bf16.mxu0 %v856
      %920 = vmatpush1.bf16.msra.mxu0 %v855
      %921 = vmatprep.subr.bf16.mxu0 %v858
      %922 = vmatpush1.bf16.msra.mxu0 %v857
      %923 = vmatprep.subr.bf16.mxu0 %v860
      %924 = vmatpush1.bf16.msra.mxu0 %v859
      %925 = vmatprep.subr.bf16.mxu0 %v862
      %926 = vmatpush1.bf16.msra.mxu0 %v861
      %927 = vmatprep.subr.bf16.mxu0 %v864
      %928 = vmatpush1.bf16.msra.mxu0 %v863
      %929 = vmatprep.mubr.bf16.mxu0 %v734
      %930 = vmatmul.mubr.bf16.gmra.mrb[0].mxu0 %v733
      %v931 = vpop.f32.mrb[0].mxu0
      %v932 = vadd.f32 0.0, %v931
      %v933 = vpop.f32.mrb[0].mxu0
      %v934 = vadd.f32 0.0, %v933
      %v935 = vpop.f32.mrb[0].mxu0
      %v936 = vpop.f32.mrb[0].mxu0
      %937 = vdwg.mxu0
      %v938 = vadd.f32 %v688, %v932
      %v939 = vadd.f32 %v690, %v934
      %v940 = vld [vmem:[%s3] sm:$0x3]
      %v942 = vlaneseq
      %v943 = vshrl.u32 %v942, 7
      %v944 = vsub.s32 0, %v943
      %v945 = vrot.slane %v940, %v944
      %v946 = vlaneseq
      %v947 = vshrl.u32 %v946, 7
      %v948 = vsub.s32 1, %v947
      %v949 = vrot.slane %v940, %v948
      %v952 = vadd.f32 %v938, %v945
      %v953 = vadd.f32 %v939, %v949
      %v954 = vmax.f32 %v952, 0.0
      %v955 = vmax.f32 %v953, 0.0
      %v956 = vmax.f32 %v954, %v955
      %v957 = vpack.c.bf16 %v956, %v956
      %v958 = vld [vmem:[%s2] sm:$0x3]
      %vm959 = vcmask 64512
      %v961 = vsel %vm959, %v958, 0
      %vm963 = vcmask 1043456
      %v965 = vsel %vm963, %v957, 0
      %967 = vmatprep.subr.bf16.mxu0 0
      %968 = vmatpush1.bf16.msra.mxu0 %v965
      %969 = vmatprep.subr.bf16.mxu0 0
      %970 = vmatpush1.bf16.msra.mxu0 0
      %971 = vmatprep.subr.bf16.mxu0 0
      %972 = vmatpush1.bf16.msra.mxu0 0
      %973 = vmatprep.subr.bf16.mxu0 0
      %974 = vmatpush1.bf16.msra.mxu0 0
      %975 = vmatprep.subr.bf16.mxu0 0
      %976 = vmatpush1.bf16.msra.mxu0 0
      %977 = vmatprep.subr.bf16.mxu0 0
      %978 = vmatpush1.bf16.msra.mxu0 0
      %979 = vmatprep.subr.bf16.mxu0 0
      %980 = vmatpush1.bf16.msra.mxu0 0
      %981 = vmatprep.subr.bf16.mxu0 0
      %982 = vmatpush1.bf16.msra.mxu0 0
      %983 = vmatprep.subr.bf16.mxu0 0
      %984 = vmatpush1.bf16.msra.mxu0 0
      %985 = vmatprep.subr.bf16.mxu0 0
      %986 = vmatpush1.bf16.msra.mxu0 0
      %987 = vmatprep.subr.bf16.mxu0 0
      %988 = vmatpush1.bf16.msra.mxu0 0
      %989 = vmatprep.subr.bf16.mxu0 0
      %990 = vmatpush1.bf16.msra.mxu0 0
      %991 = vmatprep.subr.bf16.mxu0 0
      %992 = vmatpush1.bf16.msra.mxu0 0
      %993 = vmatprep.subr.bf16.mxu0 0
      %994 = vmatpush1.bf16.msra.mxu0 0
      %995 = vmatprep.subr.bf16.mxu0 0
      %996 = vmatpush1.bf16.msra.mxu0 0
      %997 = vmatprep.subr.bf16.mxu0 0
      %998 = vmatpush1.bf16.msra.mxu0 0
      %999 = vmatprep.mubr.bf16.mxu0 0
      %1000 = vmatmul.mubr.bf16.gmra.mrb[0].mxu0 %v961
      %v1001 = vpop.f32.mrb[0].mxu0
      %v1002 = vadd.f32 0.0, %v1001
      %v1003 = vpop.f32.mrb[0].mxu0
      %v1004 = vpop.f32.mrb[0].mxu0
      %v1005 = vpop.f32.mrb[0].mxu0
      %1006 = vdwg.mxu0
      %s1007 = scalar_lea.vmem %s2, 2
      %v1008 = vld [vmem:[%s1007] sm:$0x3]
      %v1010 = vsel %vm959, %v1008, 0
      %1012 = vmatprep.subr.bf16.mxu0 0
      %1013 = vmatpush1.bf16.msra.mxu0 %v965
      %1014 = vmatprep.subr.bf16.mxu0 0
      %1015 = vmatpush1.bf16.msra.mxu0 0
      %1016 = vmatprep.subr.bf16.mxu0 0
      %1017 = vmatpush1.bf16.msra.mxu0 0
      %1018 = vmatprep.subr.bf16.mxu0 0
      %1019 = vmatpush1.bf16.msra.mxu0 0
      %1020 = vmatprep.subr.bf16.mxu0 0
      %1021 = vmatpush1.bf16.msra.mxu0 0
      %1022 = vmatprep.subr.bf16.mxu0 0
      %1023 = vmatpush1.bf16.msra.mxu0 0
      %1024 = vmatprep.subr.bf16.mxu0 0
      %1025 = vmatpush1.bf16.msra.mxu0 0
      %1026 = vmatprep.subr.bf16.mxu0 0
      %1027 = vmatpush1.bf16.msra.mxu0 0
      %1028 = vmatprep.subr.bf16.mxu0 0
      %1029 = vmatpush1.bf16.msra.mxu0 0
      %1030 = vmatprep.subr.bf16.mxu0 0
      %1031 = vmatpush1.bf16.msra.mxu0 0
      %1032 = vmatprep.subr.bf16.mxu0 0
      %1033 = vmatpush1.bf16.msra.mxu0 0
      %1034 = vmatprep.subr.bf16.mxu0 0
      %1035 = vmatpush1.bf16.msra.mxu0 0
      %1036 = vmatprep.subr.bf16.mxu0 0
      %1037 = vmatpush1.bf16.msra.mxu0 0
      %1038 = vmatprep.subr.bf16.mxu0 0
      %1039 = vmatpush1.bf16.msra.mxu0 0
      %1040 = vmatprep.subr.bf16.mxu0 0
      %1041 = vmatpush1.bf16.msra.mxu0 0
      %1042 = vmatprep.subr.bf16.mxu0 0
      %1043 = vmatpush1.bf16.msra.mxu0 0
      %1044 = vmatprep.mubr.bf16.mxu0 0
      %1045 = vmatmul.mubr.bf16.gmra.mrb[0].mxu0 %v1010
      %v1046 = vpop.f32.mrb[0].mxu0
      %v1047 = vadd.f32 0.0, %v1046
      %v1048 = vpop.f32.mrb[0].mxu0
      %v1049 = vpop.f32.mrb[0].mxu0
      %v1050 = vpop.f32.mrb[0].mxu0
      %1051 = vdwg.mxu0
      %v1052 = vmax.f32 %v1002, %v1047
      %v1053 = vpack.c.bf16 %v1052, %v1052
      %1054 = vst [vmem:[%s195] sm:$0x3] %v1053
      %p1055 = scmp.lt.s32.totalorder %s15, 1
      %s1056 = scalar_select %p1055, %s15, 1
      %s1057 = smul.addr %s1056, 2
      %s1058 = scalar_lea.vmem %s4, %s1057
      // Predicated region
      $region37: #{forward.9} parent=35 // pred_check
        %p1059 = pneg %p122
      $region38: #{forward.9} parent=35 // pred_check_branch
        %1061 = sbr.rel (%p1059) target = $region40
      $region39: #{forward.9} parent=35 // pred_region
        _
      $region40: #{forward.9} parent=35 // pred_fallthru
        _
    $region36: #{forward.9} parent=5 // pred_fallthru
      _
    %p1062 = scmp.le.s32.totalorder 2, %s10
    // Predicated region
    $region41: #{forward.9} parent=5 // pred_check
      %p1063 = pneg %p1062
    $region42: #{forward.9} parent=5 // pred_check_branch
      %1065 = sbr.rel (%p1063) target = $region44
    $region43: #{forward.9} parent=5 // pred_region
      %s1066 = ssub.s32 %s10, 2
      // Predicated region
      $region45: #{forward.9} parent=43 // pred_check
        %p1067 = pneg %p128
      $region46: #{forward.9} parent=43 // pred_check_branch
        %1069 = sbr.rel (%p1067) target = $region48
      $region47: #{forward.9} parent=43 // pred_region
        %p1070 = scmp.lt.s32.totalorder %s16, 1
        %s1071 = scalar_select %p1070, %s16, 1
        %s1072 = smul.addr %s1071, 2
        %s1073 = scalar_lea.vmem %s4, %s1072
      $region48: #{forward.9} parent=43 // pred_fallthru
        _
    $region44: #{forward.9} parent=5 // pred_fallthru
      _
  $region6: #{forward.9} parent=0 // loop_footer
    %s14 = sadd.s32 1, %s10
  $region7: #{forward.9} parent=0 // loop_footer_branch
    %9 = sbr.rel target = $region3
  $region8: #{forward.9} parent=0 // loop_exit
    _

// kernel: forward.8
$region0: #{forward.8}
  #allocation0 [shape = 'u32[]', space=smem, size = 0x4, offset = 0x4, fixed_abs, tag = 'smem constant byte address 0x4 - core index']
  #allocation1 [shape = 'u32[144,128]{1,0:T(1,128)}', space=vmem, size = 0x12000, scoped, tag = 'internal scratch']
  %s0 = inlined_call_operand.vmem [shape: bf16[2,22,256], index: 0, kind: input, shape index: {}]
  %s1 = inlined_call_operand.vmem [shape: bf16[3,256,512], index: 1, kind: input, shape index: {}]
  %s2 = inlined_call_operand.vmem [shape: bf16[2,10,20], index: 2, kind: input, shape index: {}]
  %s3 = inlined_call_operand.vmem [shape: f32[1,512], index: 3, kind: input, shape index: {}]
  %s4 = inlined_call_operand.vmem [shape: bf16[2,10,256], index: 4, kind: output, shape index: {}]
  %s5 = sld [smem:[#allocation0]]
  $region49: #{forward.8} parent=0
    _
  %s7 = ssub.s32 1, %s5
  %s8 = scalar_select 0, %s7, %s5
  loop: start=0, step=1, limit=4
  $region2: #{forward.8} parent=0 // loop_pre_header
    _
  $region3: #{forward.8} parent=0 // loop_header
    %s10 = sphi 0, %s14
    %p11 = scmp.ge.s32.totalorder %s10, 4
    %s20 = sphi 0, %s22
    %s23 = sphi 0, %s20
    %s24 = sphi 0, %s23
    %s40 = sphi 0, %s24
    %s44 = sphi 0, %s44
    %s46 = sphi 0, %s44
    %s47 = sphi 0, %s46
    %s61 = sphi 0, %s47
    %s65 = sphi 0, %s65
    %s67 = sphi 0, %s65
    %s68 = sphi 0, %s67
    %s82 = sphi 0, %s68
    %s86 = sphi 0, %s86
    %s88 = sphi 0, %s86
    %s89 = sphi 0, %s88
    %s103 = sphi 0, %s89
    %s109 = sphi 0, %s111
    %s112 = sphi 0, %s109
    %s113 = sphi 0, %s112
    %s129 = sphi 0, %s113
  $region4: #{forward.8} parent=0 // loop_header_branch
    %13 = sbr.rel (%p11) target = $region8
  $region5: #{forward.8} parent=0 // loop_body
    %s15 = ssub.s32 %s10, 1
    %s16 = ssub.s32 %s10, 2
    %s17 = sadd.s32 %s10, 1
    %s18 = ssub.s32 %s10, %s17
    %p19 = scmp.eq.s32.totalorder %s18, 0
    %s21 = sadd.s32 %s20, 1
    %s22 = scalar_select %p19, %s20, %s21
    %p25 = pneg %p19
    %p26 = scmp.eq.s32.totalorder %s10, 1
    %p27 = por %p25, %p26
    %p28 = scmp.ne.s32.totalorder %s20, %s23
    %p29 = scmp.eq.s32.totalorder %s10, 0
    %p30 = por %p28, %p29
    %p31 = scmp.ne.s32.totalorder %s20, %s23
    %p32 = scmp.eq.s32.totalorder %s15, 1
    %p33 = por %p31, %p32
    %p34 = scmp.ne.s32.totalorder %s23, %s24
    %p35 = scmp.eq.s32.totalorder %s15, 0
    %p36 = por %p34, %p35
    %p37 = scmp.ne.s32.totalorder %s23, %s24
    %p38 = scmp.eq.s32.totalorder %s16, 1
    %p39 = por %p37, %p38
    %p41 = scmp.ne.s32.totalorder %s24, %s40
    %p42 = scmp.eq.s32.totalorder %s16, 0
    %p43 = por %p41, %p42
    %s45 = sadd.s32 %s44, 1
    %p48 = scmp.eq.s32.totalorder %s10, 1
    %p49 = scmp.ne.s32.totalorder %s44, %s46
    %p50 = scmp.eq.s32.totalorder %s10, 0
    %p51 = por %p49, %p50
    %p52 = scmp.ne.s32.totalorder %s44, %s46
    %p53 = scmp.eq.s32.totalorder %s15, 1
    %p54 = por %p52, %p53
    %p55 = scmp.ne.s32.totalorder %s46, %s47
    %p56 = scmp.eq.s32.totalorder %s15, 0
    %p57 = por %p55, %p56
    %p58 = scmp.ne.s32.totalorder %s46, %s47
    %p59 = scmp.eq.s32.totalorder %s16, 1
    %p60 = por %p58, %p59
    %p62 = scmp.ne.s32.totalorder %s47, %s61
    %p63 = scmp.eq.s32.totalorder %s16, 0
    %p64 = por %p62, %p63
    %s66 = sadd.s32 %s65, 1
    %p69 = scmp.eq.s32.totalorder %s10, 1
    %p70 = scmp.ne.s32.totalorder %s65, %s67
    %p71 = scmp.eq.s32.totalorder %s10, 0
    %p72 = por %p70, %p71
    %p73 = scmp.ne.s32.totalorder %s65, %s67
    %p74 = scmp.eq.s32.totalorder %s15, 1
    %p75 = por %p73, %p74
    %p76 = scmp.ne.s32.totalorder %s67, %s68
    %p77 = scmp.eq.s32.totalorder %s15, 0
    %p78 = por %p76, %p77
    %p79 = scmp.ne.s32.totalorder %s67, %s68
    %p80 = scmp.eq.s32.totalorder %s16, 1
    %p81 = por %p79, %p80
    %p83 = scmp.ne.s32.totalorder %s68, %s82
    %p84 = scmp.eq.s32.totalorder %s16, 0
    %p85 = por %p83, %p84
    %s87 = sadd.s32 %s86, 1
    %p90 = scmp.eq.s32.totalorder %s10, 1
    %p91 = scmp.ne.s32.totalorder %s86, %s88
    %p92 = scmp.eq.s32.totalorder %s10, 0
    %p93 = por %p91, %p92
    %p94 = scmp.ne.s32.totalorder %s86, %s88
    %p95 = scmp.eq.s32.totalorder %s15, 1
    %p96 = por %p94, %p95
    %p97 = scmp.ne.s32.totalorder %s88, %s89
    %p98 = scmp.eq.s32.totalorder %s15, 0
    %p99 = por %p97, %p98
    %p100 = scmp.ne.s32.totalorder %s88, %s89
    %p101 = scmp.eq.s32.totalorder %s16, 1
    %p102 = por %p100, %p101
    %p104 = scmp.ne.s32.totalorder %s89, %s103
    %p105 = scmp.eq.s32.totalorder %s16, 0
    %p106 = por %p104, %p105
    %s107 = ssub.s32 %s10, %s17
    %p108 = scmp.eq.s32.totalorder %s107, 0
    %s110 = sadd.s32 %s109, 1
    %s111 = scalar_select %p108, %s109, %s110
    %p114 = pneg %p108
    %p115 = scmp.eq.s32.totalorder %s10, 1
    %p116 = por %p114, %p115
    %p117 = scmp.ne.s32.totalorder %s109, %s112
    %p118 = scmp.eq.s32.totalorder %s10, 0
    %p119 = por %p117, %p118
    %p120 = scmp.ne.s32.totalorder %s109, %s112
    %p121 = scmp.eq.s32.totalorder %s15, 1
    %p122 = por %p120, %p121
    %p123 = scmp.ne.s32.totalorder %s112, %s113
    %p124 = scmp.eq.s32.totalorder %s15, 0
    %p125 = por %p123, %p124
    %p126 = scmp.ne.s32.totalorder %s112, %s113
    %p127 = scmp.eq.s32.totalorder %s16, 1
    %p128 = por %p126, %p127
    %p130 = scmp.ne.s32.totalorder %s113, %s129
    %p131 = scmp.eq.s32.totalorder %s16, 0
    %p132 = por %p130, %p131
    %p133 = scmp.le.s32.totalorder 1, %s10
    %p134 = scmp.lt.s32.totalorder %s10, 3
    %p135 = pnand %p133, %p134
    %p136 = pneg %p135
    // Predicated region
    $region9: #{forward.8} parent=5 // pred_check
      _
    $region10: #{forward.8} parent=5 // pred_check_branch
      %138 = sbr.rel (%p135) target = $region12
    $region11: #{forward.8} parent=5 // pred_region
      %s139 = ssub.s32 %s10, 1
      // Predicated region
      $region13: #{forward.8} parent=11 // pred_check
        %p140 = pneg %p57
      $region14: #{forward.8} parent=11 // pred_check_branch
        %142 = sbr.rel (%p140) target = $region16
      $region15: #{forward.8} parent=11 // pred_region
        _
      $region16: #{forward.8} parent=11 // pred_fallthru
        _
      // Predicated region
      $region17: #{forward.8} parent=11 // pred_check
        %p143 = pneg %p78
      $region18: #{forward.8} parent=11 // pred_check_branch
        %145 = sbr.rel (%p143) target = $region20
      $region19: #{forward.8} parent=11 // pred_region
        _
      $region20: #{forward.8} parent=11 // pred_fallthru
        _
      // Predicated region
      $region21: #{forward.8} parent=11 // pred_check
        %p146 = pneg %p99
      $region22: #{forward.8} parent=11 // pred_check_branch
        %148 = sbr.rel (%p146) target = $region24
      $region23: #{forward.8} parent=11 // pred_region
        _
      $region24: #{forward.8} parent=11 // pred_fallthru
        _
    $region12: #{forward.8} parent=5 // pred_fallthru
      _
    %p149 = scmp.lt.s32.totalorder %s10, 2
    // Predicated region
    $region25: #{forward.8} parent=5 // pred_check
      %p150 = pneg %p149
    $region26: #{forward.8} parent=5 // pred_check_branch
      %152 = sbr.rel (%p150) target = $region28
    $region27: #{forward.8} parent=5 // pred_region
      // Predicated region
      $region29: #{forward.8} parent=27 // pred_check
        %p153 = pneg %p30
      $region30: #{forward.8} parent=27 // pred_check_branch
        %155 = sbr.rel (%p153) target = $region32
      $region31: #{forward.8} parent=27 // pred_region
        %p156 = scmp.lt.s32.totalorder %s10, 1
        %s157 = scalar_select %p156, %s10, 1
        %s158 = smul.addr %s157, 6
        %s159 = smul.addr %s158, 4
        %s160 = scalar_lea.vmem %s0, %s159
      $region32: #{forward.8} parent=27 // pred_fallthru
        _
    $region28: #{forward.8} parent=5 // pred_fallthru
      _
    %p161 = scmp.le.s32.totalorder 1, %s10
    %p162 = scmp.lt.s32.totalorder %s10, 3
    %p163 = pnand %p161, %p162
    %p164 = pneg %p163
    // Predicated region
    $region33: #{forward.8} parent=5 // pred_check
      _
    $region34: #{forward.8} parent=5 // pred_check_branch
      %166 = sbr.rel (%p163) target = $region36
    $region35: #{forward.8} parent=5 // pred_region
      %s167 = ssub.s32 %s10, 1
      %p168 = scmp.lt.s32.totalorder %s15, 1
      %s169 = scalar_select %p168, %s15, 1
      %s170 = smul.addr %s169, 6
      %s171 = smul.addr %s170, 4
      %s172 = scalar_lea.vmem %s0, %s171
      %p173 = pneg %p36
      %p174 = pneg %p33
      %p175 = pneg %p57
      %p176 = pneg %p54
      %p177 = pneg %p78
      %p178 = pneg %p75
      %p179 = pneg %p99
      %p180 = pneg %p96
      %p181 = pneg %p125
      %p182 = pneg %p122
      %p183 = scmp.lt.s32.totalorder %s15, 1
      %s184 = scalar_select %p183, %s15, 1
      %s185 = smul.addr %s184, 4
      %s186 = smul.addr %s185, 4
      %s187 = scalar_lea.vmem %s4, %s186
      %p188 = scmp.lt.s32.totalorder %s15, 1
      %s189 = scalar_select %p188, %s15, 1
      %s190 = smul.addr %s189, 6
      %s191 = smul.addr %s190, 4
      %s192 = scalar_lea.vmem %s0, %s191
      %p193 = scmp.lt.s32.totalorder %s15, 1
      %s194 = scalar_select %p193, %s15, 1
      %s195 = smul.addr %s194, 4
      %s196 = smul.addr %s195, 4
      %s197 = scalar_lea.vmem %s4, %s196
      %v199 = vld [vmem:[%s192] sm:$0xff]
      %v200 = vld [vmem:[%s192 + $0x8] sm:$0xff]
      %v201 = vld [vmem:[%s192 + $0x10] sm:$0x33]
      %v202 = vld [vmem:[%s1] sm:$0xff]
      %v203 = vld [vmem:[%s1 + $0x8] sm:$0xff]
      %v204 = vld [vmem:[%s1 + $0x10] sm:$0xff]
      %v205 = vld [vmem:[%s1 + $0x18] sm:$0xff]
      %v206 = vld [vmem:[%s1 + $0x20] sm:$0xff]
      %v207 = vld [vmem:[%s1 + $0x28] sm:$0xff]
      %v208 = vld [vmem:[%s1 + $0x30] sm:$0xff]
      %v209 = vld [vmem:[%s1 + $0x38] sm:$0xff]
      %v210 = vld [vmem:[%s1 + $0x40] sm:$0xff]
      %v211 = vld [vmem:[%s1 + $0x48] sm:$0xff]
      %v212 = vld [vmem:[%s1 + $0x50] sm:$0xff]
      %v213 = vld [vmem:[%s1 + $0x58] sm:$0xff]
      %v214 = vld [vmem:[%s1 + $0x60] sm:$0xff]
      %v215 = vld [vmem:[%s1 + $0x68] sm:$0xff]
      %v216 = vld [vmem:[%s1 + $0x70] sm:$0xff]
      %v217 = vld [vmem:[%s1 + $0x78] sm:$0xff]
      %v218 = vld [vmem:[%s1 + $0x80] sm:$0xff]
      %v219 = vld [vmem:[%s1 + $0x88] sm:$0xff]
      %v220 = vld [vmem:[%s1 + $0x90] sm:$0xff]
      %v221 = vld [vmem:[%s1 + $0x98] sm:$0xff]
      %v222 = vld [vmem:[%s1 + $0xa0] sm:$0xff]
      %v223 = vld [vmem:[%s1 + $0xa8] sm:$0xff]
      %v224 = vld [vmem:[%s1 + $0xb0] sm:$0xff]
      %v225 = vld [vmem:[%s1 + $0xb8] sm:$0xff]
      %v226 = vld [vmem:[%s1 + $0xc0] sm:$0xff]
      %v227 = vld [vmem:[%s1 + $0xc8] sm:$0xff]
      %v228 = vld [vmem:[%s1 + $0xd0] sm:$0xff]
      %v229 = vld [vmem:[%s1 + $0xd8] sm:$0xff]
      %v230 = vld [vmem:[%s1 + $0xe0] sm:$0xff]
      %v231 = vld [vmem:[%s1 + $0xe8] sm:$0xff]
      %v232 = vld [vmem:[%s1 + $0xf0] sm:$0xff]
      %v233 = vld [vmem:[%s1 + $0xf8] sm:$0xff]
      %v234 = vld [vmem:[%s1 + $0x100] sm:$0xff]
      %v235 = vld [vmem:[%s1 + $0x108] sm:$0xff]
      %v236 = vld [vmem:[%s1 + $0x110] sm:$0xff]
      %v237 = vld [vmem:[%s1 + $0x118] sm:$0xff]
      %v238 = vld [vmem:[%s1 + $0x120] sm:$0xff]
      %v239 = vld [vmem:[%s1 + $0x128] sm:$0xff]
      %v240 = vld [vmem:[%s1 + $0x130] sm:$0xff]
      %v241 = vld [vmem:[%s1 + $0x138] sm:$0xff]
      %v242 = vld [vmem:[%s1 + $0x140] sm:$0xff]
      %v243 = vld [vmem:[%s1 + $0x148] sm:$0xff]
      %v244 = vld [vmem:[%s1 + $0x150] sm:$0xff]
      %v245 = vld [vmem:[%s1 + $0x158] sm:$0xff]
      %v246 = vld [vmem:[%s1 + $0x160] sm:$0xff]
      %v247 = vld [vmem:[%s1 + $0x168] sm:$0xff]
      %v248 = vld [vmem:[%s1 + $0x170] sm:$0xff]
      %v249 = vld [vmem:[%s1 + $0x178] sm:$0xff]
      %v250 = vld [vmem:[%s1 + $0x180] sm:$0xff]
      %v251 = vld [vmem:[%s1 + $0x188] sm:$0xff]
      %v252 = vld [vmem:[%s1 + $0x190] sm:$0xff]
      %v253 = vld [vmem:[%s1 + $0x198] sm:$0xff]
      %v254 = vld [vmem:[%s1 + $0x1a0] sm:$0xff]
      %v255 = vld [vmem:[%s1 + $0x1a8] sm:$0xff]
      %v256 = vld [vmem:[%s1 + $0x1b0] sm:$0xff]
      %v257 = vld [vmem:[%s1 + $0x1b8] sm:$0xff]
      %v258 = vld [vmem:[%s1 + $0x1c0] sm:$0xff]
      %v259 = vld [vmem:[%s1 + $0x1c8] sm:$0xff]
      %v260 = vld [vmem:[%s1 + $0x1d0] sm:$0xff]
      %v261 = vld [vmem:[%s1 + $0x1d8] sm:$0xff]
      %v262 = vld [vmem:[%s1 + $0x1e0] sm:$0xff]
      %v263 = vld [vmem:[%s1 + $0x1e8] sm:$0xff]
      %v264 = vld [vmem:[%s1 + $0x1f0] sm:$0xff]
      %v265 = vld [vmem:[%s1 + $0x1f8] sm:$0xff]
      %v266 = vld [vmem:[%s192 + $0x10] sm:$0x77]
      %s267 = scalar_lea.vmem %s1, 512
      %v268 = vld [vmem:[%s267] sm:$0xff]
      %v269 = vld [vmem:[%s267 + $0x8] sm:$0xff]
      %v270 = vld [vmem:[%s267 + $0x10] sm:$0xff]
      %v271 = vld [vmem:[%s267 + $0x18] sm:$0xff]
      %v272 = vld [vmem:[%s267 + $0x20] sm:$0xff]
      %v273 = vld [vmem:[%s267 + $0x28] sm:$0xff]
      %v274 = vld [vmem:[%s267 + $0x30] sm:$0xff]
      %v275 = vld [vmem:[%s267 + $0x38] sm:$0xff]
      %v276 = vld [vmem:[%s267 + $0x40] sm:$0xff]
      %v277 = vld [vmem:[%s267 + $0x48] sm:$0xff]
      %v278 = vld [vmem:[%s267 + $0x50] sm:$0xff]
      %v279 = vld [vmem:[%s267 + $0x58] sm:$0xff]
      %v280 = vld [vmem:[%s267 + $0x60] sm:$0xff]
      %v281 = vld [vmem:[%s267 + $0x68] sm:$0xff]
      %v282 = vld [vmem:[%s267 + $0x70] sm:$0xff]
      %v283 = vld [vmem:[%s267 + $0x78] sm:$0xff]
      %v284 = vld [vmem:[%s267 + $0x80] sm:$0xff]
      %v285 = vld [vmem:[%s267 + $0x88] sm:$0xff]
      %v286 = vld [vmem:[%s267 + $0x90] sm:$0xff]
      %v287 = vld [vmem:[%s267 + $0x98] sm:$0xff]
      %v288 = vld [vmem:[%s267 + $0xa0] sm:$0xff]
      %v289 = vld [vmem:[%s267 + $0xa8] sm:$0xff]
      %v290 = vld [vmem:[%s267 + $0xb0] sm:$0xff]
      %v291 = vld [vmem:[%s267 + $0xb8] sm:$0xff]
      %v292 = vld [vmem:[%s267 + $0xc0] sm:$0xff]
      %v293 = vld [vmem:[%s267 + $0xc8] sm:$0xff]
      %v294 = vld [vmem:[%s267 + $0xd0] sm:$0xff]
      %v295 = vld [vmem:[%s267 + $0xd8] sm:$0xff]
      %v296 = vld [vmem:[%s267 + $0xe0] sm:$0xff]
      %v297 = vld [vmem:[%s267 + $0xe8] sm:$0xff]
      %v298 = vld [vmem:[%s267 + $0xf0] sm:$0xff]
      %v299 = vld [vmem:[%s267 + $0xf8] sm:$0xff]
      %v300 = vld [vmem:[%s267 + $0x100] sm:$0xff]
      %v301 = vld [vmem:[%s267 + $0x108] sm:$0xff]
      %v302 = vld [vmem:[%s267 + $0x110] sm:$0xff]
      %v303 = vld [vmem:[%s267 + $0x118] sm:$0xff]
      %v304 = vld [vmem:[%s267 + $0x120] sm:$0xff]
      %v305 = vld [vmem:[%s267 + $0x128] sm:$0xff]
      %v306 = vld [vmem:[%s267 + $0x130] sm:$0xff]
      %v307 = vld [vmem:[%s267 + $0x138] sm:$0xff]
      %v308 = vld [vmem:[%s267 + $0x140] sm:$0xff]
      %v309 = vld [vmem:[%s267 + $0x148] sm:$0xff]
      %v310 = vld [vmem:[%s267 + $0x150] sm:$0xff]
      %v311 = vld [vmem:[%s267 + $0x158] sm:$0xff]
      %v312 = vld [vmem:[%s267 + $0x160] sm:$0xff]
      %v313 = vld [vmem:[%s267 + $0x168] sm:$0xff]
      %v314 = vld [vmem:[%s267 + $0x170] sm:$0xff]
      %v315 = vld [vmem:[%s267 + $0x178] sm:$0xff]
      %v316 = vld [vmem:[%s267 + $0x180] sm:$0xff]
      %v317 = vld [vmem:[%s267 + $0x188] sm:$0xff]
      %v318 = vld [vmem:[%s267 + $0x190] sm:$0xff]
      %v319 = vld [vmem:[%s267 + $0x198] sm:$0xff]
      %v320 = vld [vmem:[%s267 + $0x1a0] sm:$0xff]
      %v321 = vld [vmem:[%s267 + $0x1a8] sm:$0xff]
      %v322 = vld [vmem:[%s267 + $0x1b0] sm:$0xff]
      %v323 = vld [vmem:[%s267 + $0x1b8] sm:$0xff]
      %v324 = vld [vmem:[%s267 + $0x1c0] sm:$0xff]
      %v325 = vld [vmem:[%s267 + $0x1c8] sm:$0xff]
      %v326 = vld [vmem:[%s267 + $0x1d0] sm:$0xff]
      %v327 = vld [vmem:[%s267 + $0x1d8] sm:$0xff]
      %v328 = vld [vmem:[%s267 + $0x1e0] sm:$0xff]
      %v329 = vld [vmem:[%s267 + $0x1e8] sm:$0xff]
      %v330 = vld [vmem:[%s267 + $0x1f0] sm:$0xff]
      %v331 = vld [vmem:[%s267 + $0x1f8] sm:$0xff]
      %v335 = vunpack.c.l.b16 %v199
      %v336 = vunpack.c.h.b16 %v199
      %v337 = vunpack.c.l.b16 %v200
      %v338 = vunpack.c.h.b16 %v200
      %v339 = vunpack.c.l.b16 %v266
      %v340 = vunpack.c.h.b16 %v266
      %v341 = vpack.c.b16 %v337, %v335
      %v342 = vpack.c.b16 %v338, %v336
      %v343 = vpack.c.b16 %v339, %v339
      %v344 = vpack.c.b16 %v340, %v340
      %vm345 = vsmask.f32 7424
      %v347 = vshrl.u32 %v341, 16
      %v349 = vshll.u32 %v341, 16
      %v351 = vrot.slane %v349, 1
      %v352 = vor.u32 %v347, %v351
      %v354 = vshll.u32 %v343, 16
      %v356 = vrot.slane %v354, 1
      %v357 = vsel %vm345, %v352, %v356
      %v359 = vshrl.u32 %v342, 16
      %v361 = vshll.u32 %v342, 16
      %v363 = vrot.slane %v361, 1
      %v364 = vor.u32 %v359, %v363
      %v366 = vshll.u32 %v344, 16
      %v368 = vrot.slane %v366, 1
      %v369 = vsel %vm345, %v364, %v368
      %v370 = vshrl.u32 %v343, 16
      %v372 = vor.u32 %v370, %v356
      %v373 = vshrl.u32 %v344, 16
      %v375 = vor.u32 %v373, %v368
      %v444 = vunpack.c.l.b16 %v268
      %v445 = vunpack.c.h.b16 %v268
      %v446 = vunpack.c.l.b16 %v269
      %v447 = vunpack.c.h.b16 %v269
      %v448 = vunpack.c.l.b16 %v270
      %v449 = vunpack.c.h.b16 %v270
      %v450 = vunpack.c.l.b16 %v271
      %v451 = vunpack.c.h.b16 %v271
      %v452 = vunpack.c.l.b16 %v272
      %v453 = vunpack.c.h.b16 %v272
      %v454 = vunpack.c.l.b16 %v273
      %v455 = vunpack.c.h.b16 %v273
      %v456 = vunpack.c.l.b16 %v274
      %v457 = vunpack.c.h.b16 %v274
      %v458 = vunpack.c.l.b16 %v275
      %v459 = vunpack.c.h.b16 %v275
      %v460 = vunpack.c.l.b16 %v276
      %v461 = vunpack.c.h.b16 %v276
      %v462 = vunpack.c.l.b16 %v277
      %v463 = vunpack.c.h.b16 %v277
      %v464 = vunpack.c.l.b16 %v278
      %v465 = vunpack.c.h.b16 %v278
      %v466 = vunpack.c.l.b16 %v279
      %v467 = vunpack.c.h.b16 %v279
      %v468 = vunpack.c.l.b16 %v280
      %v469 = vunpack.c.h.b16 %v280
      %v470 = vunpack.c.l.b16 %v281
      %v471 = vunpack.c.h.b16 %v281
      %v472 = vunpack.c.l.b16 %v282
      %v473 = vunpack.c.h.b16 %v282
      %v474 = vunpack.c.l.b16 %v283
      %v475 = vunpack.c.h.b16 %v283
      %v476 = vunpack.c.l.b16 %v284
      %v477 = vunpack.c.h.b16 %v284
      %v478 = vunpack.c.l.b16 %v285
      %v479 = vunpack.c.h.b16 %v285
      %v480 = vunpack.c.l.b16 %v286
      %v481 = vunpack.c.h.b16 %v286
      %v482 = vunpack.c.l.b16 %v287
      %v483 = vunpack.c.h.b16 %v287
      %v484 = vunpack.c.l.b16 %v288
      %v485 = vunpack.c.h.b16 %v288
      %v486 = vunpack.c.l.b16 %v289
      %v487 = vunpack.c.h.b16 %v289
      %v488 = vunpack.c.l.b16 %v290
      %v489 = vunpack.c.h.b16 %v290
      %v490 = vunpack.c.l.b16 %v291
      %v491 = vunpack.c.h.b16 %v291
      %v492 = vunpack.c.l.b16 %v292
      %v493 = vunpack.c.h.b16 %v292
      %v494 = vunpack.c.l.b16 %v293
      %v495 = vunpack.c.h.b16 %v293
      %v496 = vunpack.c.l.b16 %v294
      %v497 = vunpack.c.h.b16 %v294
      %v498 = vunpack.c.l.b16 %v295
      %v499 = vunpack.c.h.b16 %v295
      %v500 = vunpack.c.l.b16 %v296
      %v501 = vunpack.c.h.b16 %v296
      %v502 = vunpack.c.l.b16 %v297
      %v503 = vunpack.c.h.b16 %v297
      %v504 = vunpack.c.l.b16 %v298
      %v505 = vunpack.c.h.b16 %v298
      %v506 = vunpack.c.l.b16 %v299
      %v507 = vunpack.c.h.b16 %v299
      %v508 = vunpack.c.l.b16 %v300
      %v509 = vunpack.c.h.b16 %v300
      %v510 = vunpack.c.l.b16 %v301
      %v511 = vunpack.c.h.b16 %v301
      %v512 = vunpack.c.l.b16 %v302
      %v513 = vunpack.c.h.b16 %v302
      %v514 = vunpack.c.l.b16 %v303
      %v515 = vunpack.c.h.b16 %v303
      %v516 = vunpack.c.l.b16 %v304
      %v517 = vunpack.c.h.b16 %v304
      %v518 = vunpack.c.l.b16 %v305
      %v519 = vunpack.c.h.b16 %v305
      %v520 = vunpack.c.l.b16 %v306
      %v521 = vunpack.c.h.b16 %v306
      %v522 = vunpack.c.l.b16 %v307
      %v523 = vunpack.c.h.b16 %v307
      %v524 = vunpack.c.l.b16 %v308
      %v525 = vunpack.c.h.b16 %v308
      %v526 = vunpack.c.l.b16 %v309
      %v527 = vunpack.c.h.b16 %v309
      %v528 = vunpack.c.l.b16 %v310
      %v529 = vunpack.c.h.b16 %v310
      %v530 = vunpack.c.l.b16 %v311
      %v531 = vunpack.c.h.b16 %v311
      %v532 = vunpack.c.l.b16 %v312
      %v533 = vunpack.c.h.b16 %v312
      %v534 = vunpack.c.l.b16 %v313
      %v535 = vunpack.c.h.b16 %v313
      %v536 = vunpack.c.l.b16 %v314
      %v537 = vunpack.c.h.b16 %v314
      %v538 = vunpack.c.l.b16 %v315
      %v539 = vunpack.c.h.b16 %v315
      %v540 = vunpack.c.l.b16 %v316
      %v541 = vunpack.c.h.b16 %v316
      %v542 = vunpack.c.l.b16 %v317
      %v543 = vunpack.c.h.b16 %v317
      %v544 = vunpack.c.l.b16 %v318
      %v545 = vunpack.c.h.b16 %v318
      %v546 = vunpack.c.l.b16 %v319
      %v547 = vunpack.c.h.b16 %v319
      %v548 = vunpack.c.l.b16 %v320
      %v549 = vunpack.c.h.b16 %v320
      %v550 = vunpack.c.l.b16 %v321
      %v551 = vunpack.c.h.b16 %v321
      %v552 = vunpack.c.l.b16 %v322
      %v553 = vunpack.c.h.b16 %v322
      %v554 = vunpack.c.l.b16 %v323
      %v555 = vunpack.c.h.b16 %v323
      %v556 = vunpack.c.l.b16 %v324
      %v557 = vunpack.c.h.b16 %v324
      %v558 = vunpack.c.l.b16 %v325
      %v559 = vunpack.c.h.b16 %v325
      %v560 = vunpack.c.l.b16 %v326
      %v561 = vunpack.c.h.b16 %v326
      %v562 = vunpack.c.l.b16 %v327
      %v563 = vunpack.c.h.b16 %v327
      %v564 = vunpack.c.l.b16 %v328
      %v565 = vunpack.c.h.b16 %v328
      %v566 = vunpack.c.l.b16 %v329
      %v567 = vunpack.c.h.b16 %v329
      %v568 = vunpack.c.l.b16 %v330
      %v569 = vunpack.c.h.b16 %v330
      %v570 = vunpack.c.l.b16 %v331
      %v571 = vunpack.c.h.b16 %v331
      %v572 = vpack.c.b16 %v448, %v444
      %v573 = vpack.c.b16 %v449, %v445
      %v574 = vpack.c.b16 %v450, %v446
      %v575 = vpack.c.b16 %v451, %v447
      %v576 = vpack.c.b16 %v456, %v452
      %v577 = vpack.c.b16 %v457, %v453
      %v578 = vpack.c.b16 %v458, %v454
      %v579 = vpack.c.b16 %v459, %v455
      %v580 = vpack.c.b16 %v464, %v460
      %v581 = vpack.c.b16 %v465, %v461
      %v582 = vpack.c.b16 %v466, %v462
      %v583 = vpack.c.b16 %v467, %v463
      %v584 = vpack.c.b16 %v472, %v468
      %v585 = vpack.c.b16 %v473, %v469
      %v586 = vpack.c.b16 %v474, %v470
      %v587 = vpack.c.b16 %v475, %v471
      %v588 = vpack.c.b16 %v480, %v476
      %v589 = vpack.c.b16 %v481, %v477
      %v590 = vpack.c.b16 %v482, %v478
      %v591 = vpack.c.b16 %v483, %v479
      %v592 = vpack.c.b16 %v488, %v484
      %v593 = vpack.c.b16 %v489, %v485
      %v594 = vpack.c.b16 %v490, %v486
      %v595 = vpack.c.b16 %v491, %v487
      %v596 = vpack.c.b16 %v496, %v492
      %v597 = vpack.c.b16 %v497, %v493
      %v598 = vpack.c.b16 %v498, %v494
      %v599 = vpack.c.b16 %v499, %v495
      %v600 = vpack.c.b16 %v504, %v500
      %v601 = vpack.c.b16 %v505, %v501
      %v602 = vpack.c.b16 %v506, %v502
      %v603 = vpack.c.b16 %v507, %v503
      %v604 = vpack.c.b16 %v512, %v508
      %v605 = vpack.c.b16 %v513, %v509
      %v606 = vpack.c.b16 %v514, %v510
      %v607 = vpack.c.b16 %v515, %v511
      %v608 = vpack.c.b16 %v520, %v516
      %v609 = vpack.c.b16 %v521, %v517
      %v610 = vpack.c.b16 %v522, %v518
      %v611 = vpack.c.b16 %v523, %v519
      %v612 = vpack.c.b16 %v528, %v524
      %v613 = vpack.c.b16 %v529, %v525
      %v614 = vpack.c.b16 %v530, %v526
      %v615 = vpack.c.b16 %v531, %v527
      %v616 = vpack.c.b16 %v536, %v532
      %v617 = vpack.c.b16 %v537, %v533
      %v618 = vpack.c.b16 %v538, %v534
      %v619 = vpack.c.b16 %v539, %v535
      %v620 = vpack.c.b16 %v544, %v540
      %v621 = vpack.c.b16 %v545, %v541
      %v622 = vpack.c.b16 %v546, %v542
      %v623 = vpack.c.b16 %v547, %v543
      %v624 = vpack.c.b16 %v552, %v548
      %v625 = vpack.c.b16 %v553, %v549
      %v626 = vpack.c.b16 %v554, %v550
      %v627 = vpack.c.b16 %v555, %v551
      %v628 = vpack.c.b16 %v560, %v556
      %v629 = vpack.c.b16 %v561, %v557
      %v630 = vpack.c.b16 %v562, %v558
      %v631 = vpack.c.b16 %v563, %v559
      %v632 = vpack.c.b16 %v568, %v564
      %v633 = vpack.c.b16 %v569, %v565
      %v634 = vpack.c.b16 %v570, %v566
      %v635 = vpack.c.b16 %v571, %v567
      %700 = vmatprep.subr.bf16.mxu0 %v573
      %701 = vmatpush1.bf16.msra.mxu0 %v572
      %702 = vmatprep.subr.bf16.mxu0 %v577
      %703 = vmatpush1.bf16.msra.mxu0 %v576
      %704 = vmatprep.subr.bf16.mxu0 %v581
      %705 = vmatpush1.bf16.msra.mxu0 %v580
      %706 = vmatprep.subr.bf16.mxu0 %v585
      %707 = vmatpush1.bf16.msra.mxu0 %v584
      %708 = vmatprep.subr.bf16.mxu0 %v589
      %709 = vmatpush1.bf16.msra.mxu0 %v588
      %710 = vmatprep.subr.bf16.mxu0 %v593
      %711 = vmatpush1.bf16.msra.mxu0 %v592
      %712 = vmatprep.subr.bf16.mxu0 %v597
      %713 = vmatpush1.bf16.msra.mxu0 %v596
      %714 = vmatprep.subr.bf16.mxu0 %v601
      %715 = vmatpush1.bf16.msra.mxu0 %v600
      %716 = vmatprep.subr.bf16.mxu0 %v605
      %717 = vmatpush1.bf16.msra.mxu0 %v604
      %718 = vmatprep.subr.bf16.mxu0 %v609
      %719 = vmatpush1.bf16.msra.mxu0 %v608
      %720 = vmatprep.subr.bf16.mxu0 %v613
      %721 = vmatpush1.bf16.msra.mxu0 %v612
      %722 = vmatprep.subr.bf16.mxu0 %v617
      %723 = vmatpush1.bf16.msra.mxu0 %v616
      %724 = vmatprep.subr.bf16.mxu0 %v621
      %725 = vmatpush1.bf16.msra.mxu0 %v620
      %726 = vmatprep.subr.bf16.mxu0 %v625
      %727 = vmatpush1.bf16.msra.mxu0 %v624
      %728 = vmatprep.subr.bf16.mxu0 %v629
      %729 = vmatpush1.bf16.msra.mxu0 %v628
      %730 = vmatprep.subr.bf16.mxu0 %v633
      %731 = vmatpush1.bf16.msra.mxu0 %v632
      %732 = vmatprep.mubr.bf16.mxu0 %v369
      %733 = vmatmul.mubr.bf16.gmra.mrb[0].mxu0 %v357
      %v734 = vpop.f32.mrb[0].mxu0
      %v735 = vadd.f32 0.0, %v734
      %v736 = vpop.f32.mrb[0].mxu0
      %v737 = vadd.f32 0.0, %v736
      %v738 = vpop.f32.mrb[0].mxu0
      %v739 = vadd.f32 0.0, %v738
      %v740 = vpop.f32.mrb[0].mxu0
      %v741 = vadd.f32 0.0, %v740
      %742 = vmatprep.mubr.bf16.mxu0 %v375
      %743 = vmatmul.mubr.bf16.gmra.mrb[0].mxu0 %v372
      %v744 = vpop.f32.mrb[0].mxu0
      %v745 = vadd.f32 0.0, %v744
      %v746 = vpop.f32.mrb[0].mxu0
      %v747 = vadd.f32 0.0, %v746
      %v748 = vpop.f32.mrb[0].mxu0
      %v749 = vpop.f32.mrb[0].mxu0
      %750 = vdwg.mxu0
      %751 = vmatprep.subr.bf16.mxu0 %v575
      %752 = vmatpush1.bf16.msra.mxu0 %v574
      %753 = vmatprep.subr.bf16.mxu0 %v579
      %754 = vmatpush1.bf16.msra.mxu0 %v578
      %755 = vmatprep.subr.bf16.mxu0 %v583
      %756 = vmatpush1.bf16.msra.mxu0 %v582
      %757 = vmatprep.subr.bf16.mxu0 %v587
      %758 = vmatpush1.bf16.msra.mxu0 %v586
      %759 = vmatprep.subr.bf16.mxu0 %v591
      %760 = vmatpush1.bf16.msra.mxu0 %v590
      %761 = vmatprep.subr.bf16.mxu0 %v595
      %762 = vmatpush1.bf16.msra.mxu0 %v594
      %763 = vmatprep.subr.bf16.mxu0 %v599
      %764 = vmatpush1.bf16.msra.mxu0 %v598
      %765 = vmatprep.subr.bf16.mxu0 %v603
      %766 = vmatpush1.bf16.msra.mxu0 %v602
      %767 = vmatprep.subr.bf16.mxu0 %v607
      %768 = vmatpush1.bf16.msra.mxu0 %v606
      %769 = vmatprep.subr.bf16.mxu0 %v611
      %770 = vmatpush1.bf16.msra.mxu0 %v610
      %771 = vmatprep.subr.bf16.mxu0 %v615
      %772 = vmatpush1.bf16.msra.mxu0 %v614
      %773 = vmatprep.subr.bf16.mxu0 %v619
      %774 = vmatpush1.bf16.msra.mxu0 %v618
      %775 = vmatprep.subr.bf16.mxu0 %v623
      %776 = vmatpush1.bf16.msra.mxu0 %v622
      %777 = vmatprep.subr.bf16.mxu0 %v627
      %778 = vmatpush1.bf16.msra.mxu0 %v626
      %779 = vmatprep.subr.bf16.mxu0 %v631
      %780 = vmatpush1.bf16.msra.mxu0 %v630
      %781 = vmatprep.subr.bf16.mxu0 %v635
      %782 = vmatpush1.bf16.msra.mxu0 %v634
      %783 = vmatprep.mubr.bf16.mxu0 %v369
      %784 = vmatmul.mubr.bf16.gmra.mrb[0].mxu0 %v357
      %v785 = vpop.f32.mrb[0].mxu0
      %v786 = vadd.f32 0.0, %v785
      %v787 = vpop.f32.mrb[0].mxu0
      %v788 = vadd.f32 0.0, %v787
      %v789 = vpop.f32.mrb[0].mxu0
      %v790 = vadd.f32 0.0, %v789
      %v791 = vpop.f32.mrb[0].mxu0
      %v792 = vadd.f32 0.0, %v791
      %793 = vmatprep.mubr.bf16.mxu0 %v375
      %794 = vmatmul.mubr.bf16.gmra.mrb[0].mxu0 %v372
      %v795 = vpop.f32.mrb[0].mxu0
      %v796 = vadd.f32 0.0, %v795
      %v797 = vpop.f32.mrb[0].mxu0
      %v798 = vadd.f32 0.0, %v797
      %v799 = vpop.f32.mrb[0].mxu0
      %v800 = vpop.f32.mrb[0].mxu0
      %801 = vdwg.mxu0
      %v803 = vunpack.c.l.b16 %v201
      %v804 = vunpack.c.h.b16 %v201
      %v805 = vpack.c.b16 %v803, %v803
      %v806 = vpack.c.b16 %v804, %v804
      %v875 = vunpack.c.l.b16 %v202
      %v876 = vunpack.c.h.b16 %v202
      %v877 = vunpack.c.l.b16 %v203
      %v878 = vunpack.c.h.b16 %v203
      %v879 = vunpack.c.l.b16 %v204
      %v880 = vunpack.c.h.b16 %v204
      %v881 = vunpack.c.l.b16 %v205
      %v882 = vunpack.c.h.b16 %v205
      %v883 = vunpack.c.l.b16 %v206
      %v884 = vunpack.c.h.b16 %v206
      %v885 = vunpack.c.l.b16 %v207
      %v886 = vunpack.c.h.b16 %v207
      %v887 = vunpack.c.l.b16 %v208
      %v888 = vunpack.c.h.b16 %v208
      %v889 = vunpack.c.l.b16 %v209
      %v890 = vunpack.c.h.b16 %v209
      %v891 = vunpack.c.l.b16 %v210
      %v892 = vunpack.c.h.b16 %v210
      %v893 = vunpack.c.l.b16 %v211
      %v894 = vunpack.c.h.b16 %v211
      %v895 = vunpack.c.l.b16 %v212
      %v896 = vunpack.c.h.b16 %v212
      %v897 = vunpack.c.l.b16 %v213
      %v898 = vunpack.c.h.b16 %v213
      %v899 = vunpack.c.l.b16 %v214
      %v900 = vunpack.c.h.b16 %v214
      %v901 = vunpack.c.l.b16 %v215
      %v902 = vunpack.c.h.b16 %v215
      %v903 = vunpack.c.l.b16 %v216
      %v904 = vunpack.c.h.b16 %v216
      %v905 = vunpack.c.l.b16 %v217
      %v906 = vunpack.c.h.b16 %v217
      %v907 = vunpack.c.l.b16 %v218
      %v908 = vunpack.c.h.b16 %v218
      %v909 = vunpack.c.l.b16 %v219
      %v910 = vunpack.c.h.b16 %v219
      %v911 = vunpack.c.l.b16 %v220
      %v912 = vunpack.c.h.b16 %v220
      %v913 = vunpack.c.l.b16 %v221
      %v914 = vunpack.c.h.b16 %v221
      %v915 = vunpack.c.l.b16 %v222
      %v916 = vunpack.c.h.b16 %v222
      %v917 = vunpack.c.l.b16 %v223
      %v918 = vunpack.c.h.b16 %v223
      %v919 = vunpack.c.l.b16 %v224
      %v920 = vunpack.c.h.b16 %v224
      %v921 = vunpack.c.l.b16 %v225
      %v922 = vunpack.c.h.b16 %v225
      %v923 = vunpack.c.l.b16 %v226
      %v924 = vunpack.c.h.b16 %v226
      %v925 = vunpack.c.l.b16 %v227
      %v926 = vunpack.c.h.b16 %v227
      %v927 = vunpack.c.l.b16 %v228
      %v928 = vunpack.c.h.b16 %v228
      %v929 = vunpack.c.l.b16 %v229
      %v930 = vunpack.c.h.b16 %v229
      %v931 = vunpack.c.l.b16 %v230
      %v932 = vunpack.c.h.b16 %v230
      %v933 = vunpack.c.l.b16 %v231
      %v934 = vunpack.c.h.b16 %v231
      %v935 = vunpack.c.l.b16 %v232
      %v936 = vunpack.c.h.b16 %v232
      %v937 = vunpack.c.l.b16 %v233
      %v938 = vunpack.c.h.b16 %v233
      %v939 = vunpack.c.l.b16 %v234
      %v940 = vunpack.c.h.b16 %v234
      %v941 = vunpack.c.l.b16 %v235
      %v942 = vunpack.c.h.b16 %v235
      %v943 = vunpack.c.l.b16 %v236
      %v944 = vunpack.c.h.b16 %v236
      %v945 = vunpack.c.l.b16 %v237
      %v946 = vunpack.c.h.b16 %v237
      %v947 = vunpack.c.l.b16 %v238
      %v948 = vunpack.c.h.b16 %v238
      %v949 = vunpack.c.l.b16 %v239
      %v950 = vunpack.c.h.b16 %v239
      %v951 = vunpack.c.l.b16 %v240
      %v952 = vunpack.c.h.b16 %v240
      %v953 = vunpack.c.l.b16 %v241
      %v954 = vunpack.c.h.b16 %v241
      %v955 = vunpack.c.l.b16 %v242
      %v956 = vunpack.c.h.b16 %v242
      %v957 = vunpack.c.l.b16 %v243
      %v958 = vunpack.c.h.b16 %v243
      %v959 = vunpack.c.l.b16 %v244
      %v960 = vunpack.c.h.b16 %v244
      %v961 = vunpack.c.l.b16 %v245
      %v962 = vunpack.c.h.b16 %v245
      %v963 = vunpack.c.l.b16 %v246
      %v964 = vunpack.c.h.b16 %v246
      %v965 = vunpack.c.l.b16 %v247
      %v966 = vunpack.c.h.b16 %v247
      %v967 = vunpack.c.l.b16 %v248
      %v968 = vunpack.c.h.b16 %v248
      %v969 = vunpack.c.l.b16 %v249
      %v970 = vunpack.c.h.b16 %v249
      %v971 = vunpack.c.l.b16 %v250
      %v972 = vunpack.c.h.b16 %v250
      %v973 = vunpack.c.l.b16 %v251
      %v974 = vunpack.c.h.b16 %v251
      %v975 = vunpack.c.l.b16 %v252
      %v976 = vunpack.c.h.b16 %v252
      %v977 = vunpack.c.l.b16 %v253
      %v978 = vunpack.c.h.b16 %v253
      %v979 = vunpack.c.l.b16 %v254
      %v980 = vunpack.c.h.b16 %v254
      %v981 = vunpack.c.l.b16 %v255
      %v982 = vunpack.c.h.b16 %v255
      %v983 = vunpack.c.l.b16 %v256
      %v984 = vunpack.c.h.b16 %v256
      %v985 = vunpack.c.l.b16 %v257
      %v986 = vunpack.c.h.b16 %v257
      %v987 = vunpack.c.l.b16 %v258
      %v988 = vunpack.c.h.b16 %v258
      %v989 = vunpack.c.l.b16 %v259
      %v990 = vunpack.c.h.b16 %v259
      %v991 = vunpack.c.l.b16 %v260
      %v992 = vunpack.c.h.b16 %v260
      %v993 = vunpack.c.l.b16 %v261
      %v994 = vunpack.c.h.b16 %v261
      %v995 = vunpack.c.l.b16 %v262
      %v996 = vunpack.c.h.b16 %v262
      %v997 = vunpack.c.l.b16 %v263
      %v998 = vunpack.c.h.b16 %v263
      %v999 = vunpack.c.l.b16 %v264
      %v1000 = vunpack.c.h.b16 %v264
      %v1001 = vunpack.c.l.b16 %v265
      %v1002 = vunpack.c.h.b16 %v265
      %v1003 = vpack.c.b16 %v879, %v875
      %v1004 = vpack.c.b16 %v880, %v876
      %v1005 = vpack.c.b16 %v881, %v877
      %v1006 = vpack.c.b16 %v882, %v878
      %v1007 = vpack.c.b16 %v887, %v883
      %v1008 = vpack.c.b16 %v888, %v884
      %v1009 = vpack.c.b16 %v889, %v885
      %v1010 = vpack.c.b16 %v890, %v886
      %v1011 = vpack.c.b16 %v895, %v891
      %v1012 = vpack.c.b16 %v896, %v892
      %v1013 = vpack.c.b16 %v897, %v893
      %v1014 = vpack.c.b16 %v898, %v894
      %v1015 = vpack.c.b16 %v903, %v899
      %v1016 = vpack.c.b16 %v904, %v900
      %v1017 = vpack.c.b16 %v905, %v901
      %v1018 = vpack.c.b16 %v906, %v902
      %v1019 = vpack.c.b16 %v911, %v907
      %v1020 = vpack.c.b16 %v912, %v908
      %v1021 = vpack.c.b16 %v913, %v909
      %v1022 = vpack.c.b16 %v914, %v910
      %v1023 = vpack.c.b16 %v919, %v915
      %v1024 = vpack.c.b16 %v920, %v916
      %v1025 = vpack.c.b16 %v921, %v917
      %v1026 = vpack.c.b16 %v922, %v918
      %v1027 = vpack.c.b16 %v927, %v923
      %v1028 = vpack.c.b16 %v928, %v924
      %v1029 = vpack.c.b16 %v929, %v925
      %v1030 = vpack.c.b16 %v930, %v926
      %v1031 = vpack.c.b16 %v935, %v931
      %v1032 = vpack.c.b16 %v936, %v932
      %v1033 = vpack.c.b16 %v937, %v933
      %v1034 = vpack.c.b16 %v938, %v934
      %v1035 = vpack.c.b16 %v943, %v939
      %v1036 = vpack.c.b16 %v944, %v940
      %v1037 = vpack.c.b16 %v945, %v941
      %v1038 = vpack.c.b16 %v946, %v942
      %v1039 = vpack.c.b16 %v951, %v947
      %v1040 = vpack.c.b16 %v952, %v948
      %v1041 = vpack.c.b16 %v953, %v949
      %v1042 = vpack.c.b16 %v954, %v950
      %v1043 = vpack.c.b16 %v959, %v955
      %v1044 = vpack.c.b16 %v960, %v956
      %v1045 = vpack.c.b16 %v961, %v957
      %v1046 = vpack.c.b16 %v962, %v958
      %v1047 = vpack.c.b16 %v967, %v963
      %v1048 = vpack.c.b16 %v968, %v964
      %v1049 = vpack.c.b16 %v969, %v965
      %v1050 = vpack.c.b16 %v970, %v966
      %v1051 = vpack.c.b16 %v975, %v971
      %v1052 = vpack.c.b16 %v976, %v972
      %v1053 = vpack.c.b16 %v977, %v973
      %v1054 = vpack.c.b16 %v978, %v974
      %v1055 = vpack.c.b16 %v983, %v979
      %v1056 = vpack.c.b16 %v984, %v980
      %v1057 = vpack.c.b16 %v985, %v981
      %v1058 = vpack.c.b16 %v986, %v982
      %v1059 = vpack.c.b16 %v991, %v987
      %v1060 = vpack.c.b16 %v992, %v988
      %v1061 = vpack.c.b16 %v993, %v989
      %v1062 = vpack.c.b16 %v994, %v990
      %v1063 = vpack.c.b16 %v999, %v995
      %v1064 = vpack.c.b16 %v1000, %v996
      %v1065 = vpack.c.b16 %v1001, %v997
      %v1066 = vpack.c.b16 %v1002, %v998
      %1131 = vmatprep.subr.bf16.mxu0 %v1004
      %1132 = vmatpush1.bf16.msra.mxu0 %v1003
      %1133 = vmatprep.subr.bf16.mxu0 %v1008
      %1134 = vmatpush1.bf16.msra.mxu0 %v1007
      %1135 = vmatprep.subr.bf16.mxu0 %v1012
      %1136 = vmatpush1.bf16.msra.mxu0 %v1011
      %1137 = vmatprep.subr.bf16.mxu0 %v1016
      %1138 = vmatpush1.bf16.msra.mxu0 %v1015
      %1139 = vmatprep.subr.bf16.mxu0 %v1020
      %1140 = vmatpush1.bf16.msra.mxu0 %v1019
      %1141 = vmatprep.subr.bf16.mxu0 %v1024
      %1142 = vmatpush1.bf16.msra.mxu0 %v1023
      %1143 = vmatprep.subr.bf16.mxu0 %v1028
      %1144 = vmatpush1.bf16.msra.mxu0 %v1027
      %1145 = vmatprep.subr.bf16.mxu0 %v1032
      %1146 = vmatpush1.bf16.msra.mxu0 %v1031
      %1147 = vmatprep.subr.bf16.mxu0 %v1036
      %1148 = vmatpush1.bf16.msra.mxu0 %v1035
      %1149 = vmatprep.subr.bf16.mxu0 %v1040
      %1150 = vmatpush1.bf16.msra.mxu0 %v1039
      %1151 = vmatprep.subr.bf16.mxu0 %v1044
      %1152 = vmatpush1.bf16.msra.mxu0 %v1043
      %1153 = vmatprep.subr.bf16.mxu0 %v1048
      %1154 = vmatpush1.bf16.msra.mxu0 %v1047
      %1155 = vmatprep.subr.bf16.mxu0 %v1052
      %1156 = vmatpush1.bf16.msra.mxu0 %v1051
      %1157 = vmatprep.subr.bf16.mxu0 %v1056
      %1158 = vmatpush1.bf16.msra.mxu0 %v1055
      %1159 = vmatprep.subr.bf16.mxu0 %v1060
      %1160 = vmatpush1.bf16.msra.mxu0 %v1059
      %1161 = vmatprep.subr.bf16.mxu0 %v1064
      %1162 = vmatpush1.bf16.msra.mxu0 %v1063
      %1163 = vmatprep.mubr.bf16.mxu0 %v342
      %1164 = vmatmul.mubr.bf16.gmra.mrb[0].mxu0 %v341
      %v1165 = vpop.f32.mrb[0].mxu0
      %v1166 = vadd.f32 %v735, %v1165
      %v1167 = vpop.f32.mrb[0].mxu0
      %v1168 = vadd.f32 %v737, %v1167
      %v1169 = vpop.f32.mrb[0].mxu0
      %v1170 = vadd.f32 %v739, %v1169
      %v1171 = vpop.f32.mrb[0].mxu0
      %v1172 = vadd.f32 %v741, %v1171
      %1173 = vmatprep.mubr.bf16.mxu0 %v806
      %1174 = vmatmul.mubr.bf16.gmra.mrb[0].mxu0 %v805
      %v1175 = vpop.f32.mrb[0].mxu0
      %v1176 = vadd.f32 %v745, %v1175
      %v1177 = vpop.f32.mrb[0].mxu0
      %v1178 = vadd.f32 %v747, %v1177
      %v1179 = vpop.f32.mrb[0].mxu0
      %v1180 = vpop.f32.mrb[0].mxu0
      %1181 = vdwg.mxu0
      %1182 = vmatprep.subr.bf16.mxu0 %v1006
      %1183 = vmatpush1.bf16.msra.mxu0 %v1005
      %1184 = vmatprep.subr.bf16.mxu0 %v1010
      %1185 = vmatpush1.bf16.msra.mxu0 %v1009
      %1186 = vmatprep.subr.bf16.mxu0 %v1014
      %1187 = vmatpush1.bf16.msra.mxu0 %v1013
      %1188 = vmatprep.subr.bf16.mxu0 %v1018
      %1189 = vmatpush1.bf16.msra.mxu0 %v1017
      %1190 = vmatprep.subr.bf16.mxu0 %v1022
      %1191 = vmatpush1.bf16.msra.mxu0 %v1021
      %1192 = vmatprep.subr.bf16.mxu0 %v1026
      %1193 = vmatpush1.bf16.msra.mxu0 %v1025
      %1194 = vmatprep.subr.bf16.mxu0 %v1030
      %1195 = vmatpush1.bf16.msra.mxu0 %v1029
      %1196 = vmatprep.subr.bf16.mxu0 %v1034
      %1197 = vmatpush1.bf16.msra.mxu0 %v1033
      %1198 = vmatprep.subr.bf16.mxu0 %v1038
      %1199 = vmatpush1.bf16.msra.mxu0 %v1037
      %1200 = vmatprep.subr.bf16.mxu0 %v1042
      %1201 = vmatpush1.bf16.msra.mxu0 %v1041
      %1202 = vmatprep.subr.bf16.mxu0 %v1046
      %1203 = vmatpush1.bf16.msra.mxu0 %v1045
      %1204 = vmatprep.subr.bf16.mxu0 %v1050
      %1205 = vmatpush1.bf16.msra.mxu0 %v1049
      %1206 = vmatprep.subr.bf16.mxu0 %v1054
      %1207 = vmatpush1.bf16.msra.mxu0 %v1053
      %1208 = vmatprep.subr.bf16.mxu0 %v1058
      %1209 = vmatpush1.bf16.msra.mxu0 %v1057
      %1210 = vmatprep.subr.bf16.mxu0 %v1062
      %1211 = vmatpush1.bf16.msra.mxu0 %v1061
      %1212 = vmatprep.subr.bf16.mxu0 %v1066
      %1213 = vmatpush1.bf16.msra.mxu0 %v1065
      %1214 = vmatprep.mubr.bf16.mxu0 %v342
      %1215 = vmatmul.mubr.bf16.gmra.mrb[0].mxu0 %v341
      %v1216 = vpop.f32.mrb[0].mxu0
      %v1217 = vadd.f32 %v786, %v1216
      %v1218 = vpop.f32.mrb[0].mxu0
      %v1219 = vadd.f32 %v788, %v1218
      %v1220 = vpop.f32.mrb[0].mxu0
      %v1221 = vadd.f32 %v790, %v1220
      %v1222 = vpop.f32.mrb[0].mxu0
      %v1223 = vadd.f32 %v792, %v1222
      %1224 = vmatprep.mubr.bf16.mxu0 %v806
      %1225 = vmatmul.mubr.bf16.gmra.mrb[0].mxu0 %v805
      %v1226 = vpop.f32.mrb[0].mxu0
      %v1227 = vadd.f32 %v796, %v1226
      %v1228 = vpop.f32.mrb[0].mxu0
      %v1229 = vadd.f32 %v798, %v1228
      %v1230 = vpop.f32.mrb[0].mxu0
      %v1231 = vpop.f32.mrb[0].mxu0
      %1232 = vdwg.mxu0
      %v1233 = vld [vmem:[%s192] sm:$0xee]
      %s1234 = scalar_lea.vmem %s1, 1024
      %v1235 = vld [vmem:[%s1234] sm:$0xff]
      %v1236 = vld [vmem:[%s1234 + $0x8] sm:$0xff]
      %v1237 = vld [vmem:[%s1234 + $0x10] sm:$0xff]
      %v1238 = vld [vmem:[%s1234 + $0x18] sm:$0xff]
      %v1239 = vld [vmem:[%s1234 + $0x20] sm:$0xff]
      %v1240 = vld [vmem:[%s1234 + $0x28] sm:$0xff]
      %v1241 = vld [vmem:[%s1234 + $0x30] sm:$0xff]
      %v1242 = vld [vmem:[%s1234 + $0x38] sm:$0xff]
      %v1243 = vld [vmem:[%s1234 + $0x40] sm:$0xff]
      %v1244 = vld [vmem:[%s1234 + $0x48] sm:$0xff]
      %v1245 = vld [vmem:[%s1234 + $0x50] sm:$0xff]
      %v1246 = vld [vmem:[%s1234 + $0x58] sm:$0xff]
      %v1247 = vld [vmem:[%s1234 + $0x60] sm:$0xff]
      %v1248 = vld [vmem:[%s1234 + $0x68] sm:$0xff]
      %v1249 = vld [vmem:[%s1234 + $0x70] sm:$0xff]
      %v1250 = vld [vmem:[%s1234 + $0x78] sm:$0xff]
      %v1251 = vld [vmem:[%s1234 + $0x80] sm:$0xff]
      %v1252 = vld [vmem:[%s1234 + $0x88] sm:$0xff]
      %v1253 = vld [vmem:[%s1234 + $0x90] sm:$0xff]
      %v1254 = vld [vmem:[%s1234 + $0x98] sm:$0xff]
      %v1255 = vld [vmem:[%s1234 + $0xa0] sm:$0xff]
      %v1256 = vld [vmem:[%s1234 + $0xa8] sm:$0xff]
      %v1257 = vld [vmem:[%s1234 + $0xb0] sm:$0xff]
      %v1258 = vld [vmem:[%s1234 + $0xb8] sm:$0xff]
      %v1259 = vld [vmem:[%s1234 + $0xc0] sm:$0xff]
      %v1260 = vld [vmem:[%s1234 + $0xc8] sm:$0xff]
      %v1261 = vld [vmem:[%s1234 + $0xd0] sm:$0xff]
      %v1262 = vld [vmem:[%s1234 + $0xd8] sm:$0xff]
      %v1263 = vld [vmem:[%s1234 + $0xe0] sm:$0xff]
      %v1264 = vld [vmem:[%s1234 + $0xe8] sm:$0xff]
      %v1265 = vld [vmem:[%s1234 + $0xf0] sm:$0xff]
      %v1266 = vld [vmem:[%s1234 + $0xf8] sm:$0xff]
      %v1267 = vld [vmem:[%s1234 + $0x100] sm:$0xff]
      %v1268 = vld [vmem:[%s1234 + $0x108] sm:$0xff]
      %v1269 = vld [vmem:[%s1234 + $0x110] sm:$0xff]
      %v1270 = vld [vmem:[%s1234 + $0x118] sm:$0xff]
      %v1271 = vld [vmem:[%s1234 + $0x120] sm:$0xff]
      %v1272 = vld [vmem:[%s1234 + $0x128] sm:$0xff]
      %v1273 = vld [vmem:[%s1234 + $0x130] sm:$0xff]
      %v1274 = vld [vmem:[%s1234 + $0x138] sm:$0xff]
      %v1275 = vld [vmem:[%s1234 + $0x140] sm:$0xff]
      %v1276 = vld [vmem:[%s1234 + $0x148] sm:$0xff]
      %v1277 = vld [vmem:[%s1234 + $0x150] sm:$0xff]
      %v1278 = vld [vmem:[%s1234 + $0x158] sm:$0xff]
      %v1279 = vld [vmem:[%s1234 + $0x160] sm:$0xff]
      %v1280 = vld [vmem:[%s1234 + $0x168] sm:$0xff]
      %v1281 = vld [vmem:[%s1234 + $0x170] sm:$0xff]
      %v1282 = vld [vmem:[%s1234 + $0x178] sm:$0xff]
      %v1283 = vld [vmem:[%s1234 + $0x180] sm:$0xff]
      %v1284 = vld [vmem:[%s1234 + $0x188] sm:$0xff]
      %v1285 = vld [vmem:[%s1234 + $0x190] sm:$0xff]
      %v1286 = vld [vmem:[%s1234 + $0x198] sm:$0xff]
      %v1287 = vld [vmem:[%s1234 + $0x1a0] sm:$0xff]
      %v1288 = vld [vmem:[%s1234 + $0x1a8] sm:$0xff]
      %v1289 = vld [vmem:[%s1234 + $0x1b0] sm:$0xff]
      %v1290 = vld [vmem:[%s1234 + $0x1b8] sm:$0xff]
      %v1291 = vld [vmem:[%s1234 + $0x1c0] sm:$0xff]
      %v1292 = vld [vmem:[%s1234 + $0x1c8] sm:$0xff]
      %v1293 = vld [vmem:[%s1234 + $0x1d0] sm:$0xff]
      %v1294 = vld [vmem:[%s1234 + $0x1d8] sm:$0xff]
      %v1295 = vld [vmem:[%s1234 + $0x1e0] sm:$0xff]
      %v1296 = vld [vmem:[%s1234 + $0x1e8] sm:$0xff]
      %v1297 = vld [vmem:[%s1234 + $0x1f0] sm:$0xff]
      %v1298 = vld [vmem:[%s1234 + $0x1f8] sm:$0xff]
      %v1300 = vunpack.c.l.b16 %v1233
      %v1301 = vunpack.c.h.b16 %v1233
      %v1302 = vpack.c.b16 %v337, %v1300
      %v1303 = vpack.c.b16 %v338, %v1301
      %vm1304 = vcmask 1046528
      %v1305 = vrot.slane %v1302, 1
      %v1306 = vrot.slane %v343, 1
      %v1307 = vsel %vm1304, %v1305, %v1306
      %v1308 = vrot.slane %v1303, 1
      %v1309 = vrot.slane %v344, 1
      %v1310 = vsel %vm1304, %v1308, %v1309
      %v1379 = vunpack.c.l.b16 %v1235
      %v1380 = vunpack.c.h.b16 %v1235
      %v1381 = vunpack.c.l.b16 %v1236
      %v1382 = vunpack.c.h.b16 %v1236
      %v1383 = vunpack.c.l.b16 %v1237
      %v1384 = vunpack.c.h.b16 %v1237
      %v1385 = vunpack.c.l.b16 %v1238
      %v1386 = vunpack.c.h.b16 %v1238
      %v1387 = vunpack.c.l.b16 %v1239
      %v1388 = vunpack.c.h.b16 %v1239
      %v1389 = vunpack.c.l.b16 %v1240
      %v1390 = vunpack.c.h.b16 %v1240
      %v1391 = vunpack.c.l.b16 %v1241
      %v1392 = vunpack.c.h.b16 %v1241
      %v1393 = vunpack.c.l.b16 %v1242
      %v1394 = vunpack.c.h.b16 %v1242
      %v1395 = vunpack.c.l.b16 %v1243
      %v1396 = vunpack.c.h.b16 %v1243
      %v1397 = vunpack.c.l.b16 %v1244
      %v1398 = vunpack.c.h.b16 %v1244
      %v1399 = vunpack.c.l.b16 %v1245
      %v1400 = vunpack.c.h.b16 %v1245
      %v1401 = vunpack.c.l.b16 %v1246
      %v1402 = vunpack.c.h.b16 %v1246
      %v1403 = vunpack.c.l.b16 %v1247
      %v1404 = vunpack.c.h.b16 %v1247
      %v1405 = vunpack.c.l.b16 %v1248
      %v1406 = vunpack.c.h.b16 %v1248
      %v1407 = vunpack.c.l.b16 %v1249
      %v1408 = vunpack.c.h.b16 %v1249
      %v1409 = vunpack.c.l.b16 %v1250
      %v1410 = vunpack.c.h.b16 %v1250
      %v1411 = vunpack.c.l.b16 %v1251
      %v1412 = vunpack.c.h.b16 %v1251
      %v1413 = vunpack.c.l.b16 %v1252
      %v1414 = vunpack.c.h.b16 %v1252
      %v1415 = vunpack.c.l.b16 %v1253
      %v1416 = vunpack.c.h.b16 %v1253
      %v1417 = vunpack.c.l.b16 %v1254
      %v1418 = vunpack.c.h.b16 %v1254
      %v1419 = vunpack.c.l.b16 %v1255
      %v1420 = vunpack.c.h.b16 %v1255
      %v1421 = vunpack.c.l.b16 %v1256
      %v1422 = vunpack.c.h.b16 %v1256
      %v1423 = vunpack.c.l.b16 %v1257
      %v1424 = vunpack.c.h.b16 %v1257
      %v1425 = vunpack.c.l.b16 %v1258
      %v1426 = vunpack.c.h.b16 %v1258
      %v1427 = vunpack.c.l.b16 %v1259
      %v1428 = vunpack.c.h.b16 %v1259
      %v1429 = vunpack.c.l.b16 %v1260
      %v1430 = vunpack.c.h.b16 %v1260
      %v1431 = vunpack.c.l.b16 %v1261
      %v1432 = vunpack.c.h.b16 %v1261
      %v1433 = vunpack.c.l.b16 %v1262
      %v1434 = vunpack.c.h.b16 %v1262
      %v1435 = vunpack.c.l.b16 %v1263
      %v1436 = vunpack.c.h.b16 %v1263
      %v1437 = vunpack.c.l.b16 %v1264
      %v1438 = vunpack.c.h.b16 %v1264
      %v1439 = vunpack.c.l.b16 %v1265
      %v1440 = vunpack.c.h.b16 %v1265
      %v1441 = vunpack.c.l.b16 %v1266
      %v1442 = vunpack.c.h.b16 %v1266
      %v1443 = vunpack.c.l.b16 %v1267
      %v1444 = vunpack.c.h.b16 %v1267
      %v1445 = vunpack.c.l.b16 %v1268
      %v1446 = vunpack.c.h.b16 %v1268
      %v1447 = vunpack.c.l.b16 %v1269
      %v1448 = vunpack.c.h.b16 %v1269
      %v1449 = vunpack.c.l.b16 %v1270
      %v1450 = vunpack.c.h.b16 %v1270
      %v1451 = vunpack.c.l.b16 %v1271
      %v1452 = vunpack.c.h.b16 %v1271
      %v1453 = vunpack.c.l.b16 %v1272
      %v1454 = vunpack.c.h.b16 %v1272
      %v1455 = vunpack.c.l.b16 %v1273
      %v1456 = vunpack.c.h.b16 %v1273
      %v1457 = vunpack.c.l.b16 %v1274
      %v1458 = vunpack.c.h.b16 %v1274
      %v1459 = vunpack.c.l.b16 %v1275
      %v1460 = vunpack.c.h.b16 %v1275
      %v1461 = vunpack.c.l.b16 %v1276
      %v1462 = vunpack.c.h.b16 %v1276
      %v1463 = vunpack.c.l.b16 %v1277
      %v1464 = vunpack.c.h.b16 %v1277
      %v1465 = vunpack.c.l.b16 %v1278
      %v1466 = vunpack.c.h.b16 %v1278
      %v1467 = vunpack.c.l.b16 %v1279
      %v1468 = vunpack.c.h.b16 %v1279
      %v1469 = vunpack.c.l.b16 %v1280
      %v1470 = vunpack.c.h.b16 %v1280
      %v1471 = vunpack.c.l.b16 %v1281
      %v1472 = vunpack.c.h.b16 %v1281
      %v1473 = vunpack.c.l.b16 %v1282
      %v1474 = vunpack.c.h.b16 %v1282
      %v1475 = vunpack.c.l.b16 %v1283
      %v1476 = vunpack.c.h.b16 %v1283
      %v1477 = vunpack.c.l.b16 %v1284
      %v1478 = vunpack.c.h.b16 %v1284
      %v1479 = vunpack.c.l.b16 %v1285
      %v1480 = vunpack.c.h.b16 %v1285
      %v1481 = vunpack.c.l.b16 %v1286
      %v1482 = vunpack.c.h.b16 %v1286
      %v1483 = vunpack.c.l.b16 %v1287
      %v1484 = vunpack.c.h.b16 %v1287
      %v1485 = vunpack.c.l.b16 %v1288
      %v1486 = vunpack.c.h.b16 %v1288
      %v1487 = vunpack.c.l.b16 %v1289
      %v1488 = vunpack.c.h.b16 %v1289
      %v1489 = vunpack.c.l.b16 %v1290
      %v1490 = vunpack.c.h.b16 %v1290
      %v1491 = vunpack.c.l.b16 %v1291
      %v1492 = vunpack.c.h.b16 %v1291
      %v1493 = vunpack.c.l.b16 %v1292
      %v1494 = vunpack.c.h.b16 %v1292
      %v1495 = vunpack.c.l.b16 %v1293
      %v1496 = vunpack.c.h.b16 %v1293
      %v1497 = vunpack.c.l.b16 %v1294
      %v1498 = vunpack.c.h.b16 %v1294
      %v1499 = vunpack.c.l.b16 %v1295
      %v1500 = vunpack.c.h.b16 %v1295
      %v1501 = vunpack.c.l.b16 %v1296
      %v1502 = vunpack.c.h.b16 %v1296
      %v1503 = vunpack.c.l.b16 %v1297
      %v1504 = vunpack.c.h.b16 %v1297
      %v1505 = vunpack.c.l.b16 %v1298
      %v1506 = vunpack.c.h.b16 %v1298
      %v1507 = vpack.c.b16 %v1383, %v1379
      %v1508 = vpack.c.b16 %v1384, %v1380
      %v1509 = vpack.c.b16 %v1385, %v1381
      %v1510 = vpack.c.b16 %v1386, %v1382
      %v1511 = vpack.c.b16 %v1391, %v1387
      %v1512 = vpack.c.b16 %v1392, %v1388
      %v1513 = vpack.c.b16 %v1393, %v1389
      %v1514 = vpack.c.b16 %v1394, %v1390
      %v1515 = vpack.c.b16 %v1399, %v1395
      %v1516 = vpack.c.b16 %v1400, %v1396
      %v1517 = vpack.c.b16 %v1401, %v1397
      %v1518 = vpack.c.b16 %v1402, %v1398
      %v1519 = vpack.c.b16 %v1407, %v1403
      %v1520 = vpack.c.b16 %v1408, %v1404
      %v1521 = vpack.c.b16 %v1409, %v1405
      %v1522 = vpack.c.b16 %v1410, %v1406
      %v1523 = vpack.c.b16 %v1415, %v1411
      %v1524 = vpack.c.b16 %v1416, %v1412
      %v1525 = vpack.c.b16 %v1417, %v1413
      %v1526 = vpack.c.b16 %v1418, %v1414
      %v1527 = vpack.c.b16 %v1423, %v1419
      %v1528 = vpack.c.b16 %v1424, %v1420
      %v1529 = vpack.c.b16 %v1425, %v1421
      %v1530 = vpack.c.b16 %v1426, %v1422
      %v1531 = vpack.c.b16 %v1431, %v1427
      %v1532 = vpack.c.b16 %v1432, %v1428
      %v1533 = vpack.c.b16 %v1433, %v1429
      %v1534 = vpack.c.b16 %v1434, %v1430
      %v1535 = vpack.c.b16 %v1439, %v1435
      %v1536 = vpack.c.b16 %v1440, %v1436
      %v1537 = vpack.c.b16 %v1441, %v1437
      %v1538 = vpack.c.b16 %v1442, %v1438
      %v1539 = vpack.c.b16 %v1447, %v1443
      %v1540 = vpack.c.b16 %v1448, %v1444
      %v1541 = vpack.c.b16 %v1449, %v1445
      %v1542 = vpack.c.b16 %v1450, %v1446
      %v1543 = vpack.c.b16 %v1455, %v1451
      %v1544 = vpack.c.b16 %v1456, %v1452
      %v1545 = vpack.c.b16 %v1457, %v1453
      %v1546 = vpack.c.b16 %v1458, %v1454
      %v1547 = vpack.c.b16 %v1463, %v1459
      %v1548 = vpack.c.b16 %v1464, %v1460
      %v1549 = vpack.c.b16 %v1465, %v1461
      %v1550 = vpack.c.b16 %v1466, %v1462
      %v1551 = vpack.c.b16 %v1471, %v1467
      %v1552 = vpack.c.b16 %v1472, %v1468
      %v1553 = vpack.c.b16 %v1473, %v1469
      %v1554 = vpack.c.b16 %v1474, %v1470
      %v1555 = vpack.c.b16 %v1479, %v1475
      %v1556 = vpack.c.b16 %v1480, %v1476
      %v1557 = vpack.c.b16 %v1481, %v1477
      %v1558 = vpack.c.b16 %v1482, %v1478
      %v1559 = vpack.c.b16 %v1487, %v1483
      %v1560 = vpack.c.b16 %v1488, %v1484
      %v1561 = vpack.c.b16 %v1489, %v1485
      %v1562 = vpack.c.b16 %v1490, %v1486
      %v1563 = vpack.c.b16 %v1495, %v1491
      %v1564 = vpack.c.b16 %v1496, %v1492
      %v1565 = vpack.c.b16 %v1497, %v1493
      %v1566 = vpack.c.b16 %v1498, %v1494
      %v1567 = vpack.c.b16 %v1503, %v1499
      %v1568 = vpack.c.b16 %v1504, %v1500
      %v1569 = vpack.c.b16 %v1505, %v1501
      %v1570 = vpack.c.b16 %v1506, %v1502
      %1635 = vmatprep.subr.bf16.mxu0 %v1508
      %1636 = vmatpush1.bf16.msra.mxu0 %v1507
      %1637 = vmatprep.subr.bf16.mxu0 %v1512
      %1638 = vmatpush1.bf16.msra.mxu0 %v1511
      %1639 = vmatprep.subr.bf16.mxu0 %v1516
      %1640 = vmatpush1.bf16.msra.mxu0 %v1515
      %1641 = vmatprep.subr.bf16.mxu0 %v1520
      %1642 = vmatpush1.bf16.msra.mxu0 %v1519
      %1643 = vmatprep.subr.bf16.mxu0 %v1524
      %1644 = vmatpush1.bf16.msra.mxu0 %v1523
      %1645 = vmatprep.subr.bf16.mxu0 %v1528
      %1646 = vmatpush1.bf16.msra.mxu0 %v1527
      %1647 = vmatprep.subr.bf16.mxu0 %v1532
      %1648 = vmatpush1.bf16.msra.mxu0 %v1531
      %1649 = vmatprep.subr.bf16.mxu0 %v1536
      %1650 = vmatpush1.bf16.msra.mxu0 %v1535
      %1651 = vmatprep.subr.bf16.mxu0 %v1540
      %1652 = vmatpush1.bf16.msra.mxu0 %v1539
      %1653 = vmatprep.subr.bf16.mxu0 %v1544
      %1654 = vmatpush1.bf16.msra.mxu0 %v1543
      %1655 = vmatprep.subr.bf16.mxu0 %v1548
      %1656 = vmatpush1.bf16.msra.mxu0 %v1547
      %1657 = vmatprep.subr.bf16.mxu0 %v1552
      %1658 = vmatpush1.bf16.msra.mxu0 %v1551
      %1659 = vmatprep.subr.bf16.mxu0 %v1556
      %1660 = vmatpush1.bf16.msra.mxu0 %v1555
      %1661 = vmatprep.subr.bf16.mxu0 %v1560
      %1662 = vmatpush1.bf16.msra.mxu0 %v1559
      %1663 = vmatprep.subr.bf16.mxu0 %v1564
      %1664 = vmatpush1.bf16.msra.mxu0 %v1563
      %1665 = vmatprep.subr.bf16.mxu0 %v1568
      %1666 = vmatpush1.bf16.msra.mxu0 %v1567
      %1667 = vmatprep.mubr.bf16.mxu0 %v1310
      %1668 = vmatmul.mubr.bf16.gmra.mrb[0].mxu0 %v1307
      %v1669 = vpop.f32.mrb[0].mxu0
      %v1670 = vadd.f32 0.0, %v1669
      %v1671 = vpop.f32.mrb[0].mxu0
      %v1672 = vadd.f32 0.0, %v1671
      %v1673 = vpop.f32.mrb[0].mxu0
      %v1674 = vadd.f32 0.0, %v1673
      %v1675 = vpop.f32.mrb[0].mxu0
      %v1676 = vadd.f32 0.0, %v1675
      %1677 = vmatprep.mubr.bf16.mxu0 %v1309
      %1678 = vmatmul.mubr.bf16.gmra.mrb[0].mxu0 %v1306
      %v1679 = vpop.f32.mrb[0].mxu0
      %v1680 = vadd.f32 0.0, %v1679
      %v1681 = vpop.f32.mrb[0].mxu0
      %v1682 = vadd.f32 0.0, %v1681
      %v1683 = vpop.f32.mrb[0].mxu0
      %v1684 = vpop.f32.mrb[0].mxu0
      %1685 = vdwg.mxu0
      %1686 = vmatprep.subr.bf16.mxu0 %v1510
      %1687 = vmatpush1.bf16.msra.mxu0 %v1509
      %1688 = vmatprep.subr.bf16.mxu0 %v1514
      %1689 = vmatpush1.bf16.msra.mxu0 %v1513
      %1690 = vmatprep.subr.bf16.mxu0 %v1518
      %1691 = vmatpush1.bf16.msra.mxu0 %v1517
      %1692 = vmatprep.subr.bf16.mxu0 %v1522
      %1693 = vmatpush1.bf16.msra.mxu0 %v1521
      %1694 = vmatprep.subr.bf16.mxu0 %v1526
      %1695 = vmatpush1.bf16.msra.mxu0 %v1525
      %1696 = vmatprep.subr.bf16.mxu0 %v1530
      %1697 = vmatpush1.bf16.msra.mxu0 %v1529
      %1698 = vmatprep.subr.bf16.mxu0 %v1534
      %1699 = vmatpush1.bf16.msra.mxu0 %v1533
      %1700 = vmatprep.subr.bf16.mxu0 %v1538
      %1701 = vmatpush1.bf16.msra.mxu0 %v1537
      %1702 = vmatprep.subr.bf16.mxu0 %v1542
      %1703 = vmatpush1.bf16.msra.mxu0 %v1541
      %1704 = vmatprep.subr.bf16.mxu0 %v1546
      %1705 = vmatpush1.bf16.msra.mxu0 %v1545
      %1706 = vmatprep.subr.bf16.mxu0 %v1550
      %1707 = vmatpush1.bf16.msra.mxu0 %v1549
      %1708 = vmatprep.subr.bf16.mxu0 %v1554
      %1709 = vmatpush1.bf16.msra.mxu0 %v1553
      %1710 = vmatprep.subr.bf16.mxu0 %v1558
      %1711 = vmatpush1.bf16.msra.mxu0 %v1557
      %1712 = vmatprep.subr.bf16.mxu0 %v1562
      %1713 = vmatpush1.bf16.msra.mxu0 %v1561
      %1714 = vmatprep.subr.bf16.mxu0 %v1566
      %1715 = vmatpush1.bf16.msra.mxu0 %v1565
      %1716 = vmatprep.subr.bf16.mxu0 %v1570
      %1717 = vmatpush1.bf16.msra.mxu0 %v1569
      %1718 = vmatprep.mubr.bf16.mxu0 %v1310
      %1719 = vmatmul.mubr.bf16.gmra.mrb[0].mxu0 %v1307
      %v1720 = vpop.f32.mrb[0].mxu0
      %v1721 = vadd.f32 0.0, %v1720
      %v1722 = vpop.f32.mrb[0].mxu0
      %v1723 = vadd.f32 0.0, %v1722
      %v1724 = vpop.f32.mrb[0].mxu0
      %v1725 = vadd.f32 0.0, %v1724
      %v1726 = vpop.f32.mrb[0].mxu0
      %v1727 = vadd.f32 0.0, %v1726
      %1728 = vmatprep.mubr.bf16.mxu0 %v1309
      %1729 = vmatmul.mubr.bf16.gmra.mrb[0].mxu0 %v1306
      %v1730 = vpop.f32.mrb[0].mxu0
      %v1731 = vadd.f32 0.0, %v1730
      %v1732 = vpop.f32.mrb[0].mxu0
      %v1733 = vadd.f32 0.0, %v1732
      %v1734 = vpop.f32.mrb[0].mxu0
      %v1735 = vpop.f32.mrb[0].mxu0
      %1736 = vdwg.mxu0
      %v1737 = vadd.f32 %v1166, %v1670
      %v1738 = vadd.f32 %v1168, %v1672
      %v1739 = vadd.f32 %v1217, %v1721
      %v1740 = vadd.f32 %v1219, %v1723
      %v1741 = vadd.f32 %v1170, %v1674
      %v1742 = vadd.f32 %v1172, %v1676
      %v1743 = vadd.f32 %v1221, %v1725
      %v1744 = vadd.f32 %v1223, %v1727
      %v1745 = vadd.f32 %v1176, %v1680
      %v1746 = vadd.f32 %v1178, %v1682
      %v1747 = vadd.f32 %v1227, %v1731
      %v1748 = vadd.f32 %v1229, %v1733
      %v1749 = vld [vmem:[%s3] sm:$0xf]
      %v1751 = vlaneseq
      %v1752 = vshrl.u32 %v1751, 7
      %v1753 = vsub.s32 0, %v1752
      %v1754 = vrot.slane %v1749, %v1753
      %v1755 = vlaneseq
      %v1756 = vshrl.u32 %v1755, 7
      %v1757 = vsub.s32 1, %v1756
      %v1758 = vrot.slane %v1749, %v1757
      %v1759 = vlaneseq
      %v1760 = vshrl.u32 %v1759, 7
      %v1761 = vsub.s32 2, %v1760
      %v1762 = vrot.slane %v1749, %v1761
      %v1763 = vlaneseq
      %v1764 = vshrl.u32 %v1763, 7
      %v1765 = vsub.s32 3, %v1764
      %v1766 = vrot.slane %v1749, %v1765
      %v1771 = vadd.f32 %v1737, %v1754
      %v1772 = vadd.f32 %v1738, %v1758
      %v1773 = vadd.f32 %v1739, %v1762
      %v1774 = vadd.f32 %v1740, %v1766
      %v1775 = vadd.f32 %v1741, %v1754
      %v1776 = vadd.f32 %v1742, %v1758
      %v1777 = vadd.f32 %v1743, %v1762
      %v1778 = vadd.f32 %v1744, %v1766
      %v1779 = vadd.f32 %v1745, %v1754
      %v1780 = vadd.f32 %v1746, %v1758
      %v1781 = vadd.f32 %v1747, %v1762
      %v1782 = vadd.f32 %v1748, %v1766
      %v1783 = vmax.f32 %v1771, 0.0
      %v1784 = vmax.f32 %v1772, 0.0
      %v1785 = vmax.f32 %v1773, 0.0
      %v1786 = vmax.f32 %v1774, 0.0
      %v1787 = vmax.f32 %v1775, 0.0
      %v1788 = vmax.f32 %v1776, 0.0
      %v1789 = vmax.f32 %v1777, 0.0
      %v1790 = vmax.f32 %v1778, 0.0
      %v1791 = vmax.f32 %v1779, 0.0
      %v1792 = vmax.f32 %v1780, 0.0
      %v1793 = vmax.f32 %v1781, 0.0
      %v1794 = vmax.f32 %v1782, 0.0
      %v1795 = vmax.f32 %v1783, %v1785
      %v1796 = vmax.f32 %v1784, %v1786
      %v1797 = vmax.f32 %v1787, %v1789
      %v1798 = vmax.f32 %v1788, %v1790
      %v1799 = vmax.f32 %v1791, %v1793
      %v1800 = vmax.f32 %v1792, %v1794
      %v1801 = vpack.c.bf16 %v1797, %v1795
      %v1802 = vpack.c.bf16 %v1798, %v1796
      %v1803 = vpack.c.bf16 %v1799, %v1799
      %v1804 = vpack.c.bf16 %v1800, %v1800
      %v1805 = vld [vmem:[%s2] sm:$0xf]
      %v1806 = vld [vmem:[%s2 + $0x4] sm:$0x1]
      %v1809 = vunpack.c.l.b16 %v1805
      %v1810 = vunpack.c.l.b16 %v1806
      %v1811 = vpack.c.b16 %v1810, %v1809
      %vm1812 = vcmask 162816
      %v1814 = vsel %vm1812, %v1811, 0
      %vm1816 = vcmask 1041408
      %v1818 = vsel %vm1816, %v1803, 0
      %v1821 = vsel %vm1816, %v1804, 0
      %1823 = vmatprep.subr.bf16.mxu0 %v1802
      %1824 = vmatpush1.bf16.msra.mxu0 %v1801
      %1825 = vmatprep.subr.bf16.mxu0 %v1821
      %1826 = vmatpush1.bf16.msra.mxu0 %v1818
      %1827 = vmatprep.subr.bf16.mxu0 0
      %1828 = vmatpush1.bf16.msra.mxu0 0
      %1829 = vmatprep.subr.bf16.mxu0 0
      %1830 = vmatpush1.bf16.msra.mxu0 0
      %1831 = vmatprep.subr.bf16.mxu0 0
      %1832 = vmatpush1.bf16.msra.mxu0 0
      %1833 = vmatprep.subr.bf16.mxu0 0
      %1834 = vmatpush1.bf16.msra.mxu0 0
      %1835 = vmatprep.subr.bf16.mxu0 0
      %1836 = vmatpush1.bf16.msra.mxu0 0
      %1837 = vmatprep.subr.bf16.mxu0 0
      %1838 = vmatpush1.bf16.msra.mxu0 0
      %1839 = vmatprep.subr.bf16.mxu0 0
      %1840 = vmatpush1.bf16.msra.mxu0 0
      %1841 = vmatprep.subr.bf16.mxu0 0
      %1842 = vmatpush1.bf16.msra.mxu0 0
      %1843 = vmatprep.subr.bf16.mxu0 0
      %1844 = vmatpush1.bf16.msra.mxu0 0
      %1845 = vmatprep.subr.bf16.mxu0 0
      %1846 = vmatpush1.bf16.msra.mxu0 0
      %1847 = vmatprep.subr.bf16.mxu0 0
      %1848 = vmatpush1.bf16.msra.mxu0 0
      %1849 = vmatprep.subr.bf16.mxu0 0
      %1850 = vmatpush1.bf16.msra.mxu0 0
      %1851 = vmatprep.subr.bf16.mxu0 0
      %1852 = vmatpush1.bf16.msra.mxu0 0
      %1853 = vmatprep.subr.bf16.mxu0 0
      %1854 = vmatpush1.bf16.msra.mxu0 0
      %1855 = vmatprep.mubr.bf16.mxu0 0
      %1856 = vmatmul.mubr.bf16.gmra.mrb[0].mxu0 %v1814
      %v1857 = vpop.f32.mrb[0].mxu0
      %v1858 = vadd.f32 0.0, %v1857
      %v1859 = vpop.f32.mrb[0].mxu0
      %v1860 = vadd.f32 0.0, %v1859
      %v1861 = vpop.f32.mrb[0].mxu0
      %v1862 = vadd.f32 0.0, %v1861
      %v1863 = vpop.f32.mrb[0].mxu0
      %v1864 = vadd.f32 0.0, %v1863
      %1865 = vdwg.mxu0
      %s1866 = scalar_lea.vmem %s2, 8
      %v1867 = vld [vmem:[%s1866] sm:$0xf]
      %v1868 = vld [vmem:[%s1866 + $0x4] sm:$0x1]
      %v1871 = vunpack.c.l.b16 %v1867
      %v1872 = vunpack.c.l.b16 %v1868
      %v1873 = vpack.c.b16 %v1872, %v1871
      %v1875 = vsel %vm1812, %v1873, 0
      %1877 = vmatprep.subr.bf16.mxu0 %v1802
      %1878 = vmatpush1.bf16.msra.mxu0 %v1801
      %1879 = vmatprep.subr.bf16.mxu0 %v1821
      %1880 = vmatpush1.bf16.msra.mxu0 %v1818
      %1881 = vmatprep.subr.bf16.mxu0 0
      %1882 = vmatpush1.bf16.msra.mxu0 0
      %1883 = vmatprep.subr.bf16.mxu0 0
      %1884 = vmatpush1.bf16.msra.mxu0 0
      %1885 = vmatprep.subr.bf16.mxu0 0
      %1886 = vmatpush1.bf16.msra.mxu0 0
      %1887 = vmatprep.subr.bf16.mxu0 0
      %1888 = vmatpush1.bf16.msra.mxu0 0
      %1889 = vmatprep.subr.bf16.mxu0 0
      %1890 = vmatpush1.bf16.msra.mxu0 0
      %1891 = vmatprep.subr.bf16.mxu0 0
      %1892 = vmatpush1.bf16.msra.mxu0 0
      %1893 = vmatprep.subr.bf16.mxu0 0
      %1894 = vmatpush1.bf16.msra.mxu0 0
      %1895 = vmatprep.subr.bf16.mxu0 0
      %1896 = vmatpush1.bf16.msra.mxu0 0
      %1897 = vmatprep.subr.bf16.mxu0 0
      %1898 = vmatpush1.bf16.msra.mxu0 0
      %1899 = vmatprep.subr.bf16.mxu0 0
      %1900 = vmatpush1.bf16.msra.mxu0 0
      %1901 = vmatprep.subr.bf16.mxu0 0
      %1902 = vmatpush1.bf16.msra.mxu0 0
      %1903 = vmatprep.subr.bf16.mxu0 0
      %1904 = vmatpush1.bf16.msra.mxu0 0
      %1905 = vmatprep.subr.bf16.mxu0 0
      %1906 = vmatpush1.bf16.msra.mxu0 0
      %1907 = vmatprep.subr.bf16.mxu0 0
      %1908 = vmatpush1.bf16.msra.mxu0 0
      %1909 = vmatprep.mubr.bf16.mxu0 0
      %1910 = vmatmul.mubr.bf16.gmra.mrb[0].mxu0 %v1875
      %v1911 = vpop.f32.mrb[0].mxu0
      %v1912 = vadd.f32 0.0, %v1911
      %v1913 = vpop.f32.mrb[0].mxu0
      %v1914 = vadd.f32 0.0, %v1913
      %v1915 = vpop.f32.mrb[0].mxu0
      %v1916 = vadd.f32 0.0, %v1915
      %v1917 = vpop.f32.mrb[0].mxu0
      %v1918 = vadd.f32 0.0, %v1917
      %1919 = vdwg.mxu0
      %v1920 = vmax.f32 %v1858, %v1912
      %v1921 = vmax.f32 %v1860, %v1914
      %v1922 = vmax.f32 %v1862, %v1916
      %v1923 = vmax.f32 %v1864, %v1918
      %v1924 = vpack.c.bf16 %v1922, %v1920
      %v1925 = vpack.c.bf16 %v1923, %v1921
      %v1928 = vunpack.c.l.b16 %v1924
      %v1929 = vunpack.c.l.b16 %v1925
      %v1930 = vunpack.c.h.b16 %v1924
      %v1931 = vunpack.c.h.b16 %v1925
      %v1932 = vpack.c.b16 %v1929, %v1928
      %v1933 = vpack.c.b16 %v1931, %v1930
      %1936 = vst [vmem:[%s197] sm:$0xff] %v1932
      %1937 = vst [vmem:[%s197 + $0x8] sm:$0x11] %v1933
      %p1938 = scmp.lt.s32.totalorder %s15, 1
      %s1939 = scalar_select %p1938, %s15, 1
      %s1940 = smul.addr %s1939, 4
      %s1941 = smul.addr %s1940, 4
      %s1942 = scalar_lea.vmem %s4, %s1941
      // Predicated region
      $region37: #{forward.8} parent=35 // pred_check
        %p1943 = pneg %p122
      $region38: #{forward.8} parent=35 // pred_check_branch
        %1945 = sbr.rel (%p1943) target = $region40
      $region39: #{forward.8} parent=35 // pred_region
        _
      $region40: #{forward.8} parent=35 // pred_fallthru
        _
    $region36: #{forward.8} parent=5 // pred_fallthru
      _
    %p1946 = scmp.le.s32.totalorder 2, %s10
    // Predicated region
    $region41: #{forward.8} parent=5 // pred_check
      %p1947 = pneg %p1946
    $region42: #{forward.8} parent=5 // pred_check_branch
      %1949 = sbr.rel (%p1947) target = $region44
    $region43: #{forward.8} parent=5 // pred_region
      %s1950 = ssub.s32 %s10, 2
      // Predicated region
      $region45: #{forward.8} parent=43 // pred_check
        %p1951 = pneg %p128
      $region46: #{forward.8} parent=43 // pred_check_branch
        %1953 = sbr.rel (%p1951) target = $region48
      $region47: #{forward.8} parent=43 // pred_region
        %p1954 = scmp.lt.s32.totalorder %s16, 1
        %s1955 = scalar_select %p1954, %s16, 1
        %s1956 = smul.addr %s1955, 4
        %s1957 = smul.addr %s1956, 4
        %s1958 = scalar_lea.vmem %s4, %s1957
      $region48: #{forward.8} parent=43 // pred_fallthru
        _
    $region44: #{forward.8} parent=5 // pred_fallthru
      _
  $region6: #{forward.8} parent=0 // loop_footer
    %s14 = sadd.s32 1, %s10
  $region7: #{forward.8} parent=0 // loop_footer_branch
    %9 = sbr.rel target = $region3
  $region8: #{forward.8} parent=0 // loop_exit
    _

// kernel: forward.7
$region0: #{forward.7}
  #allocation0 [shape = 'u32[]', space=smem, size = 0x4, offset = 0x4, fixed_abs, tag = 'smem constant byte address 0x4 - core index']
  #allocation1 [shape = 'u32[144,128]{1,0:T(1,128)}', space=vmem, size = 0x12000, scoped, tag = 'internal scratch']
  %s0 = inlined_call_operand.vmem [shape: bf16[2,47,384], index: 0, kind: input, shape index: {}]
  %s1 = inlined_call_operand.vmem [shape: bf16[3,384,512], index: 1, kind: input, shape index: {}]
  %s2 = inlined_call_operand.vmem [shape: bf16[2,22,44], index: 2, kind: input, shape index: {}]
  %s3 = inlined_call_operand.vmem [shape: f32[1,512], index: 3, kind: input, shape index: {}]
  %s4 = inlined_call_operand.vmem [shape: bf16[2,22,256], index: 4, kind: output, shape index: {}]
  %s5 = sld [smem:[#allocation0]]
  $region49: #{forward.7} parent=0
    _
  %s7 = ssub.s32 1, %s5
  %s8 = scalar_select 0, %s7, %s5
  loop: start=0, step=1, limit=4
  $region2: #{forward.7} parent=0 // loop_pre_header
    _
  $region3: #{forward.7} parent=0 // loop_header
    %s10 = sphi 0, %s14
    %p11 = scmp.ge.s32.totalorder %s10, 4
    %s20 = sphi 0, %s22
    %s23 = sphi 0, %s20
    %s24 = sphi 0, %s23
    %s40 = sphi 0, %s24
    %s44 = sphi 0, %s44
    %s46 = sphi 0, %s44
    %s47 = sphi 0, %s46
    %s61 = sphi 0, %s47
    %s65 = sphi 0, %s65
    %s67 = sphi 0, %s65
    %s68 = sphi 0, %s67
    %s82 = sphi 0, %s68
    %s86 = sphi 0, %s86
    %s88 = sphi 0, %s86
    %s89 = sphi 0, %s88
    %s103 = sphi 0, %s89
    %s109 = sphi 0, %s111
    %s112 = sphi 0, %s109
    %s113 = sphi 0, %s112
    %s129 = sphi 0, %s113
  $region4: #{forward.7} parent=0 // loop_header_branch
    %13 = sbr.rel (%p11) target = $region8
  $region5: #{forward.7} parent=0 // loop_body
    %s15 = ssub.s32 %s10, 1
    %s16 = ssub.s32 %s10, 2
    %s17 = sadd.s32 %s10, 1
    %s18 = ssub.s32 %s10, %s17
    %p19 = scmp.eq.s32.totalorder %s18, 0
    %s21 = sadd.s32 %s20, 1
    %s22 = scalar_select %p19, %s20, %s21
    %p25 = pneg %p19
    %p26 = scmp.eq.s32.totalorder %s10, 1
    %p27 = por %p25, %p26
    %p28 = scmp.ne.s32.totalorder %s20, %s23
    %p29 = scmp.eq.s32.totalorder %s10, 0
    %p30 = por %p28, %p29
    %p31 = scmp.ne.s32.totalorder %s20, %s23
    %p32 = scmp.eq.s32.totalorder %s15, 1
    %p33 = por %p31, %p32
    %p34 = scmp.ne.s32.totalorder %s23, %s24
    %p35 = scmp.eq.s32.totalorder %s15, 0
    %p36 = por %p34, %p35
    %p37 = scmp.ne.s32.totalorder %s23, %s24
    %p38 = scmp.eq.s32.totalorder %s16, 1
    %p39 = por %p37, %p38
    %p41 = scmp.ne.s32.totalorder %s24, %s40
    %p42 = scmp.eq.s32.totalorder %s16, 0
    %p43 = por %p41, %p42
    %s45 = sadd.s32 %s44, 1
    %p48 = scmp.eq.s32.totalorder %s10, 1
    %p49 = scmp.ne.s32.totalorder %s44, %s46
    %p50 = scmp.eq.s32.totalorder %s10, 0
    %p51 = por %p49, %p50
    %p52 = scmp.ne.s32.totalorder %s44, %s46
    %p53 = scmp.eq.s32.totalorder %s15, 1
    %p54 = por %p52, %p53
    %p55 = scmp.ne.s32.totalorder %s46, %s47
    %p56 = scmp.eq.s32.totalorder %s15, 0
    %p57 = por %p55, %p56
    %p58 = scmp.ne.s32.totalorder %s46, %s47
    %p59 = scmp.eq.s32.totalorder %s16, 1
    %p60 = por %p58, %p59
    %p62 = scmp.ne.s32.totalorder %s47, %s61
    %p63 = scmp.eq.s32.totalorder %s16, 0
    %p64 = por %p62, %p63
    %s66 = sadd.s32 %s65, 1
    %p69 = scmp.eq.s32.totalorder %s10, 1
    %p70 = scmp.ne.s32.totalorder %s65, %s67
    %p71 = scmp.eq.s32.totalorder %s10, 0
    %p72 = por %p70, %p71
    %p73 = scmp.ne.s32.totalorder %s65, %s67
    %p74 = scmp.eq.s32.totalorder %s15, 1
    %p75 = por %p73, %p74
    %p76 = scmp.ne.s32.totalorder %s67, %s68
    %p77 = scmp.eq.s32.totalorder %s15, 0
    %p78 = por %p76, %p77
    %p79 = scmp.ne.s32.totalorder %s67, %s68
    %p80 = scmp.eq.s32.totalorder %s16, 1
    %p81 = por %p79, %p80
    %p83 = scmp.ne.s32.totalorder %s68, %s82
    %p84 = scmp.eq.s32.totalorder %s16, 0
    %p85 = por %p83, %p84
    %s87 = sadd.s32 %s86, 1
    %p90 = scmp.eq.s32.totalorder %s10, 1
    %p91 = scmp.ne.s32.totalorder %s86, %s88
    %p92 = scmp.eq.s32.totalorder %s10, 0
    %p93 = por %p91, %p92
    %p94 = scmp.ne.s32.totalorder %s86, %s88
    %p95 = scmp.eq.s32.totalorder %s15, 1
    %p96 = por %p94, %p95
    %p97 = scmp.ne.s32.totalorder %s88, %s89
    %p98 = scmp.eq.s32.totalorder %s15, 0
    %p99 = por %p97, %p98
    %p100 = scmp.ne.s32.totalorder %s88, %s89
    %p101 = scmp.eq.s32.totalorder %s16, 1
    %p102 = por %p100, %p101
    %p104 = scmp.ne.s32.totalorder %s89, %s103
    %p105 = scmp.eq.s32.totalorder %s16, 0
    %p106 = por %p104, %p105
    %s107 = ssub.s32 %s10, %s17
    %p108 = scmp.eq.s32.totalorder %s107, 0
    %s110 = sadd.s32 %s109, 1
    %s111 = scalar_select %p108, %s109, %s110
    %p114 = pneg %p108
    %p115 = scmp.eq.s32.totalorder %s10, 1
    %p116 = por %p114, %p115
    %p117 = scmp.ne.s32.totalorder %s109, %s112
    %p118 = scmp.eq.s32.totalorder %s10, 0
    %p119 = por %p117, %p118
    %p120 = scmp.ne.s32.totalorder %s109, %s112
    %p121 = scmp.eq.s32.totalorder %s15, 1
    %p122 = por %p120, %p121
    %p123 = scmp.ne.s32.totalorder %s112, %s113
    %p124 = scmp.eq.s32.totalorder %s15, 0
    %p125 = por %p123, %p124
    %p126 = scmp.ne.s32.totalorder %s112, %s113
    %p127 = scmp.eq.s32.totalorder %s16, 1
    %p128 = por %p126, %p127
    %p130 = scmp.ne.s32.totalorder %s113, %s129
    %p131 = scmp.eq.s32.totalorder %s16, 0
    %p132 = por %p130, %p131
    %p133 = scmp.le.s32.totalorder 1, %s10
    %p134 = scmp.lt.s32.totalorder %s10, 3
    %p135 = pnand %p133, %p134
    %p136 = pneg %p135
    // Predicated region
    $region9: #{forward.7} parent=5 // pred_check
      _
    $region10: #{forward.7} parent=5 // pred_check_branch
      %138 = sbr.rel (%p135) target = $region12
    $region11: #{forward.7} parent=5 // pred_region
      %s139 = ssub.s32 %s10, 1
      // Predicated region
      $region13: #{forward.7} parent=11 // pred_check
        %p140 = pneg %p57
      $region14: #{forward.7} parent=11 // pred_check_branch
        %142 = sbr.rel (%p140) target = $region16
      $region15: #{forward.7} parent=11 // pred_region
        _
      $region16: #{forward.7} parent=11 // pred_fallthru
        _
      // Predicated region
      $region17: #{forward.7} parent=11 // pred_check
        %p143 = pneg %p78
      $region18: #{forward.7} parent=11 // pred_check_branch
        %145 = sbr.rel (%p143) target = $region20
      $region19: #{forward.7} parent=11 // pred_region
        _
      $region20: #{forward.7} parent=11 // pred_fallthru
        _
      // Predicated region
      $region21: #{forward.7} parent=11 // pred_check
        %p146 = pneg %p99
      $region22: #{forward.7} parent=11 // pred_check_branch
        %148 = sbr.rel (%p146) target = $region24
      $region23: #{forward.7} parent=11 // pred_region
        _
      $region24: #{forward.7} parent=11 // pred_fallthru
        _
    $region12: #{forward.7} parent=5 // pred_fallthru
      _
    %p149 = scmp.lt.s32.totalorder %s10, 2
    // Predicated region
    $region25: #{forward.7} parent=5 // pred_check
      %p150 = pneg %p149
    $region26: #{forward.7} parent=5 // pred_check_branch
      %152 = sbr.rel (%p150) target = $region28
    $region27: #{forward.7} parent=5 // pred_region
      // Predicated region
      $region29: #{forward.7} parent=27 // pred_check
        %p153 = pneg %p30
      $region30: #{forward.7} parent=27 // pred_check_branch
        %155 = sbr.rel (%p153) target = $region32
      $region31: #{forward.7} parent=27 // pred_region
        %p156 = scmp.lt.s32.totalorder %s10, 1
        %s157 = scalar_select %p156, %s10, 1
        %s158 = smul.addr %s157, 18
        %s159 = smul.addr %s158, 4
        %s160 = scalar_lea.vmem %s0, %s159
      $region32: #{forward.7} parent=27 // pred_fallthru
        _
    $region28: #{forward.7} parent=5 // pred_fallthru
      _
    %p161 = scmp.le.s32.totalorder 1, %s10
    %p162 = scmp.lt.s32.totalorder %s10, 3
    %p163 = pnand %p161, %p162
    %p164 = pneg %p163
    // Predicated region
    $region33: #{forward.7} parent=5 // pred_check
      _
    $region34: #{forward.7} parent=5 // pred_check_branch
      %166 = sbr.rel (%p163) target = $region36
    $region35: #{forward.7} parent=5 // pred_region
      %s167 = ssub.s32 %s10, 1
      %p168 = scmp.lt.s32.totalorder %s15, 1
      %s169 = scalar_select %p168, %s15, 1
      %s170 = smul.addr %s169, 18
      %s171 = smul.addr %s170, 4
      %s172 = scalar_lea.vmem %s0, %s171
      %p173 = pneg %p36
      %p174 = pneg %p33
      %p175 = pneg %p57
      %p176 = pneg %p54
      %p177 = pneg %p78
      %p178 = pneg %p75
      %p179 = pneg %p99
      %p180 = pneg %p96
      %p181 = pneg %p125
      %p182 = pneg %p122
      %p183 = scmp.lt.s32.totalorder %s15, 1
      %s184 = scalar_select %p183, %s15, 1
      %s185 = smul.addr %s184, 6
      %s186 = smul.addr %s185, 4
      %s187 = scalar_lea.vmem %s4, %s186
      %p188 = scmp.lt.s32.totalorder %s15, 1
      %s189 = scalar_select %p188, %s15, 1
      %s190 = smul.addr %s189, 18
      %s191 = smul.addr %s190, 4
      %s192 = scalar_lea.vmem %s0, %s191
      %p193 = scmp.lt.s32.totalorder %s15, 1
      %s194 = scalar_select %p193, %s15, 1
      %s195 = smul.addr %s194, 6
      %s196 = smul.addr %s195, 4
      %s197 = scalar_lea.vmem %s4, %s196
      %v199 = vld [vmem:[%s192] sm:$0xff]
      %v200 = vld [vmem:[%s192 + $0x8] sm:$0xf]
      %v201 = vld [vmem:[%s192 + $0xc] sm:$0xff]
      %v202 = vld [vmem:[%s192 + $0x14] sm:$0xf]
      %v203 = vld [vmem:[%s192 + $0x18] sm:$0xff]
      %v204 = vld [vmem:[%s192 + $0x20] sm:$0xf]
      %v205 = vld [vmem:[%s192 + $0x24] sm:$0xff]
      %v206 = vld [vmem:[%s192 + $0x2c] sm:$0xf]
      %v207 = vld [vmem:[%s192 + $0x30] sm:$0xff]
      %v208 = vld [vmem:[%s192 + $0x38] sm:$0xf]
      %v209 = vld [vmem:[%s192 + $0x3c] sm:$0x33]
      %v210 = vld [vmem:[%s192 + $0x44] sm:$0x3]
      %v211 = vld [vmem:[%s1] sm:$0xff]
      %v212 = vld [vmem:[%s1 + $0x8] sm:$0xff]
      %v213 = vld [vmem:[%s1 + $0x10] sm:$0xff]
      %v214 = vld [vmem:[%s1 + $0x18] sm:$0xff]
      %v215 = vld [vmem:[%s1 + $0x20] sm:$0xff]
      %v216 = vld [vmem:[%s1 + $0x28] sm:$0xff]
      %v217 = vld [vmem:[%s1 + $0x30] sm:$0xff]
      %v218 = vld [vmem:[%s1 + $0x38] sm:$0xff]
      %v219 = vld [vmem:[%s1 + $0x40] sm:$0xff]
      %v220 = vld [vmem:[%s1 + $0x48] sm:$0xff]
      %v221 = vld [vmem:[%s1 + $0x50] sm:$0xff]
      %v222 = vld [vmem:[%s1 + $0x58] sm:$0xff]
      %v223 = vld [vmem:[%s1 + $0x60] sm:$0xff]
      %v224 = vld [vmem:[%s1 + $0x68] sm:$0xff]
      %v225 = vld [vmem:[%s1 + $0x70] sm:$0xff]
      %v226 = vld [vmem:[%s1 + $0x78] sm:$0xff]
      %v227 = vld [vmem:[%s1 + $0x80] sm:$0xff]
      %v228 = vld [vmem:[%s1 + $0x88] sm:$0xff]
      %v229 = vld [vmem:[%s1 + $0x90] sm:$0xff]
      %v230 = vld [vmem:[%s1 + $0x98] sm:$0xff]
      %v231 = vld [vmem:[%s1 + $0xa0] sm:$0xff]
      %v232 = vld [vmem:[%s1 + $0xa8] sm:$0xff]
      %v233 = vld [vmem:[%s1 + $0xb0] sm:$0xff]
      %v234 = vld [vmem:[%s1 + $0xb8] sm:$0xff]
      %v235 = vld [vmem:[%s1 + $0xc0] sm:$0xff]
      %v236 = vld [vmem:[%s1 + $0xc8] sm:$0xff]
      %v237 = vld [vmem:[%s1 + $0xd0] sm:$0xff]
      %v238 = vld [vmem:[%s1 + $0xd8] sm:$0xff]
      %v239 = vld [vmem:[%s1 + $0xe0] sm:$0xff]
      %v240 = vld [vmem:[%s1 + $0xe8] sm:$0xff]
      %v241 = vld [vmem:[%s1 + $0xf0] sm:$0xff]
      %v242 = vld [vmem:[%s1 + $0xf8] sm:$0xff]
      %v243 = vld [vmem:[%s1 + $0x100] sm:$0xff]
      %v244 = vld [vmem:[%s1 + $0x108] sm:$0xff]
      %v245 = vld [vmem:[%s1 + $0x110] sm:$0xff]
      %v246 = vld [vmem:[%s1 + $0x118] sm:$0xff]
      %v247 = vld [vmem:[%s1 + $0x120] sm:$0xff]
      %v248 = vld [vmem:[%s1 + $0x128] sm:$0xff]
      %v249 = vld [vmem:[%s1 + $0x130] sm:$0xff]
      %v250 = vld [vmem:[%s1 + $0x138] sm:$0xff]
      %v251 = vld [vmem:[%s1 + $0x140] sm:$0xff]
      %v252 = vld [vmem:[%s1 + $0x148] sm:$0xff]
      %v253 = vld [vmem:[%s1 + $0x150] sm:$0xff]
      %v254 = vld [vmem:[%s1 + $0x158] sm:$0xff]
      %v255 = vld [vmem:[%s1 + $0x160] sm:$0xff]
      %v256 = vld [vmem:[%s1 + $0x168] sm:$0xff]
      %v257 = vld [vmem:[%s1 + $0x170] sm:$0xff]
      %v258 = vld [vmem:[%s1 + $0x178] sm:$0xff]
      %v259 = vld [vmem:[%s1 + $0x180] sm:$0xff]
      %v260 = vld [vmem:[%s1 + $0x188] sm:$0xff]
      %v261 = vld [vmem:[%s1 + $0x190] sm:$0xff]
      %v262 = vld [vmem:[%s1 + $0x198] sm:$0xff]
      %v263 = vld [vmem:[%s1 + $0x1a0] sm:$0xff]
      %v264 = vld [vmem:[%s1 + $0x1a8] sm:$0xff]
      %v265 = vld [vmem:[%s1 + $0x1b0] sm:$0xff]
      %v266 = vld [vmem:[%s1 + $0x1b8] sm:$0xff]
      %v267 = vld [vmem:[%s1 + $0x1c0] sm:$0xff]
      %v268 = vld [vmem:[%s1 + $0x1c8] sm:$0xff]
      %v269 = vld [vmem:[%s1 + $0x1d0] sm:$0xff]
      %v270 = vld [vmem:[%s1 + $0x1d8] sm:$0xff]
      %v271 = vld [vmem:[%s1 + $0x1e0] sm:$0xff]
      %v272 = vld [vmem:[%s1 + $0x1e8] sm:$0xff]
      %v273 = vld [vmem:[%s1 + $0x1f0] sm:$0xff]
      %v274 = vld [vmem:[%s1 + $0x1f8] sm:$0xff]
      %v275 = vld [vmem:[%s1 + $0x200] sm:$0xff]
      %v276 = vld [vmem:[%s1 + $0x208] sm:$0xff]
      %v277 = vld [vmem:[%s1 + $0x210] sm:$0xff]
      %v278 = vld [vmem:[%s1 + $0x218] sm:$0xff]
      %v279 = vld [vmem:[%s1 + $0x220] sm:$0xff]
      %v280 = vld [vmem:[%s1 + $0x228] sm:$0xff]
      %v281 = vld [vmem:[%s1 + $0x230] sm:$0xff]
      %v282 = vld [vmem:[%s1 + $0x238] sm:$0xff]
      %v283 = vld [vmem:[%s1 + $0x240] sm:$0xff]
      %v284 = vld [vmem:[%s1 + $0x248] sm:$0xff]
      %v285 = vld [vmem:[%s1 + $0x250] sm:$0xff]
      %v286 = vld [vmem:[%s1 + $0x258] sm:$0xff]
      %v287 = vld [vmem:[%s1 + $0x260] sm:$0xff]
      %v288 = vld [vmem:[%s1 + $0x268] sm:$0xff]
      %v289 = vld [vmem:[%s1 + $0x270] sm:$0xff]
      %v290 = vld [vmem:[%s1 + $0x278] sm:$0xff]
      %v291 = vld [vmem:[%s1 + $0x280] sm:$0xff]
      %v292 = vld [vmem:[%s1 + $0x288] sm:$0xff]
      %v293 = vld [vmem:[%s1 + $0x290] sm:$0xff]
      %v294 = vld [vmem:[%s1 + $0x298] sm:$0xff]
      %v295 = vld [vmem:[%s1 + $0x2a0] sm:$0xff]
      %v296 = vld [vmem:[%s1 + $0x2a8] sm:$0xff]
      %v297 = vld [vmem:[%s1 + $0x2b0] sm:$0xff]
      %v298 = vld [vmem:[%s1 + $0x2b8] sm:$0xff]
      %v299 = vld [vmem:[%s1 + $0x2c0] sm:$0xff]
      %v300 = vld [vmem:[%s1 + $0x2c8] sm:$0xff]
      %v301 = vld [vmem:[%s1 + $0x2d0] sm:$0xff]
      %v302 = vld [vmem:[%s1 + $0x2d8] sm:$0xff]
      %v303 = vld [vmem:[%s1 + $0x2e0] sm:$0xff]
      %v304 = vld [vmem:[%s1 + $0x2e8] sm:$0xff]
      %v305 = vld [vmem:[%s1 + $0x2f0] sm:$0xff]
      %v306 = vld [vmem:[%s1 + $0x2f8] sm:$0xff]
      %v307 = vld [vmem:[%s192 + $0x3c] sm:$0x77]
      %v308 = vld [vmem:[%s192 + $0x44] sm:$0x7]
      %s309 = scalar_lea.vmem %s1, 768
      %v310 = vld [vmem:[%s309] sm:$0xff]
      %v311 = vld [vmem:[%s309 + $0x8] sm:$0xff]
      %v312 = vld [vmem:[%s309 + $0x10] sm:$0xff]
      %v313 = vld [vmem:[%s309 + $0x18] sm:$0xff]
      %v314 = vld [vmem:[%s309 + $0x20] sm:$0xff]
      %v315 = vld [vmem:[%s309 + $0x28] sm:$0xff]
      %v316 = vld [vmem:[%s309 + $0x30] sm:$0xff]
      %v317 = vld [vmem:[%s309 + $0x38] sm:$0xff]
      %v318 = vld [vmem:[%s309 + $0x40] sm:$0xff]
      %v319 = vld [vmem:[%s309 + $0x48] sm:$0xff]
      %v320 = vld [vmem:[%s309 + $0x50] sm:$0xff]
      %v321 = vld [vmem:[%s309 + $0x58] sm:$0xff]
      %v322 = vld [vmem:[%s309 + $0x60] sm:$0xff]
      %v323 = vld [vmem:[%s309 + $0x68] sm:$0xff]
      %v324 = vld [vmem:[%s309 + $0x70] sm:$0xff]
      %v325 = vld [vmem:[%s309 + $0x78] sm:$0xff]
      %v326 = vld [vmem:[%s309 + $0x80] sm:$0xff]
      %v327 = vld [vmem:[%s309 + $0x88] sm:$0xff]
      %v328 = vld [vmem:[%s309 + $0x90] sm:$0xff]
      %v329 = vld [vmem:[%s309 + $0x98] sm:$0xff]
      %v330 = vld [vmem:[%s309 + $0xa0] sm:$0xff]
      %v331 = vld [vmem:[%s309 + $0xa8] sm:$0xff]
      %v332 = vld [vmem:[%s309 + $0xb0] sm:$0xff]
      %v333 = vld [vmem:[%s309 + $0xb8] sm:$0xff]
      %v334 = vld [vmem:[%s309 + $0xc0] sm:$0xff]
      %v335 = vld [vmem:[%s309 + $0xc8] sm:$0xff]
      %v336 = vld [vmem:[%s309 + $0xd0] sm:$0xff]
      %v337 = vld [vmem:[%s309 + $0xd8] sm:$0xff]
      %v338 = vld [vmem:[%s309 + $0xe0] sm:$0xff]
      %v339 = vld [vmem:[%s309 + $0xe8] sm:$0xff]
      %v340 = vld [vmem:[%s309 + $0xf0] sm:$0xff]
      %v341 = vld [vmem:[%s309 + $0xf8] sm:$0xff]
      %v342 = vld [vmem:[%s309 + $0x100] sm:$0xff]
      %v343 = vld [vmem:[%s309 + $0x108] sm:$0xff]
      %v344 = vld [vmem:[%s309 + $0x110] sm:$0xff]
      %v345 = vld [vmem:[%s309 + $0x118] sm:$0xff]
      %v346 = vld [vmem:[%s309 + $0x120] sm:$0xff]
      %v347 = vld [vmem:[%s309 + $0x128] sm:$0xff]
      %v348 = vld [vmem:[%s309 + $0x130] sm:$0xff]
      %v349 = vld [vmem:[%s309 + $0x138] sm:$0xff]
      %v350 = vld [vmem:[%s309 + $0x140] sm:$0xff]
      %v351 = vld [vmem:[%s309 + $0x148] sm:$0xff]
      %v352 = vld [vmem:[%s309 + $0x150] sm:$0xff]
      %v353 = vld [vmem:[%s309 + $0x158] sm:$0xff]
      %v354 = vld [vmem:[%s309 + $0x160] sm:$0xff]
      %v355 = vld [vmem:[%s309 + $0x168] sm:$0xff]
      %v356 = vld [vmem:[%s309 + $0x170] sm:$0xff]
      %v357 = vld [vmem:[%s309 + $0x178] sm:$0xff]
      %v358 = vld [vmem:[%s309 + $0x180] sm:$0xff]
      %v359 = vld [vmem:[%s309 + $0x188] sm:$0xff]
      %v360 = vld [vmem:[%s309 + $0x190] sm:$0xff]
      %v361 = vld [vmem:[%s309 + $0x198] sm:$0xff]
      %v362 = vld [vmem:[%s309 + $0x1a0] sm:$0xff]
      %v363 = vld [vmem:[%s309 + $0x1a8] sm:$0xff]
      %v364 = vld [vmem:[%s309 + $0x1b0] sm:$0xff]
      %v365 = vld [vmem:[%s309 + $0x1b8] sm:$0xff]
      %v366 = vld [vmem:[%s309 + $0x1c0] sm:$0xff]
      %v367 = vld [vmem:[%s309 + $0x1c8] sm:$0xff]
      %v368 = vld [vmem:[%s309 + $0x1d0] sm:$0xff]
      %v369 = vld [vmem:[%s309 + $0x1d8] sm:$0xff]
      %v370 = vld [vmem:[%s309 + $0x1e0] sm:$0xff]
      %v371 = vld [vmem:[%s309 + $0x1e8] sm:$0xff]
      %v372 = vld [vmem:[%s309 + $0x1f0] sm:$0xff]
      %v373 = vld [vmem:[%s309 + $0x1f8] sm:$0xff]
      %v374 = vld [vmem:[%s309 + $0x200] sm:$0xff]
      %v375 = vld [vmem:[%s309 + $0x208] sm:$0xff]
      %v376 = vld [vmem:[%s309 + $0x210] sm:$0xff]
      %v377 = vld [vmem:[%s309 + $0x218] sm:$0xff]
      %v378 = vld [vmem:[%s309 + $0x220] sm:$0xff]
      %v379 = vld [vmem:[%s309 + $0x228] sm:$0xff]
      %v380 = vld [vmem:[%s309 + $0x230] sm:$0xff]
      %v381 = vld [vmem:[%s309 + $0x238] sm:$0xff]
      %v382 = vld [vmem:[%s309 + $0x240] sm:$0xff]
      %v383 = vld [vmem:[%s309 + $0x248] sm:$0xff]
      %v384 = vld [vmem:[%s309 + $0x250] sm:$0xff]
      %v385 = vld [vmem:[%s309 + $0x258] sm:$0xff]
      %v386 = vld [vmem:[%s309 + $0x260] sm:$0xff]
      %v387 = vld [vmem:[%s309 + $0x268] sm:$0xff]
      %v388 = vld [vmem:[%s309 + $0x270] sm:$0xff]
      %v389 = vld [vmem:[%s309 + $0x278] sm:$0xff]
      %v390 = vld [vmem:[%s309 + $0x280] sm:$0xff]
      %v391 = vld [vmem:[%s309 + $0x288] sm:$0xff]
      %v392 = vld [vmem:[%s309 + $0x290] sm:$0xff]
      %v393 = vld [vmem:[%s309 + $0x298] sm:$0xff]
      %v394 = vld [vmem:[%s309 + $0x2a0] sm:$0xff]
      %v395 = vld [vmem:[%s309 + $0x2a8] sm:$0xff]
      %v396 = vld [vmem:[%s309 + $0x2b0] sm:$0xff]
      %v397 = vld [vmem:[%s309 + $0x2b8] sm:$0xff]
      %v398 = vld [vmem:[%s309 + $0x2c0] sm:$0xff]
      %v399 = vld [vmem:[%s309 + $0x2c8] sm:$0xff]
      %v400 = vld [vmem:[%s309 + $0x2d0] sm:$0xff]
      %v401 = vld [vmem:[%s309 + $0x2d8] sm:$0xff]
      %v402 = vld [vmem:[%s309 + $0x2e0] sm:$0xff]
      %v403 = vld [vmem:[%s309 + $0x2e8] sm:$0xff]
      %v404 = vld [vmem:[%s309 + $0x2f0] sm:$0xff]
      %v405 = vld [vmem:[%s309 + $0x2f8] sm:$0xff]
      %v418 = vunpack.c.l.b16 %v199
      %v419 = vunpack.c.h.b16 %v199
      %v420 = vunpack.c.l.b16 %v200
      %v421 = vunpack.c.l.b16 %v201
      %v422 = vunpack.c.h.b16 %v201
      %v423 = vunpack.c.l.b16 %v202
      %v424 = vunpack.c.l.b16 %v203
      %v425 = vunpack.c.h.b16 %v203
      %v426 = vunpack.c.l.b16 %v204
      %v427 = vunpack.c.l.b16 %v205
      %v428 = vunpack.c.h.b16 %v205
      %v429 = vunpack.c.l.b16 %v206
      %v430 = vunpack.c.l.b16 %v207
      %v431 = vunpack.c.h.b16 %v207
      %v432 = vunpack.c.l.b16 %v208
      %v433 = vunpack.c.l.b16 %v307
      %v434 = vunpack.c.h.b16 %v307
      %v435 = vunpack.c.l.b16 %v308
      %v436 = vpack.c.b16 %v421, %v418
      %v437 = vpack.c.b16 %v422, %v419
      %v438 = vpack.c.b16 %v423, %v420
      %v439 = vpack.c.b16 %v427, %v424
      %v440 = vpack.c.b16 %v428, %v425
      %v441 = vpack.c.b16 %v429, %v426
      %v442 = vpack.c.b16 %v433, %v430
      %v443 = vpack.c.b16 %v434, %v431
      %v444 = vpack.c.b16 %v435, %v432
      %vm445 = vsmask.f32 7424
      %v447 = vshrl.u32 %v436, 16
      %v449 = vshll.u32 %v436, 16
      %v451 = vrot.slane %v449, 1
      %v452 = vor.u32 %v447, %v451
      %v454 = vshll.u32 %v439, 16
      %v456 = vrot.slane %v454, 1
      %v457 = vsel %vm445, %v452, %v456
      %v459 = vshrl.u32 %v437, 16
      %v461 = vshll.u32 %v437, 16
      %v463 = vrot.slane %v461, 1
      %v464 = vor.u32 %v459, %v463
      %v466 = vshll.u32 %v440, 16
      %v468 = vrot.slane %v466, 1
      %v469 = vsel %vm445, %v464, %v468
      %v471 = vshrl.u32 %v438, 16
      %v473 = vshll.u32 %v438, 16
      %v475 = vrot.slane %v473, 1
      %v476 = vor.u32 %v471, %v475
      %v478 = vshll.u32 %v441, 16
      %v480 = vrot.slane %v478, 1
      %v481 = vsel %vm445, %v476, %v480
      %v482 = vshrl.u32 %v439, 16
      %v484 = vor.u32 %v482, %v456
      %v486 = vshll.u32 %v442, 16
      %v488 = vrot.slane %v486, 1
      %v489 = vsel %vm445, %v484, %v488
      %v490 = vshrl.u32 %v440, 16
      %v492 = vor.u32 %v490, %v468
      %v494 = vshll.u32 %v443, 16
      %v496 = vrot.slane %v494, 1
      %v497 = vsel %vm445, %v492, %v496
      %v498 = vshrl.u32 %v441, 16
      %v500 = vor.u32 %v498, %v480
      %v502 = vshll.u32 %v444, 16
      %v504 = vrot.slane %v502, 1
      %v505 = vsel %vm445, %v500, %v504
      %v506 = vshrl.u32 %v442, 16
      %v508 = vor.u32 %v506, %v488
      %v509 = vshrl.u32 %v443, 16
      %v511 = vor.u32 %v509, %v496
      %v512 = vshrl.u32 %v444, 16
      %v514 = vor.u32 %v512, %v504
      %v620 = vunpack.c.l.b16 %v310
      %v621 = vunpack.c.h.b16 %v310
      %v622 = vunpack.c.l.b16 %v311
      %v623 = vunpack.c.h.b16 %v311
      %v624 = vunpack.c.l.b16 %v312
      %v625 = vunpack.c.h.b16 %v312
      %v626 = vunpack.c.l.b16 %v313
      %v627 = vunpack.c.h.b16 %v313
      %v628 = vunpack.c.l.b16 %v314
      %v629 = vunpack.c.h.b16 %v314
      %v630 = vunpack.c.l.b16 %v315
      %v631 = vunpack.c.h.b16 %v315
      %v632 = vunpack.c.l.b16 %v316
      %v633 = vunpack.c.h.b16 %v316
      %v634 = vunpack.c.l.b16 %v317
      %v635 = vunpack.c.h.b16 %v317
      %v636 = vunpack.c.l.b16 %v318
      %v637 = vunpack.c.h.b16 %v318
      %v638 = vunpack.c.l.b16 %v319
      %v639 = vunpack.c.h.b16 %v319
      %v640 = vunpack.c.l.b16 %v320
      %v641 = vunpack.c.h.b16 %v320
      %v642 = vunpack.c.l.b16 %v321
      %v643 = vunpack.c.h.b16 %v321
      %v644 = vunpack.c.l.b16 %v322
      %v645 = vunpack.c.h.b16 %v322
      %v646 = vunpack.c.l.b16 %v323
      %v647 = vunpack.c.h.b16 %v323
      %v648 = vunpack.c.l.b16 %v324
      %v649 = vunpack.c.h.b16 %v324
      %v650 = vunpack.c.l.b16 %v325
      %v651 = vunpack.c.h.b16 %v325
      %v652 = vunpack.c.l.b16 %v326
      %v653 = vunpack.c.h.b16 %v326
      %v654 = vunpack.c.l.b16 %v327
      %v655 = vunpack.c.h.b16 %v327
      %v656 = vunpack.c.l.b16 %v328
      %v657 = vunpack.c.h.b16 %v328
      %v658 = vunpack.c.l.b16 %v329
      %v659 = vunpack.c.h.b16 %v329
      %v660 = vunpack.c.l.b16 %v330
      %v661 = vunpack.c.h.b16 %v330
      %v662 = vunpack.c.l.b16 %v331
      %v663 = vunpack.c.h.b16 %v331
      %v664 = vunpack.c.l.b16 %v332
      %v665 = vunpack.c.h.b16 %v332
      %v666 = vunpack.c.l.b16 %v333
      %v667 = vunpack.c.h.b16 %v333
      %v668 = vunpack.c.l.b16 %v334
      %v669 = vunpack.c.h.b16 %v334
      %v670 = vunpack.c.l.b16 %v335
      %v671 = vunpack.c.h.b16 %v335
      %v672 = vunpack.c.l.b16 %v336
      %v673 = vunpack.c.h.b16 %v336
      %v674 = vunpack.c.l.b16 %v337
      %v675 = vunpack.c.h.b16 %v337
      %v676 = vunpack.c.l.b16 %v338
      %v677 = vunpack.c.h.b16 %v338
      %v678 = vunpack.c.l.b16 %v339
      %v679 = vunpack.c.h.b16 %v339
      %v680 = vunpack.c.l.b16 %v340
      %v681 = vunpack.c.h.b16 %v340
      %v682 = vunpack.c.l.b16 %v341
      %v683 = vunpack.c.h.b16 %v341
      %v684 = vunpack.c.l.b16 %v342
      %v685 = vunpack.c.h.b16 %v342
      %v686 = vunpack.c.l.b16 %v343
      %v687 = vunpack.c.h.b16 %v343
      %v688 = vunpack.c.l.b16 %v344
      %v689 = vunpack.c.h.b16 %v344
      %v690 = vunpack.c.l.b16 %v345
      %v691 = vunpack.c.h.b16 %v345
      %v692 = vunpack.c.l.b16 %v346
      %v693 = vunpack.c.h.b16 %v346
      %v694 = vunpack.c.l.b16 %v347
      %v695 = vunpack.c.h.b16 %v347
      %v696 = vunpack.c.l.b16 %v348
      %v697 = vunpack.c.h.b16 %v348
      %v698 = vunpack.c.l.b16 %v349
      %v699 = vunpack.c.h.b16 %v349
      %v700 = vunpack.c.l.b16 %v350
      %v701 = vunpack.c.h.b16 %v350
      %v702 = vunpack.c.l.b16 %v351
      %v703 = vunpack.c.h.b16 %v351
      %v704 = vunpack.c.l.b16 %v352
      %v705 = vunpack.c.h.b16 %v352
      %v706 = vunpack.c.l.b16 %v353
      %v707 = vunpack.c.h.b16 %v353
      %v708 = vunpack.c.l.b16 %v354
      %v709 = vunpack.c.h.b16 %v354
      %v710 = vunpack.c.l.b16 %v355
      %v711 = vunpack.c.h.b16 %v355
      %v712 = vunpack.c.l.b16 %v356
      %v713 = vunpack.c.h.b16 %v356
      %v714 = vunpack.c.l.b16 %v357
      %v715 = vunpack.c.h.b16 %v357
      %v716 = vunpack.c.l.b16 %v358
      %v717 = vunpack.c.h.b16 %v358
      %v718 = vunpack.c.l.b16 %v359
      %v719 = vunpack.c.h.b16 %v359
      %v720 = vunpack.c.l.b16 %v360
      %v721 = vunpack.c.h.b16 %v360
      %v722 = vunpack.c.l.b16 %v361
      %v723 = vunpack.c.h.b16 %v361
      %v724 = vunpack.c.l.b16 %v362
      %v725 = vunpack.c.h.b16 %v362
      %v726 = vunpack.c.l.b16 %v363
      %v727 = vunpack.c.h.b16 %v363
      %v728 = vunpack.c.l.b16 %v364
      %v729 = vunpack.c.h.b16 %v364
      %v730 = vunpack.c.l.b16 %v365
      %v731 = vunpack.c.h.b16 %v365
      %v732 = vunpack.c.l.b16 %v366
      %v733 = vunpack.c.h.b16 %v366
      %v734 = vunpack.c.l.b16 %v367
      %v735 = vunpack.c.h.b16 %v367
      %v736 = vunpack.c.l.b16 %v368
      %v737 = vunpack.c.h.b16 %v368
      %v738 = vunpack.c.l.b16 %v369
      %v739 = vunpack.c.h.b16 %v369
      %v740 = vunpack.c.l.b16 %v370
      %v741 = vunpack.c.h.b16 %v370
      %v742 = vunpack.c.l.b16 %v371
      %v743 = vunpack.c.h.b16 %v371
      %v744 = vunpack.c.l.b16 %v372
      %v745 = vunpack.c.h.b16 %v372
      %v746 = vunpack.c.l.b16 %v373
      %v747 = vunpack.c.h.b16 %v373
      %v748 = vunpack.c.l.b16 %v374
      %v749 = vunpack.c.h.b16 %v374
      %v750 = vunpack.c.l.b16 %v375
      %v751 = vunpack.c.h.b16 %v375
      %v752 = vunpack.c.l.b16 %v376
      %v753 = vunpack.c.h.b16 %v376
      %v754 = vunpack.c.l.b16 %v377
      %v755 = vunpack.c.h.b16 %v377
      %v756 = vunpack.c.l.b16 %v378
      %v757 = vunpack.c.h.b16 %v378
      %v758 = vunpack.c.l.b16 %v379
      %v759 = vunpack.c.h.b16 %v379
      %v760 = vunpack.c.l.b16 %v380
      %v761 = vunpack.c.h.b16 %v380
      %v762 = vunpack.c.l.b16 %v381
      %v763 = vunpack.c.h.b16 %v381
      %v764 = vunpack.c.l.b16 %v382
      %v765 = vunpack.c.h.b16 %v382
      %v766 = vunpack.c.l.b16 %v383
      %v767 = vunpack.c.h.b16 %v383
      %v768 = vunpack.c.l.b16 %v384
      %v769 = vunpack.c.h.b16 %v384
      %v770 = vunpack.c.l.b16 %v385
      %v771 = vunpack.c.h.b16 %v385
      %v772 = vunpack.c.l.b16 %v386
      %v773 = vunpack.c.h.b16 %v386
      %v774 = vunpack.c.l.b16 %v387
      %v775 = vunpack.c.h.b16 %v387
      %v776 = vunpack.c.l.b16 %v388
      %v777 = vunpack.c.h.b16 %v388
      %v778 = vunpack.c.l.b16 %v389
      %v779 = vunpack.c.h.b16 %v389
      %v780 = vunpack.c.l.b16 %v390
      %v781 = vunpack.c.h.b16 %v390
      %v782 = vunpack.c.l.b16 %v391
      %v783 = vunpack.c.h.b16 %v391
      %v784 = vunpack.c.l.b16 %v392
      %v785 = vunpack.c.h.b16 %v392
      %v786 = vunpack.c.l.b16 %v393
      %v787 = vunpack.c.h.b16 %v393
      %v788 = vunpack.c.l.b16 %v394
      %v789 = vunpack.c.h.b16 %v394
      %v790 = vunpack.c.l.b16 %v395
      %v791 = vunpack.c.h.b16 %v395
      %v792 = vunpack.c.l.b16 %v396
      %v793 = vunpack.c.h.b16 %v396
      %v794 = vunpack.c.l.b16 %v397
      %v795 = vunpack.c.h.b16 %v397
      %v796 = vunpack.c.l.b16 %v398
      %v797 = vunpack.c.h.b16 %v398
      %v798 = vunpack.c.l.b16 %v399
      %v799 = vunpack.c.h.b16 %v399
      %v800 = vunpack.c.l.b16 %v400
      %v801 = vunpack.c.h.b16 %v400
      %v802 = vunpack.c.l.b16 %v401
      %v803 = vunpack.c.h.b16 %v401
      %v804 = vunpack.c.l.b16 %v402
      %v805 = vunpack.c.h.b16 %v402
      %v806 = vunpack.c.l.b16 %v403
      %v807 = vunpack.c.h.b16 %v403
      %v808 = vunpack.c.l.b16 %v404
      %v809 = vunpack.c.h.b16 %v404
      %v810 = vunpack.c.l.b16 %v405
      %v811 = vunpack.c.h.b16 %v405
      %v812 = vpack.c.b16 %v624, %v620
      %v813 = vpack.c.b16 %v625, %v621
      %v814 = vpack.c.b16 %v626, %v622
      %v815 = vpack.c.b16 %v627, %v623
      %v816 = vpack.c.b16 %v632, %v628
      %v817 = vpack.c.b16 %v633, %v629
      %v818 = vpack.c.b16 %v634, %v630
      %v819 = vpack.c.b16 %v635, %v631
      %v820 = vpack.c.b16 %v640, %v636
      %v821 = vpack.c.b16 %v641, %v637
      %v822 = vpack.c.b16 %v642, %v638
      %v823 = vpack.c.b16 %v643, %v639
      %v824 = vpack.c.b16 %v648, %v644
      %v825 = vpack.c.b16 %v649, %v645
      %v826 = vpack.c.b16 %v650, %v646
      %v827 = vpack.c.b16 %v651, %v647
      %v828 = vpack.c.b16 %v656, %v652
      %v829 = vpack.c.b16 %v657, %v653
      %v830 = vpack.c.b16 %v658, %v654
      %v831 = vpack.c.b16 %v659, %v655
      %v832 = vpack.c.b16 %v664, %v660
      %v833 = vpack.c.b16 %v665, %v661
      %v834 = vpack.c.b16 %v666, %v662
      %v835 = vpack.c.b16 %v667, %v663
      %v836 = vpack.c.b16 %v672, %v668
      %v837 = vpack.c.b16 %v673, %v669
      %v838 = vpack.c.b16 %v674, %v670
      %v839 = vpack.c.b16 %v675, %v671
      %v840 = vpack.c.b16 %v680, %v676
      %v841 = vpack.c.b16 %v681, %v677
      %v842 = vpack.c.b16 %v682, %v678
      %v843 = vpack.c.b16 %v683, %v679
      %v844 = vpack.c.b16 %v688, %v684
      %v845 = vpack.c.b16 %v689, %v685
      %v846 = vpack.c.b16 %v690, %v686
      %v847 = vpack.c.b16 %v691, %v687
      %v848 = vpack.c.b16 %v696, %v692
      %v849 = vpack.c.b16 %v697, %v693
      %v850 = vpack.c.b16 %v698, %v694
      %v851 = vpack.c.b16 %v699, %v695
      %v852 = vpack.c.b16 %v704, %v700
      %v853 = vpack.c.b16 %v705, %v701
      %v854 = vpack.c.b16 %v706, %v702
      %v855 = vpack.c.b16 %v707, %v703
      %v856 = vpack.c.b16 %v712, %v708
      %v857 = vpack.c.b16 %v713, %v709
      %v858 = vpack.c.b16 %v714, %v710
      %v859 = vpack.c.b16 %v715, %v711
      %v860 = vpack.c.b16 %v720, %v716
      %v861 = vpack.c.b16 %v721, %v717
      %v862 = vpack.c.b16 %v722, %v718
      %v863 = vpack.c.b16 %v723, %v719
      %v864 = vpack.c.b16 %v728, %v724
      %v865 = vpack.c.b16 %v729, %v725
      %v866 = vpack.c.b16 %v730, %v726
      %v867 = vpack.c.b16 %v731, %v727
      %v868 = vpack.c.b16 %v736, %v732
      %v869 = vpack.c.b16 %v737, %v733
      %v870 = vpack.c.b16 %v738, %v734
      %v871 = vpack.c.b16 %v739, %v735
      %v872 = vpack.c.b16 %v744, %v740
      %v873 = vpack.c.b16 %v745, %v741
      %v874 = vpack.c.b16 %v746, %v742
      %v875 = vpack.c.b16 %v747, %v743
      %v876 = vpack.c.b16 %v752, %v748
      %v877 = vpack.c.b16 %v753, %v749
      %v878 = vpack.c.b16 %v754, %v750
      %v879 = vpack.c.b16 %v755, %v751
      %v880 = vpack.c.b16 %v760, %v756
      %v881 = vpack.c.b16 %v761, %v757
      %v882 = vpack.c.b16 %v762, %v758
      %v883 = vpack.c.b16 %v763, %v759
      %v884 = vpack.c.b16 %v768, %v764
      %v885 = vpack.c.b16 %v769, %v765
      %v886 = vpack.c.b16 %v770, %v766
      %v887 = vpack.c.b16 %v771, %v767
      %v888 = vpack.c.b16 %v776, %v772
      %v889 = vpack.c.b16 %v777, %v773
      %v890 = vpack.c.b16 %v778, %v774
      %v891 = vpack.c.b16 %v779, %v775
      %v892 = vpack.c.b16 %v784, %v780
      %v893 = vpack.c.b16 %v785, %v781
      %v894 = vpack.c.b16 %v786, %v782
      %v895 = vpack.c.b16 %v787, %v783
      %v896 = vpack.c.b16 %v792, %v788
      %v897 = vpack.c.b16 %v793, %v789
      %v898 = vpack.c.b16 %v794, %v790
      %v899 = vpack.c.b16 %v795, %v791
      %v900 = vpack.c.b16 %v800, %v796
      %v901 = vpack.c.b16 %v801, %v797
      %v902 = vpack.c.b16 %v802, %v798
      %v903 = vpack.c.b16 %v803, %v799
      %v904 = vpack.c.b16 %v808, %v804
      %v905 = vpack.c.b16 %v809, %v805
      %v906 = vpack.c.b16 %v810, %v806
      %v907 = vpack.c.b16 %v811, %v807
      %1004 = vmatprep.subr.bf16.mxu0 %v813
      %1005 = vmatpush1.bf16.msra.mxu0 %v812
      %1006 = vmatprep.subr.bf16.mxu0 %v817
      %1007 = vmatpush1.bf16.msra.mxu0 %v816
      %1008 = vmatprep.subr.bf16.mxu0 %v821
      %1009 = vmatpush1.bf16.msra.mxu0 %v820
      %1010 = vmatprep.subr.bf16.mxu0 %v825
      %1011 = vmatpush1.bf16.msra.mxu0 %v824
      %1012 = vmatprep.subr.bf16.mxu0 %v829
      %1013 = vmatpush1.bf16.msra.mxu0 %v828
      %1014 = vmatprep.subr.bf16.mxu0 %v833
      %1015 = vmatpush1.bf16.msra.mxu0 %v832
      %1016 = vmatprep.subr.bf16.mxu0 %v837
      %1017 = vmatpush1.bf16.msra.mxu0 %v836
      %1018 = vmatprep.subr.bf16.mxu0 %v841
      %1019 = vmatpush1.bf16.msra.mxu0 %v840
      %1020 = vmatprep.subr.bf16.mxu0 %v845
      %1021 = vmatpush1.bf16.msra.mxu0 %v844
      %1022 = vmatprep.subr.bf16.mxu0 %v849
      %1023 = vmatpush1.bf16.msra.mxu0 %v848
      %1024 = vmatprep.subr.bf16.mxu0 %v853
      %1025 = vmatpush1.bf16.msra.mxu0 %v852
      %1026 = vmatprep.subr.bf16.mxu0 %v857
      %1027 = vmatpush1.bf16.msra.mxu0 %v856
      %1028 = vmatprep.subr.bf16.mxu0 %v861
      %1029 = vmatpush1.bf16.msra.mxu0 %v860
      %1030 = vmatprep.subr.bf16.mxu0 %v865
      %1031 = vmatpush1.bf16.msra.mxu0 %v864
      %1032 = vmatprep.subr.bf16.mxu0 %v869
      %1033 = vmatpush1.bf16.msra.mxu0 %v868
      %1034 = vmatprep.subr.bf16.mxu0 %v873
      %1035 = vmatpush1.bf16.msra.mxu0 %v872
      %1036 = vmatprep.mubr.bf16.mxu0 %v469
      %1037 = vmatmul.mubr.bf16.gmra.mrb[0].mxu0 %v457
      %v1038 = vpop.f32.mrb[0].mxu0
      %v1039 = vadd.f32 0.0, %v1038
      %v1040 = vpop.f32.mrb[0].mxu0
      %v1041 = vadd.f32 0.0, %v1040
      %v1042 = vpop.f32.mrb[0].mxu0
      %v1043 = vadd.f32 0.0, %v1042
      %v1044 = vpop.f32.mrb[0].mxu0
      %v1045 = vadd.f32 0.0, %v1044
      %1046 = vmatprep.mubr.bf16.mxu0 %v497
      %1047 = vmatmul.mubr.bf16.gmra.mrb[0].mxu0 %v489
      %v1048 = vpop.f32.mrb[0].mxu0
      %v1049 = vadd.f32 0.0, %v1048
      %v1050 = vpop.f32.mrb[0].mxu0
      %v1051 = vadd.f32 0.0, %v1050
      %v1052 = vpop.f32.mrb[0].mxu0
      %v1053 = vadd.f32 0.0, %v1052
      %v1054 = vpop.f32.mrb[0].mxu0
      %v1055 = vadd.f32 0.0, %v1054
      %1056 = vmatprep.mubr.bf16.mxu0 %v511
      %1057 = vmatmul.mubr.bf16.gmra.mrb[0].mxu0 %v508
      %v1058 = vpop.f32.mrb[0].mxu0
      %v1059 = vadd.f32 0.0, %v1058
      %v1060 = vpop.f32.mrb[0].mxu0
      %v1061 = vadd.f32 0.0, %v1060
      %v1062 = vpop.f32.mrb[0].mxu0
      %v1063 = vadd.f32 0.0, %v1062
      %v1064 = vpop.f32.mrb[0].mxu0
      %v1065 = vadd.f32 0.0, %v1064
      %1066 = vdwg.mxu0
      %1067 = vmatprep.subr.bf16.mxu0 %v877
      %1068 = vmatpush1.bf16.msra.mxu0 %v876
      %1069 = vmatprep.subr.bf16.mxu0 %v881
      %1070 = vmatpush1.bf16.msra.mxu0 %v880
      %1071 = vmatprep.subr.bf16.mxu0 %v885
      %1072 = vmatpush1.bf16.msra.mxu0 %v884
      %1073 = vmatprep.subr.bf16.mxu0 %v889
      %1074 = vmatpush1.bf16.msra.mxu0 %v888
      %1075 = vmatprep.subr.bf16.mxu0 %v893
      %1076 = vmatpush1.bf16.msra.mxu0 %v892
      %1077 = vmatprep.subr.bf16.mxu0 %v897
      %1078 = vmatpush1.bf16.msra.mxu0 %v896
      %1079 = vmatprep.subr.bf16.mxu0 %v901
      %1080 = vmatpush1.bf16.msra.mxu0 %v900
      %1081 = vmatprep.subr.bf16.mxu0 %v905
      %1082 = vmatpush1.bf16.msra.mxu0 %v904
      %1083 = vmatprep.subr.bf16.mxu0 0
      %1084 = vmatpush1.bf16.msra.mxu0 0
      %1085 = vmatprep.subr.bf16.mxu0 0
      %1086 = vmatpush1.bf16.msra.mxu0 0
      %1087 = vmatprep.subr.bf16.mxu0 0
      %1088 = vmatpush1.bf16.msra.mxu0 0
      %1089 = vmatprep.subr.bf16.mxu0 0
      %1090 = vmatpush1.bf16.msra.mxu0 0
      %1091 = vmatprep.subr.bf16.mxu0 0
      %1092 = vmatpush1.bf16.msra.mxu0 0
      %1093 = vmatprep.subr.bf16.mxu0 0
      %1094 = vmatpush1.bf16.msra.mxu0 0
      %1095 = vmatprep.subr.bf16.mxu0 0
      %1096 = vmatpush1.bf16.msra.mxu0 0
      %1097 = vmatprep.subr.bf16.mxu0 0
      %1098 = vmatpush1.bf16.msra.mxu0 0
      %1099 = vmatprep.mubr.bf16.mxu0 0
      %1100 = vmatmul.mubr.bf16.gmra.mrb[0].mxu0 %v481
      %v1101 = vpop.f32.mrb[0].mxu0
      %v1102 = vadd.f32 %v1039, %v1101
      %v1103 = vpop.f32.mrb[0].mxu0
      %v1104 = vadd.f32 %v1041, %v1103
      %v1105 = vpop.f32.mrb[0].mxu0
      %v1106 = vadd.f32 %v1043, %v1105
      %v1107 = vpop.f32.mrb[0].mxu0
      %v1108 = vadd.f32 %v1045, %v1107
      %1109 = vmatprep.mubr.bf16.mxu0 0
      %1110 = vmatmul.mubr.bf16.gmra.mrb[0].mxu0 %v505
      %v1111 = vpop.f32.mrb[0].mxu0
      %v1112 = vadd.f32 %v1049, %v1111
      %v1113 = vpop.f32.mrb[0].mxu0
      %v1114 = vadd.f32 %v1051, %v1113
      %v1115 = vpop.f32.mrb[0].mxu0
      %v1116 = vadd.f32 %v1053, %v1115
      %v1117 = vpop.f32.mrb[0].mxu0
      %v1118 = vadd.f32 %v1055, %v1117
      %1119 = vmatprep.mubr.bf16.mxu0 0
      %1120 = vmatmul.mubr.bf16.gmra.mrb[0].mxu0 %v514
      %v1121 = vpop.f32.mrb[0].mxu0
      %v1122 = vadd.f32 %v1059, %v1121
      %v1123 = vpop.f32.mrb[0].mxu0
      %v1124 = vadd.f32 %v1061, %v1123
      %v1125 = vpop.f32.mrb[0].mxu0
      %v1126 = vadd.f32 %v1063, %v1125
      %v1127 = vpop.f32.mrb[0].mxu0
      %v1128 = vadd.f32 %v1065, %v1127
      %1129 = vdwg.mxu0
      %1130 = vmatprep.subr.bf16.mxu0 %v815
      %1131 = vmatpush1.bf16.msra.mxu0 %v814
      %1132 = vmatprep.subr.bf16.mxu0 %v819
      %1133 = vmatpush1.bf16.msra.mxu0 %v818
      %1134 = vmatprep.subr.bf16.mxu0 %v823
      %1135 = vmatpush1.bf16.msra.mxu0 %v822
      %1136 = vmatprep.subr.bf16.mxu0 %v827
      %1137 = vmatpush1.bf16.msra.mxu0 %v826
      %1138 = vmatprep.subr.bf16.mxu0 %v831
      %1139 = vmatpush1.bf16.msra.mxu0 %v830
      %1140 = vmatprep.subr.bf16.mxu0 %v835
      %1141 = vmatpush1.bf16.msra.mxu0 %v834
      %1142 = vmatprep.subr.bf16.mxu0 %v839
      %1143 = vmatpush1.bf16.msra.mxu0 %v838
      %1144 = vmatprep.subr.bf16.mxu0 %v843
      %1145 = vmatpush1.bf16.msra.mxu0 %v842
      %1146 = vmatprep.subr.bf16.mxu0 %v847
      %1147 = vmatpush1.bf16.msra.mxu0 %v846
      %1148 = vmatprep.subr.bf16.mxu0 %v851
      %1149 = vmatpush1.bf16.msra.mxu0 %v850
      %1150 = vmatprep.subr.bf16.mxu0 %v855
      %1151 = vmatpush1.bf16.msra.mxu0 %v854
      %1152 = vmatprep.subr.bf16.mxu0 %v859
      %1153 = vmatpush1.bf16.msra.mxu0 %v858
      %1154 = vmatprep.subr.bf16.mxu0 %v863
      %1155 = vmatpush1.bf16.msra.mxu0 %v862
      %1156 = vmatprep.subr.bf16.mxu0 %v867
      %1157 = vmatpush1.bf16.msra.mxu0 %v866
      %1158 = vmatprep.subr.bf16.mxu0 %v871
      %1159 = vmatpush1.bf16.msra.mxu0 %v870
      %1160 = vmatprep.subr.bf16.mxu0 %v875
      %1161 = vmatpush1.bf16.msra.mxu0 %v874
      %1162 = vmatprep.mubr.bf16.mxu0 %v469
      %1163 = vmatmul.mubr.bf16.gmra.mrb[0].mxu0 %v457
      %v1164 = vpop.f32.mrb[0].mxu0
      %v1165 = vadd.f32 0.0, %v1164
      %v1166 = vpop.f32.mrb[0].mxu0
      %v1167 = vadd.f32 0.0, %v1166
      %v1168 = vpop.f32.mrb[0].mxu0
      %v1169 = vadd.f32 0.0, %v1168
      %v1170 = vpop.f32.mrb[0].mxu0
      %v1171 = vadd.f32 0.0, %v1170
      %1172 = vmatprep.mubr.bf16.mxu0 %v497
      %1173 = vmatmul.mubr.bf16.gmra.mrb[0].mxu0 %v489
      %v1174 = vpop.f32.mrb[0].mxu0
      %v1175 = vadd.f32 0.0, %v1174
      %v1176 = vpop.f32.mrb[0].mxu0
      %v1177 = vadd.f32 0.0, %v1176
      %v1178 = vpop.f32.mrb[0].mxu0
      %v1179 = vadd.f32 0.0, %v1178
      %v1180 = vpop.f32.mrb[0].mxu0
      %v1181 = vadd.f32 0.0, %v1180
      %1182 = vmatprep.mubr.bf16.mxu0 %v511
      %1183 = vmatmul.mubr.bf16.gmra.mrb[0].mxu0 %v508
      %v1184 = vpop.f32.mrb[0].mxu0
      %v1185 = vadd.f32 0.0, %v1184
      %v1186 = vpop.f32.mrb[0].mxu0
      %v1187 = vadd.f32 0.0, %v1186
      %v1188 = vpop.f32.mrb[0].mxu0
      %v1189 = vadd.f32 0.0, %v1188
      %v1190 = vpop.f32.mrb[0].mxu0
      %v1191 = vadd.f32 0.0, %v1190
      %1192 = vdwg.mxu0
      %1193 = vmatprep.subr.bf16.mxu0 %v879
      %1194 = vmatpush1.bf16.msra.mxu0 %v878
      %1195 = vmatprep.subr.bf16.mxu0 %v883
      %1196 = vmatpush1.bf16.msra.mxu0 %v882
      %1197 = vmatprep.subr.bf16.mxu0 %v887
      %1198 = vmatpush1.bf16.msra.mxu0 %v886
      %1199 = vmatprep.subr.bf16.mxu0 %v891
      %1200 = vmatpush1.bf16.msra.mxu0 %v890
      %1201 = vmatprep.subr.bf16.mxu0 %v895
      %1202 = vmatpush1.bf16.msra.mxu0 %v894
      %1203 = vmatprep.subr.bf16.mxu0 %v899
      %1204 = vmatpush1.bf16.msra.mxu0 %v898
      %1205 = vmatprep.subr.bf16.mxu0 %v903
      %1206 = vmatpush1.bf16.msra.mxu0 %v902
      %1207 = vmatprep.subr.bf16.mxu0 %v907
      %1208 = vmatpush1.bf16.msra.mxu0 %v906
      %1209 = vmatprep.subr.bf16.mxu0 0
      %1210 = vmatpush1.bf16.msra.mxu0 0
      %1211 = vmatprep.subr.bf16.mxu0 0
      %1212 = vmatpush1.bf16.msra.mxu0 0
      %1213 = vmatprep.subr.bf16.mxu0 0
      %1214 = vmatpush1.bf16.msra.mxu0 0
      %1215 = vmatprep.subr.bf16.mxu0 0
      %1216 = vmatpush1.bf16.msra.mxu0 0
      %1217 = vmatprep.subr.bf16.mxu0 0
      %1218 = vmatpush1.bf16.msra.mxu0 0
      %1219 = vmatprep.subr.bf16.mxu0 0
      %1220 = vmatpush1.bf16.msra.mxu0 0
      %1221 = vmatprep.subr.bf16.mxu0 0
      %1222 = vmatpush1.bf16.msra.mxu0 0
      %1223 = vmatprep.subr.bf16.mxu0 0
      %1224 = vmatpush1.bf16.msra.mxu0 0
      %1225 = vmatprep.mubr.bf16.mxu0 0
      %1226 = vmatmul.mubr.bf16.gmra.mrb[0].mxu0 %v481
      %v1227 = vpop.f32.mrb[0].mxu0
      %v1228 = vadd.f32 %v1165, %v1227
      %v1229 = vpop.f32.mrb[0].mxu0
      %v1230 = vadd.f32 %v1167, %v1229
      %v1231 = vpop.f32.mrb[0].mxu0
      %v1232 = vadd.f32 %v1169, %v1231
      %v1233 = vpop.f32.mrb[0].mxu0
      %v1234 = vadd.f32 %v1171, %v1233
      %1235 = vmatprep.mubr.bf16.mxu0 0
      %1236 = vmatmul.mubr.bf16.gmra.mrb[0].mxu0 %v505
      %v1237 = vpop.f32.mrb[0].mxu0
      %v1238 = vadd.f32 %v1175, %v1237
      %v1239 = vpop.f32.mrb[0].mxu0
      %v1240 = vadd.f32 %v1177, %v1239
      %v1241 = vpop.f32.mrb[0].mxu0
      %v1242 = vadd.f32 %v1179, %v1241
      %v1243 = vpop.f32.mrb[0].mxu0
      %v1244 = vadd.f32 %v1181, %v1243
      %1245 = vmatprep.mubr.bf16.mxu0 0
      %1246 = vmatmul.mubr.bf16.gmra.mrb[0].mxu0 %v514
      %v1247 = vpop.f32.mrb[0].mxu0
      %v1248 = vadd.f32 %v1185, %v1247
      %v1249 = vpop.f32.mrb[0].mxu0
      %v1250 = vadd.f32 %v1187, %v1249
      %v1251 = vpop.f32.mrb[0].mxu0
      %v1252 = vadd.f32 %v1189, %v1251
      %v1253 = vpop.f32.mrb[0].mxu0
      %v1254 = vadd.f32 %v1191, %v1253
      %1255 = vdwg.mxu0
      %v1258 = vunpack.c.l.b16 %v209
      %v1259 = vunpack.c.h.b16 %v209
      %v1260 = vunpack.c.l.b16 %v210
      %v1261 = vpack.c.b16 %v1258, %v430
      %v1262 = vpack.c.b16 %v1259, %v431
      %v1263 = vpack.c.b16 %v1260, %v432
      %v1369 = vunpack.c.l.b16 %v211
      %v1370 = vunpack.c.h.b16 %v211
      %v1371 = vunpack.c.l.b16 %v212
      %v1372 = vunpack.c.h.b16 %v212
      %v1373 = vunpack.c.l.b16 %v213
      %v1374 = vunpack.c.h.b16 %v213
      %v1375 = vunpack.c.l.b16 %v214
      %v1376 = vunpack.c.h.b16 %v214
      %v1377 = vunpack.c.l.b16 %v215
      %v1378 = vunpack.c.h.b16 %v215
      %v1379 = vunpack.c.l.b16 %v216
      %v1380 = vunpack.c.h.b16 %v216
      %v1381 = vunpack.c.l.b16 %v217
      %v1382 = vunpack.c.h.b16 %v217
      %v1383 = vunpack.c.l.b16 %v218
      %v1384 = vunpack.c.h.b16 %v218
      %v1385 = vunpack.c.l.b16 %v219
      %v1386 = vunpack.c.h.b16 %v219
      %v1387 = vunpack.c.l.b16 %v220
      %v1388 = vunpack.c.h.b16 %v220
      %v1389 = vunpack.c.l.b16 %v221
      %v1390 = vunpack.c.h.b16 %v221
      %v1391 = vunpack.c.l.b16 %v222
      %v1392 = vunpack.c.h.b16 %v222
      %v1393 = vunpack.c.l.b16 %v223
      %v1394 = vunpack.c.h.b16 %v223
      %v1395 = vunpack.c.l.b16 %v224
      %v1396 = vunpack.c.h.b16 %v224
      %v1397 = vunpack.c.l.b16 %v225
      %v1398 = vunpack.c.h.b16 %v225
      %v1399 = vunpack.c.l.b16 %v226
      %v1400 = vunpack.c.h.b16 %v226
      %v1401 = vunpack.c.l.b16 %v227
      %v1402 = vunpack.c.h.b16 %v227
      %v1403 = vunpack.c.l.b16 %v228
      %v1404 = vunpack.c.h.b16 %v228
      %v1405 = vunpack.c.l.b16 %v229
      %v1406 = vunpack.c.h.b16 %v229
      %v1407 = vunpack.c.l.b16 %v230
      %v1408 = vunpack.c.h.b16 %v230
      %v1409 = vunpack.c.l.b16 %v231
      %v1410 = vunpack.c.h.b16 %v231
      %v1411 = vunpack.c.l.b16 %v232
      %v1412 = vunpack.c.h.b16 %v232
      %v1413 = vunpack.c.l.b16 %v233
      %v1414 = vunpack.c.h.b16 %v233
      %v1415 = vunpack.c.l.b16 %v234
      %v1416 = vunpack.c.h.b16 %v234
      %v1417 = vunpack.c.l.b16 %v235
      %v1418 = vunpack.c.h.b16 %v235
      %v1419 = vunpack.c.l.b16 %v236
      %v1420 = vunpack.c.h.b16 %v236
      %v1421 = vunpack.c.l.b16 %v237
      %v1422 = vunpack.c.h.b16 %v237
      %v1423 = vunpack.c.l.b16 %v238
      %v1424 = vunpack.c.h.b16 %v238
      %v1425 = vunpack.c.l.b16 %v239
      %v1426 = vunpack.c.h.b16 %v239
      %v1427 = vunpack.c.l.b16 %v240
      %v1428 = vunpack.c.h.b16 %v240
      %v1429 = vunpack.c.l.b16 %v241
      %v1430 = vunpack.c.h.b16 %v241
      %v1431 = vunpack.c.l.b16 %v242
      %v1432 = vunpack.c.h.b16 %v242
      %v1433 = vunpack.c.l.b16 %v243
      %v1434 = vunpack.c.h.b16 %v243
      %v1435 = vunpack.c.l.b16 %v244
      %v1436 = vunpack.c.h.b16 %v244
      %v1437 = vunpack.c.l.b16 %v245
      %v1438 = vunpack.c.h.b16 %v245
      %v1439 = vunpack.c.l.b16 %v246
      %v1440 = vunpack.c.h.b16 %v246
      %v1441 = vunpack.c.l.b16 %v247
      %v1442 = vunpack.c.h.b16 %v247
      %v1443 = vunpack.c.l.b16 %v248
      %v1444 = vunpack.c.h.b16 %v248
      %v1445 = vunpack.c.l.b16 %v249
      %v1446 = vunpack.c.h.b16 %v249
      %v1447 = vunpack.c.l.b16 %v250
      %v1448 = vunpack.c.h.b16 %v250
      %v1449 = vunpack.c.l.b16 %v251
      %v1450 = vunpack.c.h.b16 %v251
      %v1451 = vunpack.c.l.b16 %v252
      %v1452 = vunpack.c.h.b16 %v252
      %v1453 = vunpack.c.l.b16 %v253
      %v1454 = vunpack.c.h.b16 %v253
      %v1455 = vunpack.c.l.b16 %v254
      %v1456 = vunpack.c.h.b16 %v254
      %v1457 = vunpack.c.l.b16 %v255
      %v1458 = vunpack.c.h.b16 %v255
      %v1459 = vunpack.c.l.b16 %v256
      %v1460 = vunpack.c.h.b16 %v256
      %v1461 = vunpack.c.l.b16 %v257
      %v1462 = vunpack.c.h.b16 %v257
      %v1463 = vunpack.c.l.b16 %v258
      %v1464 = vunpack.c.h.b16 %v258
      %v1465 = vunpack.c.l.b16 %v259
      %v1466 = vunpack.c.h.b16 %v259
      %v1467 = vunpack.c.l.b16 %v260
      %v1468 = vunpack.c.h.b16 %v260
      %v1469 = vunpack.c.l.b16 %v261
      %v1470 = vunpack.c.h.b16 %v261
      %v1471 = vunpack.c.l.b16 %v262
      %v1472 = vunpack.c.h.b16 %v262
      %v1473 = vunpack.c.l.b16 %v263
      %v1474 = vunpack.c.h.b16 %v263
      %v1475 = vunpack.c.l.b16 %v264
      %v1476 = vunpack.c.h.b16 %v264
      %v1477 = vunpack.c.l.b16 %v265
      %v1478 = vunpack.c.h.b16 %v265
      %v1479 = vunpack.c.l.b16 %v266
      %v1480 = vunpack.c.h.b16 %v266
      %v1481 = vunpack.c.l.b16 %v267
      %v1482 = vunpack.c.h.b16 %v267
      %v1483 = vunpack.c.l.b16 %v268
      %v1484 = vunpack.c.h.b16 %v268
      %v1485 = vunpack.c.l.b16 %v269
      %v1486 = vunpack.c.h.b16 %v269
      %v1487 = vunpack.c.l.b16 %v270
      %v1488 = vunpack.c.h.b16 %v270
      %v1489 = vunpack.c.l.b16 %v271
      %v1490 = vunpack.c.h.b16 %v271
      %v1491 = vunpack.c.l.b16 %v272
      %v1492 = vunpack.c.h.b16 %v272
      %v1493 = vunpack.c.l.b16 %v273
      %v1494 = vunpack.c.h.b16 %v273
      %v1495 = vunpack.c.l.b16 %v274
      %v1496 = vunpack.c.h.b16 %v274
      %v1497 = vunpack.c.l.b16 %v275
      %v1498 = vunpack.c.h.b16 %v275
      %v1499 = vunpack.c.l.b16 %v276
      %v1500 = vunpack.c.h.b16 %v276
      %v1501 = vunpack.c.l.b16 %v277
      %v1502 = vunpack.c.h.b16 %v277
      %v1503 = vunpack.c.l.b16 %v278
      %v1504 = vunpack.c.h.b16 %v278
      %v1505 = vunpack.c.l.b16 %v279
      %v1506 = vunpack.c.h.b16 %v279
      %v1507 = vunpack.c.l.b16 %v280
      %v1508 = vunpack.c.h.b16 %v280
      %v1509 = vunpack.c.l.b16 %v281
      %v1510 = vunpack.c.h.b16 %v281
      %v1511 = vunpack.c.l.b16 %v282
      %v1512 = vunpack.c.h.b16 %v282
      %v1513 = vunpack.c.l.b16 %v283
      %v1514 = vunpack.c.h.b16 %v283
      %v1515 = vunpack.c.l.b16 %v284
      %v1516 = vunpack.c.h.b16 %v284
      %v1517 = vunpack.c.l.b16 %v285
      %v1518 = vunpack.c.h.b16 %v285
      %v1519 = vunpack.c.l.b16 %v286
      %v1520 = vunpack.c.h.b16 %v286
      %v1521 = vunpack.c.l.b16 %v287
      %v1522 = vunpack.c.h.b16 %v287
      %v1523 = vunpack.c.l.b16 %v288
      %v1524 = vunpack.c.h.b16 %v288
      %v1525 = vunpack.c.l.b16 %v289
      %v1526 = vunpack.c.h.b16 %v289
      %v1527 = vunpack.c.l.b16 %v290
      %v1528 = vunpack.c.h.b16 %v290
      %v1529 = vunpack.c.l.b16 %v291
      %v1530 = vunpack.c.h.b16 %v291
      %v1531 = vunpack.c.l.b16 %v292
      %v1532 = vunpack.c.h.b16 %v292
      %v1533 = vunpack.c.l.b16 %v293
      %v1534 = vunpack.c.h.b16 %v293
      %v1535 = vunpack.c.l.b16 %v294
      %v1536 = vunpack.c.h.b16 %v294
      %v1537 = vunpack.c.l.b16 %v295
      %v1538 = vunpack.c.h.b16 %v295
      %v1539 = vunpack.c.l.b16 %v296
      %v1540 = vunpack.c.h.b16 %v296
      %v1541 = vunpack.c.l.b16 %v297
      %v1542 = vunpack.c.h.b16 %v297
      %v1543 = vunpack.c.l.b16 %v298
      %v1544 = vunpack.c.h.b16 %v298
      %v1545 = vunpack.c.l.b16 %v299
      %v1546 = vunpack.c.h.b16 %v299
      %v1547 = vunpack.c.l.b16 %v300
      %v1548 = vunpack.c.h.b16 %v300
      %v1549 = vunpack.c.l.b16 %v301
      %v1550 = vunpack.c.h.b16 %v301
      %v1551 = vunpack.c.l.b16 %v302
      %v1552 = vunpack.c.h.b16 %v302
      %v1553 = vunpack.c.l.b16 %v303
      %v1554 = vunpack.c.h.b16 %v303
      %v1555 = vunpack.c.l.b16 %v304
      %v1556 = vunpack.c.h.b16 %v304
      %v1557 = vunpack.c.l.b16 %v305
      %v1558 = vunpack.c.h.b16 %v305
      %v1559 = vunpack.c.l.b16 %v306
      %v1560 = vunpack.c.h.b16 %v306
      %v1561 = vpack.c.b16 %v1373, %v1369
      %v1562 = vpack.c.b16 %v1374, %v1370
      %v1563 = vpack.c.b16 %v1375, %v1371
      %v1564 = vpack.c.b16 %v1376, %v1372
      %v1565 = vpack.c.b16 %v1381, %v1377
      %v1566 = vpack.c.b16 %v1382, %v1378
      %v1567 = vpack.c.b16 %v1383, %v1379
      %v1568 = vpack.c.b16 %v1384, %v1380
      %v1569 = vpack.c.b16 %v1389, %v1385
      %v1570 = vpack.c.b16 %v1390, %v1386
      %v1571 = vpack.c.b16 %v1391, %v1387
      %v1572 = vpack.c.b16 %v1392, %v1388
      %v1573 = vpack.c.b16 %v1397, %v1393
      %v1574 = vpack.c.b16 %v1398, %v1394
      %v1575 = vpack.c.b16 %v1399, %v1395
      %v1576 = vpack.c.b16 %v1400, %v1396
      %v1577 = vpack.c.b16 %v1405, %v1401
      %v1578 = vpack.c.b16 %v1406, %v1402
      %v1579 = vpack.c.b16 %v1407, %v1403
      %v1580 = vpack.c.b16 %v1408, %v1404
      %v1581 = vpack.c.b16 %v1413, %v1409
      %v1582 = vpack.c.b16 %v1414, %v1410
      %v1583 = vpack.c.b16 %v1415, %v1411
      %v1584 = vpack.c.b16 %v1416, %v1412
      %v1585 = vpack.c.b16 %v1421, %v1417
      %v1586 = vpack.c.b16 %v1422, %v1418
      %v1587 = vpack.c.b16 %v1423, %v1419
      %v1588 = vpack.c.b16 %v1424, %v1420
      %v1589 = vpack.c.b16 %v1429, %v1425
      %v1590 = vpack.c.b16 %v1430, %v1426
      %v1591 = vpack.c.b16 %v1431, %v1427
      %v1592 = vpack.c.b16 %v1432, %v1428
      %v1593 = vpack.c.b16 %v1437, %v1433
      %v1594 = vpack.c.b16 %v1438, %v1434
      %v1595 = vpack.c.b16 %v1439, %v1435
      %v1596 = vpack.c.b16 %v1440, %v1436
      %v1597 = vpack.c.b16 %v1445, %v1441
      %v1598 = vpack.c.b16 %v1446, %v1442
      %v1599 = vpack.c.b16 %v1447, %v1443
      %v1600 = vpack.c.b16 %v1448, %v1444
      %v1601 = vpack.c.b16 %v1453, %v1449
      %v1602 = vpack.c.b16 %v1454, %v1450
      %v1603 = vpack.c.b16 %v1455, %v1451
      %v1604 = vpack.c.b16 %v1456, %v1452
      %v1605 = vpack.c.b16 %v1461, %v1457
      %v1606 = vpack.c.b16 %v1462, %v1458
      %v1607 = vpack.c.b16 %v1463, %v1459
      %v1608 = vpack.c.b16 %v1464, %v1460
      %v1609 = vpack.c.b16 %v1469, %v1465
      %v1610 = vpack.c.b16 %v1470, %v1466
      %v1611 = vpack.c.b16 %v1471, %v1467
      %v1612 = vpack.c.b16 %v1472, %v1468
      %v1613 = vpack.c.b16 %v1477, %v1473
      %v1614 = vpack.c.b16 %v1478, %v1474
      %v1615 = vpack.c.b16 %v1479, %v1475
      %v1616 = vpack.c.b16 %v1480, %v1476
      %v1617 = vpack.c.b16 %v1485, %v1481
      %v1618 = vpack.c.b16 %v1486, %v1482
      %v1619 = vpack.c.b16 %v1487, %v1483
      %v1620 = vpack.c.b16 %v1488, %v1484
      %v1621 = vpack.c.b16 %v1493, %v1489
      %v1622 = vpack.c.b16 %v1494, %v1490
      %v1623 = vpack.c.b16 %v1495, %v1491
      %v1624 = vpack.c.b16 %v1496, %v1492
      %v1625 = vpack.c.b16 %v1501, %v1497
      %v1626 = vpack.c.b16 %v1502, %v1498
      %v1627 = vpack.c.b16 %v1503, %v1499
      %v1628 = vpack.c.b16 %v1504, %v1500
      %v1629 = vpack.c.b16 %v1509, %v1505
      %v1630 = vpack.c.b16 %v1510, %v1506
      %v1631 = vpack.c.b16 %v1511, %v1507
      %v1632 = vpack.c.b16 %v1512, %v1508
      %v1633 = vpack.c.b16 %v1517, %v1513
      %v1634 = vpack.c.b16 %v1518, %v1514
      %v1635 = vpack.c.b16 %v1519, %v1515
      %v1636 = vpack.c.b16 %v1520, %v1516
      %v1637 = vpack.c.b16 %v1525, %v1521
      %v1638 = vpack.c.b16 %v1526, %v1522
      %v1639 = vpack.c.b16 %v1527, %v1523
      %v1640 = vpack.c.b16 %v1528, %v1524
      %v1641 = vpack.c.b16 %v1533, %v1529
      %v1642 = vpack.c.b16 %v1534, %v1530
      %v1643 = vpack.c.b16 %v1535, %v1531
      %v1644 = vpack.c.b16 %v1536, %v1532
      %v1645 = vpack.c.b16 %v1541, %v1537
      %v1646 = vpack.c.b16 %v1542, %v1538
      %v1647 = vpack.c.b16 %v1543, %v1539
      %v1648 = vpack.c.b16 %v1544, %v1540
      %v1649 = vpack.c.b16 %v1549, %v1545
      %v1650 = vpack.c.b16 %v1550, %v1546
      %v1651 = vpack.c.b16 %v1551, %v1547
      %v1652 = vpack.c.b16 %v1552, %v1548
      %v1653 = vpack.c.b16 %v1557, %v1553
      %v1654 = vpack.c.b16 %v1558, %v1554
      %v1655 = vpack.c.b16 %v1559, %v1555
      %v1656 = vpack.c.b16 %v1560, %v1556
      %1753 = vmatprep.subr.bf16.mxu0 %v1562
      %1754 = vmatpush1.bf16.msra.mxu0 %v1561
      %1755 = vmatprep.subr.bf16.mxu0 %v1566
      %1756 = vmatpush1.bf16.msra.mxu0 %v1565
      %1757 = vmatprep.subr.bf16.mxu0 %v1570
      %1758 = vmatpush1.bf16.msra.mxu0 %v1569
      %1759 = vmatprep.subr.bf16.mxu0 %v1574
      %1760 = vmatpush1.bf16.msra.mxu0 %v1573
      %1761 = vmatprep.subr.bf16.mxu0 %v1578
      %1762 = vmatpush1.bf16.msra.mxu0 %v1577
      %1763 = vmatprep.subr.bf16.mxu0 %v1582
      %1764 = vmatpush1.bf16.msra.mxu0 %v1581
      %1765 = vmatprep.subr.bf16.mxu0 %v1586
      %1766 = vmatpush1.bf16.msra.mxu0 %v1585
      %1767 = vmatprep.subr.bf16.mxu0 %v1590
      %1768 = vmatpush1.bf16.msra.mxu0 %v1589
      %1769 = vmatprep.subr.bf16.mxu0 %v1594
      %1770 = vmatpush1.bf16.msra.mxu0 %v1593
      %1771 = vmatprep.subr.bf16.mxu0 %v1598
      %1772 = vmatpush1.bf16.msra.mxu0 %v1597
      %1773 = vmatprep.subr.bf16.mxu0 %v1602
      %1774 = vmatpush1.bf16.msra.mxu0 %v1601
      %1775 = vmatprep.subr.bf16.mxu0 %v1606
      %1776 = vmatpush1.bf16.msra.mxu0 %v1605
      %1777 = vmatprep.subr.bf16.mxu0 %v1610
      %1778 = vmatpush1.bf16.msra.mxu0 %v1609
      %1779 = vmatprep.subr.bf16.mxu0 %v1614
      %1780 = vmatpush1.bf16.msra.mxu0 %v1613
      %1781 = vmatprep.subr.bf16.mxu0 %v1618
      %1782 = vmatpush1.bf16.msra.mxu0 %v1617
      %1783 = vmatprep.subr.bf16.mxu0 %v1622
      %1784 = vmatpush1.bf16.msra.mxu0 %v1621
      %1785 = vmatprep.mubr.bf16.mxu0 %v437
      %1786 = vmatmul.mubr.bf16.gmra.mrb[0].mxu0 %v436
      %v1787 = vpop.f32.mrb[0].mxu0
      %v1788 = vadd.f32 %v1102, %v1787
      %v1789 = vpop.f32.mrb[0].mxu0
      %v1790 = vadd.f32 %v1104, %v1789
      %v1791 = vpop.f32.mrb[0].mxu0
      %v1792 = vadd.f32 %v1106, %v1791
      %v1793 = vpop.f32.mrb[0].mxu0
      %v1794 = vadd.f32 %v1108, %v1793
      %1795 = vmatprep.mubr.bf16.mxu0 %v440
      %1796 = vmatmul.mubr.bf16.gmra.mrb[0].mxu0 %v439
      %v1797 = vpop.f32.mrb[0].mxu0
      %v1798 = vadd.f32 %v1112, %v1797
      %v1799 = vpop.f32.mrb[0].mxu0
      %v1800 = vadd.f32 %v1114, %v1799
      %v1801 = vpop.f32.mrb[0].mxu0
      %v1802 = vadd.f32 %v1116, %v1801
      %v1803 = vpop.f32.mrb[0].mxu0
      %v1804 = vadd.f32 %v1118, %v1803
      %1805 = vmatprep.mubr.bf16.mxu0 %v1262
      %1806 = vmatmul.mubr.bf16.gmra.mrb[0].mxu0 %v1261
      %v1807 = vpop.f32.mrb[0].mxu0
      %v1808 = vadd.f32 %v1122, %v1807
      %v1809 = vpop.f32.mrb[0].mxu0
      %v1810 = vadd.f32 %v1124, %v1809
      %v1811 = vpop.f32.mrb[0].mxu0
      %v1812 = vadd.f32 %v1126, %v1811
      %v1813 = vpop.f32.mrb[0].mxu0
      %v1814 = vadd.f32 %v1128, %v1813
      %1815 = vdwg.mxu0
      %1816 = vmatprep.subr.bf16.mxu0 %v1626
      %1817 = vmatpush1.bf16.msra.mxu0 %v1625
      %1818 = vmatprep.subr.bf16.mxu0 %v1630
      %1819 = vmatpush1.bf16.msra.mxu0 %v1629
      %1820 = vmatprep.subr.bf16.mxu0 %v1634
      %1821 = vmatpush1.bf16.msra.mxu0 %v1633
      %1822 = vmatprep.subr.bf16.mxu0 %v1638
      %1823 = vmatpush1.bf16.msra.mxu0 %v1637
      %1824 = vmatprep.subr.bf16.mxu0 %v1642
      %1825 = vmatpush1.bf16.msra.mxu0 %v1641
      %1826 = vmatprep.subr.bf16.mxu0 %v1646
      %1827 = vmatpush1.bf16.msra.mxu0 %v1645
      %1828 = vmatprep.subr.bf16.mxu0 %v1650
      %1829 = vmatpush1.bf16.msra.mxu0 %v1649
      %1830 = vmatprep.subr.bf16.mxu0 %v1654
      %1831 = vmatpush1.bf16.msra.mxu0 %v1653
      %1832 = vmatprep.subr.bf16.mxu0 0
      %1833 = vmatpush1.bf16.msra.mxu0 0
      %1834 = vmatprep.subr.bf16.mxu0 0
      %1835 = vmatpush1.bf16.msra.mxu0 0
      %1836 = vmatprep.subr.bf16.mxu0 0
      %1837 = vmatpush1.bf16.msra.mxu0 0
      %1838 = vmatprep.subr.bf16.mxu0 0
      %1839 = vmatpush1.bf16.msra.mxu0 0
      %1840 = vmatprep.subr.bf16.mxu0 0
      %1841 = vmatpush1.bf16.msra.mxu0 0
      %1842 = vmatprep.subr.bf16.mxu0 0
      %1843 = vmatpush1.bf16.msra.mxu0 0
      %1844 = vmatprep.subr.bf16.mxu0 0
      %1845 = vmatpush1.bf16.msra.mxu0 0
      %1846 = vmatprep.subr.bf16.mxu0 0
      %1847 = vmatpush1.bf16.msra.mxu0 0
      %1848 = vmatprep.mubr.bf16.mxu0 0
      %1849 = vmatmul.mubr.bf16.gmra.mrb[0].mxu0 %v438
      %v1850 = vpop.f32.mrb[0].mxu0
      %v1851 = vadd.f32 %v1788, %v1850
      %v1852 = vpop.f32.mrb[0].mxu0
      %v1853 = vadd.f32 %v1790, %v1852
      %v1854 = vpop.f32.mrb[0].mxu0
      %v1855 = vadd.f32 %v1792, %v1854
      %v1856 = vpop.f32.mrb[0].mxu0
      %v1857 = vadd.f32 %v1794, %v1856
      %1858 = vmatprep.mubr.bf16.mxu0 0
      %1859 = vmatmul.mubr.bf16.gmra.mrb[0].mxu0 %v441
      %v1860 = vpop.f32.mrb[0].mxu0
      %v1861 = vadd.f32 %v1798, %v1860
      %v1862 = vpop.f32.mrb[0].mxu0
      %v1863 = vadd.f32 %v1800, %v1862
      %v1864 = vpop.f32.mrb[0].mxu0
      %v1865 = vadd.f32 %v1802, %v1864
      %v1866 = vpop.f32.mrb[0].mxu0
      %v1867 = vadd.f32 %v1804, %v1866
      %1868 = vmatprep.mubr.bf16.mxu0 0
      %1869 = vmatmul.mubr.bf16.gmra.mrb[0].mxu0 %v1263
      %v1870 = vpop.f32.mrb[0].mxu0
      %v1871 = vadd.f32 %v1808, %v1870
      %v1872 = vpop.f32.mrb[0].mxu0
      %v1873 = vadd.f32 %v1810, %v1872
      %v1874 = vpop.f32.mrb[0].mxu0
      %v1875 = vadd.f32 %v1812, %v1874
      %v1876 = vpop.f32.mrb[0].mxu0
      %v1877 = vadd.f32 %v1814, %v1876
      %1878 = vdwg.mxu0
      %1879 = vmatprep.subr.bf16.mxu0 %v1564
      %1880 = vmatpush1.bf16.msra.mxu0 %v1563
      %1881 = vmatprep.subr.bf16.mxu0 %v1568
      %1882 = vmatpush1.bf16.msra.mxu0 %v1567
      %1883 = vmatprep.subr.bf16.mxu0 %v1572
      %1884 = vmatpush1.bf16.msra.mxu0 %v1571
      %1885 = vmatprep.subr.bf16.mxu0 %v1576
      %1886 = vmatpush1.bf16.msra.mxu0 %v1575
      %1887 = vmatprep.subr.bf16.mxu0 %v1580
      %1888 = vmatpush1.bf16.msra.mxu0 %v1579
      %1889 = vmatprep.subr.bf16.mxu0 %v1584
      %1890 = vmatpush1.bf16.msra.mxu0 %v1583
      %1891 = vmatprep.subr.bf16.mxu0 %v1588
      %1892 = vmatpush1.bf16.msra.mxu0 %v1587
      %1893 = vmatprep.subr.bf16.mxu0 %v1592
      %1894 = vmatpush1.bf16.msra.mxu0 %v1591
      %1895 = vmatprep.subr.bf16.mxu0 %v1596
      %1896 = vmatpush1.bf16.msra.mxu0 %v1595
      %1897 = vmatprep.subr.bf16.mxu0 %v1600
      %1898 = vmatpush1.bf16.msra.mxu0 %v1599
      %1899 = vmatprep.subr.bf16.mxu0 %v1604
      %1900 = vmatpush1.bf16.msra.mxu0 %v1603
      %1901 = vmatprep.subr.bf16.mxu0 %v1608
      %1902 = vmatpush1.bf16.msra.mxu0 %v1607
      %1903 = vmatprep.subr.bf16.mxu0 %v1612
      %1904 = vmatpush1.bf16.msra.mxu0 %v1611
      %1905 = vmatprep.subr.bf16.mxu0 %v1616
      %1906 = vmatpush1.bf16.msra.mxu0 %v1615
      %1907 = vmatprep.subr.bf16.mxu0 %v1620
      %1908 = vmatpush1.bf16.msra.mxu0 %v1619
      %1909 = vmatprep.subr.bf16.mxu0 %v1624
      %1910 = vmatpush1.bf16.msra.mxu0 %v1623
      %1911 = vmatprep.mubr.bf16.mxu0 %v437
      %1912 = vmatmul.mubr.bf16.gmra.mrb[0].mxu0 %v436
      %v1913 = vpop.f32.mrb[0].mxu0
      %v1914 = vadd.f32 %v1228, %v1913
      %v1915 = vpop.f32.mrb[0].mxu0
      %v1916 = vadd.f32 %v1230, %v1915
      %v1917 = vpop.f32.mrb[0].mxu0
      %v1918 = vadd.f32 %v1232, %v1917
      %v1919 = vpop.f32.mrb[0].mxu0
      %v1920 = vadd.f32 %v1234, %v1919
      %1921 = vmatprep.mubr.bf16.mxu0 %v440
      %1922 = vmatmul.mubr.bf16.gmra.mrb[0].mxu0 %v439
      %v1923 = vpop.f32.mrb[0].mxu0
      %v1924 = vadd.f32 %v1238, %v1923
      %v1925 = vpop.f32.mrb[0].mxu0
      %v1926 = vadd.f32 %v1240, %v1925
      %v1927 = vpop.f32.mrb[0].mxu0
      %v1928 = vadd.f32 %v1242, %v1927
      %v1929 = vpop.f32.mrb[0].mxu0
      %v1930 = vadd.f32 %v1244, %v1929
      %1931 = vmatprep.mubr.bf16.mxu0 %v1262
      %1932 = vmatmul.mubr.bf16.gmra.mrb[0].mxu0 %v1261
      %v1933 = vpop.f32.mrb[0].mxu0
      %v1934 = vadd.f32 %v1248, %v1933
      %v1935 = vpop.f32.mrb[0].mxu0
      %v1936 = vadd.f32 %v1250, %v1935
      %v1937 = vpop.f32.mrb[0].mxu0
      %v1938 = vadd.f32 %v1252, %v1937
      %v1939 = vpop.f32.mrb[0].mxu0
      %v1940 = vadd.f32 %v1254, %v1939
      %1941 = vdwg.mxu0
      %1942 = vmatprep.subr.bf16.mxu0 %v1628
      %1943 = vmatpush1.bf16.msra.mxu0 %v1627
      %1944 = vmatprep.subr.bf16.mxu0 %v1632
      %1945 = vmatpush1.bf16.msra.mxu0 %v1631
      %1946 = vmatprep.subr.bf16.mxu0 %v1636
      %1947 = vmatpush1.bf16.msra.mxu0 %v1635
      %1948 = vmatprep.subr.bf16.mxu0 %v1640
      %1949 = vmatpush1.bf16.msra.mxu0 %v1639
      %1950 = vmatprep.subr.bf16.mxu0 %v1644
      %1951 = vmatpush1.bf16.msra.mxu0 %v1643
      %1952 = vmatprep.subr.bf16.mxu0 %v1648
      %1953 = vmatpush1.bf16.msra.mxu0 %v1647
      %1954 = vmatprep.subr.bf16.mxu0 %v1652
      %1955 = vmatpush1.bf16.msra.mxu0 %v1651
      %1956 = vmatprep.subr.bf16.mxu0 %v1656
      %1957 = vmatpush1.bf16.msra.mxu0 %v1655
      %1958 = vmatprep.subr.bf16.mxu0 0
      %1959 = vmatpush1.bf16.msra.mxu0 0
      %1960 = vmatprep.subr.bf16.mxu0 0
      %1961 = vmatpush1.bf16.msra.mxu0 0
      %1962 = vmatprep.subr.bf16.mxu0 0
      %1963 = vmatpush1.bf16.msra.mxu0 0
      %1964 = vmatprep.subr.bf16.mxu0 0
      %1965 = vmatpush1.bf16.msra.mxu0 0
      %1966 = vmatprep.subr.bf16.mxu0 0
      %1967 = vmatpush1.bf16.msra.mxu0 0
      %1968 = vmatprep.subr.bf16.mxu0 0
      %1969 = vmatpush1.bf16.msra.mxu0 0
      %1970 = vmatprep.subr.bf16.mxu0 0
      %1971 = vmatpush1.bf16.msra.mxu0 0
      %1972 = vmatprep.subr.bf16.mxu0 0
      %1973 = vmatpush1.bf16.msra.mxu0 0
      %1974 = vmatprep.mubr.bf16.mxu0 0
      %1975 = vmatmul.mubr.bf16.gmra.mrb[0].mxu0 %v438
      %v1976 = vpop.f32.mrb[0].mxu0
      %v1977 = vadd.f32 %v1914, %v1976
      %v1978 = vpop.f32.mrb[0].mxu0
      %v1979 = vadd.f32 %v1916, %v1978
      %v1980 = vpop.f32.mrb[0].mxu0
      %v1981 = vadd.f32 %v1918, %v1980
      %v1982 = vpop.f32.mrb[0].mxu0
      %v1983 = vadd.f32 %v1920, %v1982
      %1984 = vmatprep.mubr.bf16.mxu0 0
      %1985 = vmatmul.mubr.bf16.gmra.mrb[0].mxu0 %v441
      %v1986 = vpop.f32.mrb[0].mxu0
      %v1987 = vadd.f32 %v1924, %v1986
      %v1988 = vpop.f32.mrb[0].mxu0
      %v1989 = vadd.f32 %v1926, %v1988
      %v1990 = vpop.f32.mrb[0].mxu0
      %v1991 = vadd.f32 %v1928, %v1990
      %v1992 = vpop.f32.mrb[0].mxu0
      %v1993 = vadd.f32 %v1930, %v1992
      %1994 = vmatprep.mubr.bf16.mxu0 0
      %1995 = vmatmul.mubr.bf16.gmra.mrb[0].mxu0 %v1263
      %v1996 = vpop.f32.mrb[0].mxu0
      %v1997 = vadd.f32 %v1934, %v1996
      %v1998 = vpop.f32.mrb[0].mxu0
      %v1999 = vadd.f32 %v1936, %v1998
      %v2000 = vpop.f32.mrb[0].mxu0
      %v2001 = vadd.f32 %v1938, %v2000
      %v2002 = vpop.f32.mrb[0].mxu0
      %v2003 = vadd.f32 %v1940, %v2002
      %2004 = vdwg.mxu0
      %v2005 = vld [vmem:[%s192] sm:$0xee]
      %v2006 = vld [vmem:[%s192 + $0x8] sm:$0xe]
      %s2007 = scalar_lea.vmem %s1, 1536
      %v2008 = vld [vmem:[%s2007] sm:$0xff]
      %v2009 = vld [vmem:[%s2007 + $0x8] sm:$0xff]
      %v2010 = vld [vmem:[%s2007 + $0x10] sm:$0xff]
      %v2011 = vld [vmem:[%s2007 + $0x18] sm:$0xff]
      %v2012 = vld [vmem:[%s2007 + $0x20] sm:$0xff]
      %v2013 = vld [vmem:[%s2007 + $0x28] sm:$0xff]
      %v2014 = vld [vmem:[%s2007 + $0x30] sm:$0xff]
      %v2015 = vld [vmem:[%s2007 + $0x38] sm:$0xff]
      %v2016 = vld [vmem:[%s2007 + $0x40] sm:$0xff]
      %v2017 = vld [vmem:[%s2007 + $0x48] sm:$0xff]
      %v2018 = vld [vmem:[%s2007 + $0x50] sm:$0xff]
      %v2019 = vld [vmem:[%s2007 + $0x58] sm:$0xff]
      %v2020 = vld [vmem:[%s2007 + $0x60] sm:$0xff]
      %v2021 = vld [vmem:[%s2007 + $0x68] sm:$0xff]
      %v2022 = vld [vmem:[%s2007 + $0x70] sm:$0xff]
      %v2023 = vld [vmem:[%s2007 + $0x78] sm:$0xff]
      %v2024 = vld [vmem:[%s2007 + $0x80] sm:$0xff]
      %v2025 = vld [vmem:[%s2007 + $0x88] sm:$0xff]
      %v2026 = vld [vmem:[%s2007 + $0x90] sm:$0xff]
      %v2027 = vld [vmem:[%s2007 + $0x98] sm:$0xff]
      %v2028 = vld [vmem:[%s2007 + $0xa0] sm:$0xff]
      %v2029 = vld [vmem:[%s2007 + $0xa8] sm:$0xff]
      %v2030 = vld [vmem:[%s2007 + $0xb0] sm:$0xff]
      %v2031 = vld [vmem:[%s2007 + $0xb8] sm:$0xff]
      %v2032 = vld [vmem:[%s2007 + $0xc0] sm:$0xff]
      %v2033 = vld [vmem:[%s2007 + $0xc8] sm:$0xff]
      %v2034 = vld [vmem:[%s2007 + $0xd0] sm:$0xff]
      %v2035 = vld [vmem:[%s2007 + $0xd8] sm:$0xff]
      %v2036 = vld [vmem:[%s2007 + $0xe0] sm:$0xff]
      %v2037 = vld [vmem:[%s2007 + $0xe8] sm:$0xff]
      %v2038 = vld [vmem:[%s2007 + $0xf0] sm:$0xff]
      %v2039 = vld [vmem:[%s2007 + $0xf8] sm:$0xff]
      %v2040 = vld [vmem:[%s2007 + $0x100] sm:$0xff]
      %v2041 = vld [vmem:[%s2007 + $0x108] sm:$0xff]
      %v2042 = vld [vmem:[%s2007 + $0x110] sm:$0xff]
      %v2043 = vld [vmem:[%s2007 + $0x118] sm:$0xff]
      %v2044 = vld [vmem:[%s2007 + $0x120] sm:$0xff]
      %v2045 = vld [vmem:[%s2007 + $0x128] sm:$0xff]
      %v2046 = vld [vmem:[%s2007 + $0x130] sm:$0xff]
      %v2047 = vld [vmem:[%s2007 + $0x138] sm:$0xff]
      %v2048 = vld [vmem:[%s2007 + $0x140] sm:$0xff]
      %v2049 = vld [vmem:[%s2007 + $0x148] sm:$0xff]
      %v2050 = vld [vmem:[%s2007 + $0x150] sm:$0xff]
      %v2051 = vld [vmem:[%s2007 + $0x158] sm:$0xff]
      %v2052 = vld [vmem:[%s2007 + $0x160] sm:$0xff]
      %v2053 = vld [vmem:[%s2007 + $0x168] sm:$0xff]
      %v2054 = vld [vmem:[%s2007 + $0x170] sm:$0xff]
      %v2055 = vld [vmem:[%s2007 + $0x178] sm:$0xff]
      %v2056 = vld [vmem:[%s2007 + $0x180] sm:$0xff]
      %v2057 = vld [vmem:[%s2007 + $0x188] sm:$0xff]
      %v2058 = vld [vmem:[%s2007 + $0x190] sm:$0xff]
      %v2059 = vld [vmem:[%s2007 + $0x198] sm:$0xff]
      %v2060 = vld [vmem:[%s2007 + $0x1a0] sm:$0xff]
      %v2061 = vld [vmem:[%s2007 + $0x1a8] sm:$0xff]
      %v2062 = vld [vmem:[%s2007 + $0x1b0] sm:$0xff]
      %v2063 = vld [vmem:[%s2007 + $0x1b8] sm:$0xff]
      %v2064 = vld [vmem:[%s2007 + $0x1c0] sm:$0xff]
      %v2065 = vld [vmem:[%s2007 + $0x1c8] sm:$0xff]
      %v2066 = vld [vmem:[%s2007 + $0x1d0] sm:$0xff]
      %v2067 = vld [vmem:[%s2007 + $0x1d8] sm:$0xff]
      %v2068 = vld [vmem:[%s2007 + $0x1e0] sm:$0xff]
      %v2069 = vld [vmem:[%s2007 + $0x1e8] sm:$0xff]
      %v2070 = vld [vmem:[%s2007 + $0x1f0] sm:$0xff]
      %v2071 = vld [vmem:[%s2007 + $0x1f8] sm:$0xff]
      %v2072 = vld [vmem:[%s2007 + $0x200] sm:$0xff]
      %v2073 = vld [vmem:[%s2007 + $0x208] sm:$0xff]
      %v2074 = vld [vmem:[%s2007 + $0x210] sm:$0xff]
      %v2075 = vld [vmem:[%s2007 + $0x218] sm:$0xff]
      %v2076 = vld [vmem:[%s2007 + $0x220] sm:$0xff]
      %v2077 = vld [vmem:[%s2007 + $0x228] sm:$0xff]
      %v2078 = vld [vmem:[%s2007 + $0x230] sm:$0xff]
      %v2079 = vld [vmem:[%s2007 + $0x238] sm:$0xff]
      %v2080 = vld [vmem:[%s2007 + $0x240] sm:$0xff]
      %v2081 = vld [vmem:[%s2007 + $0x248] sm:$0xff]
      %v2082 = vld [vmem:[%s2007 + $0x250] sm:$0xff]
      %v2083 = vld [vmem:[%s2007 + $0x258] sm:$0xff]
      %v2084 = vld [vmem:[%s2007 + $0x260] sm:$0xff]
      %v2085 = vld [vmem:[%s2007 + $0x268] sm:$0xff]
      %v2086 = vld [vmem:[%s2007 + $0x270] sm:$0xff]
      %v2087 = vld [vmem:[%s2007 + $0x278] sm:$0xff]
      %v2088 = vld [vmem:[%s2007 + $0x280] sm:$0xff]
      %v2089 = vld [vmem:[%s2007 + $0x288] sm:$0xff]
      %v2090 = vld [vmem:[%s2007 + $0x290] sm:$0xff]
      %v2091 = vld [vmem:[%s2007 + $0x298] sm:$0xff]
      %v2092 = vld [vmem:[%s2007 + $0x2a0] sm:$0xff]
      %v2093 = vld [vmem:[%s2007 + $0x2a8] sm:$0xff]
      %v2094 = vld [vmem:[%s2007 + $0x2b0] sm:$0xff]
      %v2095 = vld [vmem:[%s2007 + $0x2b8] sm:$0xff]
      %v2096 = vld [vmem:[%s2007 + $0x2c0] sm:$0xff]
      %v2097 = vld [vmem:[%s2007 + $0x2c8] sm:$0xff]
      %v2098 = vld [vmem:[%s2007 + $0x2d0] sm:$0xff]
      %v2099 = vld [vmem:[%s2007 + $0x2d8] sm:$0xff]
      %v2100 = vld [vmem:[%s2007 + $0x2e0] sm:$0xff]
      %v2101 = vld [vmem:[%s2007 + $0x2e8] sm:$0xff]
      %v2102 = vld [vmem:[%s2007 + $0x2f0] sm:$0xff]
      %v2103 = vld [vmem:[%s2007 + $0x2f8] sm:$0xff]
      %v2106 = vunpack.c.l.b16 %v2005
      %v2107 = vunpack.c.h.b16 %v2005
      %v2108 = vunpack.c.l.b16 %v2006
      %v2109 = vpack.c.b16 %v421, %v2106
      %v2110 = vpack.c.b16 %v422, %v2107
      %v2111 = vpack.c.b16 %v423, %v2108
      %vm2112 = vcmask 1046528
      %v2113 = vrot.slane %v2109, 1
      %v2114 = vrot.slane %v439, 1
      %v2115 = vsel %vm2112, %v2113, %v2114
      %v2116 = vrot.slane %v2110, 1
      %v2117 = vrot.slane %v440, 1
      %v2118 = vsel %vm2112, %v2116, %v2117
      %v2119 = vrot.slane %v2111, 1
      %v2120 = vrot.slane %v441, 1
      %v2121 = vsel %vm2112, %v2119, %v2120
      %v2122 = vrot.slane %v442, 1
      %v2123 = vsel %vm2112, %v2114, %v2122
      %v2124 = vrot.slane %v443, 1
      %v2125 = vsel %vm2112, %v2117, %v2124
      %v2126 = vrot.slane %v444, 1
      %v2127 = vsel %vm2112, %v2120, %v2126
      %v2233 = vunpack.c.l.b16 %v2008
      %v2234 = vunpack.c.h.b16 %v2008
      %v2235 = vunpack.c.l.b16 %v2009
      %v2236 = vunpack.c.h.b16 %v2009
      %v2237 = vunpack.c.l.b16 %v2010
      %v2238 = vunpack.c.h.b16 %v2010
      %v2239 = vunpack.c.l.b16 %v2011
      %v2240 = vunpack.c.h.b16 %v2011
      %v2241 = vunpack.c.l.b16 %v2012
      %v2242 = vunpack.c.h.b16 %v2012
      %v2243 = vunpack.c.l.b16 %v2013
      %v2244 = vunpack.c.h.b16 %v2013
      %v2245 = vunpack.c.l.b16 %v2014
      %v2246 = vunpack.c.h.b16 %v2014
      %v2247 = vunpack.c.l.b16 %v2015
      %v2248 = vunpack.c.h.b16 %v2015
      %v2249 = vunpack.c.l.b16 %v2016
      %v2250 = vunpack.c.h.b16 %v2016
      %v2251 = vunpack.c.l.b16 %v2017
      %v2252 = vunpack.c.h.b16 %v2017
      %v2253 = vunpack.c.l.b16 %v2018
      %v2254 = vunpack.c.h.b16 %v2018
      %v2255 = vunpack.c.l.b16 %v2019
      %v2256 = vunpack.c.h.b16 %v2019
      %v2257 = vunpack.c.l.b16 %v2020
      %v2258 = vunpack.c.h.b16 %v2020
      %v2259 = vunpack.c.l.b16 %v2021
      %v2260 = vunpack.c.h.b16 %v2021
      %v2261 = vunpack.c.l.b16 %v2022
      %v2262 = vunpack.c.h.b16 %v2022
      %v2263 = vunpack.c.l.b16 %v2023
      %v2264 = vunpack.c.h.b16 %v2023
      %v2265 = vunpack.c.l.b16 %v2024
      %v2266 = vunpack.c.h.b16 %v2024
      %v2267 = vunpack.c.l.b16 %v2025
      %v2268 = vunpack.c.h.b16 %v2025
      %v2269 = vunpack.c.l.b16 %v2026
      %v2270 = vunpack.c.h.b16 %v2026
      %v2271 = vunpack.c.l.b16 %v2027
      %v2272 = vunpack.c.h.b16 %v2027
      %v2273 = vunpack.c.l.b16 %v2028
      %v2274 = vunpack.c.h.b16 %v2028
      %v2275 = vunpack.c.l.b16 %v2029
      %v2276 = vunpack.c.h.b16 %v2029
      %v2277 = vunpack.c.l.b16 %v2030
      %v2278 = vunpack.c.h.b16 %v2030
      %v2279 = vunpack.c.l.b16 %v2031
      %v2280 = vunpack.c.h.b16 %v2031
      %v2281 = vunpack.c.l.b16 %v2032
      %v2282 = vunpack.c.h.b16 %v2032
      %v2283 = vunpack.c.l.b16 %v2033
      %v2284 = vunpack.c.h.b16 %v2033
      %v2285 = vunpack.c.l.b16 %v2034
      %v2286 = vunpack.c.h.b16 %v2034
      %v2287 = vunpack.c.l.b16 %v2035
      %v2288 = vunpack.c.h.b16 %v2035
      %v2289 = vunpack.c.l.b16 %v2036
      %v2290 = vunpack.c.h.b16 %v2036
      %v2291 = vunpack.c.l.b16 %v2037
      %v2292 = vunpack.c.h.b16 %v2037
      %v2293 = vunpack.c.l.b16 %v2038
      %v2294 = vunpack.c.h.b16 %v2038
      %v2295 = vunpack.c.l.b16 %v2039
      %v2296 = vunpack.c.h.b16 %v2039
      %v2297 = vunpack.c.l.b16 %v2040
      %v2298 = vunpack.c.h.b16 %v2040
      %v2299 = vunpack.c.l.b16 %v2041
      %v2300 = vunpack.c.h.b16 %v2041
      %v2301 = vunpack.c.l.b16 %v2042
      %v2302 = vunpack.c.h.b16 %v2042
      %v2303 = vunpack.c.l.b16 %v2043
      %v2304 = vunpack.c.h.b16 %v2043
      %v2305 = vunpack.c.l.b16 %v2044
      %v2306 = vunpack.c.h.b16 %v2044
      %v2307 = vunpack.c.l.b16 %v2045
      %v2308 = vunpack.c.h.b16 %v2045
      %v2309 = vunpack.c.l.b16 %v2046
      %v2310 = vunpack.c.h.b16 %v2046
      %v2311 = vunpack.c.l.b16 %v2047
      %v2312 = vunpack.c.h.b16 %v2047
      %v2313 = vunpack.c.l.b16 %v2048
      %v2314 = vunpack.c.h.b16 %v2048
      %v2315 = vunpack.c.l.b16 %v2049
      %v2316 = vunpack.c.h.b16 %v2049
      %v2317 = vunpack.c.l.b16 %v2050
      %v2318 = vunpack.c.h.b16 %v2050
      %v2319 = vunpack.c.l.b16 %v2051
      %v2320 = vunpack.c.h.b16 %v2051
      %v2321 = vunpack.c.l.b16 %v2052
      %v2322 = vunpack.c.h.b16 %v2052
      %v2323 = vunpack.c.l.b16 %v2053
      %v2324 = vunpack.c.h.b16 %v2053
      %v2325 = vunpack.c.l.b16 %v2054
      %v2326 = vunpack.c.h.b16 %v2054
      %v2327 = vunpack.c.l.b16 %v2055
      %v2328 = vunpack.c.h.b16 %v2055
      %v2329 = vunpack.c.l.b16 %v2056
      %v2330 = vunpack.c.h.b16 %v2056
      %v2331 = vunpack.c.l.b16 %v2057
      %v2332 = vunpack.c.h.b16 %v2057
      %v2333 = vunpack.c.l.b16 %v2058
      %v2334 = vunpack.c.h.b16 %v2058
      %v2335 = vunpack.c.l.b16 %v2059
      %v2336 = vunpack.c.h.b16 %v2059
      %v2337 = vunpack.c.l.b16 %v2060
      %v2338 = vunpack.c.h.b16 %v2060
      %v2339 = vunpack.c.l.b16 %v2061
      %v2340 = vunpack.c.h.b16 %v2061
      %v2341 = vunpack.c.l.b16 %v2062
      %v2342 = vunpack.c.h.b16 %v2062
      %v2343 = vunpack.c.l.b16 %v2063
      %v2344 = vunpack.c.h.b16 %v2063
      %v2345 = vunpack.c.l.b16 %v2064
      %v2346 = vunpack.c.h.b16 %v2064
      %v2347 = vunpack.c.l.b16 %v2065
      %v2348 = vunpack.c.h.b16 %v2065
      %v2349 = vunpack.c.l.b16 %v2066
      %v2350 = vunpack.c.h.b16 %v2066
      %v2351 = vunpack.c.l.b16 %v2067
      %v2352 = vunpack.c.h.b16 %v2067
      %v2353 = vunpack.c.l.b16 %v2068
      %v2354 = vunpack.c.h.b16 %v2068
      %v2355 = vunpack.c.l.b16 %v2069
      %v2356 = vunpack.c.h.b16 %v2069
      %v2357 = vunpack.c.l.b16 %v2070
      %v2358 = vunpack.c.h.b16 %v2070
      %v2359 = vunpack.c.l.b16 %v2071
      %v2360 = vunpack.c.h.b16 %v2071
      %v2361 = vunpack.c.l.b16 %v2072
      %v2362 = vunpack.c.h.b16 %v2072
      %v2363 = vunpack.c.l.b16 %v2073
      %v2364 = vunpack.c.h.b16 %v2073
      %v2365 = vunpack.c.l.b16 %v2074
      %v2366 = vunpack.c.h.b16 %v2074
      %v2367 = vunpack.c.l.b16 %v2075
      %v2368 = vunpack.c.h.b16 %v2075
      %v2369 = vunpack.c.l.b16 %v2076
      %v2370 = vunpack.c.h.b16 %v2076
      %v2371 = vunpack.c.l.b16 %v2077
      %v2372 = vunpack.c.h.b16 %v2077
      %v2373 = vunpack.c.l.b16 %v2078
      %v2374 = vunpack.c.h.b16 %v2078
      %v2375 = vunpack.c.l.b16 %v2079
      %v2376 = vunpack.c.h.b16 %v2079
      %v2377 = vunpack.c.l.b16 %v2080
      %v2378 = vunpack.c.h.b16 %v2080
      %v2379 = vunpack.c.l.b16 %v2081
      %v2380 = vunpack.c.h.b16 %v2081
      %v2381 = vunpack.c.l.b16 %v2082
      %v2382 = vunpack.c.h.b16 %v2082
      %v2383 = vunpack.c.l.b16 %v2083
      %v2384 = vunpack.c.h.b16 %v2083
      %v2385 = vunpack.c.l.b16 %v2084
      %v2386 = vunpack.c.h.b16 %v2084
      %v2387 = vunpack.c.l.b16 %v2085
      %v2388 = vunpack.c.h.b16 %v2085
      %v2389 = vunpack.c.l.b16 %v2086
      %v2390 = vunpack.c.h.b16 %v2086
      %v2391 = vunpack.c.l.b16 %v2087
      %v2392 = vunpack.c.h.b16 %v2087
      %v2393 = vunpack.c.l.b16 %v2088
      %v2394 = vunpack.c.h.b16 %v2088
      %v2395 = vunpack.c.l.b16 %v2089
      %v2396 = vunpack.c.h.b16 %v2089
      %v2397 = vunpack.c.l.b16 %v2090
      %v2398 = vunpack.c.h.b16 %v2090
      %v2399 = vunpack.c.l.b16 %v2091
      %v2400 = vunpack.c.h.b16 %v2091
      %v2401 = vunpack.c.l.b16 %v2092
      %v2402 = vunpack.c.h.b16 %v2092
      %v2403 = vunpack.c.l.b16 %v2093
      %v2404 = vunpack.c.h.b16 %v2093
      %v2405 = vunpack.c.l.b16 %v2094
      %v2406 = vunpack.c.h.b16 %v2094
      %v2407 = vunpack.c.l.b16 %v2095
      %v2408 = vunpack.c.h.b16 %v2095
      %v2409 = vunpack.c.l.b16 %v2096
      %v2410 = vunpack.c.h.b16 %v2096
      %v2411 = vunpack.c.l.b16 %v2097
      %v2412 = vunpack.c.h.b16 %v2097
      %v2413 = vunpack.c.l.b16 %v2098
      %v2414 = vunpack.c.h.b16 %v2098
      %v2415 = vunpack.c.l.b16 %v2099
      %v2416 = vunpack.c.h.b16 %v2099
      %v2417 = vunpack.c.l.b16 %v2100
      %v2418 = vunpack.c.h.b16 %v2100
      %v2419 = vunpack.c.l.b16 %v2101
      %v2420 = vunpack.c.h.b16 %v2101
      %v2421 = vunpack.c.l.b16 %v2102
      %v2422 = vunpack.c.h.b16 %v2102
      %v2423 = vunpack.c.l.b16 %v2103
      %v2424 = vunpack.c.h.b16 %v2103
      %v2425 = vpack.c.b16 %v2237, %v2233
      %v2426 = vpack.c.b16 %v2238, %v2234
      %v2427 = vpack.c.b16 %v2239, %v2235
      %v2428 = vpack.c.b16 %v2240, %v2236
      %v2429 = vpack.c.b16 %v2245, %v2241
      %v2430 = vpack.c.b16 %v2246, %v2242
      %v2431 = vpack.c.b16 %v2247, %v2243
      %v2432 = vpack.c.b16 %v2248, %v2244
      %v2433 = vpack.c.b16 %v2253, %v2249
      %v2434 = vpack.c.b16 %v2254, %v2250
      %v2435 = vpack.c.b16 %v2255, %v2251
      %v2436 = vpack.c.b16 %v2256, %v2252
      %v2437 = vpack.c.b16 %v2261, %v2257
      %v2438 = vpack.c.b16 %v2262, %v2258
      %v2439 = vpack.c.b16 %v2263, %v2259
      %v2440 = vpack.c.b16 %v2264, %v2260
      %v2441 = vpack.c.b16 %v2269, %v2265
      %v2442 = vpack.c.b16 %v2270, %v2266
      %v2443 = vpack.c.b16 %v2271, %v2267
      %v2444 = vpack.c.b16 %v2272, %v2268
      %v2445 = vpack.c.b16 %v2277, %v2273
      %v2446 = vpack.c.b16 %v2278, %v2274
      %v2447 = vpack.c.b16 %v2279, %v2275
      %v2448 = vpack.c.b16 %v2280, %v2276
      %v2449 = vpack.c.b16 %v2285, %v2281
      %v2450 = vpack.c.b16 %v2286, %v2282
      %v2451 = vpack.c.b16 %v2287, %v2283
      %v2452 = vpack.c.b16 %v2288, %v2284
      %v2453 = vpack.c.b16 %v2293, %v2289
      %v2454 = vpack.c.b16 %v2294, %v2290
      %v2455 = vpack.c.b16 %v2295, %v2291
      %v2456 = vpack.c.b16 %v2296, %v2292
      %v2457 = vpack.c.b16 %v2301, %v2297
      %v2458 = vpack.c.b16 %v2302, %v2298
      %v2459 = vpack.c.b16 %v2303, %v2299
      %v2460 = vpack.c.b16 %v2304, %v2300
      %v2461 = vpack.c.b16 %v2309, %v2305
      %v2462 = vpack.c.b16 %v2310, %v2306
      %v2463 = vpack.c.b16 %v2311, %v2307
      %v2464 = vpack.c.b16 %v2312, %v2308
      %v2465 = vpack.c.b16 %v2317, %v2313
      %v2466 = vpack.c.b16 %v2318, %v2314
      %v2467 = vpack.c.b16 %v2319, %v2315
      %v2468 = vpack.c.b16 %v2320, %v2316
      %v2469 = vpack.c.b16 %v2325, %v2321
      %v2470 = vpack.c.b16 %v2326, %v2322
      %v2471 = vpack.c.b16 %v2327, %v2323
      %v2472 = vpack.c.b16 %v2328, %v2324
      %v2473 = vpack.c.b16 %v2333, %v2329
      %v2474 = vpack.c.b16 %v2334, %v2330
      %v2475 = vpack.c.b16 %v2335, %v2331
      %v2476 = vpack.c.b16 %v2336, %v2332
      %v2477 = vpack.c.b16 %v2341, %v2337
      %v2478 = vpack.c.b16 %v2342, %v2338
      %v2479 = vpack.c.b16 %v2343, %v2339
      %v2480 = vpack.c.b16 %v2344, %v2340
      %v2481 = vpack.c.b16 %v2349, %v2345
      %v2482 = vpack.c.b16 %v2350, %v2346
      %v2483 = vpack.c.b16 %v2351, %v2347
      %v2484 = vpack.c.b16 %v2352, %v2348
      %v2485 = vpack.c.b16 %v2357, %v2353
      %v2486 = vpack.c.b16 %v2358, %v2354
      %v2487 = vpack.c.b16 %v2359, %v2355
      %v2488 = vpack.c.b16 %v2360, %v2356
      %v2489 = vpack.c.b16 %v2365, %v2361
      %v2490 = vpack.c.b16 %v2366, %v2362
      %v2491 = vpack.c.b16 %v2367, %v2363
      %v2492 = vpack.c.b16 %v2368, %v2364
      %v2493 = vpack.c.b16 %v2373, %v2369
      %v2494 = vpack.c.b16 %v2374, %v2370
      %v2495 = vpack.c.b16 %v2375, %v2371
      %v2496 = vpack.c.b16 %v2376, %v2372
      %v2497 = vpack.c.b16 %v2381, %v2377
      %v2498 = vpack.c.b16 %v2382, %v2378
      %v2499 = vpack.c.b16 %v2383, %v2379
      %v2500 = vpack.c.b16 %v2384, %v2380
      %v2501 = vpack.c.b16 %v2389, %v2385
      %v2502 = vpack.c.b16 %v2390, %v2386
      %v2503 = vpack.c.b16 %v2391, %v2387
      %v2504 = vpack.c.b16 %v2392, %v2388
      %v2505 = vpack.c.b16 %v2397, %v2393
      %v2506 = vpack.c.b16 %v2398, %v2394
      %v2507 = vpack.c.b16 %v2399, %v2395
      %v2508 = vpack.c.b16 %v2400, %v2396
      %v2509 = vpack.c.b16 %v2405, %v2401
      %v2510 = vpack.c.b16 %v2406, %v2402
      %v2511 = vpack.c.b16 %v2407, %v2403
      %v2512 = vpack.c.b16 %v2408, %v2404
      %v2513 = vpack.c.b16 %v2413, %v2409
      %v2514 = vpack.c.b16 %v2414, %v2410
      %v2515 = vpack.c.b16 %v2415, %v2411
      %v2516 = vpack.c.b16 %v2416, %v2412
      %v2517 = vpack.c.b16 %v2421, %v2417
      %v2518 = vpack.c.b16 %v2422, %v2418
      %v2519 = vpack.c.b16 %v2423, %v2419
      %v2520 = vpack.c.b16 %v2424, %v2420
      %2617 = vmatprep.subr.bf16.mxu0 %v2426
      %2618 = vmatpush1.bf16.msra.mxu0 %v2425
      %2619 = vmatprep.subr.bf16.mxu0 %v2430
      %2620 = vmatpush1.bf16.msra.mxu0 %v2429
      %2621 = vmatprep.subr.bf16.mxu0 %v2434
      %2622 = vmatpush1.bf16.msra.mxu0 %v2433
      %2623 = vmatprep.subr.bf16.mxu0 %v2438
      %2624 = vmatpush1.bf16.msra.mxu0 %v2437
      %2625 = vmatprep.subr.bf16.mxu0 %v2442
      %2626 = vmatpush1.bf16.msra.mxu0 %v2441
      %2627 = vmatprep.subr.bf16.mxu0 %v2446
      %2628 = vmatpush1.bf16.msra.mxu0 %v2445
      %2629 = vmatprep.subr.bf16.mxu0 %v2450
      %2630 = vmatpush1.bf16.msra.mxu0 %v2449
      %2631 = vmatprep.subr.bf16.mxu0 %v2454
      %2632 = vmatpush1.bf16.msra.mxu0 %v2453
      %2633 = vmatprep.subr.bf16.mxu0 %v2458
      %2634 = vmatpush1.bf16.msra.mxu0 %v2457
      %2635 = vmatprep.subr.bf16.mxu0 %v2462
      %2636 = vmatpush1.bf16.msra.mxu0 %v2461
      %2637 = vmatprep.subr.bf16.mxu0 %v2466
      %2638 = vmatpush1.bf16.msra.mxu0 %v2465
      %2639 = vmatprep.subr.bf16.mxu0 %v2470
      %2640 = vmatpush1.bf16.msra.mxu0 %v2469
      %2641 = vmatprep.subr.bf16.mxu0 %v2474
      %2642 = vmatpush1.bf16.msra.mxu0 %v2473
      %2643 = vmatprep.subr.bf16.mxu0 %v2478
      %2644 = vmatpush1.bf16.msra.mxu0 %v2477
      %2645 = vmatprep.subr.bf16.mxu0 %v2482
      %2646 = vmatpush1.bf16.msra.mxu0 %v2481
      %2647 = vmatprep.subr.bf16.mxu0 %v2486
      %2648 = vmatpush1.bf16.msra.mxu0 %v2485
      %2649 = vmatprep.mubr.bf16.mxu0 %v2118
      %2650 = vmatmul.mubr.bf16.gmra.mrb[0].mxu0 %v2115
      %v2651 = vpop.f32.mrb[0].mxu0
      %v2652 = vadd.f32 0.0, %v2651
      %v2653 = vpop.f32.mrb[0].mxu0
      %v2654 = vadd.f32 0.0, %v2653
      %v2655 = vpop.f32.mrb[0].mxu0
      %v2656 = vadd.f32 0.0, %v2655
      %v2657 = vpop.f32.mrb[0].mxu0
      %v2658 = vadd.f32 0.0, %v2657
      %2659 = vmatprep.mubr.bf16.mxu0 %v2125
      %2660 = vmatmul.mubr.bf16.gmra.mrb[0].mxu0 %v2123
      %v2661 = vpop.f32.mrb[0].mxu0
      %v2662 = vadd.f32 0.0, %v2661
      %v2663 = vpop.f32.mrb[0].mxu0
      %v2664 = vadd.f32 0.0, %v2663
      %v2665 = vpop.f32.mrb[0].mxu0
      %v2666 = vadd.f32 0.0, %v2665
      %v2667 = vpop.f32.mrb[0].mxu0
      %v2668 = vadd.f32 0.0, %v2667
      %2669 = vmatprep.mubr.bf16.mxu0 %v2124
      %2670 = vmatmul.mubr.bf16.gmra.mrb[0].mxu0 %v2122
      %v2671 = vpop.f32.mrb[0].mxu0
      %v2672 = vadd.f32 0.0, %v2671
      %v2673 = vpop.f32.mrb[0].mxu0
      %v2674 = vadd.f32 0.0, %v2673
      %v2675 = vpop.f32.mrb[0].mxu0
      %v2676 = vadd.f32 0.0, %v2675
      %v2677 = vpop.f32.mrb[0].mxu0
      %v2678 = vadd.f32 0.0, %v2677
      %2679 = vdwg.mxu0
      %2680 = vmatprep.subr.bf16.mxu0 %v2490
      %2681 = vmatpush1.bf16.msra.mxu0 %v2489
      %2682 = vmatprep.subr.bf16.mxu0 %v2494
      %2683 = vmatpush1.bf16.msra.mxu0 %v2493
      %2684 = vmatprep.subr.bf16.mxu0 %v2498
      %2685 = vmatpush1.bf16.msra.mxu0 %v2497
      %2686 = vmatprep.subr.bf16.mxu0 %v2502
      %2687 = vmatpush1.bf16.msra.mxu0 %v2501
      %2688 = vmatprep.subr.bf16.mxu0 %v2506
      %2689 = vmatpush1.bf16.msra.mxu0 %v2505
      %2690 = vmatprep.subr.bf16.mxu0 %v2510
      %2691 = vmatpush1.bf16.msra.mxu0 %v2509
      %2692 = vmatprep.subr.bf16.mxu0 %v2514
      %2693 = vmatpush1.bf16.msra.mxu0 %v2513
      %2694 = vmatprep.subr.bf16.mxu0 %v2518
      %2695 = vmatpush1.bf16.msra.mxu0 %v2517
      %2696 = vmatprep.subr.bf16.mxu0 0
      %2697 = vmatpush1.bf16.msra.mxu0 0
      %2698 = vmatprep.subr.bf16.mxu0 0
      %2699 = vmatpush1.bf16.msra.mxu0 0
      %2700 = vmatprep.subr.bf16.mxu0 0
      %2701 = vmatpush1.bf16.msra.mxu0 0
      %2702 = vmatprep.subr.bf16.mxu0 0
      %2703 = vmatpush1.bf16.msra.mxu0 0
      %2704 = vmatprep.subr.bf16.mxu0 0
      %2705 = vmatpush1.bf16.msra.mxu0 0
      %2706 = vmatprep.subr.bf16.mxu0 0
      %2707 = vmatpush1.bf16.msra.mxu0 0
      %2708 = vmatprep.subr.bf16.mxu0 0
      %2709 = vmatpush1.bf16.msra.mxu0 0
      %2710 = vmatprep.subr.bf16.mxu0 0
      %2711 = vmatpush1.bf16.msra.mxu0 0
      %2712 = vmatprep.mubr.bf16.mxu0 0
      %2713 = vmatmul.mubr.bf16.gmra.mrb[0].mxu0 %v2121
      %v2714 = vpop.f32.mrb[0].mxu0
      %v2715 = vadd.f32 %v2652, %v2714
      %v2716 = vpop.f32.mrb[0].mxu0
      %v2717 = vadd.f32 %v2654, %v2716
      %v2718 = vpop.f32.mrb[0].mxu0
      %v2719 = vadd.f32 %v2656, %v2718
      %v2720 = vpop.f32.mrb[0].mxu0
      %v2721 = vadd.f32 %v2658, %v2720
      %2722 = vmatprep.mubr.bf16.mxu0 0
      %2723 = vmatmul.mubr.bf16.gmra.mrb[0].mxu0 %v2127
      %v2724 = vpop.f32.mrb[0].mxu0
      %v2725 = vadd.f32 %v2662, %v2724
      %v2726 = vpop.f32.mrb[0].mxu0
      %v2727 = vadd.f32 %v2664, %v2726
      %v2728 = vpop.f32.mrb[0].mxu0
      %v2729 = vadd.f32 %v2666, %v2728
      %v2730 = vpop.f32.mrb[0].mxu0
      %v2731 = vadd.f32 %v2668, %v2730
      %2732 = vmatprep.mubr.bf16.mxu0 0
      %2733 = vmatmul.mubr.bf16.gmra.mrb[0].mxu0 %v2126
      %v2734 = vpop.f32.mrb[0].mxu0
      %v2735 = vadd.f32 %v2672, %v2734
      %v2736 = vpop.f32.mrb[0].mxu0
      %v2737 = vadd.f32 %v2674, %v2736
      %v2738 = vpop.f32.mrb[0].mxu0
      %v2739 = vadd.f32 %v2676, %v2738
      %v2740 = vpop.f32.mrb[0].mxu0
      %v2741 = vadd.f32 %v2678, %v2740
      %2742 = vdwg.mxu0
      %2743 = vmatprep.subr.bf16.mxu0 %v2428
      %2744 = vmatpush1.bf16.msra.mxu0 %v2427
      %2745 = vmatprep.subr.bf16.mxu0 %v2432
      %2746 = vmatpush1.bf16.msra.mxu0 %v2431
      %2747 = vmatprep.subr.bf16.mxu0 %v2436
      %2748 = vmatpush1.bf16.msra.mxu0 %v2435
      %2749 = vmatprep.subr.bf16.mxu0 %v2440
      %2750 = vmatpush1.bf16.msra.mxu0 %v2439
      %2751 = vmatprep.subr.bf16.mxu0 %v2444
      %2752 = vmatpush1.bf16.msra.mxu0 %v2443
      %2753 = vmatprep.subr.bf16.mxu0 %v2448
      %2754 = vmatpush1.bf16.msra.mxu0 %v2447
      %2755 = vmatprep.subr.bf16.mxu0 %v2452
      %2756 = vmatpush1.bf16.msra.mxu0 %v2451
      %2757 = vmatprep.subr.bf16.mxu0 %v2456
      %2758 = vmatpush1.bf16.msra.mxu0 %v2455
      %2759 = vmatprep.subr.bf16.mxu0 %v2460
      %2760 = vmatpush1.bf16.msra.mxu0 %v2459
      %2761 = vmatprep.subr.bf16.mxu0 %v2464
      %2762 = vmatpush1.bf16.msra.mxu0 %v2463
      %2763 = vmatprep.subr.bf16.mxu0 %v2468
      %2764 = vmatpush1.bf16.msra.mxu0 %v2467
      %2765 = vmatprep.subr.bf16.mxu0 %v2472
      %2766 = vmatpush1.bf16.msra.mxu0 %v2471
      %2767 = vmatprep.subr.bf16.mxu0 %v2476
      %2768 = vmatpush1.bf16.msra.mxu0 %v2475
      %2769 = vmatprep.subr.bf16.mxu0 %v2480
      %2770 = vmatpush1.bf16.msra.mxu0 %v2479
      %2771 = vmatprep.subr.bf16.mxu0 %v2484
      %2772 = vmatpush1.bf16.msra.mxu0 %v2483
      %2773 = vmatprep.subr.bf16.mxu0 %v2488
      %2774 = vmatpush1.bf16.msra.mxu0 %v2487
      %2775 = vmatprep.mubr.bf16.mxu0 %v2118
      %2776 = vmatmul.mubr.bf16.gmra.mrb[0].mxu0 %v2115
      %v2777 = vpop.f32.mrb[0].mxu0
      %v2778 = vadd.f32 0.0, %v2777
      %v2779 = vpop.f32.mrb[0].mxu0
      %v2780 = vadd.f32 0.0, %v2779
      %v2781 = vpop.f32.mrb[0].mxu0
      %v2782 = vadd.f32 0.0, %v2781
      %v2783 = vpop.f32.mrb[0].mxu0
      %v2784 = vadd.f32 0.0, %v2783
      %2785 = vmatprep.mubr.bf16.mxu0 %v2125
      %2786 = vmatmul.mubr.bf16.gmra.mrb[0].mxu0 %v2123
      %v2787 = vpop.f32.mrb[0].mxu0
      %v2788 = vadd.f32 0.0, %v2787
      %v2789 = vpop.f32.mrb[0].mxu0
      %v2790 = vadd.f32 0.0, %v2789
      %v2791 = vpop.f32.mrb[0].mxu0
      %v2792 = vadd.f32 0.0, %v2791
      %v2793 = vpop.f32.mrb[0].mxu0
      %v2794 = vadd.f32 0.0, %v2793
      %2795 = vmatprep.mubr.bf16.mxu0 %v2124
      %2796 = vmatmul.mubr.bf16.gmra.mrb[0].mxu0 %v2122
      %v2797 = vpop.f32.mrb[0].mxu0
      %v2798 = vadd.f32 0.0, %v2797
      %v2799 = vpop.f32.mrb[0].mxu0
      %v2800 = vadd.f32 0.0, %v2799
      %v2801 = vpop.f32.mrb[0].mxu0
      %v2802 = vadd.f32 0.0, %v2801
      %v2803 = vpop.f32.mrb[0].mxu0
      %v2804 = vadd.f32 0.0, %v2803
      %2805 = vdwg.mxu0
      %2806 = vmatprep.subr.bf16.mxu0 %v2492
      %2807 = vmatpush1.bf16.msra.mxu0 %v2491
      %2808 = vmatprep.subr.bf16.mxu0 %v2496
      %2809 = vmatpush1.bf16.msra.mxu0 %v2495
      %2810 = vmatprep.subr.bf16.mxu0 %v2500
      %2811 = vmatpush1.bf16.msra.mxu0 %v2499
      %2812 = vmatprep.subr.bf16.mxu0 %v2504
      %2813 = vmatpush1.bf16.msra.mxu0 %v2503
      %2814 = vmatprep.subr.bf16.mxu0 %v2508
      %2815 = vmatpush1.bf16.msra.mxu0 %v2507
      %2816 = vmatprep.subr.bf16.mxu0 %v2512
      %2817 = vmatpush1.bf16.msra.mxu0 %v2511
      %2818 = vmatprep.subr.bf16.mxu0 %v2516
      %2819 = vmatpush1.bf16.msra.mxu0 %v2515
      %2820 = vmatprep.subr.bf16.mxu0 %v2520
      %2821 = vmatpush1.bf16.msra.mxu0 %v2519
      %2822 = vmatprep.subr.bf16.mxu0 0
      %2823 = vmatpush1.bf16.msra.mxu0 0
      %2824 = vmatprep.subr.bf16.mxu0 0
      %2825 = vmatpush1.bf16.msra.mxu0 0
      %2826 = vmatprep.subr.bf16.mxu0 0
      %2827 = vmatpush1.bf16.msra.mxu0 0
      %2828 = vmatprep.subr.bf16.mxu0 0
      %2829 = vmatpush1.bf16.msra.mxu0 0
      %2830 = vmatprep.subr.bf16.mxu0 0
      %2831 = vmatpush1.bf16.msra.mxu0 0
      %2832 = vmatprep.subr.bf16.mxu0 0
      %2833 = vmatpush1.bf16.msra.mxu0 0
      %2834 = vmatprep.subr.bf16.mxu0 0
      %2835 = vmatpush1.bf16.msra.mxu0 0
      %2836 = vmatprep.subr.bf16.mxu0 0
      %2837 = vmatpush1.bf16.msra.mxu0 0
      %2838 = vmatprep.mubr.bf16.mxu0 0
      %2839 = vmatmul.mubr.bf16.gmra.mrb[0].mxu0 %v2121
      %v2840 = vpop.f32.mrb[0].mxu0
      %v2841 = vadd.f32 %v2778, %v2840
      %v2842 = vpop.f32.mrb[0].mxu0
      %v2843 = vadd.f32 %v2780, %v2842
      %v2844 = vpop.f32.mrb[0].mxu0
      %v2845 = vadd.f32 %v2782, %v2844
      %v2846 = vpop.f32.mrb[0].mxu0
      %v2847 = vadd.f32 %v2784, %v2846
      %2848 = vmatprep.mubr.bf16.mxu0 0
      %2849 = vmatmul.mubr.bf16.gmra.mrb[0].mxu0 %v2127
      %v2850 = vpop.f32.mrb[0].mxu0
      %v2851 = vadd.f32 %v2788, %v2850
      %v2852 = vpop.f32.mrb[0].mxu0
      %v2853 = vadd.f32 %v2790, %v2852
      %v2854 = vpop.f32.mrb[0].mxu0
      %v2855 = vadd.f32 %v2792, %v2854
      %v2856 = vpop.f32.mrb[0].mxu0
      %v2857 = vadd.f32 %v2794, %v2856
      %2858 = vmatprep.mubr.bf16.mxu0 0
      %2859 = vmatmul.mubr.bf16.gmra.mrb[0].mxu0 %v2126
      %v2860 = vpop.f32.mrb[0].mxu0
      %v2861 = vadd.f32 %v2798, %v2860
      %v2862 = vpop.f32.mrb[0].mxu0
      %v2863 = vadd.f32 %v2800, %v2862
      %v2864 = vpop.f32.mrb[0].mxu0
      %v2865 = vadd.f32 %v2802, %v2864
      %v2866 = vpop.f32.mrb[0].mxu0
      %v2867 = vadd.f32 %v2804, %v2866
      %2868 = vdwg.mxu0
      %v2869 = vadd.f32 %v1851, %v2715
      %v2870 = vadd.f32 %v1853, %v2717
      %v2871 = vadd.f32 %v1977, %v2841
      %v2872 = vadd.f32 %v1979, %v2843
      %v2873 = vadd.f32 %v1855, %v2719
      %v2874 = vadd.f32 %v1857, %v2721
      %v2875 = vadd.f32 %v1981, %v2845
      %v2876 = vadd.f32 %v1983, %v2847
      %v2877 = vadd.f32 %v1861, %v2725
      %v2878 = vadd.f32 %v1863, %v2727
      %v2879 = vadd.f32 %v1987, %v2851
      %v2880 = vadd.f32 %v1989, %v2853
      %v2881 = vadd.f32 %v1865, %v2729
      %v2882 = vadd.f32 %v1867, %v2731
      %v2883 = vadd.f32 %v1991, %v2855
      %v2884 = vadd.f32 %v1993, %v2857
      %v2885 = vadd.f32 %v1871, %v2735
      %v2886 = vadd.f32 %v1873, %v2737
      %v2887 = vadd.f32 %v1997, %v2861
      %v2888 = vadd.f32 %v1999, %v2863
      %v2889 = vadd.f32 %v1875, %v2739
      %v2890 = vadd.f32 %v1877, %v2741
      %v2891 = vadd.f32 %v2001, %v2865
      %v2892 = vadd.f32 %v2003, %v2867
      %v2893 = vld [vmem:[%s3] sm:$0xf]
      %v2895 = vlaneseq
      %v2896 = vshrl.u32 %v2895, 7
      %v2897 = vsub.s32 0, %v2896
      %v2898 = vrot.slane %v2893, %v2897
      %v2899 = vlaneseq
      %v2900 = vshrl.u32 %v2899, 7
      %v2901 = vsub.s32 1, %v2900
      %v2902 = vrot.slane %v2893, %v2901
      %v2903 = vlaneseq
      %v2904 = vshrl.u32 %v2903, 7
      %v2905 = vsub.s32 2, %v2904
      %v2906 = vrot.slane %v2893, %v2905
      %v2907 = vlaneseq
      %v2908 = vshrl.u32 %v2907, 7
      %v2909 = vsub.s32 3, %v2908
      %v2910 = vrot.slane %v2893, %v2909
      %v2915 = vadd.f32 %v2869, %v2898
      %v2916 = vadd.f32 %v2870, %v2902
      %v2917 = vadd.f32 %v2871, %v2906
      %v2918 = vadd.f32 %v2872, %v2910
      %v2919 = vadd.f32 %v2873, %v2898
      %v2920 = vadd.f32 %v2874, %v2902
      %v2921 = vadd.f32 %v2875, %v2906
      %v2922 = vadd.f32 %v2876, %v2910
      %v2923 = vadd.f32 %v2877, %v2898
      %v2924 = vadd.f32 %v2878, %v2902
      %v2925 = vadd.f32 %v2879, %v2906
      %v2926 = vadd.f32 %v2880, %v2910
      %v2927 = vadd.f32 %v2881, %v2898
      %v2928 = vadd.f32 %v2882, %v2902
      %v2929 = vadd.f32 %v2883, %v2906
      %v2930 = vadd.f32 %v2884, %v2910
      %v2931 = vadd.f32 %v2885, %v2898
      %v2932 = vadd.f32 %v2886, %v2902
      %v2933 = vadd.f32 %v2887, %v2906
      %v2934 = vadd.f32 %v2888, %v2910
      %v2935 = vadd.f32 %v2889, %v2898
      %v2936 = vadd.f32 %v2890, %v2902
      %v2937 = vadd.f32 %v2891, %v2906
      %v2938 = vadd.f32 %v2892, %v2910
      %v2939 = vmax.f32 %v2915, 0.0
      %v2940 = vmax.f32 %v2916, 0.0
      %v2941 = vmax.f32 %v2917, 0.0
      %v2942 = vmax.f32 %v2918, 0.0
      %v2943 = vmax.f32 %v2919, 0.0
      %v2944 = vmax.f32 %v2920, 0.0
      %v2945 = vmax.f32 %v2921, 0.0
      %v2946 = vmax.f32 %v2922, 0.0
      %v2947 = vmax.f32 %v2923, 0.0
      %v2948 = vmax.f32 %v2924, 0.0
      %v2949 = vmax.f32 %v2925, 0.0
      %v2950 = vmax.f32 %v2926, 0.0
      %v2951 = vmax.f32 %v2927, 0.0
      %v2952 = vmax.f32 %v2928, 0.0
      %v2953 = vmax.f32 %v2929, 0.0
      %v2954 = vmax.f32 %v2930, 0.0
      %v2955 = vmax.f32 %v2931, 0.0
      %v2956 = vmax.f32 %v2932, 0.0
      %v2957 = vmax.f32 %v2933, 0.0
      %v2958 = vmax.f32 %v2934, 0.0
      %v2959 = vmax.f32 %v2935, 0.0
      %v2960 = vmax.f32 %v2936, 0.0
      %v2961 = vmax.f32 %v2937, 0.0
      %v2962 = vmax.f32 %v2938, 0.0
      %v2963 = vmax.f32 %v2939, %v2941
      %v2964 = vmax.f32 %v2940, %v2942
      %v2965 = vmax.f32 %v2943, %v2945
      %v2966 = vmax.f32 %v2944, %v2946
      %v2967 = vmax.f32 %v2947, %v2949
      %v2968 = vmax.f32 %v2948, %v2950
      %v2969 = vmax.f32 %v2951, %v2953
      %v2970 = vmax.f32 %v2952, %v2954
      %v2971 = vmax.f32 %v2955, %v2957
      %v2972 = vmax.f32 %v2956, %v2958
      %v2973 = vmax.f32 %v2959, %v2961
      %v2974 = vmax.f32 %v2960, %v2962
      %v2975 = vpack.c.bf16 %v2965, %v2963
      %v2976 = vpack.c.bf16 %v2966, %v2964
      %v2977 = vpack.c.bf16 %v2969, %v2967
      %v2978 = vpack.c.bf16 %v2970, %v2968
      %v2979 = vpack.c.bf16 %v2973, %v2971
      %v2980 = vpack.c.bf16 %v2974, %v2972
      %v2981 = vld [vmem:[%s2] sm:$0xf]
      %v2982 = vld [vmem:[%s2 + $0x4] sm:$0xf]
      %v2983 = vld [vmem:[%s2 + $0x8] sm:$0x7]
      %v2987 = vunpack.c.l.b16 %v2981
      %v2988 = vunpack.c.l.b16 %v2982
      %v2989 = vunpack.c.l.b16 %v2983
      %v2990 = vpack.c.b16 %v2988, %v2987
      %v2991 = vpack.c.b16 %v2989, %v2989
      %vm2992 = vcmask 359424
      %v2994 = vsel %vm2992, %v2990, 0
      %v2997 = vsel %vm2992, %v2991, 0
      %vm2999 = vcmask 1045504
      %v3001 = vsel %vm2999, %v2979, 0
      %v3004 = vsel %vm2999, %v2980, 0
      %3006 = vmatprep.subr.bf16.mxu0 %v2976
      %3007 = vmatpush1.bf16.msra.mxu0 %v2975
      %3008 = vmatprep.subr.bf16.mxu0 %v2978
      %3009 = vmatpush1.bf16.msra.mxu0 %v2977
      %3010 = vmatprep.subr.bf16.mxu0 %v3004
      %3011 = vmatpush1.bf16.msra.mxu0 %v3001
      %3012 = vmatprep.subr.bf16.mxu0 0
      %3013 = vmatpush1.bf16.msra.mxu0 0
      %3014 = vmatprep.subr.bf16.mxu0 0
      %3015 = vmatpush1.bf16.msra.mxu0 0
      %3016 = vmatprep.subr.bf16.mxu0 0
      %3017 = vmatpush1.bf16.msra.mxu0 0
      %3018 = vmatprep.subr.bf16.mxu0 0
      %3019 = vmatpush1.bf16.msra.mxu0 0
      %3020 = vmatprep.subr.bf16.mxu0 0
      %3021 = vmatpush1.bf16.msra.mxu0 0
      %3022 = vmatprep.subr.bf16.mxu0 0
      %3023 = vmatpush1.bf16.msra.mxu0 0
      %3024 = vmatprep.subr.bf16.mxu0 0
      %3025 = vmatpush1.bf16.msra.mxu0 0
      %3026 = vmatprep.subr.bf16.mxu0 0
      %3027 = vmatpush1.bf16.msra.mxu0 0
      %3028 = vmatprep.subr.bf16.mxu0 0
      %3029 = vmatpush1.bf16.msra.mxu0 0
      %3030 = vmatprep.subr.bf16.mxu0 0
      %3031 = vmatpush1.bf16.msra.mxu0 0
      %3032 = vmatprep.subr.bf16.mxu0 0
      %3033 = vmatpush1.bf16.msra.mxu0 0
      %3034 = vmatprep.subr.bf16.mxu0 0
      %3035 = vmatpush1.bf16.msra.mxu0 0
      %3036 = vmatprep.subr.bf16.mxu0 0
      %3037 = vmatpush1.bf16.msra.mxu0 0
      %3038 = vmatprep.mubr.bf16.mxu0 0
      %3039 = vmatmul.mubr.bf16.gmra.mrb[0].mxu0 %v2994
      %v3040 = vpop.f32.mrb[0].mxu0
      %v3041 = vadd.f32 0.0, %v3040
      %v3042 = vpop.f32.mrb[0].mxu0
      %v3043 = vadd.f32 0.0, %v3042
      %v3044 = vpop.f32.mrb[0].mxu0
      %v3045 = vadd.f32 0.0, %v3044
      %v3046 = vpop.f32.mrb[0].mxu0
      %v3047 = vadd.f32 0.0, %v3046
      %3048 = vmatprep.mubr.bf16.mxu0 0
      %3049 = vmatmul.mubr.bf16.gmra.mrb[0].mxu0 %v2997
      %v3050 = vpop.f32.mrb[0].mxu0
      %v3051 = vadd.f32 0.0, %v3050
      %v3052 = vpop.f32.mrb[0].mxu0
      %v3053 = vadd.f32 0.0, %v3052
      %v3054 = vpop.f32.mrb[0].mxu0
      %v3055 = vpop.f32.mrb[0].mxu0
      %3056 = vdwg.mxu0
      %s3057 = scalar_lea.vmem %s2, 12
      %v3058 = vld [vmem:[%s3057] sm:$0xf]
      %v3059 = vld [vmem:[%s3057 + $0x4] sm:$0xf]
      %v3060 = vld [vmem:[%s3057 + $0x8] sm:$0x7]
      %v3064 = vunpack.c.l.b16 %v3058
      %v3065 = vunpack.c.l.b16 %v3059
      %v3066 = vunpack.c.l.b16 %v3060
      %v3067 = vpack.c.b16 %v3065, %v3064
      %v3068 = vpack.c.b16 %v3066, %v3066
      %v3070 = vsel %vm2992, %v3067, 0
      %v3073 = vsel %vm2992, %v3068, 0
      %3075 = vmatprep.subr.bf16.mxu0 %v2976
      %3076 = vmatpush1.bf16.msra.mxu0 %v2975
      %3077 = vmatprep.subr.bf16.mxu0 %v2978
      %3078 = vmatpush1.bf16.msra.mxu0 %v2977
      %3079 = vmatprep.subr.bf16.mxu0 %v3004
      %3080 = vmatpush1.bf16.msra.mxu0 %v3001
      %3081 = vmatprep.subr.bf16.mxu0 0
      %3082 = vmatpush1.bf16.msra.mxu0 0
      %3083 = vmatprep.subr.bf16.mxu0 0
      %3084 = vmatpush1.bf16.msra.mxu0 0
      %3085 = vmatprep.subr.bf16.mxu0 0
      %3086 = vmatpush1.bf16.msra.mxu0 0
      %3087 = vmatprep.subr.bf16.mxu0 0
      %3088 = vmatpush1.bf16.msra.mxu0 0
      %3089 = vmatprep.subr.bf16.mxu0 0
      %3090 = vmatpush1.bf16.msra.mxu0 0
      %3091 = vmatprep.subr.bf16.mxu0 0
      %3092 = vmatpush1.bf16.msra.mxu0 0
      %3093 = vmatprep.subr.bf16.mxu0 0
      %3094 = vmatpush1.bf16.msra.mxu0 0
      %3095 = vmatprep.subr.bf16.mxu0 0
      %3096 = vmatpush1.bf16.msra.mxu0 0
      %3097 = vmatprep.subr.bf16.mxu0 0
      %3098 = vmatpush1.bf16.msra.mxu0 0
      %3099 = vmatprep.subr.bf16.mxu0 0
      %3100 = vmatpush1.bf16.msra.mxu0 0
      %3101 = vmatprep.subr.bf16.mxu0 0
      %3102 = vmatpush1.bf16.msra.mxu0 0
      %3103 = vmatprep.subr.bf16.mxu0 0
      %3104 = vmatpush1.bf16.msra.mxu0 0
      %3105 = vmatprep.subr.bf16.mxu0 0
      %3106 = vmatpush1.bf16.msra.mxu0 0
      %3107 = vmatprep.mubr.bf16.mxu0 0
      %3108 = vmatmul.mubr.bf16.gmra.mrb[0].mxu0 %v3070
      %v3109 = vpop.f32.mrb[0].mxu0
      %v3110 = vadd.f32 0.0, %v3109
      %v3111 = vpop.f32.mrb[0].mxu0
      %v3112 = vadd.f32 0.0, %v3111
      %v3113 = vpop.f32.mrb[0].mxu0
      %v3114 = vadd.f32 0.0, %v3113
      %v3115 = vpop.f32.mrb[0].mxu0
      %v3116 = vadd.f32 0.0, %v3115
      %3117 = vmatprep.mubr.bf16.mxu0 0
      %3118 = vmatmul.mubr.bf16.gmra.mrb[0].mxu0 %v3073
      %v3119 = vpop.f32.mrb[0].mxu0
      %v3120 = vadd.f32 0.0, %v3119
      %v3121 = vpop.f32.mrb[0].mxu0
      %v3122 = vadd.f32 0.0, %v3121
      %v3123 = vpop.f32.mrb[0].mxu0
      %v3124 = vpop.f32.mrb[0].mxu0
      %3125 = vdwg.mxu0
      %v3126 = vmax.f32 %v3041, %v3110
      %v3127 = vmax.f32 %v3043, %v3112
      %v3128 = vmax.f32 %v3045, %v3114
      %v3129 = vmax.f32 %v3047, %v3116
      %v3130 = vmax.f32 %v3051, %v3120
      %v3131 = vmax.f32 %v3053, %v3122
      %v3132 = vpack.c.bf16 %v3128, %v3126
      %v3133 = vpack.c.bf16 %v3129, %v3127
      %v3134 = vpack.c.bf16 %v3130, %v3130
      %v3135 = vpack.c.bf16 %v3131, %v3131
      %v3140 = vunpack.c.l.b16 %v3132
      %v3141 = vunpack.c.l.b16 %v3133
      %v3142 = vunpack.c.h.b16 %v3132
      %v3143 = vunpack.c.h.b16 %v3133
      %v3144 = vunpack.c.l.b16 %v3134
      %v3145 = vunpack.c.l.b16 %v3135
      %v3146 = vpack.c.b16 %v3141, %v3140
      %v3147 = vpack.c.b16 %v3143, %v3142
      %v3148 = vpack.c.b16 %v3145, %v3144
      %3152 = vst [vmem:[%s197] sm:$0xff] %v3146
      %3153 = vst [vmem:[%s197 + $0x8] sm:$0xff] %v3147
      %3154 = vst [vmem:[%s197 + $0x10] sm:$0x77] %v3148
      %p3155 = scmp.lt.s32.totalorder %s15, 1
      %s3156 = scalar_select %p3155, %s15, 1
      %s3157 = smul.addr %s3156, 6
      %s3158 = smul.addr %s3157, 4
      %s3159 = scalar_lea.vmem %s4, %s3158
      // Predicated region
      $region37: #{forward.7} parent=35 // pred_check
        %p3160 = pneg %p122
      $region38: #{forward.7} parent=35 // pred_check_branch
        %3162 = sbr.rel (%p3160) target = $region40
      $region39: #{forward.7} parent=35 // pred_region
        _
      $region40: #{forward.7} parent=35 // pred_fallthru
        _
    $region36: #{forward.7} parent=5 // pred_fallthru
      _
    %p3163 = scmp.le.s32.totalorder 2, %s10
    // Predicated region
    $region41: #{forward.7} parent=5 // pred_check
      %p3164 = pneg %p3163
    $region42: #{forward.7} parent=5 // pred_check_branch
      %3166 = sbr.rel (%p3164) target = $region44
    $region43: #{forward.7} parent=5 // pred_region
      %s3167 = ssub.s32 %s10, 2
      // Predicated region
      $region45: #{forward.7} parent=43 // pred_check
        %p3168 = pneg %p128
      $region46: #{forward.7} parent=43 // pred_check_branch
        %3170 = sbr.rel (%p3168) target = $region48
      $region47: #{forward.7} parent=43 // pred_region
        %p3171 = scmp.lt.s32.totalorder %s16, 1
        %s3172 = scalar_select %p3171, %s16, 1
        %s3173 = smul.addr %s3172, 6
        %s3174 = smul.addr %s3173, 4
        %s3175 = scalar_lea.vmem %s4, %s3174
      $region48: #{forward.7} parent=43 // pred_fallthru
        _
    $region44: #{forward.7} parent=5 // pred_fallthru
      _
  $region6: #{forward.7} parent=0 // loop_footer
    %s14 = sadd.s32 1, %s10
  $region7: #{forward.7} parent=0 // loop_footer_branch
    %9 = sbr.rel target = $region3
  $region8: #{forward.7} parent=0 // loop_exit
    _

// kernel: forward.11
$region0: #{forward.11}
  #allocation0 [shape = 'u32[]', space=smem, size = 0x4, offset = 0x4, fixed_abs, tag = 'smem constant byte address 0x4 - core index']
  #allocation1 [shape = 'u32[144,128]{1,0:T(1,128)}', space=vmem, size = 0x12000, scoped, tag = 'internal scratch']
  %s0 = inlined_call_operand.vmem [shape: bf16[2,128], index: 0, kind: input, shape index: {}]
  %s1 = inlined_call_operand.vmem [shape: bf16[128,128], index: 1, kind: input, shape index: {}]
  %s2 = inlined_call_operand.vmem [shape: f32[1,128], index: 2, kind: input, shape index: {}]
  %s3 = inlined_call_operand.vmem [shape: bf16[128,128], index: 3, kind: input, shape index: {}]
  %s4 = inlined_call_operand.vmem [shape: f32[1,128], index: 4, kind: input, shape index: {}]
  %s5 = inlined_call_operand.hbm [shape: f32[2,128], index: 5, kind: output, shape index: {}]
  %s6 = sld [smem:[#allocation0]]
  $region30: #{forward.11} parent=0
    _
  %s8 = ssub.s32 1, %s6
  %s9 = scalar_select 0, %s8, %s6
  $region1: #{forward.11} parent=0
    #allocation2 [shape = 'u8[1024]{0}', space=vmem, size = 0x400, scoped, tag = 'output window, operand 0, single buffered']
    #allocation3 [shape = 's32[1]{0}', space=sflag, size = 0x4, scoped, tag = 'scoped memory for forward.11']
    %10 = vsyncpa [#allocation3], 0
    // Predicated region
    $region2: #{forward.11} parent=1 // pred_check
      _
    $region3: #{forward.11} parent=1 // pred_check_branch
      %12 = sbr.rel (0) target = $region5
    $region4: #{forward.11} parent=1 // pred_region
      _
    $region5: #{forward.11} parent=1 // pred_fallthru
      _
    // Predicated region
    $region6: #{forward.11} parent=1 // pred_check
      _
    $region7: #{forward.11} parent=1 // pred_check_branch
      %14 = sbr.rel (0) target = $region9
    $region8: #{forward.11} parent=1 // pred_region
      _
    $region9: #{forward.11} parent=1 // pred_fallthru
      _
    // Predicated region
    $region10: #{forward.11} parent=1 // pred_check
      _
    $region11: #{forward.11} parent=1 // pred_check_branch
      %16 = sbr.rel (0) target = $region13
    $region12: #{forward.11} parent=1 // pred_region
      _
    $region13: #{forward.11} parent=1 // pred_fallthru
      _
    // Predicated region
    $region14: #{forward.11} parent=1 // pred_check
      _
    $region15: #{forward.11} parent=1 // pred_check_branch
      %18 = sbr.rel (0) target = $region17
    $region16: #{forward.11} parent=1 // pred_region
      _
    $region17: #{forward.11} parent=1 // pred_fallthru
      _
    // Predicated region
    $region18: #{forward.11} parent=1 // pred_check
      _
    $region19: #{forward.11} parent=1 // pred_check_branch
      %20 = sbr.rel (0) target = $region21
    $region20: #{forward.11} parent=1 // pred_region
      _
    $region21: #{forward.11} parent=1 // pred_fallthru
      _
    %v22 = vld [vmem:[%s0] sm:$0x1]
    %v23 = vld [vmem:[%s1] sm:$0xf]
    %v24 = vld [vmem:[%s1 + $0x4] sm:$0xf]
    %v25 = vld [vmem:[%s1 + $0x8] sm:$0xf]
    %v26 = vld [vmem:[%s1 + $0xc] sm:$0xf]
    %v27 = vld [vmem:[%s1 + $0x10] sm:$0xf]
    %v28 = vld [vmem:[%s1 + $0x14] sm:$0xf]
    %v29 = vld [vmem:[%s1 + $0x18] sm:$0xf]
    %v30 = vld [vmem:[%s1 + $0x1c] sm:$0xf]
    %v31 = vld [vmem:[%s1 + $0x20] sm:$0xf]
    %v32 = vld [vmem:[%s1 + $0x24] sm:$0xf]
    %v33 = vld [vmem:[%s1 + $0x28] sm:$0xf]
    %v34 = vld [vmem:[%s1 + $0x2c] sm:$0xf]
    %v35 = vld [vmem:[%s1 + $0x30] sm:$0xf]
    %v36 = vld [vmem:[%s1 + $0x34] sm:$0xf]
    %v37 = vld [vmem:[%s1 + $0x38] sm:$0xf]
    %v38 = vld [vmem:[%s1 + $0x3c] sm:$0xf]
    %v39 = vld [vmem:[%s2] sm:$0x1]
    %v41 = vlaneseq
    %v42 = vshrl.u32 %v41, 7
    %v43 = vsub.s32 0, %v42
    %v44 = vrot.slane %v39, %v43
    %v62 = vunpack.c.l.b16 %v23
    %v63 = vunpack.c.l.b16 %v24
    %v64 = vunpack.c.l.b16 %v25
    %v65 = vunpack.c.l.b16 %v26
    %v66 = vunpack.c.l.b16 %v27
    %v67 = vunpack.c.l.b16 %v28
    %v68 = vunpack.c.l.b16 %v29
    %v69 = vunpack.c.l.b16 %v30
    %v70 = vunpack.c.l.b16 %v31
    %v71 = vunpack.c.l.b16 %v32
    %v72 = vunpack.c.l.b16 %v33
    %v73 = vunpack.c.l.b16 %v34
    %v74 = vunpack.c.l.b16 %v35
    %v75 = vunpack.c.l.b16 %v36
    %v76 = vunpack.c.l.b16 %v37
    %v77 = vunpack.c.l.b16 %v38
    %v78 = vpack.c.b16 %v63, %v62
    %v79 = vpack.c.b16 %v65, %v64
    %v80 = vpack.c.b16 %v67, %v66
    %v81 = vpack.c.b16 %v69, %v68
    %v82 = vpack.c.b16 %v71, %v70
    %v83 = vpack.c.b16 %v73, %v72
    %v84 = vpack.c.b16 %v75, %v74
    %v85 = vpack.c.b16 %v77, %v76
    %94 = vmatprep.subr.bf16.mxu0 0
    %95 = vmatpush1.bf16.msra.mxu0 %v78
    %96 = vmatprep.subr.bf16.mxu0 0
    %97 = vmatpush1.bf16.msra.mxu0 %v79
    %98 = vmatprep.subr.bf16.mxu0 0
    %99 = vmatpush1.bf16.msra.mxu0 %v80
    %100 = vmatprep.subr.bf16.mxu0 0
    %101 = vmatpush1.bf16.msra.mxu0 %v81
    %102 = vmatprep.subr.bf16.mxu0 0
    %103 = vmatpush1.bf16.msra.mxu0 %v82
    %104 = vmatprep.subr.bf16.mxu0 0
    %105 = vmatpush1.bf16.msra.mxu0 %v83
    %106 = vmatprep.subr.bf16.mxu0 0
    %107 = vmatpush1.bf16.msra.mxu0 %v84
    %108 = vmatprep.subr.bf16.mxu0 0
    %109 = vmatpush1.bf16.msra.mxu0 %v85
    %110 = vmatprep.subr.bf16.mxu0 0
    %111 = vmatpush1.bf16.msra.mxu0 0
    %112 = vmatprep.subr.bf16.mxu0 0
    %113 = vmatpush1.bf16.msra.mxu0 0
    %114 = vmatprep.subr.bf16.mxu0 0
    %115 = vmatpush1.bf16.msra.mxu0 0
    %116 = vmatprep.subr.bf16.mxu0 0
    %117 = vmatpush1.bf16.msra.mxu0 0
    %118 = vmatprep.subr.bf16.mxu0 0
    %119 = vmatpush1.bf16.msra.mxu0 0
    %120 = vmatprep.subr.bf16.mxu0 0
    %121 = vmatpush1.bf16.msra.mxu0 0
    %122 = vmatprep.subr.bf16.mxu0 0
    %123 = vmatpush1.bf16.msra.mxu0 0
    %124 = vmatprep.subr.bf16.mxu0 0
    %125 = vmatpush1.bf16.msra.mxu0 0
    %126 = vmatprep.mubr.bf16.mxu0 0
    %127 = vmatmul.mubr.bf16.gmra.mrb[0].mxu0 %v22
    %v128 = vpop.f32.mrb[0].mxu0
    %v129 = vadd.f32 %v44, %v128
    %v130 = vpop.f32.mrb[0].mxu0
    %v131 = vpop.f32.mrb[0].mxu0
    %v132 = vpop.f32.mrb[0].mxu0
    %133 = vdwg.mxu0
    %v134 = vmax.f32 %v129, 0.0
    %v135 = vpack.c.bf16 %v134, %v134
    %v136 = vld [vmem:[%s3] sm:$0xf]
    %v137 = vld [vmem:[%s3 + $0x4] sm:$0xf]
    %v138 = vld [vmem:[%s3 + $0x8] sm:$0xf]
    %v139 = vld [vmem:[%s3 + $0xc] sm:$0xf]
    %v140 = vld [vmem:[%s3 + $0x10] sm:$0xf]
    %v141 = vld [vmem:[%s3 + $0x14] sm:$0xf]
    %v142 = vld [vmem:[%s3 + $0x18] sm:$0xf]
    %v143 = vld [vmem:[%s3 + $0x1c] sm:$0xf]
    %v144 = vld [vmem:[%s3 + $0x20] sm:$0xf]
    %v145 = vld [vmem:[%s3 + $0x24] sm:$0xf]
    %v146 = vld [vmem:[%s3 + $0x28] sm:$0xf]
    %v147 = vld [vmem:[%s3 + $0x2c] sm:$0xf]
    %v148 = vld [vmem:[%s3 + $0x30] sm:$0xf]
    %v149 = vld [vmem:[%s3 + $0x34] sm:$0xf]
    %v150 = vld [vmem:[%s3 + $0x38] sm:$0xf]
    %v151 = vld [vmem:[%s3 + $0x3c] sm:$0xf]
    %v152 = vld [vmem:[%s4] sm:$0x1]
    %v154 = vlaneseq
    %v155 = vshrl.u32 %v154, 7
    %v156 = vsub.s32 0, %v155
    %v157 = vrot.slane %v152, %v156
    %v175 = vunpack.c.l.b16 %v136
    %v176 = vunpack.c.l.b16 %v137
    %v177 = vunpack.c.l.b16 %v138
    %v178 = vunpack.c.l.b16 %v139
    %v179 = vunpack.c.l.b16 %v140
    %v180 = vunpack.c.l.b16 %v141
    %v181 = vunpack.c.l.b16 %v142
    %v182 = vunpack.c.l.b16 %v143
    %v183 = vunpack.c.l.b16 %v144
    %v184 = vunpack.c.l.b16 %v145
    %v185 = vunpack.c.l.b16 %v146
    %v186 = vunpack.c.l.b16 %v147
    %v187 = vunpack.c.l.b16 %v148
    %v188 = vunpack.c.l.b16 %v149
    %v189 = vunpack.c.l.b16 %v150
    %v190 = vunpack.c.l.b16 %v151
    %v191 = vpack.c.b16 %v176, %v175
    %v192 = vpack.c.b16 %v178, %v177
    %v193 = vpack.c.b16 %v180, %v179
    %v194 = vpack.c.b16 %v182, %v181
    %v195 = vpack.c.b16 %v184, %v183
    %v196 = vpack.c.b16 %v186, %v185
    %v197 = vpack.c.b16 %v188, %v187
    %v198 = vpack.c.b16 %v190, %v189
    %207 = vmatprep.subr.bf16.mxu0 0
    %208 = vmatpush1.bf16.msra.mxu0 %v191
    %209 = vmatprep.subr.bf16.mxu0 0
    %210 = vmatpush1.bf16.msra.mxu0 %v192
    %211 = vmatprep.subr.bf16.mxu0 0
    %212 = vmatpush1.bf16.msra.mxu0 %v193
    %213 = vmatprep.subr.bf16.mxu0 0
    %214 = vmatpush1.bf16.msra.mxu0 %v194
    %215 = vmatprep.subr.bf16.mxu0 0
    %216 = vmatpush1.bf16.msra.mxu0 %v195
    %217 = vmatprep.subr.bf16.mxu0 0
    %218 = vmatpush1.bf16.msra.mxu0 %v196
    %219 = vmatprep.subr.bf16.mxu0 0
    %220 = vmatpush1.bf16.msra.mxu0 %v197
    %221 = vmatprep.subr.bf16.mxu0 0
    %222 = vmatpush1.bf16.msra.mxu0 %v198
    %223 = vmatprep.subr.bf16.mxu0 0
    %224 = vmatpush1.bf16.msra.mxu0 0
    %225 = vmatprep.subr.bf16.mxu0 0
    %226 = vmatpush1.bf16.msra.mxu0 0
    %227 = vmatprep.subr.bf16.mxu0 0
    %228 = vmatpush1.bf16.msra.mxu0 0
    %229 = vmatprep.subr.bf16.mxu0 0
    %230 = vmatpush1.bf16.msra.mxu0 0
    %231 = vmatprep.subr.bf16.mxu0 0
    %232 = vmatpush1.bf16.msra.mxu0 0
    %233 = vmatprep.subr.bf16.mxu0 0
    %234 = vmatpush1.bf16.msra.mxu0 0
    %235 = vmatprep.subr.bf16.mxu0 0
    %236 = vmatpush1.bf16.msra.mxu0 0
    %237 = vmatprep.subr.bf16.mxu0 0
    %238 = vmatpush1.bf16.msra.mxu0 0
    %239 = vmatprep.mubr.bf16.mxu0 0
    %240 = vmatmul.mubr.bf16.gmra.mrb[0].mxu0 %v135
    %v241 = vpop.f32.mrb[0].mxu0
    %v242 = vadd.f32 %v157, %v241
    %v243 = vpop.f32.mrb[0].mxu0
    %v244 = vpop.f32.mrb[0].mxu0
    %v245 = vpop.f32.mrb[0].mxu0
    %246 = vdwg.mxu0
    %247 = vst [vmem:[#allocation2] sm:$0x3] %v242
    // Predicated region
    $region22: #{forward.11} parent=1 // pred_check
      _
    $region23: #{forward.11} parent=1 // pred_check_branch
      %249 = sbr.rel (0) target = $region25
    $region24: #{forward.11} parent=1 // pred_region
      %s251 = ssub.s32 32, 32
      %252 = vsyncadd [#allocation3], %s251
      %s254 = sshll.u32 [#allocation2], 4
      %s255 = int_to_ptr.vmem [resolvable:$true] %s254
      %257 = dma.vmem_to_hbm [thread:$0]  %s255, 32, %s5, [#allocation3]
    $region25: #{forward.11} parent=1 // pred_fallthru
      _
    // Predicated region
    $region26: #{forward.11} parent=1 // pred_check
      _
    $region27: #{forward.11} parent=1 // pred_check_branch
      %259 = sbr.rel (0) target = $region29
    $region28: #{forward.11} parent=1 // pred_region
      %260 = dma.done [#allocation3], 32
    $region29: #{forward.11} parent=1 // pred_fallthru
      _
    %261 = vsyncpa [#allocation3], 1

// kernel: forward.10
$region0: #{forward.10}
  #allocation0 [shape = 'u32[]', space=smem, size = 0x4, offset = 0x4, fixed_abs, tag = 'smem constant byte address 0x4 - core index']
  #allocation1 [shape = 'u32[144,128]{1,0:T(1,128)}', space=vmem, size = 0x12000, scoped, tag = 'internal scratch']
  %s0 = inlined_call_operand.vmem [shape: bf16[2,4,128], index: 0, kind: input, shape index: {}]
  %s1 = inlined_call_operand.vmem [shape: bf16[3,128,256], index: 1, kind: input, shape index: {}]
  %s2 = inlined_call_operand.vmem [shape: bf16[2,1,2], index: 2, kind: input, shape index: {}]
  %s3 = inlined_call_operand.vmem [shape: f32[1,256], index: 3, kind: input, shape index: {}]
  %s4 = inlined_call_operand.vmem [shape: bf16[2,1,128], index: 4, kind: output, shape index: {}]
  %s5 = sld [smem:[#allocation0]]
  $region49: #{forward.10} parent=0
    _
  %s7 = ssub.s32 1, %s5
  %s8 = scalar_select 0, %s7, %s5
  loop: start=0, step=1, limit=4
  $region2: #{forward.10} parent=0 // loop_pre_header
    _
  $region3: #{forward.10} parent=0 // loop_header
    %s10 = sphi 0, %s14
    %p11 = scmp.ge.s32.totalorder %s10, 4
    %s20 = sphi 0, %s22
    %s23 = sphi 0, %s20
    %s24 = sphi 0, %s23
    %s40 = sphi 0, %s24
    %s44 = sphi 0, %s44
    %s46 = sphi 0, %s44
    %s47 = sphi 0, %s46
    %s61 = sphi 0, %s47
    %s65 = sphi 0, %s65
    %s67 = sphi 0, %s65
    %s68 = sphi 0, %s67
    %s82 = sphi 0, %s68
    %s86 = sphi 0, %s86
    %s88 = sphi 0, %s86
    %s89 = sphi 0, %s88
    %s103 = sphi 0, %s89
    %s109 = sphi 0, %s111
    %s112 = sphi 0, %s109
    %s113 = sphi 0, %s112
    %s129 = sphi 0, %s113
  $region4: #{forward.10} parent=0 // loop_header_branch
    %13 = sbr.rel (%p11) target = $region8
  $region5: #{forward.10} parent=0 // loop_body
    %s15 = ssub.s32 %s10, 1
    %s16 = ssub.s32 %s10, 2
    %s17 = sadd.s32 %s10, 1
    %s18 = ssub.s32 %s10, %s17
    %p19 = scmp.eq.s32.totalorder %s18, 0
    %s21 = sadd.s32 %s20, 1
    %s22 = scalar_select %p19, %s20, %s21
    %p25 = pneg %p19
    %p26 = scmp.eq.s32.totalorder %s10, 1
    %p27 = por %p25, %p26
    %p28 = scmp.ne.s32.totalorder %s20, %s23
    %p29 = scmp.eq.s32.totalorder %s10, 0
    %p30 = por %p28, %p29
    %p31 = scmp.ne.s32.totalorder %s20, %s23
    %p32 = scmp.eq.s32.totalorder %s15, 1
    %p33 = por %p31, %p32
    %p34 = scmp.ne.s32.totalorder %s23, %s24
    %p35 = scmp.eq.s32.totalorder %s15, 0
    %p36 = por %p34, %p35
    %p37 = scmp.ne.s32.totalorder %s23, %s24
    %p38 = scmp.eq.s32.totalorder %s16, 1
    %p39 = por %p37, %p38
    %p41 = scmp.ne.s32.totalorder %s24, %s40
    %p42 = scmp.eq.s32.totalorder %s16, 0
    %p43 = por %p41, %p42
    %s45 = sadd.s32 %s44, 1
    %p48 = scmp.eq.s32.totalorder %s10, 1
    %p49 = scmp.ne.s32.totalorder %s44, %s46
    %p50 = scmp.eq.s32.totalorder %s10, 0
    %p51 = por %p49, %p50
    %p52 = scmp.ne.s32.totalorder %s44, %s46
    %p53 = scmp.eq.s32.totalorder %s15, 1
    %p54 = por %p52, %p53
    %p55 = scmp.ne.s32.totalorder %s46, %s47
    %p56 = scmp.eq.s32.totalorder %s15, 0
    %p57 = por %p55, %p56
    %p58 = scmp.ne.s32.totalorder %s46, %s47
    %p59 = scmp.eq.s32.totalorder %s16, 1
    %p60 = por %p58, %p59
    %p62 = scmp.ne.s32.totalorder %s47, %s61
    %p63 = scmp.eq.s32.totalorder %s16, 0
    %p64 = por %p62, %p63
    %s66 = sadd.s32 %s65, 1
    %p69 = scmp.eq.s32.totalorder %s10, 1
    %p70 = scmp.ne.s32.totalorder %s65, %s67
    %p71 = scmp.eq.s32.totalorder %s10, 0
    %p72 = por %p70, %p71
    %p73 = scmp.ne.s32.totalorder %s65, %s67
    %p74 = scmp.eq.s32.totalorder %s15, 1
    %p75 = por %p73, %p74
    %p76 = scmp.ne.s32.totalorder %s67, %s68
    %p77 = scmp.eq.s32.totalorder %s15, 0
    %p78 = por %p76, %p77
    %p79 = scmp.ne.s32.totalorder %s67, %s68
    %p80 = scmp.eq.s32.totalorder %s16, 1
    %p81 = por %p79, %p80
    %p83 = scmp.ne.s32.totalorder %s68, %s82
    %p84 = scmp.eq.s32.totalorder %s16, 0
    %p85 = por %p83, %p84
    %s87 = sadd.s32 %s86, 1
    %p90 = scmp.eq.s32.totalorder %s10, 1
    %p91 = scmp.ne.s32.totalorder %s86, %s88
    %p92 = scmp.eq.s32.totalorder %s10, 0
    %p93 = por %p91, %p92
    %p94 = scmp.ne.s32.totalorder %s86, %s88
    %p95 = scmp.eq.s32.totalorder %s15, 1
    %p96 = por %p94, %p95
    %p97 = scmp.ne.s32.totalorder %s88, %s89
    %p98 = scmp.eq.s32.totalorder %s15, 0
    %p99 = por %p97, %p98
    %p100 = scmp.ne.s32.totalorder %s88, %s89
    %p101 = scmp.eq.s32.totalorder %s16, 1
    %p102 = por %p100, %p101
    %p104 = scmp.ne.s32.totalorder %s89, %s103
    %p105 = scmp.eq.s32.totalorder %s16, 0
    %p106 = por %p104, %p105
    %s107 = ssub.s32 %s10, %s17
    %p108 = scmp.eq.s32.totalorder %s107, 0
    %s110 = sadd.s32 %s109, 1
    %s111 = scalar_select %p108, %s109, %s110
    %p114 = pneg %p108
    %p115 = scmp.eq.s32.totalorder %s10, 1
    %p116 = por %p114, %p115
    %p117 = scmp.ne.s32.totalorder %s109, %s112
    %p118 = scmp.eq.s32.totalorder %s10, 0
    %p119 = por %p117, %p118
    %p120 = scmp.ne.s32.totalorder %s109, %s112
    %p121 = scmp.eq.s32.totalorder %s15, 1
    %p122 = por %p120, %p121
    %p123 = scmp.ne.s32.totalorder %s112, %s113
    %p124 = scmp.eq.s32.totalorder %s15, 0
    %p125 = por %p123, %p124
    %p126 = scmp.ne.s32.totalorder %s112, %s113
    %p127 = scmp.eq.s32.totalorder %s16, 1
    %p128 = por %p126, %p127
    %p130 = scmp.ne.s32.totalorder %s113, %s129
    %p131 = scmp.eq.s32.totalorder %s16, 0
    %p132 = por %p130, %p131
    %p133 = scmp.le.s32.totalorder 1, %s10
    %p134 = scmp.lt.s32.totalorder %s10, 3
    %p135 = pnand %p133, %p134
    %p136 = pneg %p135
    // Predicated region
    $region9: #{forward.10} parent=5 // pred_check
      _
    $region10: #{forward.10} parent=5 // pred_check_branch
      %138 = sbr.rel (%p135) target = $region12
    $region11: #{forward.10} parent=5 // pred_region
      %s139 = ssub.s32 %s10, 1
      // Predicated region
      $region13: #{forward.10} parent=11 // pred_check
        %p140 = pneg %p57
      $region14: #{forward.10} parent=11 // pred_check_branch
        %142 = sbr.rel (%p140) target = $region16
      $region15: #{forward.10} parent=11 // pred_region
        _
      $region16: #{forward.10} parent=11 // pred_fallthru
        _
      // Predicated region
      $region17: #{forward.10} parent=11 // pred_check
        %p143 = pneg %p78
      $region18: #{forward.10} parent=11 // pred_check_branch
        %145 = sbr.rel (%p143) target = $region20
      $region19: #{forward.10} parent=11 // pred_region
        _
      $region20: #{forward.10} parent=11 // pred_fallthru
        _
      // Predicated region
      $region21: #{forward.10} parent=11 // pred_check
        %p146 = pneg %p99
      $region22: #{forward.10} parent=11 // pred_check_branch
        %148 = sbr.rel (%p146) target = $region24
      $region23: #{forward.10} parent=11 // pred_region
        _
      $region24: #{forward.10} parent=11 // pred_fallthru
        _
    $region12: #{forward.10} parent=5 // pred_fallthru
      _
    %p149 = scmp.lt.s32.totalorder %s10, 2
    // Predicated region
    $region25: #{forward.10} parent=5 // pred_check
      %p150 = pneg %p149
    $region26: #{forward.10} parent=5 // pred_check_branch
      %152 = sbr.rel (%p150) target = $region28
    $region27: #{forward.10} parent=5 // pred_region
      // Predicated region
      $region29: #{forward.10} parent=27 // pred_check
        %p153 = pneg %p30
      $region30: #{forward.10} parent=27 // pred_check_branch
        %155 = sbr.rel (%p153) target = $region32
      $region31: #{forward.10} parent=27 // pred_region
        %p156 = scmp.lt.s32.totalorder %s10, 1
        %s157 = scalar_select %p156, %s10, 1
        %s158 = smul.addr %s157, 2
        %s159 = scalar_lea.vmem %s0, %s158
      $region32: #{forward.10} parent=27 // pred_fallthru
        _
    $region28: #{forward.10} parent=5 // pred_fallthru
      _
    %p160 = scmp.le.s32.totalorder 1, %s10
    %p161 = scmp.lt.s32.totalorder %s10, 3
    %p162 = pnand %p160, %p161
    %p163 = pneg %p162
    // Predicated region
    $region33: #{forward.10} parent=5 // pred_check
      _
    $region34: #{forward.10} parent=5 // pred_check_branch
      %165 = sbr.rel (%p162) target = $region36
    $region35: #{forward.10} parent=5 // pred_region
      %s166 = ssub.s32 %s10, 1
      %p167 = scmp.lt.s32.totalorder %s15, 1
      %s168 = scalar_select %p167, %s15, 1
      %s169 = smul.addr %s168, 2
      %s170 = scalar_lea.vmem %s0, %s169
      %p171 = pneg %p36
      %p172 = pneg %p33
      %p173 = pneg %p57
      %p174 = pneg %p54
      %p175 = pneg %p78
      %p176 = pneg %p75
      %p177 = pneg %p99
      %p178 = pneg %p96
      %p179 = pneg %p125
      %p180 = pneg %p122
      %p181 = scmp.lt.s32.totalorder %s15, 1
      %s182 = scalar_select %p181, %s15, 1
      %s183 = scalar_lea.vmem %s4, %s182
      %p184 = scmp.lt.s32.totalorder %s15, 1
      %s185 = scalar_select %p184, %s15, 1
      %s186 = smul.addr %s185, 2
      %s187 = scalar_lea.vmem %s0, %s186
      %p188 = scmp.lt.s32.totalorder %s15, 1
      %s189 = scalar_select %p188, %s15, 1
      %s190 = scalar_lea.vmem %s4, %s189
      %v192 = vld [vmem:[%s187] sm:$0x1]
      %v193 = vld [vmem:[%s1] sm:$0xff]
      %v194 = vld [vmem:[%s1 + $0x8] sm:$0xff]
      %v195 = vld [vmem:[%s1 + $0x10] sm:$0xff]
      %v196 = vld [vmem:[%s1 + $0x18] sm:$0xff]
      %v197 = vld [vmem:[%s1 + $0x20] sm:$0xff]
      %v198 = vld [vmem:[%s1 + $0x28] sm:$0xff]
      %v199 = vld [vmem:[%s1 + $0x30] sm:$0xff]
      %v200 = vld [vmem:[%s1 + $0x38] sm:$0xff]
      %v201 = vld [vmem:[%s1 + $0x40] sm:$0xff]
      %v202 = vld [vmem:[%s1 + $0x48] sm:$0xff]
      %v203 = vld [vmem:[%s1 + $0x50] sm:$0xff]
      %v204 = vld [vmem:[%s1 + $0x58] sm:$0xff]
      %v205 = vld [vmem:[%s1 + $0x60] sm:$0xff]
      %v206 = vld [vmem:[%s1 + $0x68] sm:$0xff]
      %v207 = vld [vmem:[%s1 + $0x70] sm:$0xff]
      %v208 = vld [vmem:[%s1 + $0x78] sm:$0xff]
      %v209 = vld [vmem:[%s187] sm:$0x3]
      %s210 = scalar_lea.vmem %s1, 128
      %v211 = vld [vmem:[%s210] sm:$0xff]
      %v212 = vld [vmem:[%s210 + $0x8] sm:$0xff]
      %v213 = vld [vmem:[%s210 + $0x10] sm:$0xff]
      %v214 = vld [vmem:[%s210 + $0x18] sm:$0xff]
      %v215 = vld [vmem:[%s210 + $0x20] sm:$0xff]
      %v216 = vld [vmem:[%s210 + $0x28] sm:$0xff]
      %v217 = vld [vmem:[%s210 + $0x30] sm:$0xff]
      %v218 = vld [vmem:[%s210 + $0x38] sm:$0xff]
      %v219 = vld [vmem:[%s210 + $0x40] sm:$0xff]
      %v220 = vld [vmem:[%s210 + $0x48] sm:$0xff]
      %v221 = vld [vmem:[%s210 + $0x50] sm:$0xff]
      %v222 = vld [vmem:[%s210 + $0x58] sm:$0xff]
      %v223 = vld [vmem:[%s210 + $0x60] sm:$0xff]
      %v224 = vld [vmem:[%s210 + $0x68] sm:$0xff]
      %v225 = vld [vmem:[%s210 + $0x70] sm:$0xff]
      %v226 = vld [vmem:[%s210 + $0x78] sm:$0xff]
      %v229 = vunpack.c.l.s4 1983009808
      %v230 = vunpack.c.0.s8 %v229
      %v231 = vlaneseq
      %v232 = vshrl.u32 %v231, 7
      %v233 = vsub.s32 %v230, %v232
      %v234 = vrot.slane %v209, %v233
      %v236 = vshrl.u32 %v234, 16
      %v238 = vshll.u32 %v234, 16
      %v240 = vrot.slane %v238, 1
      %v241 = vor.u32 %v236, %v240
      %v259 = vunpack.c.l.b16 %v211
      %v260 = vunpack.c.h.b16 %v211
      %v261 = vunpack.c.l.b16 %v212
      %v262 = vunpack.c.h.b16 %v212
      %v263 = vunpack.c.l.b16 %v213
      %v264 = vunpack.c.h.b16 %v213
      %v265 = vunpack.c.l.b16 %v214
      %v266 = vunpack.c.h.b16 %v214
      %v267 = vunpack.c.l.b16 %v215
      %v268 = vunpack.c.h.b16 %v215
      %v269 = vunpack.c.l.b16 %v216
      %v270 = vunpack.c.h.b16 %v216
      %v271 = vunpack.c.l.b16 %v217
      %v272 = vunpack.c.h.b16 %v217
      %v273 = vunpack.c.l.b16 %v218
      %v274 = vunpack.c.h.b16 %v218
      %v275 = vunpack.c.l.b16 %v219
      %v276 = vunpack.c.h.b16 %v219
      %v277 = vunpack.c.l.b16 %v220
      %v278 = vunpack.c.h.b16 %v220
      %v279 = vunpack.c.l.b16 %v221
      %v280 = vunpack.c.h.b16 %v221
      %v281 = vunpack.c.l.b16 %v222
      %v282 = vunpack.c.h.b16 %v222
      %v283 = vunpack.c.l.b16 %v223
      %v284 = vunpack.c.h.b16 %v223
      %v285 = vunpack.c.l.b16 %v224
      %v286 = vunpack.c.h.b16 %v224
      %v287 = vunpack.c.l.b16 %v225
      %v288 = vunpack.c.h.b16 %v225
      %v289 = vunpack.c.l.b16 %v226
      %v290 = vunpack.c.h.b16 %v226
      %v291 = vpack.c.b16 %v261, %v259
      %v292 = vpack.c.b16 %v262, %v260
      %v293 = vpack.c.b16 %v265, %v263
      %v294 = vpack.c.b16 %v266, %v264
      %v295 = vpack.c.b16 %v269, %v267
      %v296 = vpack.c.b16 %v270, %v268
      %v297 = vpack.c.b16 %v273, %v271
      %v298 = vpack.c.b16 %v274, %v272
      %v299 = vpack.c.b16 %v277, %v275
      %v300 = vpack.c.b16 %v278, %v276
      %v301 = vpack.c.b16 %v281, %v279
      %v302 = vpack.c.b16 %v282, %v280
      %v303 = vpack.c.b16 %v285, %v283
      %v304 = vpack.c.b16 %v286, %v284
      %v305 = vpack.c.b16 %v289, %v287
      %v306 = vpack.c.b16 %v290, %v288
      %323 = vmatprep.subr.bf16.mxu0 %v292
      %324 = vmatpush1.bf16.msra.mxu0 %v291
      %325 = vmatprep.subr.bf16.mxu0 %v294
      %326 = vmatpush1.bf16.msra.mxu0 %v293
      %327 = vmatprep.subr.bf16.mxu0 %v296
      %328 = vmatpush1.bf16.msra.mxu0 %v295
      %329 = vmatprep.subr.bf16.mxu0 %v298
      %330 = vmatpush1.bf16.msra.mxu0 %v297
      %331 = vmatprep.subr.bf16.mxu0 %v300
      %332 = vmatpush1.bf16.msra.mxu0 %v299
      %333 = vmatprep.subr.bf16.mxu0 %v302
      %334 = vmatpush1.bf16.msra.mxu0 %v301
      %335 = vmatprep.subr.bf16.mxu0 %v304
      %336 = vmatpush1.bf16.msra.mxu0 %v303
      %337 = vmatprep.subr.bf16.mxu0 %v306
      %338 = vmatpush1.bf16.msra.mxu0 %v305
      %339 = vmatprep.subr.bf16.mxu0 0
      %340 = vmatpush1.bf16.msra.mxu0 0
      %341 = vmatprep.subr.bf16.mxu0 0
      %342 = vmatpush1.bf16.msra.mxu0 0
      %343 = vmatprep.subr.bf16.mxu0 0
      %344 = vmatpush1.bf16.msra.mxu0 0
      %345 = vmatprep.subr.bf16.mxu0 0
      %346 = vmatpush1.bf16.msra.mxu0 0
      %347 = vmatprep.subr.bf16.mxu0 0
      %348 = vmatpush1.bf16.msra.mxu0 0
      %349 = vmatprep.subr.bf16.mxu0 0
      %350 = vmatpush1.bf16.msra.mxu0 0
      %351 = vmatprep.subr.bf16.mxu0 0
      %352 = vmatpush1.bf16.msra.mxu0 0
      %353 = vmatprep.subr.bf16.mxu0 0
      %354 = vmatpush1.bf16.msra.mxu0 0
      %355 = vmatprep.mubr.bf16.mxu0 0
      %356 = vmatmul.mubr.bf16.gmra.mrb[0].mxu0 %v241
      %v357 = vpop.f32.mrb[0].mxu0
      %v358 = vadd.f32 0.0, %v357
      %v359 = vpop.f32.mrb[0].mxu0
      %v360 = vadd.f32 0.0, %v359
      %v361 = vpop.f32.mrb[0].mxu0
      %v362 = vpop.f32.mrb[0].mxu0
      %363 = vdwg.mxu0
      %v380 = vunpack.c.l.b16 %v193
      %v381 = vunpack.c.h.b16 %v193
      %v382 = vunpack.c.l.b16 %v194
      %v383 = vunpack.c.h.b16 %v194
      %v384 = vunpack.c.l.b16 %v195
      %v385 = vunpack.c.h.b16 %v195
      %v386 = vunpack.c.l.b16 %v196
      %v387 = vunpack.c.h.b16 %v196
      %v388 = vunpack.c.l.b16 %v197
      %v389 = vunpack.c.h.b16 %v197
      %v390 = vunpack.c.l.b16 %v198
      %v391 = vunpack.c.h.b16 %v198
      %v392 = vunpack.c.l.b16 %v199
      %v393 = vunpack.c.h.b16 %v199
      %v394 = vunpack.c.l.b16 %v200
      %v395 = vunpack.c.h.b16 %v200
      %v396 = vunpack.c.l.b16 %v201
      %v397 = vunpack.c.h.b16 %v201
      %v398 = vunpack.c.l.b16 %v202
      %v399 = vunpack.c.h.b16 %v202
      %v400 = vunpack.c.l.b16 %v203
      %v401 = vunpack.c.h.b16 %v203
      %v402 = vunpack.c.l.b16 %v204
      %v403 = vunpack.c.h.b16 %v204
      %v404 = vunpack.c.l.b16 %v205
      %v405 = vunpack.c.h.b16 %v205
      %v406 = vunpack.c.l.b16 %v206
      %v407 = vunpack.c.h.b16 %v206
      %v408 = vunpack.c.l.b16 %v207
      %v409 = vunpack.c.h.b16 %v207
      %v410 = vunpack.c.l.b16 %v208
      %v411 = vunpack.c.h.b16 %v208
      %v412 = vpack.c.b16 %v382, %v380
      %v413 = vpack.c.b16 %v383, %v381
      %v414 = vpack.c.b16 %v386, %v384
      %v415 = vpack.c.b16 %v387, %v385
      %v416 = vpack.c.b16 %v390, %v388
      %v417 = vpack.c.b16 %v391, %v389
      %v418 = vpack.c.b16 %v394, %v392
      %v419 = vpack.c.b16 %v395, %v393
      %v420 = vpack.c.b16 %v398, %v396
      %v421 = vpack.c.b16 %v399, %v397
      %v422 = vpack.c.b16 %v402, %v400
      %v423 = vpack.c.b16 %v403, %v401
      %v424 = vpack.c.b16 %v406, %v404
      %v425 = vpack.c.b16 %v407, %v405
      %v426 = vpack.c.b16 %v410, %v408
      %v427 = vpack.c.b16 %v411, %v409
      %444 = vmatprep.subr.bf16.mxu0 %v413
      %445 = vmatpush1.bf16.msra.mxu0 %v412
      %446 = vmatprep.subr.bf16.mxu0 %v415
      %447 = vmatpush1.bf16.msra.mxu0 %v414
      %448 = vmatprep.subr.bf16.mxu0 %v417
      %449 = vmatpush1.bf16.msra.mxu0 %v416
      %450 = vmatprep.subr.bf16.mxu0 %v419
      %451 = vmatpush1.bf16.msra.mxu0 %v418
      %452 = vmatprep.subr.bf16.mxu0 %v421
      %453 = vmatpush1.bf16.msra.mxu0 %v420
      %454 = vmatprep.subr.bf16.mxu0 %v423
      %455 = vmatpush1.bf16.msra.mxu0 %v422
      %456 = vmatprep.subr.bf16.mxu0 %v425
      %457 = vmatpush1.bf16.msra.mxu0 %v424
      %458 = vmatprep.subr.bf16.mxu0 %v427
      %459 = vmatpush1.bf16.msra.mxu0 %v426
      %460 = vmatprep.subr.bf16.mxu0 0
      %461 = vmatpush1.bf16.msra.mxu0 0
      %462 = vmatprep.subr.bf16.mxu0 0
      %463 = vmatpush1.bf16.msra.mxu0 0
      %464 = vmatprep.subr.bf16.mxu0 0
      %465 = vmatpush1.bf16.msra.mxu0 0
      %466 = vmatprep.subr.bf16.mxu0 0
      %467 = vmatpush1.bf16.msra.mxu0 0
      %468 = vmatprep.subr.bf16.mxu0 0
      %469 = vmatpush1.bf16.msra.mxu0 0
      %470 = vmatprep.subr.bf16.mxu0 0
      %471 = vmatpush1.bf16.msra.mxu0 0
      %472 = vmatprep.subr.bf16.mxu0 0
      %473 = vmatpush1.bf16.msra.mxu0 0
      %474 = vmatprep.subr.bf16.mxu0 0
      %475 = vmatpush1.bf16.msra.mxu0 0
      %476 = vmatprep.mubr.bf16.mxu0 0
      %477 = vmatmul.mubr.bf16.gmra.mrb[0].mxu0 %v192
      %v478 = vpop.f32.mrb[0].mxu0
      %v479 = vadd.f32 %v358, %v478
      %v480 = vpop.f32.mrb[0].mxu0
      %v481 = vadd.f32 %v360, %v480
      %v482 = vpop.f32.mrb[0].mxu0
      %v483 = vpop.f32.mrb[0].mxu0
      %484 = vdwg.mxu0
      %v485 = vld [vmem:[%s187] sm:$0x2]
      %s486 = scalar_lea.vmem %s1, 256
      %v487 = vld [vmem:[%s486] sm:$0xff]
      %v488 = vld [vmem:[%s486 + $0x8] sm:$0xff]
      %v489 = vld [vmem:[%s486 + $0x10] sm:$0xff]
      %v490 = vld [vmem:[%s486 + $0x18] sm:$0xff]
      %v491 = vld [vmem:[%s486 + $0x20] sm:$0xff]
      %v492 = vld [vmem:[%s486 + $0x28] sm:$0xff]
      %v493 = vld [vmem:[%s486 + $0x30] sm:$0xff]
      %v494 = vld [vmem:[%s486 + $0x38] sm:$0xff]
      %v495 = vld [vmem:[%s486 + $0x40] sm:$0xff]
      %v496 = vld [vmem:[%s486 + $0x48] sm:$0xff]
      %v497 = vld [vmem:[%s486 + $0x50] sm:$0xff]
      %v498 = vld [vmem:[%s486 + $0x58] sm:$0xff]
      %v499 = vld [vmem:[%s486 + $0x60] sm:$0xff]
      %v500 = vld [vmem:[%s486 + $0x68] sm:$0xff]
      %v501 = vld [vmem:[%s486 + $0x70] sm:$0xff]
      %v502 = vld [vmem:[%s486 + $0x78] sm:$0xff]
      %v505 = vunpack.c.l.s4 1983009808
      %v506 = vunpack.c.0.s8 %v505
      %v507 = vlaneseq
      %v508 = vshrl.u32 %v507, 7
      %v509 = vsub.s32 %v506, %v508
      %v510 = vrot.slane %v485, %v509
      %v511 = vrot.slane %v510, 1
      %v529 = vunpack.c.l.b16 %v487
      %v530 = vunpack.c.h.b16 %v487
      %v531 = vunpack.c.l.b16 %v488
      %v532 = vunpack.c.h.b16 %v488
      %v533 = vunpack.c.l.b16 %v489
      %v534 = vunpack.c.h.b16 %v489
      %v535 = vunpack.c.l.b16 %v490
      %v536 = vunpack.c.h.b16 %v490
      %v537 = vunpack.c.l.b16 %v491
      %v538 = vunpack.c.h.b16 %v491
      %v539 = vunpack.c.l.b16 %v492
      %v540 = vunpack.c.h.b16 %v492
      %v541 = vunpack.c.l.b16 %v493
      %v542 = vunpack.c.h.b16 %v493
      %v543 = vunpack.c.l.b16 %v494
      %v544 = vunpack.c.h.b16 %v494
      %v545 = vunpack.c.l.b16 %v495
      %v546 = vunpack.c.h.b16 %v495
      %v547 = vunpack.c.l.b16 %v496
      %v548 = vunpack.c.h.b16 %v496
      %v549 = vunpack.c.l.b16 %v497
      %v550 = vunpack.c.h.b16 %v497
      %v551 = vunpack.c.l.b16 %v498
      %v552 = vunpack.c.h.b16 %v498
      %v553 = vunpack.c.l.b16 %v499
      %v554 = vunpack.c.h.b16 %v499
      %v555 = vunpack.c.l.b16 %v500
      %v556 = vunpack.c.h.b16 %v500
      %v557 = vunpack.c.l.b16 %v501
      %v558 = vunpack.c.h.b16 %v501
      %v559 = vunpack.c.l.b16 %v502
      %v560 = vunpack.c.h.b16 %v502
      %v561 = vpack.c.b16 %v531, %v529
      %v562 = vpack.c.b16 %v532, %v530
      %v563 = vpack.c.b16 %v535, %v533
      %v564 = vpack.c.b16 %v536, %v534
      %v565 = vpack.c.b16 %v539, %v537
      %v566 = vpack.c.b16 %v540, %v538
      %v567 = vpack.c.b16 %v543, %v541
      %v568 = vpack.c.b16 %v544, %v542
      %v569 = vpack.c.b16 %v547, %v545
      %v570 = vpack.c.b16 %v548, %v546
      %v571 = vpack.c.b16 %v551, %v549
      %v572 = vpack.c.b16 %v552, %v550
      %v573 = vpack.c.b16 %v555, %v553
      %v574 = vpack.c.b16 %v556, %v554
      %v575 = vpack.c.b16 %v559, %v557
      %v576 = vpack.c.b16 %v560, %v558
      %593 = vmatprep.subr.bf16.mxu0 %v562
      %594 = vmatpush1.bf16.msra.mxu0 %v561
      %595 = vmatprep.subr.bf16.mxu0 %v564
      %596 = vmatpush1.bf16.msra.mxu0 %v563
      %597 = vmatprep.subr.bf16.mxu0 %v566
      %598 = vmatpush1.bf16.msra.mxu0 %v565
      %599 = vmatprep.subr.bf16.mxu0 %v568
      %600 = vmatpush1.bf16.msra.mxu0 %v567
      %601 = vmatprep.subr.bf16.mxu0 %v570
      %602 = vmatpush1.bf16.msra.mxu0 %v569
      %603 = vmatprep.subr.bf16.mxu0 %v572
      %604 = vmatpush1.bf16.msra.mxu0 %v571
      %605 = vmatprep.subr.bf16.mxu0 %v574
      %606 = vmatpush1.bf16.msra.mxu0 %v573
      %607 = vmatprep.subr.bf16.mxu0 %v576
      %608 = vmatpush1.bf16.msra.mxu0 %v575
      %609 = vmatprep.subr.bf16.mxu0 0
      %610 = vmatpush1.bf16.msra.mxu0 0
      %611 = vmatprep.subr.bf16.mxu0 0
      %612 = vmatpush1.bf16.msra.mxu0 0
      %613 = vmatprep.subr.bf16.mxu0 0
      %614 = vmatpush1.bf16.msra.mxu0 0
      %615 = vmatprep.subr.bf16.mxu0 0
      %616 = vmatpush1.bf16.msra.mxu0 0
      %617 = vmatprep.subr.bf16.mxu0 0
      %618 = vmatpush1.bf16.msra.mxu0 0
      %619 = vmatprep.subr.bf16.mxu0 0
      %620 = vmatpush1.bf16.msra.mxu0 0
      %621 = vmatprep.subr.bf16.mxu0 0
      %622 = vmatpush1.bf16.msra.mxu0 0
      %623 = vmatprep.subr.bf16.mxu0 0
      %624 = vmatpush1.bf16.msra.mxu0 0
      %625 = vmatprep.mubr.bf16.mxu0 0
      %626 = vmatmul.mubr.bf16.gmra.mrb[0].mxu0 %v511
      %v627 = vpop.f32.mrb[0].mxu0
      %v628 = vadd.f32 0.0, %v627
      %v629 = vpop.f32.mrb[0].mxu0
      %v630 = vadd.f32 0.0, %v629
      %v631 = vpop.f32.mrb[0].mxu0
      %v632 = vpop.f32.mrb[0].mxu0
      %633 = vdwg.mxu0
      %v634 = vadd.f32 %v479, %v628
      %v635 = vadd.f32 %v481, %v630
      %v636 = vld [vmem:[%s3] sm:$0x3]
      %v638 = vlaneseq
      %v639 = vshrl.u32 %v638, 7
      %v640 = vsub.s32 0, %v639
      %v641 = vrot.slane %v636, %v640
      %v642 = vlaneseq
      %v643 = vshrl.u32 %v642, 7
      %v644 = vsub.s32 1, %v643
      %v645 = vrot.slane %v636, %v644
      %v648 = vadd.f32 %v634, %v641
      %v649 = vadd.f32 %v635, %v645
      %v650 = vmax.f32 %v648, 0.0
      %v651 = vmax.f32 %v649, 0.0
      %v652 = vmax.f32 %v650, %v651
      %v653 = vpack.c.bf16 %v652, %v652
      %v654 = vld [vmem:[%s2] sm:$0x1]
      %vm655 = vcmask 15360
      %v657 = vsel %vm655, %v654, 0
      %vm659 = vcmask 1040384
      %v661 = vsel %vm659, %v653, 0
      %663 = vmatprep.subr.bf16.mxu0 0
      %664 = vmatpush1.bf16.msra.mxu0 %v661
      %665 = vmatprep.subr.bf16.mxu0 0
      %666 = vmatpush1.bf16.msra.mxu0 0
      %667 = vmatprep.subr.bf16.mxu0 0
      %668 = vmatpush1.bf16.msra.mxu0 0
      %669 = vmatprep.subr.bf16.mxu0 0
      %670 = vmatpush1.bf16.msra.mxu0 0
      %671 = vmatprep.subr.bf16.mxu0 0
      %672 = vmatpush1.bf16.msra.mxu0 0
      %673 = vmatprep.subr.bf16.mxu0 0
      %674 = vmatpush1.bf16.msra.mxu0 0
      %675 = vmatprep.subr.bf16.mxu0 0
      %676 = vmatpush1.bf16.msra.mxu0 0
      %677 = vmatprep.subr.bf16.mxu0 0
      %678 = vmatpush1.bf16.msra.mxu0 0
      %679 = vmatprep.subr.bf16.mxu0 0
      %680 = vmatpush1.bf16.msra.mxu0 0
      %681 = vmatprep.subr.bf16.mxu0 0
      %682 = vmatpush1.bf16.msra.mxu0 0
      %683 = vmatprep.subr.bf16.mxu0 0
      %684 = vmatpush1.bf16.msra.mxu0 0
      %685 = vmatprep.subr.bf16.mxu0 0
      %686 = vmatpush1.bf16.msra.mxu0 0
      %687 = vmatprep.subr.bf16.mxu0 0
      %688 = vmatpush1.bf16.msra.mxu0 0
      %689 = vmatprep.subr.bf16.mxu0 0
      %690 = vmatpush1.bf16.msra.mxu0 0
      %691 = vmatprep.subr.bf16.mxu0 0
      %692 = vmatpush1.bf16.msra.mxu0 0
      %693 = vmatprep.subr.bf16.mxu0 0
      %694 = vmatpush1.bf16.msra.mxu0 0
      %695 = vmatprep.mubr.bf16.mxu0 0
      %696 = vmatmul.mubr.bf16.gmra.mrb[0].mxu0 %v657
      %v697 = vpop.f32.mrb[0].mxu0
      %v698 = vadd.f32 0.0, %v697
      %v699 = vpop.f32.mrb[0].mxu0
      %v700 = vpop.f32.mrb[0].mxu0
      %v701 = vpop.f32.mrb[0].mxu0
      %702 = vdwg.mxu0
      %s703 = scalar_lea.vmem %s2, 1
      %v704 = vld [vmem:[%s703] sm:$0x1]
      %v706 = vsel %vm655, %v704, 0
      %708 = vmatprep.subr.bf16.mxu0 0
      %709 = vmatpush1.bf16.msra.mxu0 %v661
      %710 = vmatprep.subr.bf16.mxu0 0
      %711 = vmatpush1.bf16.msra.mxu0 0
      %712 = vmatprep.subr.bf16.mxu0 0
      %713 = vmatpush1.bf16.msra.mxu0 0
      %714 = vmatprep.subr.bf16.mxu0 0
      %715 = vmatpush1.bf16.msra.mxu0 0
      %716 = vmatprep.subr.bf16.mxu0 0
      %717 = vmatpush1.bf16.msra.mxu0 0
      %718 = vmatprep.subr.bf16.mxu0 0
      %719 = vmatpush1.bf16.msra.mxu0 0
      %720 = vmatprep.subr.bf16.mxu0 0
      %721 = vmatpush1.bf16.msra.mxu0 0
      %722 = vmatprep.subr.bf16.mxu0 0
      %723 = vmatpush1.bf16.msra.mxu0 0
      %724 = vmatprep.subr.bf16.mxu0 0
      %725 = vmatpush1.bf16.msra.mxu0 0
      %726 = vmatprep.subr.bf16.mxu0 0
      %727 = vmatpush1.bf16.msra.mxu0 0
      %728 = vmatprep.subr.bf16.mxu0 0
      %729 = vmatpush1.bf16.msra.mxu0 0
      %730 = vmatprep.subr.bf16.mxu0 0
      %731 = vmatpush1.bf16.msra.mxu0 0
      %732 = vmatprep.subr.bf16.mxu0 0
      %733 = vmatpush1.bf16.msra.mxu0 0
      %734 = vmatprep.subr.bf16.mxu0 0
      %735 = vmatpush1.bf16.msra.mxu0 0
      %736 = vmatprep.subr.bf16.mxu0 0
      %737 = vmatpush1.bf16.msra.mxu0 0
      %738 = vmatprep.subr.bf16.mxu0 0
      %739 = vmatpush1.bf16.msra.mxu0 0
      %740 = vmatprep.mubr.bf16.mxu0 0
      %741 = vmatmul.mubr.bf16.gmra.mrb[0].mxu0 %v706
      %v742 = vpop.f32.mrb[0].mxu0
      %v743 = vadd.f32 0.0, %v742
      %v744 = vpop.f32.mrb[0].mxu0
      %v745 = vpop.f32.mrb[0].mxu0
      %v746 = vpop.f32.mrb[0].mxu0
      %747 = vdwg.mxu0
      %v748 = vmax.f32 %v698, %v743
      %v749 = vpack.c.bf16 %v748, %v748
      %vm750 = vcmask 1040384
      %vm751 = vsmask.f32 256
      %vm752 = vmand %vm750, %vm751
      %v753 = vld [vmem:[%s190] sm:$0x1]
      %v754 = vsel %vm752, %v749, %v753
      %755 = vst [vmem:[%s190] sm:$0x1] %v754
      %p756 = scmp.lt.s32.totalorder %s15, 1
      %s757 = scalar_select %p756, %s15, 1
      %s758 = scalar_lea.vmem %s4, %s757
      // Predicated region
      $region37: #{forward.10} parent=35 // pred_check
        %p759 = pneg %p122
      $region38: #{forward.10} parent=35 // pred_check_branch
        %761 = sbr.rel (%p759) target = $region40
      $region39: #{forward.10} parent=35 // pred_region
        _
      $region40: #{forward.10} parent=35 // pred_fallthru
        _
    $region36: #{forward.10} parent=5 // pred_fallthru
      _
    %p762 = scmp.le.s32.totalorder 2, %s10
    // Predicated region
    $region41: #{forward.10} parent=5 // pred_check
      %p763 = pneg %p762
    $region42: #{forward.10} parent=5 // pred_check_branch
      %765 = sbr.rel (%p763) target = $region44
    $region43: #{forward.10} parent=5 // pred_region
      %s766 = ssub.s32 %s10, 2
      // Predicated region
      $region45: #{forward.10} parent=43 // pred_check
        %p767 = pneg %p128
      $region46: #{forward.10} parent=43 // pred_check_branch
        %769 = sbr.rel (%p767) target = $region48
      $region47: #{forward.10} parent=43 // pred_region
        %p770 = scmp.lt.s32.totalorder %s16, 1
        %s771 = scalar_select %p770, %s16, 1
        %s772 = scalar_lea.vmem %s4, %s771
      $region48: #{forward.10} parent=43 // pred_fallthru
        _
    $region44: #{forward.10} parent=5 // pred_fallthru
      _
  $region6: #{forward.10} parent=0 // loop_footer
    %s14 = sadd.s32 1, %s10
  $region7: #{forward.10} parent=0 // loop_footer_branch
    %9 = sbr.rel target = $region3
  $region8: #{forward.10} parent=0 // loop_exit
    _

// kernel: forward.6
$region0: #{forward.6}
  #allocation0 [shape = 'u32[]', space=smem, size = 0x4, offset = 0x4, fixed_abs, tag = 'smem constant byte address 0x4 - core index']
  #allocation1 [shape = 'u32[144,128]{1,0:T(1,128)}', space=vmem, size = 0x12000, scoped, tag = 'internal scratch']
  %s0 = inlined_call_operand.vmem [shape: bf16[2,96,288], index: 0, kind: input, shape index: {}]
  %s1 = inlined_call_operand.hbm [shape: bf16[3,288,768], index: 1, kind: input, shape index: {}]
  %s2 = inlined_call_operand.vmem [shape: bf16[2,47,94], index: 2, kind: input, shape index: {}]
  %s3 = inlined_call_operand.hbm [shape: f32[1,768], index: 3, kind: input, shape index: {}]
  %s4 = inlined_call_operand.vmem [shape: bf16[2,47,384], index: 4, kind: output, shape index: {}]
  %s5 = sld [smem:[#allocation0]]
  $region57: #{forward.6} parent=0
    _
  %s7 = ssub.s32 1, %s5
  %s8 = scalar_select 0, %s7, %s5
  $region1: #{forward.6} parent=0
    #allocation2 [shape = 'u8[1327104]{0}', space=vmem, size = 0x144000, scoped, tag = 'input window, operand 1, single buffered']
    #allocation3 [shape = 's32[2]{0}', space=sflag, size = 0x8, scoped, tag = 'scoped memory for forward.6']
    #allocation4 [shape = 'u8[3072]{0}', space=vmem, size = 0xc00, scoped, tag = 'input window, operand 3, single buffered']
    #allocation5 [shape = 's32[1]{0}', space=sflag, size = 0x4, scoped, tag = 'scoped memory for forward.6']
    %9 = vsyncpa [#allocation3], 0
    %10 = vsyncpa [#allocation5], 0
    loop: start=0, step=1, limit=4
    $region2: #{forward.6} parent=1 // loop_pre_header
      _
    $region3: #{forward.6} parent=1 // loop_header
      %s12 = sphi 0, %s16
      %p13 = scmp.ge.s32.totalorder %s12, 4
      %s22 = sphi 0, %s24
      %s25 = sphi 0, %s22
      %s26 = sphi 0, %s25
      %s42 = sphi 0, %s26
      %s46 = sphi 0, %s46
      %s48 = sphi 0, %s46
      %s49 = sphi 0, %s48
      %s63 = sphi 0, %s49
      %s67 = sphi 0, %s67
      %s69 = sphi 0, %s67
      %s70 = sphi 0, %s69
      %s84 = sphi 0, %s70
      %s88 = sphi 0, %s88
      %s90 = sphi 0, %s88
      %s91 = sphi 0, %s90
      %s105 = sphi 0, %s91
      %s111 = sphi 0, %s113
      %s114 = sphi 0, %s111
      %s115 = sphi 0, %s114
      %s131 = sphi 0, %s115
    $region4: #{forward.6} parent=1 // loop_header_branch
      %15 = sbr.rel (%p13) target = $region8
    $region5: #{forward.6} parent=1 // loop_body
      %s17 = ssub.s32 %s12, 1
      %s18 = ssub.s32 %s12, 2
      %s19 = sadd.s32 %s12, 1
      %s20 = ssub.s32 %s12, %s19
      %p21 = scmp.eq.s32.totalorder %s20, 0
      %s23 = sadd.s32 %s22, 1
      %s24 = scalar_select %p21, %s22, %s23
      %p27 = pneg %p21
      %p28 = scmp.eq.s32.totalorder %s12, 1
      %p29 = por %p27, %p28
      %p30 = scmp.ne.s32.totalorder %s22, %s25
      %p31 = scmp.eq.s32.totalorder %s12, 0
      %p32 = por %p30, %p31
      %p33 = scmp.ne.s32.totalorder %s22, %s25
      %p34 = scmp.eq.s32.totalorder %s17, 1
      %p35 = por %p33, %p34
      %p36 = scmp.ne.s32.totalorder %s25, %s26
      %p37 = scmp.eq.s32.totalorder %s17, 0
      %p38 = por %p36, %p37
      %p39 = scmp.ne.s32.totalorder %s25, %s26
      %p40 = scmp.eq.s32.totalorder %s18, 1
      %p41 = por %p39, %p40
      %p43 = scmp.ne.s32.totalorder %s26, %s42
      %p44 = scmp.eq.s32.totalorder %s18, 0
      %p45 = por %p43, %p44
      %s47 = sadd.s32 %s46, 1
      %p50 = scmp.eq.s32.totalorder %s12, 1
      %p51 = scmp.ne.s32.totalorder %s46, %s48
      %p52 = scmp.eq.s32.totalorder %s12, 0
      %p53 = por %p51, %p52
      %p54 = scmp.ne.s32.totalorder %s46, %s48
      %p55 = scmp.eq.s32.totalorder %s17, 1
      %p56 = por %p54, %p55
      %p57 = scmp.ne.s32.totalorder %s48, %s49
      %p58 = scmp.eq.s32.totalorder %s17, 0
      %p59 = por %p57, %p58
      %p60 = scmp.ne.s32.totalorder %s48, %s49
      %p61 = scmp.eq.s32.totalorder %s18, 1
      %p62 = por %p60, %p61
      %p64 = scmp.ne.s32.totalorder %s49, %s63
      %p65 = scmp.eq.s32.totalorder %s18, 0
      %p66 = por %p64, %p65
      %s68 = sadd.s32 %s67, 1
      %p71 = scmp.eq.s32.totalorder %s12, 1
      %p72 = scmp.ne.s32.totalorder %s67, %s69
      %p73 = scmp.eq.s32.totalorder %s12, 0
      %p74 = por %p72, %p73
      %p75 = scmp.ne.s32.totalorder %s67, %s69
      %p76 = scmp.eq.s32.totalorder %s17, 1
      %p77 = por %p75, %p76
      %p78 = scmp.ne.s32.totalorder %s69, %s70
      %p79 = scmp.eq.s32.totalorder %s17, 0
      %p80 = por %p78, %p79
      %p81 = scmp.ne.s32.totalorder %s69, %s70
      %p82 = scmp.eq.s32.totalorder %s18, 1
      %p83 = por %p81, %p82
      %p85 = scmp.ne.s32.totalorder %s70, %s84
      %p86 = scmp.eq.s32.totalorder %s18, 0
      %p87 = por %p85, %p86
      %s89 = sadd.s32 %s88, 1
      %p92 = scmp.eq.s32.totalorder %s12, 1
      %p93 = scmp.ne.s32.totalorder %s88, %s90
      %p94 = scmp.eq.s32.totalorder %s12, 0
      %p95 = por %p93, %p94
      %p96 = scmp.ne.s32.totalorder %s88, %s90
      %p97 = scmp.eq.s32.totalorder %s17, 1
      %p98 = por %p96, %p97
      %p99 = scmp.ne.s32.totalorder %s90, %s91
      %p100 = scmp.eq.s32.totalorder %s17, 0
      %p101 = por %p99, %p100
      %p102 = scmp.ne.s32.totalorder %s90, %s91
      %p103 = scmp.eq.s32.totalorder %s18, 1
      %p104 = por %p102, %p103
      %p106 = scmp.ne.s32.totalorder %s91, %s105
      %p107 = scmp.eq.s32.totalorder %s18, 0
      %p108 = por %p106, %p107
      %s109 = ssub.s32 %s12, %s19
      %p110 = scmp.eq.s32.totalorder %s109, 0
      %s112 = sadd.s32 %s111, 1
      %s113 = scalar_select %p110, %s111, %s112
      %p116 = pneg %p110
      %p117 = scmp.eq.s32.totalorder %s12, 1
      %p118 = por %p116, %p117
      %p119 = scmp.ne.s32.totalorder %s111, %s114
      %p120 = scmp.eq.s32.totalorder %s12, 0
      %p121 = por %p119, %p120
      %p122 = scmp.ne.s32.totalorder %s111, %s114
      %p123 = scmp.eq.s32.totalorder %s17, 1
      %p124 = por %p122, %p123
      %p125 = scmp.ne.s32.totalorder %s114, %s115
      %p126 = scmp.eq.s32.totalorder %s17, 0
      %p127 = por %p125, %p126
      %p128 = scmp.ne.s32.totalorder %s114, %s115
      %p129 = scmp.eq.s32.totalorder %s18, 1
      %p130 = por %p128, %p129
      %p132 = scmp.ne.s32.totalorder %s115, %s131
      %p133 = scmp.eq.s32.totalorder %s18, 0
      %p134 = por %p132, %p133
      %p135 = scmp.le.s32.totalorder 1, %s12
      %p136 = scmp.lt.s32.totalorder %s12, 3
      %p137 = pnand %p135, %p136
      %p138 = pneg %p137
      // Predicated region
      $region9: #{forward.6} parent=5 // pred_check
        _
      $region10: #{forward.6} parent=5 // pred_check_branch
        %140 = sbr.rel (%p137) target = $region12
      $region11: #{forward.6} parent=5 // pred_region
        %s141 = ssub.s32 %s12, 1
        // Predicated region
        $region13: #{forward.6} parent=11 // pred_check
          %p142 = pneg %p59
        $region14: #{forward.6} parent=11 // pred_check_branch
          %144 = sbr.rel (%p142) target = $region16
        $region15: #{forward.6} parent=11 // pred_region
          %s146 = ssub.s32 41472, 41472
          %147 = vsyncadd [#allocation3], %s146
          %s148 = sshll.u32 [#allocation2], 4
          %s149 = int_to_ptr.vmem [resolvable:$true] %s148
          %154 = dma.hbm_to_vmem [thread:$0]  %s1, 41472, %s149, [#allocation3], 384, 384, 24
        $region16: #{forward.6} parent=11 // pred_fallthru
          _
        // Predicated region
        $region17: #{forward.6} parent=11 // pred_check
          %p155 = pneg %p80
        $region18: #{forward.6} parent=11 // pred_check_branch
          %157 = sbr.rel (%p155) target = $region20
        $region19: #{forward.6} parent=11 // pred_region
          _
        $region20: #{forward.6} parent=11 // pred_fallthru
          _
        // Predicated region
        $region21: #{forward.6} parent=11 // pred_check
          %p158 = pneg %p101
        $region22: #{forward.6} parent=11 // pred_check_branch
          %160 = sbr.rel (%p158) target = $region24
        $region23: #{forward.6} parent=11 // pred_region
          %s162 = ssub.s32 96, 96
          %163 = vsyncadd [#allocation5], %s162
          %s165 = sshll.u32 [#allocation4], 4
          %s166 = int_to_ptr.vmem [resolvable:$true] %s165
          %168 = dma.hbm_to_vmem [thread:$0]  %s3, 96, %s166, [#allocation5]
        $region24: #{forward.6} parent=11 // pred_fallthru
          _
      $region12: #{forward.6} parent=5 // pred_fallthru
        _
      %p169 = scmp.lt.s32.totalorder %s12, 2
      // Predicated region
      $region25: #{forward.6} parent=5 // pred_check
        %p170 = pneg %p169
      $region26: #{forward.6} parent=5 // pred_check_branch
        %172 = sbr.rel (%p170) target = $region28
      $region27: #{forward.6} parent=5 // pred_region
        // Predicated region
        $region29: #{forward.6} parent=27 // pred_check
          %p173 = pneg %p32
        $region30: #{forward.6} parent=27 // pred_check_branch
          %175 = sbr.rel (%p173) target = $region32
        $region31: #{forward.6} parent=27 // pred_region
          %p176 = scmp.lt.s32.totalorder %s12, 1
          %s177 = scalar_select %p176, %s12, 1
          %s178 = smul.addr %s177, 36
          %s179 = smul.addr %s178, 4
          %s180 = scalar_lea.vmem %s0, %s179
        $region32: #{forward.6} parent=27 // pred_fallthru
          _
      $region28: #{forward.6} parent=5 // pred_fallthru
        _
      %p181 = scmp.le.s32.totalorder 1, %s12
      %p182 = scmp.lt.s32.totalorder %s12, 3
      %p183 = pnand %p181, %p182
      %p184 = pneg %p183
      // Predicated region
      $region33: #{forward.6} parent=5 // pred_check
        _
      $region34: #{forward.6} parent=5 // pred_check_branch
        %186 = sbr.rel (%p183) target = $region36
      $region35: #{forward.6} parent=5 // pred_region
        %s187 = ssub.s32 %s12, 1
        // Predicated region
        $region37: #{forward.6} parent=35 // pred_check
          %p188 = pneg %p59
        $region38: #{forward.6} parent=35 // pred_check_branch
          %190 = sbr.rel (%p188) target = $region40
        $region39: #{forward.6} parent=35 // pred_region
          %191 = dma.done [#allocation3], 41472
        $region40: #{forward.6} parent=35 // pred_fallthru
          _
        // Predicated region
        $region41: #{forward.6} parent=35 // pred_check
          %p192 = pneg %p101
        $region42: #{forward.6} parent=35 // pred_check_branch
          %194 = sbr.rel (%p192) target = $region44
        $region43: #{forward.6} parent=35 // pred_region
          %195 = dma.done [#allocation5], 96
        $region44: #{forward.6} parent=35 // pred_fallthru
          _
        %p196 = scmp.lt.s32.totalorder %s17, 1
        %s197 = scalar_select %p196, %s17, 1
        %s198 = smul.addr %s197, 36
        %s199 = smul.addr %s198, 4
        %s200 = scalar_lea.vmem %s0, %s199
        %p201 = pneg %p38
        %p202 = pneg %p35
        %p203 = pneg %p59
        %p204 = pneg %p56
        %p205 = pneg %p80
        %p206 = pneg %p77
        %p207 = pneg %p101
        %p208 = pneg %p98
        %p209 = pneg %p127
        %p210 = pneg %p124
        %p211 = scmp.lt.s32.totalorder %s17, 1
        %s212 = scalar_select %p211, %s17, 1
        %s213 = smul.addr %s212, 18
        %s214 = smul.addr %s213, 4
        %s215 = scalar_lea.vmem %s4, %s214
        %p216 = scmp.lt.s32.totalorder %s17, 1
        %s217 = scalar_select %p216, %s17, 1
        %s218 = smul.addr %s217, 36
        %s219 = smul.addr %s218, 4
        %s220 = scalar_lea.vmem %s0, %s219
        %p221 = scmp.lt.s32.totalorder %s17, 1
        %s222 = scalar_select %p221, %s17, 1
        %s223 = smul.addr %s222, 18
        %s224 = smul.addr %s223, 4
        %s225 = scalar_lea.vmem %s4, %s224
        %v227 = vld [vmem:[%s220] sm:$0xff]
        %v228 = vld [vmem:[%s220 + $0x8] sm:$0xf]
        %v229 = vld [vmem:[%s220 + $0xc] sm:$0xff]
        %v230 = vld [vmem:[%s220 + $0x14] sm:$0xf]
        %v231 = vld [vmem:[%s220 + $0x18] sm:$0xff]
        %v232 = vld [vmem:[%s220 + $0x20] sm:$0xf]
        %v233 = vld [vmem:[%s220 + $0x24] sm:$0xff]
        %v234 = vld [vmem:[%s220 + $0x2c] sm:$0xf]
        %v235 = vld [vmem:[%s220 + $0x30] sm:$0xff]
        %v236 = vld [vmem:[%s220 + $0x38] sm:$0xf]
        %v237 = vld [vmem:[%s220 + $0x3c] sm:$0xff]
        %v238 = vld [vmem:[%s220 + $0x44] sm:$0xf]
        %v239 = vld [vmem:[%s220 + $0x48] sm:$0xff]
        %v240 = vld [vmem:[%s220 + $0x50] sm:$0xf]
        %v241 = vld [vmem:[%s220 + $0x54] sm:$0xff]
        %v242 = vld [vmem:[%s220 + $0x5c] sm:$0xf]
        %v243 = vld [vmem:[%s220 + $0x60] sm:$0xff]
        %v244 = vld [vmem:[%s220 + $0x68] sm:$0xf]
        %v245 = vld [vmem:[%s220 + $0x6c] sm:$0xff]
        %v246 = vld [vmem:[%s220 + $0x74] sm:$0xf]
        %v247 = vld [vmem:[%s220 + $0x78] sm:$0xff]
        %v248 = vld [vmem:[%s220 + $0x80] sm:$0xf]
        %v249 = vld [vmem:[%s220 + $0x84] sm:$0x77]
        %v250 = vld [vmem:[%s220 + $0x8c] sm:$0x7]
        %v251 = vld [vmem:[#allocation2] sm:$0xff]
        %v252 = vld [vmem:[#allocation2 + $0x8] sm:$0xff]
        %v253 = vld [vmem:[#allocation2 + $0x10] sm:$0xff]
        %v254 = vld [vmem:[#allocation2 + $0x18] sm:$0xff]
        %v255 = vld [vmem:[#allocation2 + $0x20] sm:$0xff]
        %v256 = vld [vmem:[#allocation2 + $0x28] sm:$0xff]
        %v257 = vld [vmem:[#allocation2 + $0x30] sm:$0xff]
        %v258 = vld [vmem:[#allocation2 + $0x38] sm:$0xff]
        %v259 = vld [vmem:[#allocation2 + $0x40] sm:$0xff]
        %v260 = vld [vmem:[#allocation2 + $0x48] sm:$0xff]
        %v261 = vld [vmem:[#allocation2 + $0x50] sm:$0xff]
        %v262 = vld [vmem:[#allocation2 + $0x58] sm:$0xff]
        %v263 = vld [vmem:[#allocation2 + $0x60] sm:$0xff]
        %v264 = vld [vmem:[#allocation2 + $0x68] sm:$0xff]
        %v265 = vld [vmem:[#allocation2 + $0x70] sm:$0xff]
        %v266 = vld [vmem:[#allocation2 + $0x78] sm:$0xff]
        %v267 = vld [vmem:[#allocation2 + $0x80] sm:$0xff]
        %v268 = vld [vmem:[#allocation2 + $0x88] sm:$0xff]
        %v269 = vld [vmem:[#allocation2 + $0x90] sm:$0xff]
        %v270 = vld [vmem:[#allocation2 + $0x98] sm:$0xff]
        %v271 = vld [vmem:[#allocation2 + $0xa0] sm:$0xff]
        %v272 = vld [vmem:[#allocation2 + $0xa8] sm:$0xff]
        %v273 = vld [vmem:[#allocation2 + $0xb0] sm:$0xff]
        %v274 = vld [vmem:[#allocation2 + $0xb8] sm:$0xff]
        %v275 = vld [vmem:[#allocation2 + $0xc0] sm:$0xff]
        %v276 = vld [vmem:[#allocation2 + $0xc8] sm:$0xff]
        %v277 = vld [vmem:[#allocation2 + $0xd0] sm:$0xff]
        %v278 = vld [vmem:[#allocation2 + $0xd8] sm:$0xff]
        %v279 = vld [vmem:[#allocation2 + $0xe0] sm:$0xff]
        %v280 = vld [vmem:[#allocation2 + $0xe8] sm:$0xff]
        %v281 = vld [vmem:[#allocation2 + $0xf0] sm:$0xff]
        %v282 = vld [vmem:[#allocation2 + $0xf8] sm:$0xff]
        %v283 = vld [vmem:[#allocation2 + $0x100] sm:$0xff]
        %v284 = vld [vmem:[#allocation2 + $0x108] sm:$0xff]
        %v285 = vld [vmem:[#allocation2 + $0x110] sm:$0xff]
        %v286 = vld [vmem:[#allocation2 + $0x118] sm:$0xff]
        %v287 = vld [vmem:[#allocation2 + $0x120] sm:$0xff]
        %v288 = vld [vmem:[#allocation2 + $0x128] sm:$0xff]
        %v289 = vld [vmem:[#allocation2 + $0x130] sm:$0xff]
        %v290 = vld [vmem:[#allocation2 + $0x138] sm:$0xff]
        %v291 = vld [vmem:[#allocation2 + $0x140] sm:$0xff]
        %v292 = vld [vmem:[#allocation2 + $0x148] sm:$0xff]
        %v293 = vld [vmem:[#allocation2 + $0x150] sm:$0xff]
        %v294 = vld [vmem:[#allocation2 + $0x158] sm:$0xff]
        %v295 = vld [vmem:[#allocation2 + $0x160] sm:$0xff]
        %v296 = vld [vmem:[#allocation2 + $0x168] sm:$0xff]
        %v297 = vld [vmem:[#allocation2 + $0x170] sm:$0xff]
        %v298 = vld [vmem:[#allocation2 + $0x178] sm:$0xff]
        %v299 = vld [vmem:[#allocation2 + $0x180] sm:$0xff]
        %v300 = vld [vmem:[#allocation2 + $0x188] sm:$0xff]
        %v301 = vld [vmem:[#allocation2 + $0x190] sm:$0xff]
        %v302 = vld [vmem:[#allocation2 + $0x198] sm:$0xff]
        %v303 = vld [vmem:[#allocation2 + $0x1a0] sm:$0xff]
        %v304 = vld [vmem:[#allocation2 + $0x1a8] sm:$0xff]
        %v305 = vld [vmem:[#allocation2 + $0x1b0] sm:$0xff]
        %v306 = vld [vmem:[#allocation2 + $0x1b8] sm:$0xff]
        %v307 = vld [vmem:[#allocation2 + $0x1c0] sm:$0xff]
        %v308 = vld [vmem:[#allocation2 + $0x1c8] sm:$0xff]
        %v309 = vld [vmem:[#allocation2 + $0x1d0] sm:$0xff]
        %v310 = vld [vmem:[#allocation2 + $0x1d8] sm:$0xff]
        %v311 = vld [vmem:[#allocation2 + $0x1e0] sm:$0xff]
        %v312 = vld [vmem:[#allocation2 + $0x1e8] sm:$0xff]
        %v313 = vld [vmem:[#allocation2 + $0x1f0] sm:$0xff]
        %v314 = vld [vmem:[#allocation2 + $0x1f8] sm:$0xff]
        %v315 = vld [vmem:[#allocation2 + $0x200] sm:$0xff]
        %v316 = vld [vmem:[#allocation2 + $0x208] sm:$0xff]
        %v317 = vld [vmem:[#allocation2 + $0x210] sm:$0xff]
        %v318 = vld [vmem:[#allocation2 + $0x218] sm:$0xff]
        %v319 = vld [vmem:[#allocation2 + $0x220] sm:$0xff]
        %v320 = vld [vmem:[#allocation2 + $0x228] sm:$0xff]
        %v321 = vld [vmem:[#allocation2 + $0x230] sm:$0xff]
        %v322 = vld [vmem:[#allocation2 + $0x238] sm:$0xff]
        %v323 = vld [vmem:[#allocation2 + $0x240] sm:$0xff]
        %v324 = vld [vmem:[#allocation2 + $0x248] sm:$0xff]
        %v325 = vld [vmem:[#allocation2 + $0x250] sm:$0xff]
        %v326 = vld [vmem:[#allocation2 + $0x258] sm:$0xff]
        %v327 = vld [vmem:[#allocation2 + $0x260] sm:$0xff]
        %v328 = vld [vmem:[#allocation2 + $0x268] sm:$0xff]
        %v329 = vld [vmem:[#allocation2 + $0x270] sm:$0xff]
        %v330 = vld [vmem:[#allocation2 + $0x278] sm:$0xff]
        %v331 = vld [vmem:[#allocation2 + $0x280] sm:$0xff]
        %v332 = vld [vmem:[#allocation2 + $0x288] sm:$0xff]
        %v333 = vld [vmem:[#allocation2 + $0x290] sm:$0xff]
        %v334 = vld [vmem:[#allocation2 + $0x298] sm:$0xff]
        %v335 = vld [vmem:[#allocation2 + $0x2a0] sm:$0xff]
        %v336 = vld [vmem:[#allocation2 + $0x2a8] sm:$0xff]
        %v337 = vld [vmem:[#allocation2 + $0x2b0] sm:$0xff]
        %v338 = vld [vmem:[#allocation2 + $0x2b8] sm:$0xff]
        %v339 = vld [vmem:[#allocation2 + $0x2c0] sm:$0xff]
        %v340 = vld [vmem:[#allocation2 + $0x2c8] sm:$0xff]
        %v341 = vld [vmem:[#allocation2 + $0x2d0] sm:$0xff]
        %v342 = vld [vmem:[#allocation2 + $0x2d8] sm:$0xff]
        %v343 = vld [vmem:[#allocation2 + $0x2e0] sm:$0xff]
        %v344 = vld [vmem:[#allocation2 + $0x2e8] sm:$0xff]
        %v345 = vld [vmem:[#allocation2 + $0x2f0] sm:$0xff]
        %v346 = vld [vmem:[#allocation2 + $0x2f8] sm:$0xff]
        %v347 = vld [vmem:[#allocation2 + $0x300] sm:$0xff]
        %v348 = vld [vmem:[#allocation2 + $0x308] sm:$0xff]
        %v349 = vld [vmem:[#allocation2 + $0x310] sm:$0xff]
        %v350 = vld [vmem:[#allocation2 + $0x318] sm:$0xff]
        %v351 = vld [vmem:[#allocation2 + $0x320] sm:$0xff]
        %v352 = vld [vmem:[#allocation2 + $0x328] sm:$0xff]
        %v353 = vld [vmem:[#allocation2 + $0x330] sm:$0xff]
        %v354 = vld [vmem:[#allocation2 + $0x338] sm:$0xff]
        %v355 = vld [vmem:[#allocation2 + $0x340] sm:$0xff]
        %v356 = vld [vmem:[#allocation2 + $0x348] sm:$0xff]
        %v357 = vld [vmem:[#allocation2 + $0x350] sm:$0xff]
        %v358 = vld [vmem:[#allocation2 + $0x358] sm:$0xff]
        %v359 = vld [vmem:[%s220 + $0x84] sm:$0xff]
        %v360 = vld [vmem:[%s220 + $0x8c] sm:$0xf]
        %s361 = scalar_lea.vmem [#allocation2], 864
        %v362 = vld [vmem:[%s361] sm:$0xff]
        %v363 = vld [vmem:[%s361 + $0x8] sm:$0xff]
        %v364 = vld [vmem:[%s361 + $0x10] sm:$0xff]
        %v365 = vld [vmem:[%s361 + $0x18] sm:$0xff]
        %v366 = vld [vmem:[%s361 + $0x20] sm:$0xff]
        %v367 = vld [vmem:[%s361 + $0x28] sm:$0xff]
        %v368 = vld [vmem:[%s361 + $0x30] sm:$0xff]
        %v369 = vld [vmem:[%s361 + $0x38] sm:$0xff]
        %v370 = vld [vmem:[%s361 + $0x40] sm:$0xff]
        %v371 = vld [vmem:[%s361 + $0x48] sm:$0xff]
        %v372 = vld [vmem:[%s361 + $0x50] sm:$0xff]
        %v373 = vld [vmem:[%s361 + $0x58] sm:$0xff]
        %v374 = vld [vmem:[%s361 + $0x60] sm:$0xff]
        %v375 = vld [vmem:[%s361 + $0x68] sm:$0xff]
        %v376 = vld [vmem:[%s361 + $0x70] sm:$0xff]
        %v377 = vld [vmem:[%s361 + $0x78] sm:$0xff]
        %v378 = vld [vmem:[%s361 + $0x80] sm:$0xff]
        %v379 = vld [vmem:[%s361 + $0x88] sm:$0xff]
        %v380 = vld [vmem:[%s361 + $0x90] sm:$0xff]
        %v381 = vld [vmem:[%s361 + $0x98] sm:$0xff]
        %v382 = vld [vmem:[%s361 + $0xa0] sm:$0xff]
        %v383 = vld [vmem:[%s361 + $0xa8] sm:$0xff]
        %v384 = vld [vmem:[%s361 + $0xb0] sm:$0xff]
        %v385 = vld [vmem:[%s361 + $0xb8] sm:$0xff]
        %v386 = vld [vmem:[%s361 + $0xc0] sm:$0xff]
        %v387 = vld [vmem:[%s361 + $0xc8] sm:$0xff]
        %v388 = vld [vmem:[%s361 + $0xd0] sm:$0xff]
        %v389 = vld [vmem:[%s361 + $0xd8] sm:$0xff]
        %v390 = vld [vmem:[%s361 + $0xe0] sm:$0xff]
        %v391 = vld [vmem:[%s361 + $0xe8] sm:$0xff]
        %v392 = vld [vmem:[%s361 + $0xf0] sm:$0xff]
        %v393 = vld [vmem:[%s361 + $0xf8] sm:$0xff]
        %v394 = vld [vmem:[%s361 + $0x100] sm:$0xff]
        %v395 = vld [vmem:[%s361 + $0x108] sm:$0xff]
        %v396 = vld [vmem:[%s361 + $0x110] sm:$0xff]
        %v397 = vld [vmem:[%s361 + $0x118] sm:$0xff]
        %v398 = vld [vmem:[%s361 + $0x120] sm:$0xff]
        %v399 = vld [vmem:[%s361 + $0x128] sm:$0xff]
        %v400 = vld [vmem:[%s361 + $0x130] sm:$0xff]
        %v401 = vld [vmem:[%s361 + $0x138] sm:$0xff]
        %v402 = vld [vmem:[%s361 + $0x140] sm:$0xff]
        %v403 = vld [vmem:[%s361 + $0x148] sm:$0xff]
        %v404 = vld [vmem:[%s361 + $0x150] sm:$0xff]
        %v405 = vld [vmem:[%s361 + $0x158] sm:$0xff]
        %v406 = vld [vmem:[%s361 + $0x160] sm:$0xff]
        %v407 = vld [vmem:[%s361 + $0x168] sm:$0xff]
        %v408 = vld [vmem:[%s361 + $0x170] sm:$0xff]
        %v409 = vld [vmem:[%s361 + $0x178] sm:$0xff]
        %v410 = vld [vmem:[%s361 + $0x180] sm:$0xff]
        %v411 = vld [vmem:[%s361 + $0x188] sm:$0xff]
        %v412 = vld [vmem:[%s361 + $0x190] sm:$0xff]
        %v413 = vld [vmem:[%s361 + $0x198] sm:$0xff]
        %v414 = vld [vmem:[%s361 + $0x1a0] sm:$0xff]
        %v415 = vld [vmem:[%s361 + $0x1a8] sm:$0xff]
        %v416 = vld [vmem:[%s361 + $0x1b0] sm:$0xff]
        %v417 = vld [vmem:[%s361 + $0x1b8] sm:$0xff]
        %v418 = vld [vmem:[%s361 + $0x1c0] sm:$0xff]
        %v419 = vld [vmem:[%s361 + $0x1c8] sm:$0xff]
        %v420 = vld [vmem:[%s361 + $0x1d0] sm:$0xff]
        %v421 = vld [vmem:[%s361 + $0x1d8] sm:$0xff]
        %v422 = vld [vmem:[%s361 + $0x1e0] sm:$0xff]
        %v423 = vld [vmem:[%s361 + $0x1e8] sm:$0xff]
        %v424 = vld [vmem:[%s361 + $0x1f0] sm:$0xff]
        %v425 = vld [vmem:[%s361 + $0x1f8] sm:$0xff]
        %v426 = vld [vmem:[%s361 + $0x200] sm:$0xff]
        %v427 = vld [vmem:[%s361 + $0x208] sm:$0xff]
        %v428 = vld [vmem:[%s361 + $0x210] sm:$0xff]
        %v429 = vld [vmem:[%s361 + $0x218] sm:$0xff]
        %v430 = vld [vmem:[%s361 + $0x220] sm:$0xff]
        %v431 = vld [vmem:[%s361 + $0x228] sm:$0xff]
        %v432 = vld [vmem:[%s361 + $0x230] sm:$0xff]
        %v433 = vld [vmem:[%s361 + $0x238] sm:$0xff]
        %v434 = vld [vmem:[%s361 + $0x240] sm:$0xff]
        %v435 = vld [vmem:[%s361 + $0x248] sm:$0xff]
        %v436 = vld [vmem:[%s361 + $0x250] sm:$0xff]
        %v437 = vld [vmem:[%s361 + $0x258] sm:$0xff]
        %v438 = vld [vmem:[%s361 + $0x260] sm:$0xff]
        %v439 = vld [vmem:[%s361 + $0x268] sm:$0xff]
        %v440 = vld [vmem:[%s361 + $0x270] sm:$0xff]
        %v441 = vld [vmem:[%s361 + $0x278] sm:$0xff]
        %v442 = vld [vmem:[%s361 + $0x280] sm:$0xff]
        %v443 = vld [vmem:[%s361 + $0x288] sm:$0xff]
        %v444 = vld [vmem:[%s361 + $0x290] sm:$0xff]
        %v445 = vld [vmem:[%s361 + $0x298] sm:$0xff]
        %v446 = vld [vmem:[%s361 + $0x2a0] sm:$0xff]
        %v447 = vld [vmem:[%s361 + $0x2a8] sm:$0xff]
        %v448 = vld [vmem:[%s361 + $0x2b0] sm:$0xff]
        %v449 = vld [vmem:[%s361 + $0x2b8] sm:$0xff]
        %v450 = vld [vmem:[%s361 + $0x2c0] sm:$0xff]
        %v451 = vld [vmem:[%s361 + $0x2c8] sm:$0xff]
        %v452 = vld [vmem:[%s361 + $0x2d0] sm:$0xff]
        %v453 = vld [vmem:[%s361 + $0x2d8] sm:$0xff]
        %v454 = vld [vmem:[%s361 + $0x2e0] sm:$0xff]
        %v455 = vld [vmem:[%s361 + $0x2e8] sm:$0xff]
        %v456 = vld [vmem:[%s361 + $0x2f0] sm:$0xff]
        %v457 = vld [vmem:[%s361 + $0x2f8] sm:$0xff]
        %v458 = vld [vmem:[%s361 + $0x300] sm:$0xff]
        %v459 = vld [vmem:[%s361 + $0x308] sm:$0xff]
        %v460 = vld [vmem:[%s361 + $0x310] sm:$0xff]
        %v461 = vld [vmem:[%s361 + $0x318] sm:$0xff]
        %v462 = vld [vmem:[%s361 + $0x320] sm:$0xff]
        %v463 = vld [vmem:[%s361 + $0x328] sm:$0xff]
        %v464 = vld [vmem:[%s361 + $0x330] sm:$0xff]
        %v465 = vld [vmem:[%s361 + $0x338] sm:$0xff]
        %v466 = vld [vmem:[%s361 + $0x340] sm:$0xff]
        %v467 = vld [vmem:[%s361 + $0x348] sm:$0xff]
        %v468 = vld [vmem:[%s361 + $0x350] sm:$0xff]
        %v469 = vld [vmem:[%s361 + $0x358] sm:$0xff]
        %v494 = vunpack.c.l.b16 %v227
        %v495 = vunpack.c.h.b16 %v227
        %v496 = vunpack.c.l.b16 %v228
        %v497 = vunpack.c.l.b16 %v229
        %v498 = vunpack.c.h.b16 %v229
        %v499 = vunpack.c.l.b16 %v230
        %v500 = vunpack.c.l.b16 %v231
        %v501 = vunpack.c.h.b16 %v231
        %v502 = vunpack.c.l.b16 %v232
        %v503 = vunpack.c.l.b16 %v233
        %v504 = vunpack.c.h.b16 %v233
        %v505 = vunpack.c.l.b16 %v234
        %v506 = vunpack.c.l.b16 %v235
        %v507 = vunpack.c.h.b16 %v235
        %v508 = vunpack.c.l.b16 %v236
        %v509 = vunpack.c.l.b16 %v237
        %v510 = vunpack.c.h.b16 %v237
        %v511 = vunpack.c.l.b16 %v238
        %v512 = vunpack.c.l.b16 %v239
        %v513 = vunpack.c.h.b16 %v239
        %v514 = vunpack.c.l.b16 %v240
        %v515 = vunpack.c.l.b16 %v241
        %v516 = vunpack.c.h.b16 %v241
        %v517 = vunpack.c.l.b16 %v242
        %v518 = vunpack.c.l.b16 %v243
        %v519 = vunpack.c.h.b16 %v243
        %v520 = vunpack.c.l.b16 %v244
        %v521 = vunpack.c.l.b16 %v245
        %v522 = vunpack.c.h.b16 %v245
        %v523 = vunpack.c.l.b16 %v246
        %v524 = vunpack.c.l.b16 %v247
        %v525 = vunpack.c.h.b16 %v247
        %v526 = vunpack.c.l.b16 %v248
        %v527 = vunpack.c.l.b16 %v359
        %v528 = vunpack.c.h.b16 %v359
        %v529 = vunpack.c.l.b16 %v360
        %v530 = vpack.c.b16 %v497, %v494
        %v531 = vpack.c.b16 %v498, %v495
        %v532 = vpack.c.b16 %v499, %v496
        %v533 = vpack.c.b16 %v503, %v500
        %v534 = vpack.c.b16 %v504, %v501
        %v535 = vpack.c.b16 %v505, %v502
        %v536 = vpack.c.b16 %v509, %v506
        %v537 = vpack.c.b16 %v510, %v507
        %v538 = vpack.c.b16 %v511, %v508
        %v539 = vpack.c.b16 %v515, %v512
        %v540 = vpack.c.b16 %v516, %v513
        %v541 = vpack.c.b16 %v517, %v514
        %v542 = vpack.c.b16 %v521, %v518
        %v543 = vpack.c.b16 %v522, %v519
        %v544 = vpack.c.b16 %v523, %v520
        %v545 = vpack.c.b16 %v527, %v524
        %v546 = vpack.c.b16 %v528, %v525
        %v547 = vpack.c.b16 %v529, %v526
        %vm548 = vsmask.f32 7424
        %v550 = vshrl.u32 %v530, 16
        %v552 = vshll.u32 %v530, 16
        %v554 = vrot.slane %v552, 1
        %v555 = vor.u32 %v550, %v554
        %v557 = vshll.u32 %v533, 16
        %v559 = vrot.slane %v557, 1
        %v560 = vsel %vm548, %v555, %v559
        %v562 = vshrl.u32 %v531, 16
        %v564 = vshll.u32 %v531, 16
        %v566 = vrot.slane %v564, 1
        %v567 = vor.u32 %v562, %v566
        %v569 = vshll.u32 %v534, 16
        %v571 = vrot.slane %v569, 1
        %v572 = vsel %vm548, %v567, %v571
        %v574 = vshrl.u32 %v532, 16
        %v576 = vshll.u32 %v532, 16
        %v578 = vrot.slane %v576, 1
        %v579 = vor.u32 %v574, %v578
        %v581 = vshll.u32 %v535, 16
        %v583 = vrot.slane %v581, 1
        %v584 = vsel %vm548, %v579, %v583
        %v585 = vshrl.u32 %v533, 16
        %v587 = vor.u32 %v585, %v559
        %v589 = vshll.u32 %v536, 16
        %v591 = vrot.slane %v589, 1
        %v592 = vsel %vm548, %v587, %v591
        %v593 = vshrl.u32 %v534, 16
        %v595 = vor.u32 %v593, %v571
        %v597 = vshll.u32 %v537, 16
        %v599 = vrot.slane %v597, 1
        %v600 = vsel %vm548, %v595, %v599
        %v601 = vshrl.u32 %v535, 16
        %v603 = vor.u32 %v601, %v583
        %v605 = vshll.u32 %v538, 16
        %v607 = vrot.slane %v605, 1
        %v608 = vsel %vm548, %v603, %v607
        %v609 = vshrl.u32 %v536, 16
        %v611 = vor.u32 %v609, %v591
        %v613 = vshll.u32 %v539, 16
        %v615 = vrot.slane %v613, 1
        %v616 = vsel %vm548, %v611, %v615
        %v617 = vshrl.u32 %v537, 16
        %v619 = vor.u32 %v617, %v599
        %v621 = vshll.u32 %v540, 16
        %v623 = vrot.slane %v621, 1
        %v624 = vsel %vm548, %v619, %v623
        %v625 = vshrl.u32 %v538, 16
        %v627 = vor.u32 %v625, %v607
        %v629 = vshll.u32 %v541, 16
        %v631 = vrot.slane %v629, 1
        %v632 = vsel %vm548, %v627, %v631
        %v633 = vshrl.u32 %v539, 16
        %v635 = vor.u32 %v633, %v615
        %v637 = vshll.u32 %v542, 16
        %v639 = vrot.slane %v637, 1
        %v640 = vsel %vm548, %v635, %v639
        %v641 = vshrl.u32 %v540, 16
        %v643 = vor.u32 %v641, %v623
        %v645 = vshll.u32 %v543, 16
        %v647 = vrot.slane %v645, 1
        %v648 = vsel %vm548, %v643, %v647
        %v649 = vshrl.u32 %v541, 16
        %v651 = vor.u32 %v649, %v631
        %v653 = vshll.u32 %v544, 16
        %v655 = vrot.slane %v653, 1
        %v656 = vsel %vm548, %v651, %v655
        %v657 = vshrl.u32 %v542, 16
        %v659 = vor.u32 %v657, %v639
        %v661 = vshll.u32 %v545, 16
        %v663 = vrot.slane %v661, 1
        %v664 = vsel %vm548, %v659, %v663
        %v665 = vshrl.u32 %v543, 16
        %v667 = vor.u32 %v665, %v647
        %v669 = vshll.u32 %v546, 16
        %v671 = vrot.slane %v669, 1
        %v672 = vsel %vm548, %v667, %v671
        %v673 = vshrl.u32 %v544, 16
        %v675 = vor.u32 %v673, %v655
        %v677 = vshll.u32 %v547, 16
        %v679 = vrot.slane %v677, 1
        %v680 = vsel %vm548, %v675, %v679
        %v681 = vshrl.u32 %v545, 16
        %v683 = vor.u32 %v681, %v663
        %v684 = vshrl.u32 %v546, 16
        %v686 = vor.u32 %v684, %v671
        %v687 = vshrl.u32 %v547, 16
        %v689 = vor.u32 %v687, %v679
        %v810 = vunpack.c.l.b16 %v362
        %v811 = vunpack.c.h.b16 %v362
        %v812 = vunpack.c.l.b16 %v363
        %v813 = vunpack.c.h.b16 %v363
        %v814 = vunpack.c.l.b16 %v364
        %v815 = vunpack.c.h.b16 %v364
        %v816 = vunpack.c.l.b16 %v365
        %v817 = vunpack.c.h.b16 %v365
        %v818 = vunpack.c.l.b16 %v366
        %v819 = vunpack.c.h.b16 %v366
        %v820 = vunpack.c.l.b16 %v367
        %v821 = vunpack.c.h.b16 %v367
        %v822 = vunpack.c.l.b16 %v368
        %v823 = vunpack.c.h.b16 %v368
        %v824 = vunpack.c.l.b16 %v369
        %v825 = vunpack.c.h.b16 %v369
        %v826 = vunpack.c.l.b16 %v370
        %v827 = vunpack.c.h.b16 %v370
        %v828 = vunpack.c.l.b16 %v371
        %v829 = vunpack.c.h.b16 %v371
        %v830 = vunpack.c.l.b16 %v372
        %v831 = vunpack.c.h.b16 %v372
        %v832 = vunpack.c.l.b16 %v373
        %v833 = vunpack.c.h.b16 %v373
        %v834 = vunpack.c.l.b16 %v374
        %v835 = vunpack.c.h.b16 %v374
        %v836 = vunpack.c.l.b16 %v375
        %v837 = vunpack.c.h.b16 %v375
        %v838 = vunpack.c.l.b16 %v376
        %v839 = vunpack.c.h.b16 %v376
        %v840 = vunpack.c.l.b16 %v377
        %v841 = vunpack.c.h.b16 %v377
        %v842 = vunpack.c.l.b16 %v378
        %v843 = vunpack.c.h.b16 %v378
        %v844 = vunpack.c.l.b16 %v379
        %v845 = vunpack.c.h.b16 %v379
        %v846 = vunpack.c.l.b16 %v380
        %v847 = vunpack.c.h.b16 %v380
        %v848 = vunpack.c.l.b16 %v381
        %v849 = vunpack.c.h.b16 %v381
        %v850 = vunpack.c.l.b16 %v382
        %v851 = vunpack.c.h.b16 %v382
        %v852 = vunpack.c.l.b16 %v383
        %v853 = vunpack.c.h.b16 %v383
        %v854 = vunpack.c.l.b16 %v384
        %v855 = vunpack.c.h.b16 %v384
        %v856 = vunpack.c.l.b16 %v385
        %v857 = vunpack.c.h.b16 %v385
        %v858 = vunpack.c.l.b16 %v386
        %v859 = vunpack.c.h.b16 %v386
        %v860 = vunpack.c.l.b16 %v387
        %v861 = vunpack.c.h.b16 %v387
        %v862 = vunpack.c.l.b16 %v388
        %v863 = vunpack.c.h.b16 %v388
        %v864 = vunpack.c.l.b16 %v389
        %v865 = vunpack.c.h.b16 %v389
        %v866 = vunpack.c.l.b16 %v390
        %v867 = vunpack.c.h.b16 %v390
        %v868 = vunpack.c.l.b16 %v391
        %v869 = vunpack.c.h.b16 %v391
        %v870 = vunpack.c.l.b16 %v392
        %v871 = vunpack.c.h.b16 %v392
        %v872 = vunpack.c.l.b16 %v393
        %v873 = vunpack.c.h.b16 %v393
        %v874 = vunpack.c.l.b16 %v394
        %v875 = vunpack.c.h.b16 %v394
        %v876 = vunpack.c.l.b16 %v395
        %v877 = vunpack.c.h.b16 %v395
        %v878 = vunpack.c.l.b16 %v396
        %v879 = vunpack.c.h.b16 %v396
        %v880 = vunpack.c.l.b16 %v397
        %v881 = vunpack.c.h.b16 %v397
        %v882 = vunpack.c.l.b16 %v398
        %v883 = vunpack.c.h.b16 %v398
        %v884 = vunpack.c.l.b16 %v399
        %v885 = vunpack.c.h.b16 %v399
        %v886 = vunpack.c.l.b16 %v400
        %v887 = vunpack.c.h.b16 %v400
        %v888 = vunpack.c.l.b16 %v401
        %v889 = vunpack.c.h.b16 %v401
        %v890 = vunpack.c.l.b16 %v402
        %v891 = vunpack.c.h.b16 %v402
        %v892 = vunpack.c.l.b16 %v403
        %v893 = vunpack.c.h.b16 %v403
        %v894 = vunpack.c.l.b16 %v404
        %v895 = vunpack.c.h.b16 %v404
        %v896 = vunpack.c.l.b16 %v405
        %v897 = vunpack.c.h.b16 %v405
        %v898 = vunpack.c.l.b16 %v406
        %v899 = vunpack.c.h.b16 %v406
        %v900 = vunpack.c.l.b16 %v407
        %v901 = vunpack.c.h.b16 %v407
        %v902 = vunpack.c.l.b16 %v408
        %v903 = vunpack.c.h.b16 %v408
        %v904 = vunpack.c.l.b16 %v409
        %v905 = vunpack.c.h.b16 %v409
        %v906 = vunpack.c.l.b16 %v410
        %v907 = vunpack.c.h.b16 %v410
        %v908 = vunpack.c.l.b16 %v411
        %v909 = vunpack.c.h.b16 %v411
        %v910 = vunpack.c.l.b16 %v412
        %v911 = vunpack.c.h.b16 %v412
        %v912 = vunpack.c.l.b16 %v413
        %v913 = vunpack.c.h.b16 %v413
        %v914 = vunpack.c.l.b16 %v414
        %v915 = vunpack.c.h.b16 %v414
        %v916 = vunpack.c.l.b16 %v415
        %v917 = vunpack.c.h.b16 %v415
        %v918 = vunpack.c.l.b16 %v416
        %v919 = vunpack.c.h.b16 %v416
        %v920 = vunpack.c.l.b16 %v417
        %v921 = vunpack.c.h.b16 %v417
        %v922 = vunpack.c.l.b16 %v418
        %v923 = vunpack.c.h.b16 %v418
        %v924 = vunpack.c.l.b16 %v419
        %v925 = vunpack.c.h.b16 %v419
        %v926 = vunpack.c.l.b16 %v420
        %v927 = vunpack.c.h.b16 %v420
        %v928 = vunpack.c.l.b16 %v421
        %v929 = vunpack.c.h.b16 %v421
        %v930 = vunpack.c.l.b16 %v422
        %v931 = vunpack.c.h.b16 %v422
        %v932 = vunpack.c.l.b16 %v423
        %v933 = vunpack.c.h.b16 %v423
        %v934 = vunpack.c.l.b16 %v424
        %v935 = vunpack.c.h.b16 %v424
        %v936 = vunpack.c.l.b16 %v425
        %v937 = vunpack.c.h.b16 %v425
        %v938 = vunpack.c.l.b16 %v426
        %v939 = vunpack.c.h.b16 %v426
        %v940 = vunpack.c.l.b16 %v427
        %v941 = vunpack.c.h.b16 %v427
        %v942 = vunpack.c.l.b16 %v428
        %v943 = vunpack.c.h.b16 %v428
        %v944 = vunpack.c.l.b16 %v429
        %v945 = vunpack.c.h.b16 %v429
        %v946 = vunpack.c.l.b16 %v430
        %v947 = vunpack.c.h.b16 %v430
        %v948 = vunpack.c.l.b16 %v431
        %v949 = vunpack.c.h.b16 %v431
        %v950 = vunpack.c.l.b16 %v432
        %v951 = vunpack.c.h.b16 %v432
        %v952 = vunpack.c.l.b16 %v433
        %v953 = vunpack.c.h.b16 %v433
        %v954 = vunpack.c.l.b16 %v434
        %v955 = vunpack.c.h.b16 %v434
        %v956 = vunpack.c.l.b16 %v435
        %v957 = vunpack.c.h.b16 %v435
        %v958 = vunpack.c.l.b16 %v436
        %v959 = vunpack.c.h.b16 %v436
        %v960 = vunpack.c.l.b16 %v437
        %v961 = vunpack.c.h.b16 %v437
        %v962 = vunpack.c.l.b16 %v438
        %v963 = vunpack.c.h.b16 %v438
        %v964 = vunpack.c.l.b16 %v439
        %v965 = vunpack.c.h.b16 %v439
        %v966 = vunpack.c.l.b16 %v440
        %v967 = vunpack.c.h.b16 %v440
        %v968 = vunpack.c.l.b16 %v441
        %v969 = vunpack.c.h.b16 %v441
        %v970 = vunpack.c.l.b16 %v442
        %v971 = vunpack.c.h.b16 %v442
        %v972 = vunpack.c.l.b16 %v443
        %v973 = vunpack.c.h.b16 %v443
        %v974 = vunpack.c.l.b16 %v444
        %v975 = vunpack.c.h.b16 %v444
        %v976 = vunpack.c.l.b16 %v445
        %v977 = vunpack.c.h.b16 %v445
        %v978 = vunpack.c.l.b16 %v446
        %v979 = vunpack.c.h.b16 %v446
        %v980 = vunpack.c.l.b16 %v447
        %v981 = vunpack.c.h.b16 %v447
        %v982 = vunpack.c.l.b16 %v448
        %v983 = vunpack.c.h.b16 %v448
        %v984 = vunpack.c.l.b16 %v449
        %v985 = vunpack.c.h.b16 %v449
        %v986 = vunpack.c.l.b16 %v450
        %v987 = vunpack.c.h.b16 %v450
        %v988 = vunpack.c.l.b16 %v451
        %v989 = vunpack.c.h.b16 %v451
        %v990 = vunpack.c.l.b16 %v452
        %v991 = vunpack.c.h.b16 %v452
        %v992 = vunpack.c.l.b16 %v453
        %v993 = vunpack.c.h.b16 %v453
        %v994 = vunpack.c.l.b16 %v454
        %v995 = vunpack.c.h.b16 %v454
        %v996 = vunpack.c.l.b16 %v455
        %v997 = vunpack.c.h.b16 %v455
        %v998 = vunpack.c.l.b16 %v456
        %v999 = vunpack.c.h.b16 %v456
        %v1000 = vunpack.c.l.b16 %v457
        %v1001 = vunpack.c.h.b16 %v457
        %v1002 = vunpack.c.l.b16 %v458
        %v1003 = vunpack.c.h.b16 %v458
        %v1004 = vunpack.c.l.b16 %v459
        %v1005 = vunpack.c.h.b16 %v459
        %v1006 = vunpack.c.l.b16 %v460
        %v1007 = vunpack.c.h.b16 %v460
        %v1008 = vunpack.c.l.b16 %v461
        %v1009 = vunpack.c.h.b16 %v461
        %v1010 = vunpack.c.l.b16 %v462
        %v1011 = vunpack.c.h.b16 %v462
        %v1012 = vunpack.c.l.b16 %v463
        %v1013 = vunpack.c.h.b16 %v463
        %v1014 = vunpack.c.l.b16 %v464
        %v1015 = vunpack.c.h.b16 %v464
        %v1016 = vunpack.c.l.b16 %v465
        %v1017 = vunpack.c.h.b16 %v465
        %v1018 = vunpack.c.l.b16 %v466
        %v1019 = vunpack.c.h.b16 %v466
        %v1020 = vunpack.c.l.b16 %v467
        %v1021 = vunpack.c.h.b16 %v467
        %v1022 = vunpack.c.l.b16 %v468
        %v1023 = vunpack.c.h.b16 %v468
        %v1024 = vunpack.c.l.b16 %v469
        %v1025 = vunpack.c.h.b16 %v469
        %v1026 = vpack.c.b16 %v816, %v810
        %v1027 = vpack.c.b16 %v817, %v811
        %v1028 = vpack.c.b16 %v818, %v812
        %v1029 = vpack.c.b16 %v819, %v813
        %v1030 = vpack.c.b16 %v820, %v814
        %v1031 = vpack.c.b16 %v821, %v815
        %v1032 = vpack.c.b16 %v828, %v822
        %v1033 = vpack.c.b16 %v829, %v823
        %v1034 = vpack.c.b16 %v830, %v824
        %v1035 = vpack.c.b16 %v831, %v825
        %v1036 = vpack.c.b16 %v832, %v826
        %v1037 = vpack.c.b16 %v833, %v827
        %v1038 = vpack.c.b16 %v840, %v834
        %v1039 = vpack.c.b16 %v841, %v835
        %v1040 = vpack.c.b16 %v842, %v836
        %v1041 = vpack.c.b16 %v843, %v837
        %v1042 = vpack.c.b16 %v844, %v838
        %v1043 = vpack.c.b16 %v845, %v839
        %v1044 = vpack.c.b16 %v852, %v846
        %v1045 = vpack.c.b16 %v853, %v847
        %v1046 = vpack.c.b16 %v854, %v848
        %v1047 = vpack.c.b16 %v855, %v849
        %v1048 = vpack.c.b16 %v856, %v850
        %v1049 = vpack.c.b16 %v857, %v851
        %v1050 = vpack.c.b16 %v864, %v858
        %v1051 = vpack.c.b16 %v865, %v859
        %v1052 = vpack.c.b16 %v866, %v860
        %v1053 = vpack.c.b16 %v867, %v861
        %v1054 = vpack.c.b16 %v868, %v862
        %v1055 = vpack.c.b16 %v869, %v863
        %v1056 = vpack.c.b16 %v876, %v870
        %v1057 = vpack.c.b16 %v877, %v871
        %v1058 = vpack.c.b16 %v878, %v872
        %v1059 = vpack.c.b16 %v879, %v873
        %v1060 = vpack.c.b16 %v880, %v874
        %v1061 = vpack.c.b16 %v881, %v875
        %v1062 = vpack.c.b16 %v888, %v882
        %v1063 = vpack.c.b16 %v889, %v883
        %v1064 = vpack.c.b16 %v890, %v884
        %v1065 = vpack.c.b16 %v891, %v885
        %v1066 = vpack.c.b16 %v892, %v886
        %v1067 = vpack.c.b16 %v893, %v887
        %v1068 = vpack.c.b16 %v900, %v894
        %v1069 = vpack.c.b16 %v901, %v895
        %v1070 = vpack.c.b16 %v902, %v896
        %v1071 = vpack.c.b16 %v903, %v897
        %v1072 = vpack.c.b16 %v904, %v898
        %v1073 = vpack.c.b16 %v905, %v899
        %v1074 = vpack.c.b16 %v912, %v906
        %v1075 = vpack.c.b16 %v913, %v907
        %v1076 = vpack.c.b16 %v914, %v908
        %v1077 = vpack.c.b16 %v915, %v909
        %v1078 = vpack.c.b16 %v916, %v910
        %v1079 = vpack.c.b16 %v917, %v911
        %v1080 = vpack.c.b16 %v924, %v918
        %v1081 = vpack.c.b16 %v925, %v919
        %v1082 = vpack.c.b16 %v926, %v920
        %v1083 = vpack.c.b16 %v927, %v921
        %v1084 = vpack.c.b16 %v928, %v922
        %v1085 = vpack.c.b16 %v929, %v923
        %v1086 = vpack.c.b16 %v936, %v930
        %v1087 = vpack.c.b16 %v937, %v931
        %v1088 = vpack.c.b16 %v938, %v932
        %v1089 = vpack.c.b16 %v939, %v933
        %v1090 = vpack.c.b16 %v940, %v934
        %v1091 = vpack.c.b16 %v941, %v935
        %v1092 = vpack.c.b16 %v948, %v942
        %v1093 = vpack.c.b16 %v949, %v943
        %v1094 = vpack.c.b16 %v950, %v944
        %v1095 = vpack.c.b16 %v951, %v945
        %v1096 = vpack.c.b16 %v952, %v946
        %v1097 = vpack.c.b16 %v953, %v947
        %v1098 = vpack.c.b16 %v960, %v954
        %v1099 = vpack.c.b16 %v961, %v955
        %v1100 = vpack.c.b16 %v962, %v956
        %v1101 = vpack.c.b16 %v963, %v957
        %v1102 = vpack.c.b16 %v964, %v958
        %v1103 = vpack.c.b16 %v965, %v959
        %v1104 = vpack.c.b16 %v972, %v966
        %v1105 = vpack.c.b16 %v973, %v967
        %v1106 = vpack.c.b16 %v974, %v968
        %v1107 = vpack.c.b16 %v975, %v969
        %v1108 = vpack.c.b16 %v976, %v970
        %v1109 = vpack.c.b16 %v977, %v971
        %v1110 = vpack.c.b16 %v984, %v978
        %v1111 = vpack.c.b16 %v985, %v979
        %v1112 = vpack.c.b16 %v986, %v980
        %v1113 = vpack.c.b16 %v987, %v981
        %v1114 = vpack.c.b16 %v988, %v982
        %v1115 = vpack.c.b16 %v989, %v983
        %v1116 = vpack.c.b16 %v996, %v990
        %v1117 = vpack.c.b16 %v997, %v991
        %v1118 = vpack.c.b16 %v998, %v992
        %v1119 = vpack.c.b16 %v999, %v993
        %v1120 = vpack.c.b16 %v1000, %v994
        %v1121 = vpack.c.b16 %v1001, %v995
        %v1122 = vpack.c.b16 %v1008, %v1002
        %v1123 = vpack.c.b16 %v1009, %v1003
        %v1124 = vpack.c.b16 %v1010, %v1004
        %v1125 = vpack.c.b16 %v1011, %v1005
        %v1126 = vpack.c.b16 %v1012, %v1006
        %v1127 = vpack.c.b16 %v1013, %v1007
        %v1128 = vpack.c.b16 %v1020, %v1014
        %v1129 = vpack.c.b16 %v1021, %v1015
        %v1130 = vpack.c.b16 %v1022, %v1016
        %v1131 = vpack.c.b16 %v1023, %v1017
        %v1132 = vpack.c.b16 %v1024, %v1018
        %v1133 = vpack.c.b16 %v1025, %v1019
        %vm1242 = vcmask 261120
        %v1244 = vsel %vm1242, %v584, 0
        %v1247 = vsel %vm1242, %v608, 0
        %v1250 = vsel %vm1242, %v632, 0
        %v1253 = vsel %vm1242, %v656, 0
        %v1256 = vsel %vm1242, %v680, 0
        %v1259 = vsel %vm1242, %v689, 0
        %1261 = vmatprep.subr.bf16.mxu0 %v1027
        %1262 = vmatpush1.bf16.msra.mxu0 %v1026
        %1263 = vmatprep.subr.bf16.mxu0 %v1033
        %1264 = vmatpush1.bf16.msra.mxu0 %v1032
        %1265 = vmatprep.subr.bf16.mxu0 %v1039
        %1266 = vmatpush1.bf16.msra.mxu0 %v1038
        %1267 = vmatprep.subr.bf16.mxu0 %v1045
        %1268 = vmatpush1.bf16.msra.mxu0 %v1044
        %1269 = vmatprep.subr.bf16.mxu0 %v1051
        %1270 = vmatpush1.bf16.msra.mxu0 %v1050
        %1271 = vmatprep.subr.bf16.mxu0 %v1057
        %1272 = vmatpush1.bf16.msra.mxu0 %v1056
        %1273 = vmatprep.subr.bf16.mxu0 %v1063
        %1274 = vmatpush1.bf16.msra.mxu0 %v1062
        %1275 = vmatprep.subr.bf16.mxu0 %v1069
        %1276 = vmatpush1.bf16.msra.mxu0 %v1068
        %1277 = vmatprep.subr.bf16.mxu0 %v1075
        %1278 = vmatpush1.bf16.msra.mxu0 %v1074
        %1279 = vmatprep.subr.bf16.mxu0 %v1081
        %1280 = vmatpush1.bf16.msra.mxu0 %v1080
        %1281 = vmatprep.subr.bf16.mxu0 %v1087
        %1282 = vmatpush1.bf16.msra.mxu0 %v1086
        %1283 = vmatprep.subr.bf16.mxu0 %v1093
        %1284 = vmatpush1.bf16.msra.mxu0 %v1092
        %1285 = vmatprep.subr.bf16.mxu0 %v1099
        %1286 = vmatpush1.bf16.msra.mxu0 %v1098
        %1287 = vmatprep.subr.bf16.mxu0 %v1105
        %1288 = vmatpush1.bf16.msra.mxu0 %v1104
        %1289 = vmatprep.subr.bf16.mxu0 %v1111
        %1290 = vmatpush1.bf16.msra.mxu0 %v1110
        %1291 = vmatprep.subr.bf16.mxu0 %v1117
        %1292 = vmatpush1.bf16.msra.mxu0 %v1116
        %1293 = vmatprep.mubr.bf16.mxu0 %v572
        %1294 = vmatmul.mubr.bf16.gmra.mrb[0].mxu0 %v560
        %v1295 = vpop.f32.mrb[0].mxu0
        %v1296 = vadd.f32 0.0, %v1295
        %v1297 = vpop.f32.mrb[0].mxu0
        %v1298 = vadd.f32 0.0, %v1297
        %v1299 = vpop.f32.mrb[0].mxu0
        %v1300 = vadd.f32 0.0, %v1299
        %v1301 = vpop.f32.mrb[0].mxu0
        %v1302 = vadd.f32 0.0, %v1301
        %1303 = vmatprep.mubr.bf16.mxu0 %v600
        %1304 = vmatmul.mubr.bf16.gmra.mrb[0].mxu0 %v592
        %v1305 = vpop.f32.mrb[0].mxu0
        %v1306 = vadd.f32 0.0, %v1305
        %v1307 = vpop.f32.mrb[0].mxu0
        %v1308 = vadd.f32 0.0, %v1307
        %v1309 = vpop.f32.mrb[0].mxu0
        %v1310 = vadd.f32 0.0, %v1309
        %v1311 = vpop.f32.mrb[0].mxu0
        %v1312 = vadd.f32 0.0, %v1311
        %1313 = vmatprep.mubr.bf16.mxu0 %v624
        %1314 = vmatmul.mubr.bf16.gmra.mrb[0].mxu0 %v616
        %v1315 = vpop.f32.mrb[0].mxu0
        %v1316 = vadd.f32 0.0, %v1315
        %v1317 = vpop.f32.mrb[0].mxu0
        %v1318 = vadd.f32 0.0, %v1317
        %v1319 = vpop.f32.mrb[0].mxu0
        %v1320 = vadd.f32 0.0, %v1319
        %v1321 = vpop.f32.mrb[0].mxu0
        %v1322 = vadd.f32 0.0, %v1321
        %1323 = vmatprep.mubr.bf16.mxu0 %v648
        %1324 = vmatmul.mubr.bf16.gmra.mrb[0].mxu0 %v640
        %v1325 = vpop.f32.mrb[0].mxu0
        %v1326 = vadd.f32 0.0, %v1325
        %v1327 = vpop.f32.mrb[0].mxu0
        %v1328 = vadd.f32 0.0, %v1327
        %v1329 = vpop.f32.mrb[0].mxu0
        %v1330 = vadd.f32 0.0, %v1329
        %v1331 = vpop.f32.mrb[0].mxu0
        %v1332 = vadd.f32 0.0, %v1331
        %1333 = vmatprep.mubr.bf16.mxu0 %v672
        %1334 = vmatmul.mubr.bf16.gmra.mrb[0].mxu0 %v664
        %v1335 = vpop.f32.mrb[0].mxu0
        %v1336 = vadd.f32 0.0, %v1335
        %v1337 = vpop.f32.mrb[0].mxu0
        %v1338 = vadd.f32 0.0, %v1337
        %v1339 = vpop.f32.mrb[0].mxu0
        %v1340 = vadd.f32 0.0, %v1339
        %v1341 = vpop.f32.mrb[0].mxu0
        %v1342 = vadd.f32 0.0, %v1341
        %1343 = vmatprep.mubr.bf16.mxu0 %v686
        %1344 = vmatmul.mubr.bf16.gmra.mrb[0].mxu0 %v683
        %v1345 = vpop.f32.mrb[0].mxu0
        %v1346 = vadd.f32 0.0, %v1345
        %v1347 = vpop.f32.mrb[0].mxu0
        %v1348 = vadd.f32 0.0, %v1347
        %v1349 = vpop.f32.mrb[0].mxu0
        %v1350 = vadd.f32 0.0, %v1349
        %v1351 = vpop.f32.mrb[0].mxu0
        %v1352 = vadd.f32 0.0, %v1351
        %1353 = vdwg.mxu0
        %1354 = vmatprep.subr.bf16.mxu0 %v1123
        %1355 = vmatpush1.bf16.msra.mxu0 %v1122
        %1356 = vmatprep.subr.bf16.mxu0 %v1129
        %1357 = vmatpush1.bf16.msra.mxu0 %v1128
        %1358 = vmatprep.subr.bf16.mxu0 0
        %1359 = vmatpush1.bf16.msra.mxu0 0
        %1360 = vmatprep.subr.bf16.mxu0 0
        %1361 = vmatpush1.bf16.msra.mxu0 0
        %1362 = vmatprep.subr.bf16.mxu0 0
        %1363 = vmatpush1.bf16.msra.mxu0 0
        %1364 = vmatprep.subr.bf16.mxu0 0
        %1365 = vmatpush1.bf16.msra.mxu0 0
        %1366 = vmatprep.subr.bf16.mxu0 0
        %1367 = vmatpush1.bf16.msra.mxu0 0
        %1368 = vmatprep.subr.bf16.mxu0 0
        %1369 = vmatpush1.bf16.msra.mxu0 0
        %1370 = vmatprep.subr.bf16.mxu0 0
        %1371 = vmatpush1.bf16.msra.mxu0 0
        %1372 = vmatprep.subr.bf16.mxu0 0
        %1373 = vmatpush1.bf16.msra.mxu0 0
        %1374 = vmatprep.subr.bf16.mxu0 0
        %1375 = vmatpush1.bf16.msra.mxu0 0
        %1376 = vmatprep.subr.bf16.mxu0 0
        %1377 = vmatpush1.bf16.msra.mxu0 0
        %1378 = vmatprep.subr.bf16.mxu0 0
        %1379 = vmatpush1.bf16.msra.mxu0 0
        %1380 = vmatprep.subr.bf16.mxu0 0
        %1381 = vmatpush1.bf16.msra.mxu0 0
        %1382 = vmatprep.subr.bf16.mxu0 0
        %1383 = vmatpush1.bf16.msra.mxu0 0
        %1384 = vmatprep.subr.bf16.mxu0 0
        %1385 = vmatpush1.bf16.msra.mxu0 0
        %1386 = vmatprep.mubr.bf16.mxu0 0
        %1387 = vmatmul.mubr.bf16.gmra.mrb[0].mxu0 %v1244
        %v1388 = vpop.f32.mrb[0].mxu0
        %v1389 = vadd.f32 %v1296, %v1388
        %v1390 = vpop.f32.mrb[0].mxu0
        %v1391 = vadd.f32 %v1298, %v1390
        %v1392 = vpop.f32.mrb[0].mxu0
        %v1393 = vadd.f32 %v1300, %v1392
        %v1394 = vpop.f32.mrb[0].mxu0
        %v1395 = vadd.f32 %v1302, %v1394
        %1396 = vmatprep.mubr.bf16.mxu0 0
        %1397 = vmatmul.mubr.bf16.gmra.mrb[0].mxu0 %v1247
        %v1398 = vpop.f32.mrb[0].mxu0
        %v1399 = vadd.f32 %v1306, %v1398
        %v1400 = vpop.f32.mrb[0].mxu0
        %v1401 = vadd.f32 %v1308, %v1400
        %v1402 = vpop.f32.mrb[0].mxu0
        %v1403 = vadd.f32 %v1310, %v1402
        %v1404 = vpop.f32.mrb[0].mxu0
        %v1405 = vadd.f32 %v1312, %v1404
        %1406 = vmatprep.mubr.bf16.mxu0 0
        %1407 = vmatmul.mubr.bf16.gmra.mrb[0].mxu0 %v1250
        %v1408 = vpop.f32.mrb[0].mxu0
        %v1409 = vadd.f32 %v1316, %v1408
        %v1410 = vpop.f32.mrb[0].mxu0
        %v1411 = vadd.f32 %v1318, %v1410
        %v1412 = vpop.f32.mrb[0].mxu0
        %v1413 = vadd.f32 %v1320, %v1412
        %v1414 = vpop.f32.mrb[0].mxu0
        %v1415 = vadd.f32 %v1322, %v1414
        %1416 = vmatprep.mubr.bf16.mxu0 0
        %1417 = vmatmul.mubr.bf16.gmra.mrb[0].mxu0 %v1253
        %v1418 = vpop.f32.mrb[0].mxu0
        %v1419 = vadd.f32 %v1326, %v1418
        %v1420 = vpop.f32.mrb[0].mxu0
        %v1421 = vadd.f32 %v1328, %v1420
        %v1422 = vpop.f32.mrb[0].mxu0
        %v1423 = vadd.f32 %v1330, %v1422
        %v1424 = vpop.f32.mrb[0].mxu0
        %v1425 = vadd.f32 %v1332, %v1424
        %1426 = vmatprep.mubr.bf16.mxu0 0
        %1427 = vmatmul.mubr.bf16.gmra.mrb[0].mxu0 %v1256
        %v1428 = vpop.f32.mrb[0].mxu0
        %v1429 = vadd.f32 %v1336, %v1428
        %v1430 = vpop.f32.mrb[0].mxu0
        %v1431 = vadd.f32 %v1338, %v1430
        %v1432 = vpop.f32.mrb[0].mxu0
        %v1433 = vadd.f32 %v1340, %v1432
        %v1434 = vpop.f32.mrb[0].mxu0
        %v1435 = vadd.f32 %v1342, %v1434
        %1436 = vmatprep.mubr.bf16.mxu0 0
        %1437 = vmatmul.mubr.bf16.gmra.mrb[0].mxu0 %v1259
        %v1438 = vpop.f32.mrb[0].mxu0
        %v1439 = vadd.f32 %v1346, %v1438
        %v1440 = vpop.f32.mrb[0].mxu0
        %v1441 = vadd.f32 %v1348, %v1440
        %v1442 = vpop.f32.mrb[0].mxu0
        %v1443 = vadd.f32 %v1350, %v1442
        %v1444 = vpop.f32.mrb[0].mxu0
        %v1445 = vadd.f32 %v1352, %v1444
        %1446 = vdwg.mxu0
        %1447 = vmatprep.subr.bf16.mxu0 %v1029
        %1448 = vmatpush1.bf16.msra.mxu0 %v1028
        %1449 = vmatprep.subr.bf16.mxu0 %v1035
        %1450 = vmatpush1.bf16.msra.mxu0 %v1034
        %1451 = vmatprep.subr.bf16.mxu0 %v1041
        %1452 = vmatpush1.bf16.msra.mxu0 %v1040
        %1453 = vmatprep.subr.bf16.mxu0 %v1047
        %1454 = vmatpush1.bf16.msra.mxu0 %v1046
        %1455 = vmatprep.subr.bf16.mxu0 %v1053
        %1456 = vmatpush1.bf16.msra.mxu0 %v1052
        %1457 = vmatprep.subr.bf16.mxu0 %v1059
        %1458 = vmatpush1.bf16.msra.mxu0 %v1058
        %1459 = vmatprep.subr.bf16.mxu0 %v1065
        %1460 = vmatpush1.bf16.msra.mxu0 %v1064
        %1461 = vmatprep.subr.bf16.mxu0 %v1071
        %1462 = vmatpush1.bf16.msra.mxu0 %v1070
        %1463 = vmatprep.subr.bf16.mxu0 %v1077
        %1464 = vmatpush1.bf16.msra.mxu0 %v1076
        %1465 = vmatprep.subr.bf16.mxu0 %v1083
        %1466 = vmatpush1.bf16.msra.mxu0 %v1082
        %1467 = vmatprep.subr.bf16.mxu0 %v1089
        %1468 = vmatpush1.bf16.msra.mxu0 %v1088
        %1469 = vmatprep.subr.bf16.mxu0 %v1095
        %1470 = vmatpush1.bf16.msra.mxu0 %v1094
        %1471 = vmatprep.subr.bf16.mxu0 %v1101
        %1472 = vmatpush1.bf16.msra.mxu0 %v1100
        %1473 = vmatprep.subr.bf16.mxu0 %v1107
        %1474 = vmatpush1.bf16.msra.mxu0 %v1106
        %1475 = vmatprep.subr.bf16.mxu0 %v1113
        %1476 = vmatpush1.bf16.msra.mxu0 %v1112
        %1477 = vmatprep.subr.bf16.mxu0 %v1119
        %1478 = vmatpush1.bf16.msra.mxu0 %v1118
        %1479 = vmatprep.mubr.bf16.mxu0 %v572
        %1480 = vmatmul.mubr.bf16.gmra.mrb[0].mxu0 %v560
        %v1481 = vpop.f32.mrb[0].mxu0
        %v1482 = vadd.f32 0.0, %v1481
        %v1483 = vpop.f32.mrb[0].mxu0
        %v1484 = vadd.f32 0.0, %v1483
        %v1485 = vpop.f32.mrb[0].mxu0
        %v1486 = vadd.f32 0.0, %v1485
        %v1487 = vpop.f32.mrb[0].mxu0
        %v1488 = vadd.f32 0.0, %v1487
        %1489 = vmatprep.mubr.bf16.mxu0 %v600
        %1490 = vmatmul.mubr.bf16.gmra.mrb[0].mxu0 %v592
        %v1491 = vpop.f32.mrb[0].mxu0
        %v1492 = vadd.f32 0.0, %v1491
        %v1493 = vpop.f32.mrb[0].mxu0
        %v1494 = vadd.f32 0.0, %v1493
        %v1495 = vpop.f32.mrb[0].mxu0
        %v1496 = vadd.f32 0.0, %v1495
        %v1497 = vpop.f32.mrb[0].mxu0
        %v1498 = vadd.f32 0.0, %v1497
        %1499 = vmatprep.mubr.bf16.mxu0 %v624
        %1500 = vmatmul.mubr.bf16.gmra.mrb[0].mxu0 %v616
        %v1501 = vpop.f32.mrb[0].mxu0
        %v1502 = vadd.f32 0.0, %v1501
        %v1503 = vpop.f32.mrb[0].mxu0
        %v1504 = vadd.f32 0.0, %v1503
        %v1505 = vpop.f32.mrb[0].mxu0
        %v1506 = vadd.f32 0.0, %v1505
        %v1507 = vpop.f32.mrb[0].mxu0
        %v1508 = vadd.f32 0.0, %v1507
        %1509 = vmatprep.mubr.bf16.mxu0 %v648
        %1510 = vmatmul.mubr.bf16.gmra.mrb[0].mxu0 %v640
        %v1511 = vpop.f32.mrb[0].mxu0
        %v1512 = vadd.f32 0.0, %v1511
        %v1513 = vpop.f32.mrb[0].mxu0
        %v1514 = vadd.f32 0.0, %v1513
        %v1515 = vpop.f32.mrb[0].mxu0
        %v1516 = vadd.f32 0.0, %v1515
        %v1517 = vpop.f32.mrb[0].mxu0
        %v1518 = vadd.f32 0.0, %v1517
        %1519 = vmatprep.mubr.bf16.mxu0 %v672
        %1520 = vmatmul.mubr.bf16.gmra.mrb[0].mxu0 %v664
        %v1521 = vpop.f32.mrb[0].mxu0
        %v1522 = vadd.f32 0.0, %v1521
        %v1523 = vpop.f32.mrb[0].mxu0
        %v1524 = vadd.f32 0.0, %v1523
        %v1525 = vpop.f32.mrb[0].mxu0
        %v1526 = vadd.f32 0.0, %v1525
        %v1527 = vpop.f32.mrb[0].mxu0
        %v1528 = vadd.f32 0.0, %v1527
        %1529 = vmatprep.mubr.bf16.mxu0 %v686
        %1530 = vmatmul.mubr.bf16.gmra.mrb[0].mxu0 %v683
        %v1531 = vpop.f32.mrb[0].mxu0
        %v1532 = vadd.f32 0.0, %v1531
        %v1533 = vpop.f32.mrb[0].mxu0
        %v1534 = vadd.f32 0.0, %v1533
        %v1535 = vpop.f32.mrb[0].mxu0
        %v1536 = vadd.f32 0.0, %v1535
        %v1537 = vpop.f32.mrb[0].mxu0
        %v1538 = vadd.f32 0.0, %v1537
        %1539 = vdwg.mxu0
        %1540 = vmatprep.subr.bf16.mxu0 %v1125
        %1541 = vmatpush1.bf16.msra.mxu0 %v1124
        %1542 = vmatprep.subr.bf16.mxu0 %v1131
        %1543 = vmatpush1.bf16.msra.mxu0 %v1130
        %1544 = vmatprep.subr.bf16.mxu0 0
        %1545 = vmatpush1.bf16.msra.mxu0 0
        %1546 = vmatprep.subr.bf16.mxu0 0
        %1547 = vmatpush1.bf16.msra.mxu0 0
        %1548 = vmatprep.subr.bf16.mxu0 0
        %1549 = vmatpush1.bf16.msra.mxu0 0
        %1550 = vmatprep.subr.bf16.mxu0 0
        %1551 = vmatpush1.bf16.msra.mxu0 0
        %1552 = vmatprep.subr.bf16.mxu0 0
        %1553 = vmatpush1.bf16.msra.mxu0 0
        %1554 = vmatprep.subr.bf16.mxu0 0
        %1555 = vmatpush1.bf16.msra.mxu0 0
        %1556 = vmatprep.subr.bf16.mxu0 0
        %1557 = vmatpush1.bf16.msra.mxu0 0
        %1558 = vmatprep.subr.bf16.mxu0 0
        %1559 = vmatpush1.bf16.msra.mxu0 0
        %1560 = vmatprep.subr.bf16.mxu0 0
        %1561 = vmatpush1.bf16.msra.mxu0 0
        %1562 = vmatprep.subr.bf16.mxu0 0
        %1563 = vmatpush1.bf16.msra.mxu0 0
        %1564 = vmatprep.subr.bf16.mxu0 0
        %1565 = vmatpush1.bf16.msra.mxu0 0
        %1566 = vmatprep.subr.bf16.mxu0 0
        %1567 = vmatpush1.bf16.msra.mxu0 0
        %1568 = vmatprep.subr.bf16.mxu0 0
        %1569 = vmatpush1.bf16.msra.mxu0 0
        %1570 = vmatprep.subr.bf16.mxu0 0
        %1571 = vmatpush1.bf16.msra.mxu0 0
        %1572 = vmatprep.mubr.bf16.mxu0 0
        %1573 = vmatmul.mubr.bf16.gmra.mrb[0].mxu0 %v1244
        %v1574 = vpop.f32.mrb[0].mxu0
        %v1575 = vadd.f32 %v1482, %v1574
        %v1576 = vpop.f32.mrb[0].mxu0
        %v1577 = vadd.f32 %v1484, %v1576
        %v1578 = vpop.f32.mrb[0].mxu0
        %v1579 = vadd.f32 %v1486, %v1578
        %v1580 = vpop.f32.mrb[0].mxu0
        %v1581 = vadd.f32 %v1488, %v1580
        %1582 = vmatprep.mubr.bf16.mxu0 0
        %1583 = vmatmul.mubr.bf16.gmra.mrb[0].mxu0 %v1247
        %v1584 = vpop.f32.mrb[0].mxu0
        %v1585 = vadd.f32 %v1492, %v1584
        %v1586 = vpop.f32.mrb[0].mxu0
        %v1587 = vadd.f32 %v1494, %v1586
        %v1588 = vpop.f32.mrb[0].mxu0
        %v1589 = vadd.f32 %v1496, %v1588
        %v1590 = vpop.f32.mrb[0].mxu0
        %v1591 = vadd.f32 %v1498, %v1590
        %1592 = vmatprep.mubr.bf16.mxu0 0
        %1593 = vmatmul.mubr.bf16.gmra.mrb[0].mxu0 %v1250
        %v1594 = vpop.f32.mrb[0].mxu0
        %v1595 = vadd.f32 %v1502, %v1594
        %v1596 = vpop.f32.mrb[0].mxu0
        %v1597 = vadd.f32 %v1504, %v1596
        %v1598 = vpop.f32.mrb[0].mxu0
        %v1599 = vadd.f32 %v1506, %v1598
        %v1600 = vpop.f32.mrb[0].mxu0
        %v1601 = vadd.f32 %v1508, %v1600
        %1602 = vmatprep.mubr.bf16.mxu0 0
        %1603 = vmatmul.mubr.bf16.gmra.mrb[0].mxu0 %v1253
        %v1604 = vpop.f32.mrb[0].mxu0
        %v1605 = vadd.f32 %v1512, %v1604
        %v1606 = vpop.f32.mrb[0].mxu0
        %v1607 = vadd.f32 %v1514, %v1606
        %v1608 = vpop.f32.mrb[0].mxu0
        %v1609 = vadd.f32 %v1516, %v1608
        %v1610 = vpop.f32.mrb[0].mxu0
        %v1611 = vadd.f32 %v1518, %v1610
        %1612 = vmatprep.mubr.bf16.mxu0 0
        %1613 = vmatmul.mubr.bf16.gmra.mrb[0].mxu0 %v1256
        %v1614 = vpop.f32.mrb[0].mxu0
        %v1615 = vadd.f32 %v1522, %v1614
        %v1616 = vpop.f32.mrb[0].mxu0
        %v1617 = vadd.f32 %v1524, %v1616
        %v1618 = vpop.f32.mrb[0].mxu0
        %v1619 = vadd.f32 %v1526, %v1618
        %v1620 = vpop.f32.mrb[0].mxu0
        %v1621 = vadd.f32 %v1528, %v1620
        %1622 = vmatprep.mubr.bf16.mxu0 0
        %1623 = vmatmul.mubr.bf16.gmra.mrb[0].mxu0 %v1259
        %v1624 = vpop.f32.mrb[0].mxu0
        %v1625 = vadd.f32 %v1532, %v1624
        %v1626 = vpop.f32.mrb[0].mxu0
        %v1627 = vadd.f32 %v1534, %v1626
        %v1628 = vpop.f32.mrb[0].mxu0
        %v1629 = vadd.f32 %v1536, %v1628
        %v1630 = vpop.f32.mrb[0].mxu0
        %v1631 = vadd.f32 %v1538, %v1630
        %1632 = vdwg.mxu0
        %1633 = vmatprep.subr.bf16.mxu0 %v1031
        %1634 = vmatpush1.bf16.msra.mxu0 %v1030
        %1635 = vmatprep.subr.bf16.mxu0 %v1037
        %1636 = vmatpush1.bf16.msra.mxu0 %v1036
        %1637 = vmatprep.subr.bf16.mxu0 %v1043
        %1638 = vmatpush1.bf16.msra.mxu0 %v1042
        %1639 = vmatprep.subr.bf16.mxu0 %v1049
        %1640 = vmatpush1.bf16.msra.mxu0 %v1048
        %1641 = vmatprep.subr.bf16.mxu0 %v1055
        %1642 = vmatpush1.bf16.msra.mxu0 %v1054
        %1643 = vmatprep.subr.bf16.mxu0 %v1061
        %1644 = vmatpush1.bf16.msra.mxu0 %v1060
        %1645 = vmatprep.subr.bf16.mxu0 %v1067
        %1646 = vmatpush1.bf16.msra.mxu0 %v1066
        %1647 = vmatprep.subr.bf16.mxu0 %v1073
        %1648 = vmatpush1.bf16.msra.mxu0 %v1072
        %1649 = vmatprep.subr.bf16.mxu0 %v1079
        %1650 = vmatpush1.bf16.msra.mxu0 %v1078
        %1651 = vmatprep.subr.bf16.mxu0 %v1085
        %1652 = vmatpush1.bf16.msra.mxu0 %v1084
        %1653 = vmatprep.subr.bf16.mxu0 %v1091
        %1654 = vmatpush1.bf16.msra.mxu0 %v1090
        %1655 = vmatprep.subr.bf16.mxu0 %v1097
        %1656 = vmatpush1.bf16.msra.mxu0 %v1096
        %1657 = vmatprep.subr.bf16.mxu0 %v1103
        %1658 = vmatpush1.bf16.msra.mxu0 %v1102
        %1659 = vmatprep.subr.bf16.mxu0 %v1109
        %1660 = vmatpush1.bf16.msra.mxu0 %v1108
        %1661 = vmatprep.subr.bf16.mxu0 %v1115
        %1662 = vmatpush1.bf16.msra.mxu0 %v1114
        %1663 = vmatprep.subr.bf16.mxu0 %v1121
        %1664 = vmatpush1.bf16.msra.mxu0 %v1120
        %1665 = vmatprep.mubr.bf16.mxu0 %v572
        %1666 = vmatmul.mubr.bf16.gmra.mrb[0].mxu0 %v560
        %v1667 = vpop.f32.mrb[0].mxu0
        %v1668 = vadd.f32 0.0, %v1667
        %v1669 = vpop.f32.mrb[0].mxu0
        %v1670 = vadd.f32 0.0, %v1669
        %v1671 = vpop.f32.mrb[0].mxu0
        %v1672 = vadd.f32 0.0, %v1671
        %v1673 = vpop.f32.mrb[0].mxu0
        %v1674 = vadd.f32 0.0, %v1673
        %1675 = vmatprep.mubr.bf16.mxu0 %v600
        %1676 = vmatmul.mubr.bf16.gmra.mrb[0].mxu0 %v592
        %v1677 = vpop.f32.mrb[0].mxu0
        %v1678 = vadd.f32 0.0, %v1677
        %v1679 = vpop.f32.mrb[0].mxu0
        %v1680 = vadd.f32 0.0, %v1679
        %v1681 = vpop.f32.mrb[0].mxu0
        %v1682 = vadd.f32 0.0, %v1681
        %v1683 = vpop.f32.mrb[0].mxu0
        %v1684 = vadd.f32 0.0, %v1683
        %1685 = vmatprep.mubr.bf16.mxu0 %v624
        %1686 = vmatmul.mubr.bf16.gmra.mrb[0].mxu0 %v616
        %v1687 = vpop.f32.mrb[0].mxu0
        %v1688 = vadd.f32 0.0, %v1687
        %v1689 = vpop.f32.mrb[0].mxu0
        %v1690 = vadd.f32 0.0, %v1689
        %v1691 = vpop.f32.mrb[0].mxu0
        %v1692 = vadd.f32 0.0, %v1691
        %v1693 = vpop.f32.mrb[0].mxu0
        %v1694 = vadd.f32 0.0, %v1693
        %1695 = vmatprep.mubr.bf16.mxu0 %v648
        %1696 = vmatmul.mubr.bf16.gmra.mrb[0].mxu0 %v640
        %v1697 = vpop.f32.mrb[0].mxu0
        %v1698 = vadd.f32 0.0, %v1697
        %v1699 = vpop.f32.mrb[0].mxu0
        %v1700 = vadd.f32 0.0, %v1699
        %v1701 = vpop.f32.mrb[0].mxu0
        %v1702 = vadd.f32 0.0, %v1701
        %v1703 = vpop.f32.mrb[0].mxu0
        %v1704 = vadd.f32 0.0, %v1703
        %1705 = vmatprep.mubr.bf16.mxu0 %v672
        %1706 = vmatmul.mubr.bf16.gmra.mrb[0].mxu0 %v664
        %v1707 = vpop.f32.mrb[0].mxu0
        %v1708 = vadd.f32 0.0, %v1707
        %v1709 = vpop.f32.mrb[0].mxu0
        %v1710 = vadd.f32 0.0, %v1709
        %v1711 = vpop.f32.mrb[0].mxu0
        %v1712 = vadd.f32 0.0, %v1711
        %v1713 = vpop.f32.mrb[0].mxu0
        %v1714 = vadd.f32 0.0, %v1713
        %1715 = vmatprep.mubr.bf16.mxu0 %v686
        %1716 = vmatmul.mubr.bf16.gmra.mrb[0].mxu0 %v683
        %v1717 = vpop.f32.mrb[0].mxu0
        %v1718 = vadd.f32 0.0, %v1717
        %v1719 = vpop.f32.mrb[0].mxu0
        %v1720 = vadd.f32 0.0, %v1719
        %v1721 = vpop.f32.mrb[0].mxu0
        %v1722 = vadd.f32 0.0, %v1721
        %v1723 = vpop.f32.mrb[0].mxu0
        %v1724 = vadd.f32 0.0, %v1723
        %1725 = vdwg.mxu0
        %1726 = vmatprep.subr.bf16.mxu0 %v1127
        %1727 = vmatpush1.bf16.msra.mxu0 %v1126
        %1728 = vmatprep.subr.bf16.mxu0 %v1133
        %1729 = vmatpush1.bf16.msra.mxu0 %v1132
        %1730 = vmatprep.subr.bf16.mxu0 0
        %1731 = vmatpush1.bf16.msra.mxu0 0
        %1732 = vmatprep.subr.bf16.mxu0 0
        %1733 = vmatpush1.bf16.msra.mxu0 0
        %1734 = vmatprep.subr.bf16.mxu0 0
        %1735 = vmatpush1.bf16.msra.mxu0 0
        %1736 = vmatprep.subr.bf16.mxu0 0
        %1737 = vmatpush1.bf16.msra.mxu0 0
        %1738 = vmatprep.subr.bf16.mxu0 0
        %1739 = vmatpush1.bf16.msra.mxu0 0
        %1740 = vmatprep.subr.bf16.mxu0 0
        %1741 = vmatpush1.bf16.msra.mxu0 0
        %1742 = vmatprep.subr.bf16.mxu0 0
        %1743 = vmatpush1.bf16.msra.mxu0 0
        %1744 = vmatprep.subr.bf16.mxu0 0
        %1745 = vmatpush1.bf16.msra.mxu0 0
        %1746 = vmatprep.subr.bf16.mxu0 0
        %1747 = vmatpush1.bf16.msra.mxu0 0
        %1748 = vmatprep.subr.bf16.mxu0 0
        %1749 = vmatpush1.bf16.msra.mxu0 0
        %1750 = vmatprep.subr.bf16.mxu0 0
        %1751 = vmatpush1.bf16.msra.mxu0 0
        %1752 = vmatprep.subr.bf16.mxu0 0
        %1753 = vmatpush1.bf16.msra.mxu0 0
        %1754 = vmatprep.subr.bf16.mxu0 0
        %1755 = vmatpush1.bf16.msra.mxu0 0
        %1756 = vmatprep.subr.bf16.mxu0 0
        %1757 = vmatpush1.bf16.msra.mxu0 0
        %1758 = vmatprep.mubr.bf16.mxu0 0
        %1759 = vmatmul.mubr.bf16.gmra.mrb[0].mxu0 %v1244
        %v1760 = vpop.f32.mrb[0].mxu0
        %v1761 = vadd.f32 %v1668, %v1760
        %v1762 = vpop.f32.mrb[0].mxu0
        %v1763 = vadd.f32 %v1670, %v1762
        %v1764 = vpop.f32.mrb[0].mxu0
        %v1765 = vadd.f32 %v1672, %v1764
        %v1766 = vpop.f32.mrb[0].mxu0
        %v1767 = vadd.f32 %v1674, %v1766
        %1768 = vmatprep.mubr.bf16.mxu0 0
        %1769 = vmatmul.mubr.bf16.gmra.mrb[0].mxu0 %v1247
        %v1770 = vpop.f32.mrb[0].mxu0
        %v1771 = vadd.f32 %v1678, %v1770
        %v1772 = vpop.f32.mrb[0].mxu0
        %v1773 = vadd.f32 %v1680, %v1772
        %v1774 = vpop.f32.mrb[0].mxu0
        %v1775 = vadd.f32 %v1682, %v1774
        %v1776 = vpop.f32.mrb[0].mxu0
        %v1777 = vadd.f32 %v1684, %v1776
        %1778 = vmatprep.mubr.bf16.mxu0 0
        %1779 = vmatmul.mubr.bf16.gmra.mrb[0].mxu0 %v1250
        %v1780 = vpop.f32.mrb[0].mxu0
        %v1781 = vadd.f32 %v1688, %v1780
        %v1782 = vpop.f32.mrb[0].mxu0
        %v1783 = vadd.f32 %v1690, %v1782
        %v1784 = vpop.f32.mrb[0].mxu0
        %v1785 = vadd.f32 %v1692, %v1784
        %v1786 = vpop.f32.mrb[0].mxu0
        %v1787 = vadd.f32 %v1694, %v1786
        %1788 = vmatprep.mubr.bf16.mxu0 0
        %1789 = vmatmul.mubr.bf16.gmra.mrb[0].mxu0 %v1253
        %v1790 = vpop.f32.mrb[0].mxu0
        %v1791 = vadd.f32 %v1698, %v1790
        %v1792 = vpop.f32.mrb[0].mxu0
        %v1793 = vadd.f32 %v1700, %v1792
        %v1794 = vpop.f32.mrb[0].mxu0
        %v1795 = vadd.f32 %v1702, %v1794
        %v1796 = vpop.f32.mrb[0].mxu0
        %v1797 = vadd.f32 %v1704, %v1796
        %1798 = vmatprep.mubr.bf16.mxu0 0
        %1799 = vmatmul.mubr.bf16.gmra.mrb[0].mxu0 %v1256
        %v1800 = vpop.f32.mrb[0].mxu0
        %v1801 = vadd.f32 %v1708, %v1800
        %v1802 = vpop.f32.mrb[0].mxu0
        %v1803 = vadd.f32 %v1710, %v1802
        %v1804 = vpop.f32.mrb[0].mxu0
        %v1805 = vadd.f32 %v1712, %v1804
        %v1806 = vpop.f32.mrb[0].mxu0
        %v1807 = vadd.f32 %v1714, %v1806
        %1808 = vmatprep.mubr.bf16.mxu0 0
        %1809 = vmatmul.mubr.bf16.gmra.mrb[0].mxu0 %v1259
        %v1810 = vpop.f32.mrb[0].mxu0
        %v1811 = vadd.f32 %v1718, %v1810
        %v1812 = vpop.f32.mrb[0].mxu0
        %v1813 = vadd.f32 %v1720, %v1812
        %v1814 = vpop.f32.mrb[0].mxu0
        %v1815 = vadd.f32 %v1722, %v1814
        %v1816 = vpop.f32.mrb[0].mxu0
        %v1817 = vadd.f32 %v1724, %v1816
        %1818 = vdwg.mxu0
        %v1821 = vunpack.c.l.b16 %v249
        %v1822 = vunpack.c.h.b16 %v249
        %v1823 = vunpack.c.l.b16 %v250
        %v1824 = vpack.c.b16 %v1821, %v524
        %v1825 = vpack.c.b16 %v1822, %v525
        %v1826 = vpack.c.b16 %v1823, %v526
        %v1947 = vunpack.c.l.b16 %v251
        %v1948 = vunpack.c.h.b16 %v251
        %v1949 = vunpack.c.l.b16 %v252
        %v1950 = vunpack.c.h.b16 %v252
        %v1951 = vunpack.c.l.b16 %v253
        %v1952 = vunpack.c.h.b16 %v253
        %v1953 = vunpack.c.l.b16 %v254
        %v1954 = vunpack.c.h.b16 %v254
        %v1955 = vunpack.c.l.b16 %v255
        %v1956 = vunpack.c.h.b16 %v255
        %v1957 = vunpack.c.l.b16 %v256
        %v1958 = vunpack.c.h.b16 %v256
        %v1959 = vunpack.c.l.b16 %v257
        %v1960 = vunpack.c.h.b16 %v257
        %v1961 = vunpack.c.l.b16 %v258
        %v1962 = vunpack.c.h.b16 %v258
        %v1963 = vunpack.c.l.b16 %v259
        %v1964 = vunpack.c.h.b16 %v259
        %v1965 = vunpack.c.l.b16 %v260
        %v1966 = vunpack.c.h.b16 %v260
        %v1967 = vunpack.c.l.b16 %v261
        %v1968 = vunpack.c.h.b16 %v261
        %v1969 = vunpack.c.l.b16 %v262
        %v1970 = vunpack.c.h.b16 %v262
        %v1971 = vunpack.c.l.b16 %v263
        %v1972 = vunpack.c.h.b16 %v263
        %v1973 = vunpack.c.l.b16 %v264
        %v1974 = vunpack.c.h.b16 %v264
        %v1975 = vunpack.c.l.b16 %v265
        %v1976 = vunpack.c.h.b16 %v265
        %v1977 = vunpack.c.l.b16 %v266
        %v1978 = vunpack.c.h.b16 %v266
        %v1979 = vunpack.c.l.b16 %v267
        %v1980 = vunpack.c.h.b16 %v267
        %v1981 = vunpack.c.l.b16 %v268
        %v1982 = vunpack.c.h.b16 %v268
        %v1983 = vunpack.c.l.b16 %v269
        %v1984 = vunpack.c.h.b16 %v269
        %v1985 = vunpack.c.l.b16 %v270
        %v1986 = vunpack.c.h.b16 %v270
        %v1987 = vunpack.c.l.b16 %v271
        %v1988 = vunpack.c.h.b16 %v271
        %v1989 = vunpack.c.l.b16 %v272
        %v1990 = vunpack.c.h.b16 %v272
        %v1991 = vunpack.c.l.b16 %v273
        %v1992 = vunpack.c.h.b16 %v273
        %v1993 = vunpack.c.l.b16 %v274
        %v1994 = vunpack.c.h.b16 %v274
        %v1995 = vunpack.c.l.b16 %v275
        %v1996 = vunpack.c.h.b16 %v275
        %v1997 = vunpack.c.l.b16 %v276
        %v1998 = vunpack.c.h.b16 %v276
        %v1999 = vunpack.c.l.b16 %v277
        %v2000 = vunpack.c.h.b16 %v277
        %v2001 = vunpack.c.l.b16 %v278
        %v2002 = vunpack.c.h.b16 %v278
        %v2003 = vunpack.c.l.b16 %v279
        %v2004 = vunpack.c.h.b16 %v279
        %v2005 = vunpack.c.l.b16 %v280
        %v2006 = vunpack.c.h.b16 %v280
        %v2007 = vunpack.c.l.b16 %v281
        %v2008 = vunpack.c.h.b16 %v281
        %v2009 = vunpack.c.l.b16 %v282
        %v2010 = vunpack.c.h.b16 %v282
        %v2011 = vunpack.c.l.b16 %v283
        %v2012 = vunpack.c.h.b16 %v283
        %v2013 = vunpack.c.l.b16 %v284
        %v2014 = vunpack.c.h.b16 %v284
        %v2015 = vunpack.c.l.b16 %v285
        %v2016 = vunpack.c.h.b16 %v285
        %v2017 = vunpack.c.l.b16 %v286
        %v2018 = vunpack.c.h.b16 %v286
        %v2019 = vunpack.c.l.b16 %v287
        %v2020 = vunpack.c.h.b16 %v287
        %v2021 = vunpack.c.l.b16 %v288
        %v2022 = vunpack.c.h.b16 %v288
        %v2023 = vunpack.c.l.b16 %v289
        %v2024 = vunpack.c.h.b16 %v289
        %v2025 = vunpack.c.l.b16 %v290
        %v2026 = vunpack.c.h.b16 %v290
        %v2027 = vunpack.c.l.b16 %v291
        %v2028 = vunpack.c.h.b16 %v291
        %v2029 = vunpack.c.l.b16 %v292
        %v2030 = vunpack.c.h.b16 %v292
        %v2031 = vunpack.c.l.b16 %v293
        %v2032 = vunpack.c.h.b16 %v293
        %v2033 = vunpack.c.l.b16 %v294
        %v2034 = vunpack.c.h.b16 %v294
        %v2035 = vunpack.c.l.b16 %v295
        %v2036 = vunpack.c.h.b16 %v295
        %v2037 = vunpack.c.l.b16 %v296
        %v2038 = vunpack.c.h.b16 %v296
        %v2039 = vunpack.c.l.b16 %v297
        %v2040 = vunpack.c.h.b16 %v297
        %v2041 = vunpack.c.l.b16 %v298
        %v2042 = vunpack.c.h.b16 %v298
        %v2043 = vunpack.c.l.b16 %v299
        %v2044 = vunpack.c.h.b16 %v299
        %v2045 = vunpack.c.l.b16 %v300
        %v2046 = vunpack.c.h.b16 %v300
        %v2047 = vunpack.c.l.b16 %v301
        %v2048 = vunpack.c.h.b16 %v301
        %v2049 = vunpack.c.l.b16 %v302
        %v2050 = vunpack.c.h.b16 %v302
        %v2051 = vunpack.c.l.b16 %v303
        %v2052 = vunpack.c.h.b16 %v303
        %v2053 = vunpack.c.l.b16 %v304
        %v2054 = vunpack.c.h.b16 %v304
        %v2055 = vunpack.c.l.b16 %v305
        %v2056 = vunpack.c.h.b16 %v305
        %v2057 = vunpack.c.l.b16 %v306
        %v2058 = vunpack.c.h.b16 %v306
        %v2059 = vunpack.c.l.b16 %v307
        %v2060 = vunpack.c.h.b16 %v307
        %v2061 = vunpack.c.l.b16 %v308
        %v2062 = vunpack.c.h.b16 %v308
        %v2063 = vunpack.c.l.b16 %v309
        %v2064 = vunpack.c.h.b16 %v309
        %v2065 = vunpack.c.l.b16 %v310
        %v2066 = vunpack.c.h.b16 %v310
        %v2067 = vunpack.c.l.b16 %v311
        %v2068 = vunpack.c.h.b16 %v311
        %v2069 = vunpack.c.l.b16 %v312
        %v2070 = vunpack.c.h.b16 %v312
        %v2071 = vunpack.c.l.b16 %v313
        %v2072 = vunpack.c.h.b16 %v313
        %v2073 = vunpack.c.l.b16 %v314
        %v2074 = vunpack.c.h.b16 %v314
        %v2075 = vunpack.c.l.b16 %v315
        %v2076 = vunpack.c.h.b16 %v315
        %v2077 = vunpack.c.l.b16 %v316
        %v2078 = vunpack.c.h.b16 %v316
        %v2079 = vunpack.c.l.b16 %v317
        %v2080 = vunpack.c.h.b16 %v317
        %v2081 = vunpack.c.l.b16 %v318
        %v2082 = vunpack.c.h.b16 %v318
        %v2083 = vunpack.c.l.b16 %v319
        %v2084 = vunpack.c.h.b16 %v319
        %v2085 = vunpack.c.l.b16 %v320
        %v2086 = vunpack.c.h.b16 %v320
        %v2087 = vunpack.c.l.b16 %v321
        %v2088 = vunpack.c.h.b16 %v321
        %v2089 = vunpack.c.l.b16 %v322
        %v2090 = vunpack.c.h.b16 %v322
        %v2091 = vunpack.c.l.b16 %v323
        %v2092 = vunpack.c.h.b16 %v323
        %v2093 = vunpack.c.l.b16 %v324
        %v2094 = vunpack.c.h.b16 %v324
        %v2095 = vunpack.c.l.b16 %v325
        %v2096 = vunpack.c.h.b16 %v325
        %v2097 = vunpack.c.l.b16 %v326
        %v2098 = vunpack.c.h.b16 %v326
        %v2099 = vunpack.c.l.b16 %v327
        %v2100 = vunpack.c.h.b16 %v327
        %v2101 = vunpack.c.l.b16 %v328
        %v2102 = vunpack.c.h.b16 %v328
        %v2103 = vunpack.c.l.b16 %v329
        %v2104 = vunpack.c.h.b16 %v329
        %v2105 = vunpack.c.l.b16 %v330
        %v2106 = vunpack.c.h.b16 %v330
        %v2107 = vunpack.c.l.b16 %v331
        %v2108 = vunpack.c.h.b16 %v331
        %v2109 = vunpack.c.l.b16 %v332
        %v2110 = vunpack.c.h.b16 %v332
        %v2111 = vunpack.c.l.b16 %v333
        %v2112 = vunpack.c.h.b16 %v333
        %v2113 = vunpack.c.l.b16 %v334
        %v2114 = vunpack.c.h.b16 %v334
        %v2115 = vunpack.c.l.b16 %v335
        %v2116 = vunpack.c.h.b16 %v335
        %v2117 = vunpack.c.l.b16 %v336
        %v2118 = vunpack.c.h.b16 %v336
        %v2119 = vunpack.c.l.b16 %v337
        %v2120 = vunpack.c.h.b16 %v337
        %v2121 = vunpack.c.l.b16 %v338
        %v2122 = vunpack.c.h.b16 %v338
        %v2123 = vunpack.c.l.b16 %v339
        %v2124 = vunpack.c.h.b16 %v339
        %v2125 = vunpack.c.l.b16 %v340
        %v2126 = vunpack.c.h.b16 %v340
        %v2127 = vunpack.c.l.b16 %v341
        %v2128 = vunpack.c.h.b16 %v341
        %v2129 = vunpack.c.l.b16 %v342
        %v2130 = vunpack.c.h.b16 %v342
        %v2131 = vunpack.c.l.b16 %v343
        %v2132 = vunpack.c.h.b16 %v343
        %v2133 = vunpack.c.l.b16 %v344
        %v2134 = vunpack.c.h.b16 %v344
        %v2135 = vunpack.c.l.b16 %v345
        %v2136 = vunpack.c.h.b16 %v345
        %v2137 = vunpack.c.l.b16 %v346
        %v2138 = vunpack.c.h.b16 %v346
        %v2139 = vunpack.c.l.b16 %v347
        %v2140 = vunpack.c.h.b16 %v347
        %v2141 = vunpack.c.l.b16 %v348
        %v2142 = vunpack.c.h.b16 %v348
        %v2143 = vunpack.c.l.b16 %v349
        %v2144 = vunpack.c.h.b16 %v349
        %v2145 = vunpack.c.l.b16 %v350
        %v2146 = vunpack.c.h.b16 %v350
        %v2147 = vunpack.c.l.b16 %v351
        %v2148 = vunpack.c.h.b16 %v351
        %v2149 = vunpack.c.l.b16 %v352
        %v2150 = vunpack.c.h.b16 %v352
        %v2151 = vunpack.c.l.b16 %v353
        %v2152 = vunpack.c.h.b16 %v353
        %v2153 = vunpack.c.l.b16 %v354
        %v2154 = vunpack.c.h.b16 %v354
        %v2155 = vunpack.c.l.b16 %v355
        %v2156 = vunpack.c.h.b16 %v355
        %v2157 = vunpack.c.l.b16 %v356
        %v2158 = vunpack.c.h.b16 %v356
        %v2159 = vunpack.c.l.b16 %v357
        %v2160 = vunpack.c.h.b16 %v357
        %v2161 = vunpack.c.l.b16 %v358
        %v2162 = vunpack.c.h.b16 %v358
        %v2163 = vpack.c.b16 %v1953, %v1947
        %v2164 = vpack.c.b16 %v1954, %v1948
        %v2165 = vpack.c.b16 %v1955, %v1949
        %v2166 = vpack.c.b16 %v1956, %v1950
        %v2167 = vpack.c.b16 %v1957, %v1951
        %v2168 = vpack.c.b16 %v1958, %v1952
        %v2169 = vpack.c.b16 %v1965, %v1959
        %v2170 = vpack.c.b16 %v1966, %v1960
        %v2171 = vpack.c.b16 %v1967, %v1961
        %v2172 = vpack.c.b16 %v1968, %v1962
        %v2173 = vpack.c.b16 %v1969, %v1963
        %v2174 = vpack.c.b16 %v1970, %v1964
        %v2175 = vpack.c.b16 %v1977, %v1971
        %v2176 = vpack.c.b16 %v1978, %v1972
        %v2177 = vpack.c.b16 %v1979, %v1973
        %v2178 = vpack.c.b16 %v1980, %v1974
        %v2179 = vpack.c.b16 %v1981, %v1975
        %v2180 = vpack.c.b16 %v1982, %v1976
        %v2181 = vpack.c.b16 %v1989, %v1983
        %v2182 = vpack.c.b16 %v1990, %v1984
        %v2183 = vpack.c.b16 %v1991, %v1985
        %v2184 = vpack.c.b16 %v1992, %v1986
        %v2185 = vpack.c.b16 %v1993, %v1987
        %v2186 = vpack.c.b16 %v1994, %v1988
        %v2187 = vpack.c.b16 %v2001, %v1995
        %v2188 = vpack.c.b16 %v2002, %v1996
        %v2189 = vpack.c.b16 %v2003, %v1997
        %v2190 = vpack.c.b16 %v2004, %v1998
        %v2191 = vpack.c.b16 %v2005, %v1999
        %v2192 = vpack.c.b16 %v2006, %v2000
        %v2193 = vpack.c.b16 %v2013, %v2007
        %v2194 = vpack.c.b16 %v2014, %v2008
        %v2195 = vpack.c.b16 %v2015, %v2009
        %v2196 = vpack.c.b16 %v2016, %v2010
        %v2197 = vpack.c.b16 %v2017, %v2011
        %v2198 = vpack.c.b16 %v2018, %v2012
        %v2199 = vpack.c.b16 %v2025, %v2019
        %v2200 = vpack.c.b16 %v2026, %v2020
        %v2201 = vpack.c.b16 %v2027, %v2021
        %v2202 = vpack.c.b16 %v2028, %v2022
        %v2203 = vpack.c.b16 %v2029, %v2023
        %v2204 = vpack.c.b16 %v2030, %v2024
        %v2205 = vpack.c.b16 %v2037, %v2031
        %v2206 = vpack.c.b16 %v2038, %v2032
        %v2207 = vpack.c.b16 %v2039, %v2033
        %v2208 = vpack.c.b16 %v2040, %v2034
        %v2209 = vpack.c.b16 %v2041, %v2035
        %v2210 = vpack.c.b16 %v2042, %v2036
        %v2211 = vpack.c.b16 %v2049, %v2043
        %v2212 = vpack.c.b16 %v2050, %v2044
        %v2213 = vpack.c.b16 %v2051, %v2045
        %v2214 = vpack.c.b16 %v2052, %v2046
        %v2215 = vpack.c.b16 %v2053, %v2047
        %v2216 = vpack.c.b16 %v2054, %v2048
        %v2217 = vpack.c.b16 %v2061, %v2055
        %v2218 = vpack.c.b16 %v2062, %v2056
        %v2219 = vpack.c.b16 %v2063, %v2057
        %v2220 = vpack.c.b16 %v2064, %v2058
        %v2221 = vpack.c.b16 %v2065, %v2059
        %v2222 = vpack.c.b16 %v2066, %v2060
        %v2223 = vpack.c.b16 %v2073, %v2067
        %v2224 = vpack.c.b16 %v2074, %v2068
        %v2225 = vpack.c.b16 %v2075, %v2069
        %v2226 = vpack.c.b16 %v2076, %v2070
        %v2227 = vpack.c.b16 %v2077, %v2071
        %v2228 = vpack.c.b16 %v2078, %v2072
        %v2229 = vpack.c.b16 %v2085, %v2079
        %v2230 = vpack.c.b16 %v2086, %v2080
        %v2231 = vpack.c.b16 %v2087, %v2081
        %v2232 = vpack.c.b16 %v2088, %v2082
        %v2233 = vpack.c.b16 %v2089, %v2083
        %v2234 = vpack.c.b16 %v2090, %v2084
        %v2235 = vpack.c.b16 %v2097, %v2091
        %v2236 = vpack.c.b16 %v2098, %v2092
        %v2237 = vpack.c.b16 %v2099, %v2093
        %v2238 = vpack.c.b16 %v2100, %v2094
        %v2239 = vpack.c.b16 %v2101, %v2095
        %v2240 = vpack.c.b16 %v2102, %v2096
        %v2241 = vpack.c.b16 %v2109, %v2103
        %v2242 = vpack.c.b16 %v2110, %v2104
        %v2243 = vpack.c.b16 %v2111, %v2105
        %v2244 = vpack.c.b16 %v2112, %v2106
        %v2245 = vpack.c.b16 %v2113, %v2107
        %v2246 = vpack.c.b16 %v2114, %v2108
        %v2247 = vpack.c.b16 %v2121, %v2115
        %v2248 = vpack.c.b16 %v2122, %v2116
        %v2249 = vpack.c.b16 %v2123, %v2117
        %v2250 = vpack.c.b16 %v2124, %v2118
        %v2251 = vpack.c.b16 %v2125, %v2119
        %v2252 = vpack.c.b16 %v2126, %v2120
        %v2253 = vpack.c.b16 %v2133, %v2127
        %v2254 = vpack.c.b16 %v2134, %v2128
        %v2255 = vpack.c.b16 %v2135, %v2129
        %v2256 = vpack.c.b16 %v2136, %v2130
        %v2257 = vpack.c.b16 %v2137, %v2131
        %v2258 = vpack.c.b16 %v2138, %v2132
        %v2259 = vpack.c.b16 %v2145, %v2139
        %v2260 = vpack.c.b16 %v2146, %v2140
        %v2261 = vpack.c.b16 %v2147, %v2141
        %v2262 = vpack.c.b16 %v2148, %v2142
        %v2263 = vpack.c.b16 %v2149, %v2143
        %v2264 = vpack.c.b16 %v2150, %v2144
        %v2265 = vpack.c.b16 %v2157, %v2151
        %v2266 = vpack.c.b16 %v2158, %v2152
        %v2267 = vpack.c.b16 %v2159, %v2153
        %v2268 = vpack.c.b16 %v2160, %v2154
        %v2269 = vpack.c.b16 %v2161, %v2155
        %v2270 = vpack.c.b16 %v2162, %v2156
        %v2379 = vsel %vm1242, %v532, 0
        %v2381 = vsel %vm1242, %v535, 0
        %v2383 = vsel %vm1242, %v538, 0
        %v2385 = vsel %vm1242, %v541, 0
        %v2387 = vsel %vm1242, %v544, 0
        %v2390 = vsel %vm1242, %v1826, 0
        %2392 = vmatprep.subr.bf16.mxu0 %v2164
        %2393 = vmatpush1.bf16.msra.mxu0 %v2163
        %2394 = vmatprep.subr.bf16.mxu0 %v2170
        %2395 = vmatpush1.bf16.msra.mxu0 %v2169
        %2396 = vmatprep.subr.bf16.mxu0 %v2176
        %2397 = vmatpush1.bf16.msra.mxu0 %v2175
        %2398 = vmatprep.subr.bf16.mxu0 %v2182
        %2399 = vmatpush1.bf16.msra.mxu0 %v2181
        %2400 = vmatprep.subr.bf16.mxu0 %v2188
        %2401 = vmatpush1.bf16.msra.mxu0 %v2187
        %2402 = vmatprep.subr.bf16.mxu0 %v2194
        %2403 = vmatpush1.bf16.msra.mxu0 %v2193
        %2404 = vmatprep.subr.bf16.mxu0 %v2200
        %2405 = vmatpush1.bf16.msra.mxu0 %v2199
        %2406 = vmatprep.subr.bf16.mxu0 %v2206
        %2407 = vmatpush1.bf16.msra.mxu0 %v2205
        %2408 = vmatprep.subr.bf16.mxu0 %v2212
        %2409 = vmatpush1.bf16.msra.mxu0 %v2211
        %2410 = vmatprep.subr.bf16.mxu0 %v2218
        %2411 = vmatpush1.bf16.msra.mxu0 %v2217
        %2412 = vmatprep.subr.bf16.mxu0 %v2224
        %2413 = vmatpush1.bf16.msra.mxu0 %v2223
        %2414 = vmatprep.subr.bf16.mxu0 %v2230
        %2415 = vmatpush1.bf16.msra.mxu0 %v2229
        %2416 = vmatprep.subr.bf16.mxu0 %v2236
        %2417 = vmatpush1.bf16.msra.mxu0 %v2235
        %2418 = vmatprep.subr.bf16.mxu0 %v2242
        %2419 = vmatpush1.bf16.msra.mxu0 %v2241
        %2420 = vmatprep.subr.bf16.mxu0 %v2248
        %2421 = vmatpush1.bf16.msra.mxu0 %v2247
        %2422 = vmatprep.subr.bf16.mxu0 %v2254
        %2423 = vmatpush1.bf16.msra.mxu0 %v2253
        %2424 = vmatprep.mubr.bf16.mxu0 %v531
        %2425 = vmatmul.mubr.bf16.gmra.mrb[0].mxu0 %v530
        %v2426 = vpop.f32.mrb[0].mxu0
        %v2427 = vadd.f32 %v1389, %v2426
        %v2428 = vpop.f32.mrb[0].mxu0
        %v2429 = vadd.f32 %v1391, %v2428
        %v2430 = vpop.f32.mrb[0].mxu0
        %v2431 = vadd.f32 %v1393, %v2430
        %v2432 = vpop.f32.mrb[0].mxu0
        %v2433 = vadd.f32 %v1395, %v2432
        %2434 = vmatprep.mubr.bf16.mxu0 %v534
        %2435 = vmatmul.mubr.bf16.gmra.mrb[0].mxu0 %v533
        %v2436 = vpop.f32.mrb[0].mxu0
        %v2437 = vadd.f32 %v1399, %v2436
        %v2438 = vpop.f32.mrb[0].mxu0
        %v2439 = vadd.f32 %v1401, %v2438
        %v2440 = vpop.f32.mrb[0].mxu0
        %v2441 = vadd.f32 %v1403, %v2440
        %v2442 = vpop.f32.mrb[0].mxu0
        %v2443 = vadd.f32 %v1405, %v2442
        %2444 = vmatprep.mubr.bf16.mxu0 %v537
        %2445 = vmatmul.mubr.bf16.gmra.mrb[0].mxu0 %v536
        %v2446 = vpop.f32.mrb[0].mxu0
        %v2447 = vadd.f32 %v1409, %v2446
        %v2448 = vpop.f32.mrb[0].mxu0
        %v2449 = vadd.f32 %v1411, %v2448
        %v2450 = vpop.f32.mrb[0].mxu0
        %v2451 = vadd.f32 %v1413, %v2450
        %v2452 = vpop.f32.mrb[0].mxu0
        %v2453 = vadd.f32 %v1415, %v2452
        %2454 = vmatprep.mubr.bf16.mxu0 %v540
        %2455 = vmatmul.mubr.bf16.gmra.mrb[0].mxu0 %v539
        %v2456 = vpop.f32.mrb[0].mxu0
        %v2457 = vadd.f32 %v1419, %v2456
        %v2458 = vpop.f32.mrb[0].mxu0
        %v2459 = vadd.f32 %v1421, %v2458
        %v2460 = vpop.f32.mrb[0].mxu0
        %v2461 = vadd.f32 %v1423, %v2460
        %v2462 = vpop.f32.mrb[0].mxu0
        %v2463 = vadd.f32 %v1425, %v2462
        %2464 = vmatprep.mubr.bf16.mxu0 %v543
        %2465 = vmatmul.mubr.bf16.gmra.mrb[0].mxu0 %v542
        %v2466 = vpop.f32.mrb[0].mxu0
        %v2467 = vadd.f32 %v1429, %v2466
        %v2468 = vpop.f32.mrb[0].mxu0
        %v2469 = vadd.f32 %v1431, %v2468
        %v2470 = vpop.f32.mrb[0].mxu0
        %v2471 = vadd.f32 %v1433, %v2470
        %v2472 = vpop.f32.mrb[0].mxu0
        %v2473 = vadd.f32 %v1435, %v2472
        %2474 = vmatprep.mubr.bf16.mxu0 %v1825
        %2475 = vmatmul.mubr.bf16.gmra.mrb[0].mxu0 %v1824
        %v2476 = vpop.f32.mrb[0].mxu0
        %v2477 = vadd.f32 %v1439, %v2476
        %v2478 = vpop.f32.mrb[0].mxu0
        %v2479 = vadd.f32 %v1441, %v2478
        %v2480 = vpop.f32.mrb[0].mxu0
        %v2481 = vadd.f32 %v1443, %v2480
        %v2482 = vpop.f32.mrb[0].mxu0
        %v2483 = vadd.f32 %v1445, %v2482
        %2484 = vdwg.mxu0
        %2485 = vmatprep.subr.bf16.mxu0 %v2260
        %2486 = vmatpush1.bf16.msra.mxu0 %v2259
        %2487 = vmatprep.subr.bf16.mxu0 %v2266
        %2488 = vmatpush1.bf16.msra.mxu0 %v2265
        %2489 = vmatprep.subr.bf16.mxu0 0
        %2490 = vmatpush1.bf16.msra.mxu0 0
        %2491 = vmatprep.subr.bf16.mxu0 0
        %2492 = vmatpush1.bf16.msra.mxu0 0
        %2493 = vmatprep.subr.bf16.mxu0 0
        %2494 = vmatpush1.bf16.msra.mxu0 0
        %2495 = vmatprep.subr.bf16.mxu0 0
        %2496 = vmatpush1.bf16.msra.mxu0 0
        %2497 = vmatprep.subr.bf16.mxu0 0
        %2498 = vmatpush1.bf16.msra.mxu0 0
        %2499 = vmatprep.subr.bf16.mxu0 0
        %2500 = vmatpush1.bf16.msra.mxu0 0
        %2501 = vmatprep.subr.bf16.mxu0 0
        %2502 = vmatpush1.bf16.msra.mxu0 0
        %2503 = vmatprep.subr.bf16.mxu0 0
        %2504 = vmatpush1.bf16.msra.mxu0 0
        %2505 = vmatprep.subr.bf16.mxu0 0
        %2506 = vmatpush1.bf16.msra.mxu0 0
        %2507 = vmatprep.subr.bf16.mxu0 0
        %2508 = vmatpush1.bf16.msra.mxu0 0
        %2509 = vmatprep.subr.bf16.mxu0 0
        %2510 = vmatpush1.bf16.msra.mxu0 0
        %2511 = vmatprep.subr.bf16.mxu0 0
        %2512 = vmatpush1.bf16.msra.mxu0 0
        %2513 = vmatprep.subr.bf16.mxu0 0
        %2514 = vmatpush1.bf16.msra.mxu0 0
        %2515 = vmatprep.subr.bf16.mxu0 0
        %2516 = vmatpush1.bf16.msra.mxu0 0
        %2517 = vmatprep.mubr.bf16.mxu0 0
        %2518 = vmatmul.mubr.bf16.gmra.mrb[0].mxu0 %v2379
        %v2519 = vpop.f32.mrb[0].mxu0
        %v2520 = vadd.f32 %v2427, %v2519
        %v2521 = vpop.f32.mrb[0].mxu0
        %v2522 = vadd.f32 %v2429, %v2521
        %v2523 = vpop.f32.mrb[0].mxu0
        %v2524 = vadd.f32 %v2431, %v2523
        %v2525 = vpop.f32.mrb[0].mxu0
        %v2526 = vadd.f32 %v2433, %v2525
        %2527 = vmatprep.mubr.bf16.mxu0 0
        %2528 = vmatmul.mubr.bf16.gmra.mrb[0].mxu0 %v2381
        %v2529 = vpop.f32.mrb[0].mxu0
        %v2530 = vadd.f32 %v2437, %v2529
        %v2531 = vpop.f32.mrb[0].mxu0
        %v2532 = vadd.f32 %v2439, %v2531
        %v2533 = vpop.f32.mrb[0].mxu0
        %v2534 = vadd.f32 %v2441, %v2533
        %v2535 = vpop.f32.mrb[0].mxu0
        %v2536 = vadd.f32 %v2443, %v2535
        %2537 = vmatprep.mubr.bf16.mxu0 0
        %2538 = vmatmul.mubr.bf16.gmra.mrb[0].mxu0 %v2383
        %v2539 = vpop.f32.mrb[0].mxu0
        %v2540 = vadd.f32 %v2447, %v2539
        %v2541 = vpop.f32.mrb[0].mxu0
        %v2542 = vadd.f32 %v2449, %v2541
        %v2543 = vpop.f32.mrb[0].mxu0
        %v2544 = vadd.f32 %v2451, %v2543
        %v2545 = vpop.f32.mrb[0].mxu0
        %v2546 = vadd.f32 %v2453, %v2545
        %2547 = vmatprep.mubr.bf16.mxu0 0
        %2548 = vmatmul.mubr.bf16.gmra.mrb[0].mxu0 %v2385
        %v2549 = vpop.f32.mrb[0].mxu0
        %v2550 = vadd.f32 %v2457, %v2549
        %v2551 = vpop.f32.mrb[0].mxu0
        %v2552 = vadd.f32 %v2459, %v2551
        %v2553 = vpop.f32.mrb[0].mxu0
        %v2554 = vadd.f32 %v2461, %v2553
        %v2555 = vpop.f32.mrb[0].mxu0
        %v2556 = vadd.f32 %v2463, %v2555
        %2557 = vmatprep.mubr.bf16.mxu0 0
        %2558 = vmatmul.mubr.bf16.gmra.mrb[0].mxu0 %v2387
        %v2559 = vpop.f32.mrb[0].mxu0
        %v2560 = vadd.f32 %v2467, %v2559
        %v2561 = vpop.f32.mrb[0].mxu0
        %v2562 = vadd.f32 %v2469, %v2561
        %v2563 = vpop.f32.mrb[0].mxu0
        %v2564 = vadd.f32 %v2471, %v2563
        %v2565 = vpop.f32.mrb[0].mxu0
        %v2566 = vadd.f32 %v2473, %v2565
        %2567 = vmatprep.mubr.bf16.mxu0 0
        %2568 = vmatmul.mubr.bf16.gmra.mrb[0].mxu0 %v2390
        %v2569 = vpop.f32.mrb[0].mxu0
        %v2570 = vadd.f32 %v2477, %v2569
        %v2571 = vpop.f32.mrb[0].mxu0
        %v2572 = vadd.f32 %v2479, %v2571
        %v2573 = vpop.f32.mrb[0].mxu0
        %v2574 = vadd.f32 %v2481, %v2573
        %v2575 = vpop.f32.mrb[0].mxu0
        %v2576 = vadd.f32 %v2483, %v2575
        %2577 = vdwg.mxu0
        %2578 = vmatprep.subr.bf16.mxu0 %v2166
        %2579 = vmatpush1.bf16.msra.mxu0 %v2165
        %2580 = vmatprep.subr.bf16.mxu0 %v2172
        %2581 = vmatpush1.bf16.msra.mxu0 %v2171
        %2582 = vmatprep.subr.bf16.mxu0 %v2178
        %2583 = vmatpush1.bf16.msra.mxu0 %v2177
        %2584 = vmatprep.subr.bf16.mxu0 %v2184
        %2585 = vmatpush1.bf16.msra.mxu0 %v2183
        %2586 = vmatprep.subr.bf16.mxu0 %v2190
        %2587 = vmatpush1.bf16.msra.mxu0 %v2189
        %2588 = vmatprep.subr.bf16.mxu0 %v2196
        %2589 = vmatpush1.bf16.msra.mxu0 %v2195
        %2590 = vmatprep.subr.bf16.mxu0 %v2202
        %2591 = vmatpush1.bf16.msra.mxu0 %v2201
        %2592 = vmatprep.subr.bf16.mxu0 %v2208
        %2593 = vmatpush1.bf16.msra.mxu0 %v2207
        %2594 = vmatprep.subr.bf16.mxu0 %v2214
        %2595 = vmatpush1.bf16.msra.mxu0 %v2213
        %2596 = vmatprep.subr.bf16.mxu0 %v2220
        %2597 = vmatpush1.bf16.msra.mxu0 %v2219
        %2598 = vmatprep.subr.bf16.mxu0 %v2226
        %2599 = vmatpush1.bf16.msra.mxu0 %v2225
        %2600 = vmatprep.subr.bf16.mxu0 %v2232
        %2601 = vmatpush1.bf16.msra.mxu0 %v2231
        %2602 = vmatprep.subr.bf16.mxu0 %v2238
        %2603 = vmatpush1.bf16.msra.mxu0 %v2237
        %2604 = vmatprep.subr.bf16.mxu0 %v2244
        %2605 = vmatpush1.bf16.msra.mxu0 %v2243
        %2606 = vmatprep.subr.bf16.mxu0 %v2250
        %2607 = vmatpush1.bf16.msra.mxu0 %v2249
        %2608 = vmatprep.subr.bf16.mxu0 %v2256
        %2609 = vmatpush1.bf16.msra.mxu0 %v2255
        %2610 = vmatprep.mubr.bf16.mxu0 %v531
        %2611 = vmatmul.mubr.bf16.gmra.mrb[0].mxu0 %v530
        %v2612 = vpop.f32.mrb[0].mxu0
        %v2613 = vadd.f32 %v1575, %v2612
        %v2614 = vpop.f32.mrb[0].mxu0
        %v2615 = vadd.f32 %v1577, %v2614
        %v2616 = vpop.f32.mrb[0].mxu0
        %v2617 = vadd.f32 %v1579, %v2616
        %v2618 = vpop.f32.mrb[0].mxu0
        %v2619 = vadd.f32 %v1581, %v2618
        %2620 = vmatprep.mubr.bf16.mxu0 %v534
        %2621 = vmatmul.mubr.bf16.gmra.mrb[0].mxu0 %v533
        %v2622 = vpop.f32.mrb[0].mxu0
        %v2623 = vadd.f32 %v1585, %v2622
        %v2624 = vpop.f32.mrb[0].mxu0
        %v2625 = vadd.f32 %v1587, %v2624
        %v2626 = vpop.f32.mrb[0].mxu0
        %v2627 = vadd.f32 %v1589, %v2626
        %v2628 = vpop.f32.mrb[0].mxu0
        %v2629 = vadd.f32 %v1591, %v2628
        %2630 = vmatprep.mubr.bf16.mxu0 %v537
        %2631 = vmatmul.mubr.bf16.gmra.mrb[0].mxu0 %v536
        %v2632 = vpop.f32.mrb[0].mxu0
        %v2633 = vadd.f32 %v1595, %v2632
        %v2634 = vpop.f32.mrb[0].mxu0
        %v2635 = vadd.f32 %v1597, %v2634
        %v2636 = vpop.f32.mrb[0].mxu0
        %v2637 = vadd.f32 %v1599, %v2636
        %v2638 = vpop.f32.mrb[0].mxu0
        %v2639 = vadd.f32 %v1601, %v2638
        %2640 = vmatprep.mubr.bf16.mxu0 %v540
        %2641 = vmatmul.mubr.bf16.gmra.mrb[0].mxu0 %v539
        %v2642 = vpop.f32.mrb[0].mxu0
        %v2643 = vadd.f32 %v1605, %v2642
        %v2644 = vpop.f32.mrb[0].mxu0
        %v2645 = vadd.f32 %v1607, %v2644
        %v2646 = vpop.f32.mrb[0].mxu0
        %v2647 = vadd.f32 %v1609, %v2646
        %v2648 = vpop.f32.mrb[0].mxu0
        %v2649 = vadd.f32 %v1611, %v2648
        %2650 = vmatprep.mubr.bf16.mxu0 %v543
        %2651 = vmatmul.mubr.bf16.gmra.mrb[0].mxu0 %v542
        %v2652 = vpop.f32.mrb[0].mxu0
        %v2653 = vadd.f32 %v1615, %v2652
        %v2654 = vpop.f32.mrb[0].mxu0
        %v2655 = vadd.f32 %v1617, %v2654
        %v2656 = vpop.f32.mrb[0].mxu0
        %v2657 = vadd.f32 %v1619, %v2656
        %v2658 = vpop.f32.mrb[0].mxu0
        %v2659 = vadd.f32 %v1621, %v2658
        %2660 = vmatprep.mubr.bf16.mxu0 %v1825
        %2661 = vmatmul.mubr.bf16.gmra.mrb[0].mxu0 %v1824
        %v2662 = vpop.f32.mrb[0].mxu0
        %v2663 = vadd.f32 %v1625, %v2662
        %v2664 = vpop.f32.mrb[0].mxu0
        %v2665 = vadd.f32 %v1627, %v2664
        %v2666 = vpop.f32.mrb[0].mxu0
        %v2667 = vadd.f32 %v1629, %v2666
        %v2668 = vpop.f32.mrb[0].mxu0
        %v2669 = vadd.f32 %v1631, %v2668
        %2670 = vdwg.mxu0
        %2671 = vmatprep.subr.bf16.mxu0 %v2262
        %2672 = vmatpush1.bf16.msra.mxu0 %v2261
        %2673 = vmatprep.subr.bf16.mxu0 %v2268
        %2674 = vmatpush1.bf16.msra.mxu0 %v2267
        %2675 = vmatprep.subr.bf16.mxu0 0
        %2676 = vmatpush1.bf16.msra.mxu0 0
        %2677 = vmatprep.subr.bf16.mxu0 0
        %2678 = vmatpush1.bf16.msra.mxu0 0
        %2679 = vmatprep.subr.bf16.mxu0 0
        %2680 = vmatpush1.bf16.msra.mxu0 0
        %2681 = vmatprep.subr.bf16.mxu0 0
        %2682 = vmatpush1.bf16.msra.mxu0 0
        %2683 = vmatprep.subr.bf16.mxu0 0
        %2684 = vmatpush1.bf16.msra.mxu0 0
        %2685 = vmatprep.subr.bf16.mxu0 0
        %2686 = vmatpush1.bf16.msra.mxu0 0
        %2687 = vmatprep.subr.bf16.mxu0 0
        %2688 = vmatpush1.bf16.msra.mxu0 0
        %2689 = vmatprep.subr.bf16.mxu0 0
        %2690 = vmatpush1.bf16.msra.mxu0 0
        %2691 = vmatprep.subr.bf16.mxu0 0
        %2692 = vmatpush1.bf16.msra.mxu0 0
        %2693 = vmatprep.subr.bf16.mxu0 0
        %2694 = vmatpush1.bf16.msra.mxu0 0
        %2695 = vmatprep.subr.bf16.mxu0 0
        %2696 = vmatpush1.bf16.msra.mxu0 0
        %2697 = vmatprep.subr.bf16.mxu0 0
        %2698 = vmatpush1.bf16.msra.mxu0 0
        %2699 = vmatprep.subr.bf16.mxu0 0
        %2700 = vmatpush1.bf16.msra.mxu0 0
        %2701 = vmatprep.subr.bf16.mxu0 0
        %2702 = vmatpush1.bf16.msra.mxu0 0
        %2703 = vmatprep.mubr.bf16.mxu0 0
        %2704 = vmatmul.mubr.bf16.gmra.mrb[0].mxu0 %v2379
        %v2705 = vpop.f32.mrb[0].mxu0
        %v2706 = vadd.f32 %v2613, %v2705
        %v2707 = vpop.f32.mrb[0].mxu0
        %v2708 = vadd.f32 %v2615, %v2707
        %v2709 = vpop.f32.mrb[0].mxu0
        %v2710 = vadd.f32 %v2617, %v2709
        %v2711 = vpop.f32.mrb[0].mxu0
        %v2712 = vadd.f32 %v2619, %v2711
        %2713 = vmatprep.mubr.bf16.mxu0 0
        %2714 = vmatmul.mubr.bf16.gmra.mrb[0].mxu0 %v2381
        %v2715 = vpop.f32.mrb[0].mxu0
        %v2716 = vadd.f32 %v2623, %v2715
        %v2717 = vpop.f32.mrb[0].mxu0
        %v2718 = vadd.f32 %v2625, %v2717
        %v2719 = vpop.f32.mrb[0].mxu0
        %v2720 = vadd.f32 %v2627, %v2719
        %v2721 = vpop.f32.mrb[0].mxu0
        %v2722 = vadd.f32 %v2629, %v2721
        %2723 = vmatprep.mubr.bf16.mxu0 0
        %2724 = vmatmul.mubr.bf16.gmra.mrb[0].mxu0 %v2383
        %v2725 = vpop.f32.mrb[0].mxu0
        %v2726 = vadd.f32 %v2633, %v2725
        %v2727 = vpop.f32.mrb[0].mxu0
        %v2728 = vadd.f32 %v2635, %v2727
        %v2729 = vpop.f32.mrb[0].mxu0
        %v2730 = vadd.f32 %v2637, %v2729
        %v2731 = vpop.f32.mrb[0].mxu0
        %v2732 = vadd.f32 %v2639, %v2731
        %2733 = vmatprep.mubr.bf16.mxu0 0
        %2734 = vmatmul.mubr.bf16.gmra.mrb[0].mxu0 %v2385
        %v2735 = vpop.f32.mrb[0].mxu0
        %v2736 = vadd.f32 %v2643, %v2735
        %v2737 = vpop.f32.mrb[0].mxu0
        %v2738 = vadd.f32 %v2645, %v2737
        %v2739 = vpop.f32.mrb[0].mxu0
        %v2740 = vadd.f32 %v2647, %v2739
        %v2741 = vpop.f32.mrb[0].mxu0
        %v2742 = vadd.f32 %v2649, %v2741
        %2743 = vmatprep.mubr.bf16.mxu0 0
        %2744 = vmatmul.mubr.bf16.gmra.mrb[0].mxu0 %v2387
        %v2745 = vpop.f32.mrb[0].mxu0
        %v2746 = vadd.f32 %v2653, %v2745
        %v2747 = vpop.f32.mrb[0].mxu0
        %v2748 = vadd.f32 %v2655, %v2747
        %v2749 = vpop.f32.mrb[0].mxu0
        %v2750 = vadd.f32 %v2657, %v2749
        %v2751 = vpop.f32.mrb[0].mxu0
        %v2752 = vadd.f32 %v2659, %v2751
        %2753 = vmatprep.mubr.bf16.mxu0 0
        %2754 = vmatmul.mubr.bf16.gmra.mrb[0].mxu0 %v2390
        %v2755 = vpop.f32.mrb[0].mxu0
        %v2756 = vadd.f32 %v2663, %v2755
        %v2757 = vpop.f32.mrb[0].mxu0
        %v2758 = vadd.f32 %v2665, %v2757
        %v2759 = vpop.f32.mrb[0].mxu0
        %v2760 = vadd.f32 %v2667, %v2759
        %v2761 = vpop.f32.mrb[0].mxu0
        %v2762 = vadd.f32 %v2669, %v2761
        %2763 = vdwg.mxu0
        %2764 = vmatprep.subr.bf16.mxu0 %v2168
        %2765 = vmatpush1.bf16.msra.mxu0 %v2167
        %2766 = vmatprep.subr.bf16.mxu0 %v2174
        %2767 = vmatpush1.bf16.msra.mxu0 %v2173
        %2768 = vmatprep.subr.bf16.mxu0 %v2180
        %2769 = vmatpush1.bf16.msra.mxu0 %v2179
        %2770 = vmatprep.subr.bf16.mxu0 %v2186
        %2771 = vmatpush1.bf16.msra.mxu0 %v2185
        %2772 = vmatprep.subr.bf16.mxu0 %v2192
        %2773 = vmatpush1.bf16.msra.mxu0 %v2191
        %2774 = vmatprep.subr.bf16.mxu0 %v2198
        %2775 = vmatpush1.bf16.msra.mxu0 %v2197
        %2776 = vmatprep.subr.bf16.mxu0 %v2204
        %2777 = vmatpush1.bf16.msra.mxu0 %v2203
        %2778 = vmatprep.subr.bf16.mxu0 %v2210
        %2779 = vmatpush1.bf16.msra.mxu0 %v2209
        %2780 = vmatprep.subr.bf16.mxu0 %v2216
        %2781 = vmatpush1.bf16.msra.mxu0 %v2215
        %2782 = vmatprep.subr.bf16.mxu0 %v2222
        %2783 = vmatpush1.bf16.msra.mxu0 %v2221
        %2784 = vmatprep.subr.bf16.mxu0 %v2228
        %2785 = vmatpush1.bf16.msra.mxu0 %v2227
        %2786 = vmatprep.subr.bf16.mxu0 %v2234
        %2787 = vmatpush1.bf16.msra.mxu0 %v2233
        %2788 = vmatprep.subr.bf16.mxu0 %v2240
        %2789 = vmatpush1.bf16.msra.mxu0 %v2239
        %2790 = vmatprep.subr.bf16.mxu0 %v2246
        %2791 = vmatpush1.bf16.msra.mxu0 %v2245
        %2792 = vmatprep.subr.bf16.mxu0 %v2252
        %2793 = vmatpush1.bf16.msra.mxu0 %v2251
        %2794 = vmatprep.subr.bf16.mxu0 %v2258
        %2795 = vmatpush1.bf16.msra.mxu0 %v2257
        %2796 = vmatprep.mubr.bf16.mxu0 %v531
        %2797 = vmatmul.mubr.bf16.gmra.mrb[0].mxu0 %v530
        %v2798 = vpop.f32.mrb[0].mxu0
        %v2799 = vadd.f32 %v1761, %v2798
        %v2800 = vpop.f32.mrb[0].mxu0
        %v2801 = vadd.f32 %v1763, %v2800
        %v2802 = vpop.f32.mrb[0].mxu0
        %v2803 = vadd.f32 %v1765, %v2802
        %v2804 = vpop.f32.mrb[0].mxu0
        %v2805 = vadd.f32 %v1767, %v2804
        %2806 = vmatprep.mubr.bf16.mxu0 %v534
        %2807 = vmatmul.mubr.bf16.gmra.mrb[0].mxu0 %v533
        %v2808 = vpop.f32.mrb[0].mxu0
        %v2809 = vadd.f32 %v1771, %v2808
        %v2810 = vpop.f32.mrb[0].mxu0
        %v2811 = vadd.f32 %v1773, %v2810
        %v2812 = vpop.f32.mrb[0].mxu0
        %v2813 = vadd.f32 %v1775, %v2812
        %v2814 = vpop.f32.mrb[0].mxu0
        %v2815 = vadd.f32 %v1777, %v2814
        %2816 = vmatprep.mubr.bf16.mxu0 %v537
        %2817 = vmatmul.mubr.bf16.gmra.mrb[0].mxu0 %v536
        %v2818 = vpop.f32.mrb[0].mxu0
        %v2819 = vadd.f32 %v1781, %v2818
        %v2820 = vpop.f32.mrb[0].mxu0
        %v2821 = vadd.f32 %v1783, %v2820
        %v2822 = vpop.f32.mrb[0].mxu0
        %v2823 = vadd.f32 %v1785, %v2822
        %v2824 = vpop.f32.mrb[0].mxu0
        %v2825 = vadd.f32 %v1787, %v2824
        %2826 = vmatprep.mubr.bf16.mxu0 %v540
        %2827 = vmatmul.mubr.bf16.gmra.mrb[0].mxu0 %v539
        %v2828 = vpop.f32.mrb[0].mxu0
        %v2829 = vadd.f32 %v1791, %v2828
        %v2830 = vpop.f32.mrb[0].mxu0
        %v2831 = vadd.f32 %v1793, %v2830
        %v2832 = vpop.f32.mrb[0].mxu0
        %v2833 = vadd.f32 %v1795, %v2832
        %v2834 = vpop.f32.mrb[0].mxu0
        %v2835 = vadd.f32 %v1797, %v2834
        %2836 = vmatprep.mubr.bf16.mxu0 %v543
        %2837 = vmatmul.mubr.bf16.gmra.mrb[0].mxu0 %v542
        %v2838 = vpop.f32.mrb[0].mxu0
        %v2839 = vadd.f32 %v1801, %v2838
        %v2840 = vpop.f32.mrb[0].mxu0
        %v2841 = vadd.f32 %v1803, %v2840
        %v2842 = vpop.f32.mrb[0].mxu0
        %v2843 = vadd.f32 %v1805, %v2842
        %v2844 = vpop.f32.mrb[0].mxu0
        %v2845 = vadd.f32 %v1807, %v2844
        %2846 = vmatprep.mubr.bf16.mxu0 %v1825
        %2847 = vmatmul.mubr.bf16.gmra.mrb[0].mxu0 %v1824
        %v2848 = vpop.f32.mrb[0].mxu0
        %v2849 = vadd.f32 %v1811, %v2848
        %v2850 = vpop.f32.mrb[0].mxu0
        %v2851 = vadd.f32 %v1813, %v2850
        %v2852 = vpop.f32.mrb[0].mxu0
        %v2853 = vadd.f32 %v1815, %v2852
        %v2854 = vpop.f32.mrb[0].mxu0
        %v2855 = vadd.f32 %v1817, %v2854
        %2856 = vdwg.mxu0
        %2857 = vmatprep.subr.bf16.mxu0 %v2264
        %2858 = vmatpush1.bf16.msra.mxu0 %v2263
        %2859 = vmatprep.subr.bf16.mxu0 %v2270
        %2860 = vmatpush1.bf16.msra.mxu0 %v2269
        %2861 = vmatprep.subr.bf16.mxu0 0
        %2862 = vmatpush1.bf16.msra.mxu0 0
        %2863 = vmatprep.subr.bf16.mxu0 0
        %2864 = vmatpush1.bf16.msra.mxu0 0
        %2865 = vmatprep.subr.bf16.mxu0 0
        %2866 = vmatpush1.bf16.msra.mxu0 0
        %2867 = vmatprep.subr.bf16.mxu0 0
        %2868 = vmatpush1.bf16.msra.mxu0 0
        %2869 = vmatprep.subr.bf16.mxu0 0
        %2870 = vmatpush1.bf16.msra.mxu0 0
        %2871 = vmatprep.subr.bf16.mxu0 0
        %2872 = vmatpush1.bf16.msra.mxu0 0
        %2873 = vmatprep.subr.bf16.mxu0 0
        %2874 = vmatpush1.bf16.msra.mxu0 0
        %2875 = vmatprep.subr.bf16.mxu0 0
        %2876 = vmatpush1.bf16.msra.mxu0 0
        %2877 = vmatprep.subr.bf16.mxu0 0
        %2878 = vmatpush1.bf16.msra.mxu0 0
        %2879 = vmatprep.subr.bf16.mxu0 0
        %2880 = vmatpush1.bf16.msra.mxu0 0
        %2881 = vmatprep.subr.bf16.mxu0 0
        %2882 = vmatpush1.bf16.msra.mxu0 0
        %2883 = vmatprep.subr.bf16.mxu0 0
        %2884 = vmatpush1.bf16.msra.mxu0 0
        %2885 = vmatprep.subr.bf16.mxu0 0
        %2886 = vmatpush1.bf16.msra.mxu0 0
        %2887 = vmatprep.subr.bf16.mxu0 0
        %2888 = vmatpush1.bf16.msra.mxu0 0
        %2889 = vmatprep.mubr.bf16.mxu0 0
        %2890 = vmatmul.mubr.bf16.gmra.mrb[0].mxu0 %v2379
        %v2891 = vpop.f32.mrb[0].mxu0
        %v2892 = vadd.f32 %v2799, %v2891
        %v2893 = vpop.f32.mrb[0].mxu0
        %v2894 = vadd.f32 %v2801, %v2893
        %v2895 = vpop.f32.mrb[0].mxu0
        %v2896 = vadd.f32 %v2803, %v2895
        %v2897 = vpop.f32.mrb[0].mxu0
        %v2898 = vadd.f32 %v2805, %v2897
        %2899 = vmatprep.mubr.bf16.mxu0 0
        %2900 = vmatmul.mubr.bf16.gmra.mrb[0].mxu0 %v2381
        %v2901 = vpop.f32.mrb[0].mxu0
        %v2902 = vadd.f32 %v2809, %v2901
        %v2903 = vpop.f32.mrb[0].mxu0
        %v2904 = vadd.f32 %v2811, %v2903
        %v2905 = vpop.f32.mrb[0].mxu0
        %v2906 = vadd.f32 %v2813, %v2905
        %v2907 = vpop.f32.mrb[0].mxu0
        %v2908 = vadd.f32 %v2815, %v2907
        %2909 = vmatprep.mubr.bf16.mxu0 0
        %2910 = vmatmul.mubr.bf16.gmra.mrb[0].mxu0 %v2383
        %v2911 = vpop.f32.mrb[0].mxu0
        %v2912 = vadd.f32 %v2819, %v2911
        %v2913 = vpop.f32.mrb[0].mxu0
        %v2914 = vadd.f32 %v2821, %v2913
        %v2915 = vpop.f32.mrb[0].mxu0
        %v2916 = vadd.f32 %v2823, %v2915
        %v2917 = vpop.f32.mrb[0].mxu0
        %v2918 = vadd.f32 %v2825, %v2917
        %2919 = vmatprep.mubr.bf16.mxu0 0
        %2920 = vmatmul.mubr.bf16.gmra.mrb[0].mxu0 %v2385
        %v2921 = vpop.f32.mrb[0].mxu0
        %v2922 = vadd.f32 %v2829, %v2921
        %v2923 = vpop.f32.mrb[0].mxu0
        %v2924 = vadd.f32 %v2831, %v2923
        %v2925 = vpop.f32.mrb[0].mxu0
        %v2926 = vadd.f32 %v2833, %v2925
        %v2927 = vpop.f32.mrb[0].mxu0
        %v2928 = vadd.f32 %v2835, %v2927
        %2929 = vmatprep.mubr.bf16.mxu0 0
        %2930 = vmatmul.mubr.bf16.gmra.mrb[0].mxu0 %v2387
        %v2931 = vpop.f32.mrb[0].mxu0
        %v2932 = vadd.f32 %v2839, %v2931
        %v2933 = vpop.f32.mrb[0].mxu0
        %v2934 = vadd.f32 %v2841, %v2933
        %v2935 = vpop.f32.mrb[0].mxu0
        %v2936 = vadd.f32 %v2843, %v2935
        %v2937 = vpop.f32.mrb[0].mxu0
        %v2938 = vadd.f32 %v2845, %v2937
        %2939 = vmatprep.mubr.bf16.mxu0 0
        %2940 = vmatmul.mubr.bf16.gmra.mrb[0].mxu0 %v2390
        %v2941 = vpop.f32.mrb[0].mxu0
        %v2942 = vadd.f32 %v2849, %v2941
        %v2943 = vpop.f32.mrb[0].mxu0
        %v2944 = vadd.f32 %v2851, %v2943
        %v2945 = vpop.f32.mrb[0].mxu0
        %v2946 = vadd.f32 %v2853, %v2945
        %v2947 = vpop.f32.mrb[0].mxu0
        %v2948 = vadd.f32 %v2855, %v2947
        %2949 = vdwg.mxu0
        %v2950 = vld [vmem:[%s220] sm:$0xee]
        %v2951 = vld [vmem:[%s220 + $0x8] sm:$0xe]
        %s2952 = scalar_lea.vmem [#allocation2], 1728
        %v2953 = vld [vmem:[%s2952] sm:$0xff]
        %v2954 = vld [vmem:[%s2952 + $0x8] sm:$0xff]
        %v2955 = vld [vmem:[%s2952 + $0x10] sm:$0xff]
        %v2956 = vld [vmem:[%s2952 + $0x18] sm:$0xff]
        %v2957 = vld [vmem:[%s2952 + $0x20] sm:$0xff]
        %v2958 = vld [vmem:[%s2952 + $0x28] sm:$0xff]
        %v2959 = vld [vmem:[%s2952 + $0x30] sm:$0xff]
        %v2960 = vld [vmem:[%s2952 + $0x38] sm:$0xff]
        %v2961 = vld [vmem:[%s2952 + $0x40] sm:$0xff]
        %v2962 = vld [vmem:[%s2952 + $0x48] sm:$0xff]
        %v2963 = vld [vmem:[%s2952 + $0x50] sm:$0xff]
        %v2964 = vld [vmem:[%s2952 + $0x58] sm:$0xff]
        %v2965 = vld [vmem:[%s2952 + $0x60] sm:$0xff]
        %v2966 = vld [vmem:[%s2952 + $0x68] sm:$0xff]
        %v2967 = vld [vmem:[%s2952 + $0x70] sm:$0xff]
        %v2968 = vld [vmem:[%s2952 + $0x78] sm:$0xff]
        %v2969 = vld [vmem:[%s2952 + $0x80] sm:$0xff]
        %v2970 = vld [vmem:[%s2952 + $0x88] sm:$0xff]
        %v2971 = vld [vmem:[%s2952 + $0x90] sm:$0xff]
        %v2972 = vld [vmem:[%s2952 + $0x98] sm:$0xff]
        %v2973 = vld [vmem:[%s2952 + $0xa0] sm:$0xff]
        %v2974 = vld [vmem:[%s2952 + $0xa8] sm:$0xff]
        %v2975 = vld [vmem:[%s2952 + $0xb0] sm:$0xff]
        %v2976 = vld [vmem:[%s2952 + $0xb8] sm:$0xff]
        %v2977 = vld [vmem:[%s2952 + $0xc0] sm:$0xff]
        %v2978 = vld [vmem:[%s2952 + $0xc8] sm:$0xff]
        %v2979 = vld [vmem:[%s2952 + $0xd0] sm:$0xff]
        %v2980 = vld [vmem:[%s2952 + $0xd8] sm:$0xff]
        %v2981 = vld [vmem:[%s2952 + $0xe0] sm:$0xff]
        %v2982 = vld [vmem:[%s2952 + $0xe8] sm:$0xff]
        %v2983 = vld [vmem:[%s2952 + $0xf0] sm:$0xff]
        %v2984 = vld [vmem:[%s2952 + $0xf8] sm:$0xff]
        %v2985 = vld [vmem:[%s2952 + $0x100] sm:$0xff]
        %v2986 = vld [vmem:[%s2952 + $0x108] sm:$0xff]
        %v2987 = vld [vmem:[%s2952 + $0x110] sm:$0xff]
        %v2988 = vld [vmem:[%s2952 + $0x118] sm:$0xff]
        %v2989 = vld [vmem:[%s2952 + $0x120] sm:$0xff]
        %v2990 = vld [vmem:[%s2952 + $0x128] sm:$0xff]
        %v2991 = vld [vmem:[%s2952 + $0x130] sm:$0xff]
        %v2992 = vld [vmem:[%s2952 + $0x138] sm:$0xff]
        %v2993 = vld [vmem:[%s2952 + $0x140] sm:$0xff]
        %v2994 = vld [vmem:[%s2952 + $0x148] sm:$0xff]
        %v2995 = vld [vmem:[%s2952 + $0x150] sm:$0xff]
        %v2996 = vld [vmem:[%s2952 + $0x158] sm:$0xff]
        %v2997 = vld [vmem:[%s2952 + $0x160] sm:$0xff]
        %v2998 = vld [vmem:[%s2952 + $0x168] sm:$0xff]
        %v2999 = vld [vmem:[%s2952 + $0x170] sm:$0xff]
        %v3000 = vld [vmem:[%s2952 + $0x178] sm:$0xff]
        %v3001 = vld [vmem:[%s2952 + $0x180] sm:$0xff]
        %v3002 = vld [vmem:[%s2952 + $0x188] sm:$0xff]
        %v3003 = vld [vmem:[%s2952 + $0x190] sm:$0xff]
        %v3004 = vld [vmem:[%s2952 + $0x198] sm:$0xff]
        %v3005 = vld [vmem:[%s2952 + $0x1a0] sm:$0xff]
        %v3006 = vld [vmem:[%s2952 + $0x1a8] sm:$0xff]
        %v3007 = vld [vmem:[%s2952 + $0x1b0] sm:$0xff]
        %v3008 = vld [vmem:[%s2952 + $0x1b8] sm:$0xff]
        %v3009 = vld [vmem:[%s2952 + $0x1c0] sm:$0xff]
        %v3010 = vld [vmem:[%s2952 + $0x1c8] sm:$0xff]
        %v3011 = vld [vmem:[%s2952 + $0x1d0] sm:$0xff]
        %v3012 = vld [vmem:[%s2952 + $0x1d8] sm:$0xff]
        %v3013 = vld [vmem:[%s2952 + $0x1e0] sm:$0xff]
        %v3014 = vld [vmem:[%s2952 + $0x1e8] sm:$0xff]
        %v3015 = vld [vmem:[%s2952 + $0x1f0] sm:$0xff]
        %v3016 = vld [vmem:[%s2952 + $0x1f8] sm:$0xff]
        %v3017 = vld [vmem:[%s2952 + $0x200] sm:$0xff]
        %v3018 = vld [vmem:[%s2952 + $0x208] sm:$0xff]
        %v3019 = vld [vmem:[%s2952 + $0x210] sm:$0xff]
        %v3020 = vld [vmem:[%s2952 + $0x218] sm:$0xff]
        %v3021 = vld [vmem:[%s2952 + $0x220] sm:$0xff]
        %v3022 = vld [vmem:[%s2952 + $0x228] sm:$0xff]
        %v3023 = vld [vmem:[%s2952 + $0x230] sm:$0xff]
        %v3024 = vld [vmem:[%s2952 + $0x238] sm:$0xff]
        %v3025 = vld [vmem:[%s2952 + $0x240] sm:$0xff]
        %v3026 = vld [vmem:[%s2952 + $0x248] sm:$0xff]
        %v3027 = vld [vmem:[%s2952 + $0x250] sm:$0xff]
        %v3028 = vld [vmem:[%s2952 + $0x258] sm:$0xff]
        %v3029 = vld [vmem:[%s2952 + $0x260] sm:$0xff]
        %v3030 = vld [vmem:[%s2952 + $0x268] sm:$0xff]
        %v3031 = vld [vmem:[%s2952 + $0x270] sm:$0xff]
        %v3032 = vld [vmem:[%s2952 + $0x278] sm:$0xff]
        %v3033 = vld [vmem:[%s2952 + $0x280] sm:$0xff]
        %v3034 = vld [vmem:[%s2952 + $0x288] sm:$0xff]
        %v3035 = vld [vmem:[%s2952 + $0x290] sm:$0xff]
        %v3036 = vld [vmem:[%s2952 + $0x298] sm:$0xff]
        %v3037 = vld [vmem:[%s2952 + $0x2a0] sm:$0xff]
        %v3038 = vld [vmem:[%s2952 + $0x2a8] sm:$0xff]
        %v3039 = vld [vmem:[%s2952 + $0x2b0] sm:$0xff]
        %v3040 = vld [vmem:[%s2952 + $0x2b8] sm:$0xff]
        %v3041 = vld [vmem:[%s2952 + $0x2c0] sm:$0xff]
        %v3042 = vld [vmem:[%s2952 + $0x2c8] sm:$0xff]
        %v3043 = vld [vmem:[%s2952 + $0x2d0] sm:$0xff]
        %v3044 = vld [vmem:[%s2952 + $0x2d8] sm:$0xff]
        %v3045 = vld [vmem:[%s2952 + $0x2e0] sm:$0xff]
        %v3046 = vld [vmem:[%s2952 + $0x2e8] sm:$0xff]
        %v3047 = vld [vmem:[%s2952 + $0x2f0] sm:$0xff]
        %v3048 = vld [vmem:[%s2952 + $0x2f8] sm:$0xff]
        %v3049 = vld [vmem:[%s2952 + $0x300] sm:$0xff]
        %v3050 = vld [vmem:[%s2952 + $0x308] sm:$0xff]
        %v3051 = vld [vmem:[%s2952 + $0x310] sm:$0xff]
        %v3052 = vld [vmem:[%s2952 + $0x318] sm:$0xff]
        %v3053 = vld [vmem:[%s2952 + $0x320] sm:$0xff]
        %v3054 = vld [vmem:[%s2952 + $0x328] sm:$0xff]
        %v3055 = vld [vmem:[%s2952 + $0x330] sm:$0xff]
        %v3056 = vld [vmem:[%s2952 + $0x338] sm:$0xff]
        %v3057 = vld [vmem:[%s2952 + $0x340] sm:$0xff]
        %v3058 = vld [vmem:[%s2952 + $0x348] sm:$0xff]
        %v3059 = vld [vmem:[%s2952 + $0x350] sm:$0xff]
        %v3060 = vld [vmem:[%s2952 + $0x358] sm:$0xff]
        %v3063 = vunpack.c.l.b16 %v2950
        %v3064 = vunpack.c.h.b16 %v2950
        %v3065 = vunpack.c.l.b16 %v2951
        %v3066 = vpack.c.b16 %v497, %v3063
        %v3067 = vpack.c.b16 %v498, %v3064
        %v3068 = vpack.c.b16 %v499, %v3065
        %vm3069 = vcmask 1046528
        %v3070 = vrot.slane %v3066, 1
        %v3071 = vrot.slane %v533, 1
        %v3072 = vsel %vm3069, %v3070, %v3071
        %v3073 = vrot.slane %v3067, 1
        %v3074 = vrot.slane %v534, 1
        %v3075 = vsel %vm3069, %v3073, %v3074
        %v3076 = vrot.slane %v3068, 1
        %v3077 = vrot.slane %v535, 1
        %v3078 = vsel %vm3069, %v3076, %v3077
        %v3079 = vrot.slane %v536, 1
        %v3080 = vsel %vm3069, %v3071, %v3079
        %v3081 = vrot.slane %v537, 1
        %v3082 = vsel %vm3069, %v3074, %v3081
        %v3083 = vrot.slane %v538, 1
        %v3084 = vsel %vm3069, %v3077, %v3083
        %v3085 = vrot.slane %v539, 1
        %v3086 = vsel %vm3069, %v3079, %v3085
        %v3087 = vrot.slane %v540, 1
        %v3088 = vsel %vm3069, %v3081, %v3087
        %v3089 = vrot.slane %v541, 1
        %v3090 = vsel %vm3069, %v3083, %v3089
        %v3091 = vrot.slane %v542, 1
        %v3092 = vsel %vm3069, %v3085, %v3091
        %v3093 = vrot.slane %v543, 1
        %v3094 = vsel %vm3069, %v3087, %v3093
        %v3095 = vrot.slane %v544, 1
        %v3096 = vsel %vm3069, %v3089, %v3095
        %v3097 = vrot.slane %v545, 1
        %v3098 = vsel %vm3069, %v3091, %v3097
        %v3099 = vrot.slane %v546, 1
        %v3100 = vsel %vm3069, %v3093, %v3099
        %v3101 = vrot.slane %v547, 1
        %v3102 = vsel %vm3069, %v3095, %v3101
        %v3223 = vunpack.c.l.b16 %v2953
        %v3224 = vunpack.c.h.b16 %v2953
        %v3225 = vunpack.c.l.b16 %v2954
        %v3226 = vunpack.c.h.b16 %v2954
        %v3227 = vunpack.c.l.b16 %v2955
        %v3228 = vunpack.c.h.b16 %v2955
        %v3229 = vunpack.c.l.b16 %v2956
        %v3230 = vunpack.c.h.b16 %v2956
        %v3231 = vunpack.c.l.b16 %v2957
        %v3232 = vunpack.c.h.b16 %v2957
        %v3233 = vunpack.c.l.b16 %v2958
        %v3234 = vunpack.c.h.b16 %v2958
        %v3235 = vunpack.c.l.b16 %v2959
        %v3236 = vunpack.c.h.b16 %v2959
        %v3237 = vunpack.c.l.b16 %v2960
        %v3238 = vunpack.c.h.b16 %v2960
        %v3239 = vunpack.c.l.b16 %v2961
        %v3240 = vunpack.c.h.b16 %v2961
        %v3241 = vunpack.c.l.b16 %v2962
        %v3242 = vunpack.c.h.b16 %v2962
        %v3243 = vunpack.c.l.b16 %v2963
        %v3244 = vunpack.c.h.b16 %v2963
        %v3245 = vunpack.c.l.b16 %v2964
        %v3246 = vunpack.c.h.b16 %v2964
        %v3247 = vunpack.c.l.b16 %v2965
        %v3248 = vunpack.c.h.b16 %v2965
        %v3249 = vunpack.c.l.b16 %v2966
        %v3250 = vunpack.c.h.b16 %v2966
        %v3251 = vunpack.c.l.b16 %v2967
        %v3252 = vunpack.c.h.b16 %v2967
        %v3253 = vunpack.c.l.b16 %v2968
        %v3254 = vunpack.c.h.b16 %v2968
        %v3255 = vunpack.c.l.b16 %v2969
        %v3256 = vunpack.c.h.b16 %v2969
        %v3257 = vunpack.c.l.b16 %v2970
        %v3258 = vunpack.c.h.b16 %v2970
        %v3259 = vunpack.c.l.b16 %v2971
        %v3260 = vunpack.c.h.b16 %v2971
        %v3261 = vunpack.c.l.b16 %v2972
        %v3262 = vunpack.c.h.b16 %v2972
        %v3263 = vunpack.c.l.b16 %v2973
        %v3264 = vunpack.c.h.b16 %v2973
        %v3265 = vunpack.c.l.b16 %v2974
        %v3266 = vunpack.c.h.b16 %v2974
        %v3267 = vunpack.c.l.b16 %v2975
        %v3268 = vunpack.c.h.b16 %v2975
        %v3269 = vunpack.c.l.b16 %v2976
        %v3270 = vunpack.c.h.b16 %v2976
        %v3271 = vunpack.c.l.b16 %v2977
        %v3272 = vunpack.c.h.b16 %v2977
        %v3273 = vunpack.c.l.b16 %v2978
        %v3274 = vunpack.c.h.b16 %v2978
        %v3275 = vunpack.c.l.b16 %v2979
        %v3276 = vunpack.c.h.b16 %v2979
        %v3277 = vunpack.c.l.b16 %v2980
        %v3278 = vunpack.c.h.b16 %v2980
        %v3279 = vunpack.c.l.b16 %v2981
        %v3280 = vunpack.c.h.b16 %v2981
        %v3281 = vunpack.c.l.b16 %v2982
        %v3282 = vunpack.c.h.b16 %v2982
        %v3283 = vunpack.c.l.b16 %v2983
        %v3284 = vunpack.c.h.b16 %v2983
        %v3285 = vunpack.c.l.b16 %v2984
        %v3286 = vunpack.c.h.b16 %v2984
        %v3287 = vunpack.c.l.b16 %v2985
        %v3288 = vunpack.c.h.b16 %v2985
        %v3289 = vunpack.c.l.b16 %v2986
        %v3290 = vunpack.c.h.b16 %v2986
        %v3291 = vunpack.c.l.b16 %v2987
        %v3292 = vunpack.c.h.b16 %v2987
        %v3293 = vunpack.c.l.b16 %v2988
        %v3294 = vunpack.c.h.b16 %v2988
        %v3295 = vunpack.c.l.b16 %v2989
        %v3296 = vunpack.c.h.b16 %v2989
        %v3297 = vunpack.c.l.b16 %v2990
        %v3298 = vunpack.c.h.b16 %v2990
        %v3299 = vunpack.c.l.b16 %v2991
        %v3300 = vunpack.c.h.b16 %v2991
        %v3301 = vunpack.c.l.b16 %v2992
        %v3302 = vunpack.c.h.b16 %v2992
        %v3303 = vunpack.c.l.b16 %v2993
        %v3304 = vunpack.c.h.b16 %v2993
        %v3305 = vunpack.c.l.b16 %v2994
        %v3306 = vunpack.c.h.b16 %v2994
        %v3307 = vunpack.c.l.b16 %v2995
        %v3308 = vunpack.c.h.b16 %v2995
        %v3309 = vunpack.c.l.b16 %v2996
        %v3310 = vunpack.c.h.b16 %v2996
        %v3311 = vunpack.c.l.b16 %v2997
        %v3312 = vunpack.c.h.b16 %v2997
        %v3313 = vunpack.c.l.b16 %v2998
        %v3314 = vunpack.c.h.b16 %v2998
        %v3315 = vunpack.c.l.b16 %v2999
        %v3316 = vunpack.c.h.b16 %v2999
        %v3317 = vunpack.c.l.b16 %v3000
        %v3318 = vunpack.c.h.b16 %v3000
        %v3319 = vunpack.c.l.b16 %v3001
        %v3320 = vunpack.c.h.b16 %v3001
        %v3321 = vunpack.c.l.b16 %v3002
        %v3322 = vunpack.c.h.b16 %v3002
        %v3323 = vunpack.c.l.b16 %v3003
        %v3324 = vunpack.c.h.b16 %v3003
        %v3325 = vunpack.c.l.b16 %v3004
        %v3326 = vunpack.c.h.b16 %v3004
        %v3327 = vunpack.c.l.b16 %v3005
        %v3328 = vunpack.c.h.b16 %v3005
        %v3329 = vunpack.c.l.b16 %v3006
        %v3330 = vunpack.c.h.b16 %v3006
        %v3331 = vunpack.c.l.b16 %v3007
        %v3332 = vunpack.c.h.b16 %v3007
        %v3333 = vunpack.c.l.b16 %v3008
        %v3334 = vunpack.c.h.b16 %v3008
        %v3335 = vunpack.c.l.b16 %v3009
        %v3336 = vunpack.c.h.b16 %v3009
        %v3337 = vunpack.c.l.b16 %v3010
        %v3338 = vunpack.c.h.b16 %v3010
        %v3339 = vunpack.c.l.b16 %v3011
        %v3340 = vunpack.c.h.b16 %v3011
        %v3341 = vunpack.c.l.b16 %v3012
        %v3342 = vunpack.c.h.b16 %v3012
        %v3343 = vunpack.c.l.b16 %v3013
        %v3344 = vunpack.c.h.b16 %v3013
        %v3345 = vunpack.c.l.b16 %v3014
        %v3346 = vunpack.c.h.b16 %v3014
        %v3347 = vunpack.c.l.b16 %v3015
        %v3348 = vunpack.c.h.b16 %v3015
        %v3349 = vunpack.c.l.b16 %v3016
        %v3350 = vunpack.c.h.b16 %v3016
        %v3351 = vunpack.c.l.b16 %v3017
        %v3352 = vunpack.c.h.b16 %v3017
        %v3353 = vunpack.c.l.b16 %v3018
        %v3354 = vunpack.c.h.b16 %v3018
        %v3355 = vunpack.c.l.b16 %v3019
        %v3356 = vunpack.c.h.b16 %v3019
        %v3357 = vunpack.c.l.b16 %v3020
        %v3358 = vunpack.c.h.b16 %v3020
        %v3359 = vunpack.c.l.b16 %v3021
        %v3360 = vunpack.c.h.b16 %v3021
        %v3361 = vunpack.c.l.b16 %v3022
        %v3362 = vunpack.c.h.b16 %v3022
        %v3363 = vunpack.c.l.b16 %v3023
        %v3364 = vunpack.c.h.b16 %v3023
        %v3365 = vunpack.c.l.b16 %v3024
        %v3366 = vunpack.c.h.b16 %v3024
        %v3367 = vunpack.c.l.b16 %v3025
        %v3368 = vunpack.c.h.b16 %v3025
        %v3369 = vunpack.c.l.b16 %v3026
        %v3370 = vunpack.c.h.b16 %v3026
        %v3371 = vunpack.c.l.b16 %v3027
        %v3372 = vunpack.c.h.b16 %v3027
        %v3373 = vunpack.c.l.b16 %v3028
        %v3374 = vunpack.c.h.b16 %v3028
        %v3375 = vunpack.c.l.b16 %v3029
        %v3376 = vunpack.c.h.b16 %v3029
        %v3377 = vunpack.c.l.b16 %v3030
        %v3378 = vunpack.c.h.b16 %v3030
        %v3379 = vunpack.c.l.b16 %v3031
        %v3380 = vunpack.c.h.b16 %v3031
        %v3381 = vunpack.c.l.b16 %v3032
        %v3382 = vunpack.c.h.b16 %v3032
        %v3383 = vunpack.c.l.b16 %v3033
        %v3384 = vunpack.c.h.b16 %v3033
        %v3385 = vunpack.c.l.b16 %v3034
        %v3386 = vunpack.c.h.b16 %v3034
        %v3387 = vunpack.c.l.b16 %v3035
        %v3388 = vunpack.c.h.b16 %v3035
        %v3389 = vunpack.c.l.b16 %v3036
        %v3390 = vunpack.c.h.b16 %v3036
        %v3391 = vunpack.c.l.b16 %v3037
        %v3392 = vunpack.c.h.b16 %v3037
        %v3393 = vunpack.c.l.b16 %v3038
        %v3394 = vunpack.c.h.b16 %v3038
        %v3395 = vunpack.c.l.b16 %v3039
        %v3396 = vunpack.c.h.b16 %v3039
        %v3397 = vunpack.c.l.b16 %v3040
        %v3398 = vunpack.c.h.b16 %v3040
        %v3399 = vunpack.c.l.b16 %v3041
        %v3400 = vunpack.c.h.b16 %v3041
        %v3401 = vunpack.c.l.b16 %v3042
        %v3402 = vunpack.c.h.b16 %v3042
        %v3403 = vunpack.c.l.b16 %v3043
        %v3404 = vunpack.c.h.b16 %v3043
        %v3405 = vunpack.c.l.b16 %v3044
        %v3406 = vunpack.c.h.b16 %v3044
        %v3407 = vunpack.c.l.b16 %v3045
        %v3408 = vunpack.c.h.b16 %v3045
        %v3409 = vunpack.c.l.b16 %v3046
        %v3410 = vunpack.c.h.b16 %v3046
        %v3411 = vunpack.c.l.b16 %v3047
        %v3412 = vunpack.c.h.b16 %v3047
        %v3413 = vunpack.c.l.b16 %v3048
        %v3414 = vunpack.c.h.b16 %v3048
        %v3415 = vunpack.c.l.b16 %v3049
        %v3416 = vunpack.c.h.b16 %v3049
        %v3417 = vunpack.c.l.b16 %v3050
        %v3418 = vunpack.c.h.b16 %v3050
        %v3419 = vunpack.c.l.b16 %v3051
        %v3420 = vunpack.c.h.b16 %v3051
        %v3421 = vunpack.c.l.b16 %v3052
        %v3422 = vunpack.c.h.b16 %v3052
        %v3423 = vunpack.c.l.b16 %v3053
        %v3424 = vunpack.c.h.b16 %v3053
        %v3425 = vunpack.c.l.b16 %v3054
        %v3426 = vunpack.c.h.b16 %v3054
        %v3427 = vunpack.c.l.b16 %v3055
        %v3428 = vunpack.c.h.b16 %v3055
        %v3429 = vunpack.c.l.b16 %v3056
        %v3430 = vunpack.c.h.b16 %v3056
        %v3431 = vunpack.c.l.b16 %v3057
        %v3432 = vunpack.c.h.b16 %v3057
        %v3433 = vunpack.c.l.b16 %v3058
        %v3434 = vunpack.c.h.b16 %v3058
        %v3435 = vunpack.c.l.b16 %v3059
        %v3436 = vunpack.c.h.b16 %v3059
        %v3437 = vunpack.c.l.b16 %v3060
        %v3438 = vunpack.c.h.b16 %v3060
        %v3439 = vpack.c.b16 %v3229, %v3223
        %v3440 = vpack.c.b16 %v3230, %v3224
        %v3441 = vpack.c.b16 %v3231, %v3225
        %v3442 = vpack.c.b16 %v3232, %v3226
        %v3443 = vpack.c.b16 %v3233, %v3227
        %v3444 = vpack.c.b16 %v3234, %v3228
        %v3445 = vpack.c.b16 %v3241, %v3235
        %v3446 = vpack.c.b16 %v3242, %v3236
        %v3447 = vpack.c.b16 %v3243, %v3237
        %v3448 = vpack.c.b16 %v3244, %v3238
        %v3449 = vpack.c.b16 %v3245, %v3239
        %v3450 = vpack.c.b16 %v3246, %v3240
        %v3451 = vpack.c.b16 %v3253, %v3247
        %v3452 = vpack.c.b16 %v3254, %v3248
        %v3453 = vpack.c.b16 %v3255, %v3249
        %v3454 = vpack.c.b16 %v3256, %v3250
        %v3455 = vpack.c.b16 %v3257, %v3251
        %v3456 = vpack.c.b16 %v3258, %v3252
        %v3457 = vpack.c.b16 %v3265, %v3259
        %v3458 = vpack.c.b16 %v3266, %v3260
        %v3459 = vpack.c.b16 %v3267, %v3261
        %v3460 = vpack.c.b16 %v3268, %v3262
        %v3461 = vpack.c.b16 %v3269, %v3263
        %v3462 = vpack.c.b16 %v3270, %v3264
        %v3463 = vpack.c.b16 %v3277, %v3271
        %v3464 = vpack.c.b16 %v3278, %v3272
        %v3465 = vpack.c.b16 %v3279, %v3273
        %v3466 = vpack.c.b16 %v3280, %v3274
        %v3467 = vpack.c.b16 %v3281, %v3275
        %v3468 = vpack.c.b16 %v3282, %v3276
        %v3469 = vpack.c.b16 %v3289, %v3283
        %v3470 = vpack.c.b16 %v3290, %v3284
        %v3471 = vpack.c.b16 %v3291, %v3285
        %v3472 = vpack.c.b16 %v3292, %v3286
        %v3473 = vpack.c.b16 %v3293, %v3287
        %v3474 = vpack.c.b16 %v3294, %v3288
        %v3475 = vpack.c.b16 %v3301, %v3295
        %v3476 = vpack.c.b16 %v3302, %v3296
        %v3477 = vpack.c.b16 %v3303, %v3297
        %v3478 = vpack.c.b16 %v3304, %v3298
        %v3479 = vpack.c.b16 %v3305, %v3299
        %v3480 = vpack.c.b16 %v3306, %v3300
        %v3481 = vpack.c.b16 %v3313, %v3307
        %v3482 = vpack.c.b16 %v3314, %v3308
        %v3483 = vpack.c.b16 %v3315, %v3309
        %v3484 = vpack.c.b16 %v3316, %v3310
        %v3485 = vpack.c.b16 %v3317, %v3311
        %v3486 = vpack.c.b16 %v3318, %v3312
        %v3487 = vpack.c.b16 %v3325, %v3319
        %v3488 = vpack.c.b16 %v3326, %v3320
        %v3489 = vpack.c.b16 %v3327, %v3321
        %v3490 = vpack.c.b16 %v3328, %v3322
        %v3491 = vpack.c.b16 %v3329, %v3323
        %v3492 = vpack.c.b16 %v3330, %v3324
        %v3493 = vpack.c.b16 %v3337, %v3331
        %v3494 = vpack.c.b16 %v3338, %v3332
        %v3495 = vpack.c.b16 %v3339, %v3333
        %v3496 = vpack.c.b16 %v3340, %v3334
        %v3497 = vpack.c.b16 %v3341, %v3335
        %v3498 = vpack.c.b16 %v3342, %v3336
        %v3499 = vpack.c.b16 %v3349, %v3343
        %v3500 = vpack.c.b16 %v3350, %v3344
        %v3501 = vpack.c.b16 %v3351, %v3345
        %v3502 = vpack.c.b16 %v3352, %v3346
        %v3503 = vpack.c.b16 %v3353, %v3347
        %v3504 = vpack.c.b16 %v3354, %v3348
        %v3505 = vpack.c.b16 %v3361, %v3355
        %v3506 = vpack.c.b16 %v3362, %v3356
        %v3507 = vpack.c.b16 %v3363, %v3357
        %v3508 = vpack.c.b16 %v3364, %v3358
        %v3509 = vpack.c.b16 %v3365, %v3359
        %v3510 = vpack.c.b16 %v3366, %v3360
        %v3511 = vpack.c.b16 %v3373, %v3367
        %v3512 = vpack.c.b16 %v3374, %v3368
        %v3513 = vpack.c.b16 %v3375, %v3369
        %v3514 = vpack.c.b16 %v3376, %v3370
        %v3515 = vpack.c.b16 %v3377, %v3371
        %v3516 = vpack.c.b16 %v3378, %v3372
        %v3517 = vpack.c.b16 %v3385, %v3379
        %v3518 = vpack.c.b16 %v3386, %v3380
        %v3519 = vpack.c.b16 %v3387, %v3381
        %v3520 = vpack.c.b16 %v3388, %v3382
        %v3521 = vpack.c.b16 %v3389, %v3383
        %v3522 = vpack.c.b16 %v3390, %v3384
        %v3523 = vpack.c.b16 %v3397, %v3391
        %v3524 = vpack.c.b16 %v3398, %v3392
        %v3525 = vpack.c.b16 %v3399, %v3393
        %v3526 = vpack.c.b16 %v3400, %v3394
        %v3527 = vpack.c.b16 %v3401, %v3395
        %v3528 = vpack.c.b16 %v3402, %v3396
        %v3529 = vpack.c.b16 %v3409, %v3403
        %v3530 = vpack.c.b16 %v3410, %v3404
        %v3531 = vpack.c.b16 %v3411, %v3405
        %v3532 = vpack.c.b16 %v3412, %v3406
        %v3533 = vpack.c.b16 %v3413, %v3407
        %v3534 = vpack.c.b16 %v3414, %v3408
        %v3535 = vpack.c.b16 %v3421, %v3415
        %v3536 = vpack.c.b16 %v3422, %v3416
        %v3537 = vpack.c.b16 %v3423, %v3417
        %v3538 = vpack.c.b16 %v3424, %v3418
        %v3539 = vpack.c.b16 %v3425, %v3419
        %v3540 = vpack.c.b16 %v3426, %v3420
        %v3541 = vpack.c.b16 %v3433, %v3427
        %v3542 = vpack.c.b16 %v3434, %v3428
        %v3543 = vpack.c.b16 %v3435, %v3429
        %v3544 = vpack.c.b16 %v3436, %v3430
        %v3545 = vpack.c.b16 %v3437, %v3431
        %v3546 = vpack.c.b16 %v3438, %v3432
        %v3656 = vsel %vm1242, %v3078, 0
        %v3659 = vsel %vm1242, %v3084, 0
        %v3662 = vsel %vm1242, %v3090, 0
        %v3665 = vsel %vm1242, %v3096, 0
        %v3668 = vsel %vm1242, %v3102, 0
        %v3671 = vsel %vm1242, %v3101, 0
        %3673 = vmatprep.subr.bf16.mxu0 %v3440
        %3674 = vmatpush1.bf16.msra.mxu0 %v3439
        %3675 = vmatprep.subr.bf16.mxu0 %v3446
        %3676 = vmatpush1.bf16.msra.mxu0 %v3445
        %3677 = vmatprep.subr.bf16.mxu0 %v3452
        %3678 = vmatpush1.bf16.msra.mxu0 %v3451
        %3679 = vmatprep.subr.bf16.mxu0 %v3458
        %3680 = vmatpush1.bf16.msra.mxu0 %v3457
        %3681 = vmatprep.subr.bf16.mxu0 %v3464
        %3682 = vmatpush1.bf16.msra.mxu0 %v3463
        %3683 = vmatprep.subr.bf16.mxu0 %v3470
        %3684 = vmatpush1.bf16.msra.mxu0 %v3469
        %3685 = vmatprep.subr.bf16.mxu0 %v3476
        %3686 = vmatpush1.bf16.msra.mxu0 %v3475
        %3687 = vmatprep.subr.bf16.mxu0 %v3482
        %3688 = vmatpush1.bf16.msra.mxu0 %v3481
        %3689 = vmatprep.subr.bf16.mxu0 %v3488
        %3690 = vmatpush1.bf16.msra.mxu0 %v3487
        %3691 = vmatprep.subr.bf16.mxu0 %v3494
        %3692 = vmatpush1.bf16.msra.mxu0 %v3493
        %3693 = vmatprep.subr.bf16.mxu0 %v3500
        %3694 = vmatpush1.bf16.msra.mxu0 %v3499
        %3695 = vmatprep.subr.bf16.mxu0 %v3506
        %3696 = vmatpush1.bf16.msra.mxu0 %v3505
        %3697 = vmatprep.subr.bf16.mxu0 %v3512
        %3698 = vmatpush1.bf16.msra.mxu0 %v3511
        %3699 = vmatprep.subr.bf16.mxu0 %v3518
        %3700 = vmatpush1.bf16.msra.mxu0 %v3517
        %3701 = vmatprep.subr.bf16.mxu0 %v3524
        %3702 = vmatpush1.bf16.msra.mxu0 %v3523
        %3703 = vmatprep.subr.bf16.mxu0 %v3530
        %3704 = vmatpush1.bf16.msra.mxu0 %v3529
        %3705 = vmatprep.mubr.bf16.mxu0 %v3075
        %3706 = vmatmul.mubr.bf16.gmra.mrb[0].mxu0 %v3072
        %v3707 = vpop.f32.mrb[0].mxu0
        %v3708 = vadd.f32 0.0, %v3707
        %v3709 = vpop.f32.mrb[0].mxu0
        %v3710 = vadd.f32 0.0, %v3709
        %v3711 = vpop.f32.mrb[0].mxu0
        %v3712 = vadd.f32 0.0, %v3711
        %v3713 = vpop.f32.mrb[0].mxu0
        %v3714 = vadd.f32 0.0, %v3713
        %3715 = vmatprep.mubr.bf16.mxu0 %v3082
        %3716 = vmatmul.mubr.bf16.gmra.mrb[0].mxu0 %v3080
        %v3717 = vpop.f32.mrb[0].mxu0
        %v3718 = vadd.f32 0.0, %v3717
        %v3719 = vpop.f32.mrb[0].mxu0
        %v3720 = vadd.f32 0.0, %v3719
        %v3721 = vpop.f32.mrb[0].mxu0
        %v3722 = vadd.f32 0.0, %v3721
        %v3723 = vpop.f32.mrb[0].mxu0
        %v3724 = vadd.f32 0.0, %v3723
        %3725 = vmatprep.mubr.bf16.mxu0 %v3088
        %3726 = vmatmul.mubr.bf16.gmra.mrb[0].mxu0 %v3086
        %v3727 = vpop.f32.mrb[0].mxu0
        %v3728 = vadd.f32 0.0, %v3727
        %v3729 = vpop.f32.mrb[0].mxu0
        %v3730 = vadd.f32 0.0, %v3729
        %v3731 = vpop.f32.mrb[0].mxu0
        %v3732 = vadd.f32 0.0, %v3731
        %v3733 = vpop.f32.mrb[0].mxu0
        %v3734 = vadd.f32 0.0, %v3733
        %3735 = vmatprep.mubr.bf16.mxu0 %v3094
        %3736 = vmatmul.mubr.bf16.gmra.mrb[0].mxu0 %v3092
        %v3737 = vpop.f32.mrb[0].mxu0
        %v3738 = vadd.f32 0.0, %v3737
        %v3739 = vpop.f32.mrb[0].mxu0
        %v3740 = vadd.f32 0.0, %v3739
        %v3741 = vpop.f32.mrb[0].mxu0
        %v3742 = vadd.f32 0.0, %v3741
        %v3743 = vpop.f32.mrb[0].mxu0
        %v3744 = vadd.f32 0.0, %v3743
        %3745 = vmatprep.mubr.bf16.mxu0 %v3100
        %3746 = vmatmul.mubr.bf16.gmra.mrb[0].mxu0 %v3098
        %v3747 = vpop.f32.mrb[0].mxu0
        %v3748 = vadd.f32 0.0, %v3747
        %v3749 = vpop.f32.mrb[0].mxu0
        %v3750 = vadd.f32 0.0, %v3749
        %v3751 = vpop.f32.mrb[0].mxu0
        %v3752 = vadd.f32 0.0, %v3751
        %v3753 = vpop.f32.mrb[0].mxu0
        %v3754 = vadd.f32 0.0, %v3753
        %3755 = vmatprep.mubr.bf16.mxu0 %v3099
        %3756 = vmatmul.mubr.bf16.gmra.mrb[0].mxu0 %v3097
        %v3757 = vpop.f32.mrb[0].mxu0
        %v3758 = vadd.f32 0.0, %v3757
        %v3759 = vpop.f32.mrb[0].mxu0
        %v3760 = vadd.f32 0.0, %v3759
        %v3761 = vpop.f32.mrb[0].mxu0
        %v3762 = vadd.f32 0.0, %v3761
        %v3763 = vpop.f32.mrb[0].mxu0
        %v3764 = vadd.f32 0.0, %v3763
        %3765 = vdwg.mxu0
        %3766 = vmatprep.subr.bf16.mxu0 %v3536
        %3767 = vmatpush1.bf16.msra.mxu0 %v3535
        %3768 = vmatprep.subr.bf16.mxu0 %v3542
        %3769 = vmatpush1.bf16.msra.mxu0 %v3541
        %3770 = vmatprep.subr.bf16.mxu0 0
        %3771 = vmatpush1.bf16.msra.mxu0 0
        %3772 = vmatprep.subr.bf16.mxu0 0
        %3773 = vmatpush1.bf16.msra.mxu0 0
        %3774 = vmatprep.subr.bf16.mxu0 0
        %3775 = vmatpush1.bf16.msra.mxu0 0
        %3776 = vmatprep.subr.bf16.mxu0 0
        %3777 = vmatpush1.bf16.msra.mxu0 0
        %3778 = vmatprep.subr.bf16.mxu0 0
        %3779 = vmatpush1.bf16.msra.mxu0 0
        %3780 = vmatprep.subr.bf16.mxu0 0
        %3781 = vmatpush1.bf16.msra.mxu0 0
        %3782 = vmatprep.subr.bf16.mxu0 0
        %3783 = vmatpush1.bf16.msra.mxu0 0
        %3784 = vmatprep.subr.bf16.mxu0 0
        %3785 = vmatpush1.bf16.msra.mxu0 0
        %3786 = vmatprep.subr.bf16.mxu0 0
        %3787 = vmatpush1.bf16.msra.mxu0 0
        %3788 = vmatprep.subr.bf16.mxu0 0
        %3789 = vmatpush1.bf16.msra.mxu0 0
        %3790 = vmatprep.subr.bf16.mxu0 0
        %3791 = vmatpush1.bf16.msra.mxu0 0
        %3792 = vmatprep.subr.bf16.mxu0 0
        %3793 = vmatpush1.bf16.msra.mxu0 0
        %3794 = vmatprep.subr.bf16.mxu0 0
        %3795 = vmatpush1.bf16.msra.mxu0 0
        %3796 = vmatprep.subr.bf16.mxu0 0
        %3797 = vmatpush1.bf16.msra.mxu0 0
        %3798 = vmatprep.mubr.bf16.mxu0 0
        %3799 = vmatmul.mubr.bf16.gmra.mrb[0].mxu0 %v3656
        %v3800 = vpop.f32.mrb[0].mxu0
        %v3801 = vadd.f32 %v3708, %v3800
        %v3802 = vpop.f32.mrb[0].mxu0
        %v3803 = vadd.f32 %v3710, %v3802
        %v3804 = vpop.f32.mrb[0].mxu0
        %v3805 = vadd.f32 %v3712, %v3804
        %v3806 = vpop.f32.mrb[0].mxu0
        %v3807 = vadd.f32 %v3714, %v3806
        %3808 = vmatprep.mubr.bf16.mxu0 0
        %3809 = vmatmul.mubr.bf16.gmra.mrb[0].mxu0 %v3659
        %v3810 = vpop.f32.mrb[0].mxu0
        %v3811 = vadd.f32 %v3718, %v3810
        %v3812 = vpop.f32.mrb[0].mxu0
        %v3813 = vadd.f32 %v3720, %v3812
        %v3814 = vpop.f32.mrb[0].mxu0
        %v3815 = vadd.f32 %v3722, %v3814
        %v3816 = vpop.f32.mrb[0].mxu0
        %v3817 = vadd.f32 %v3724, %v3816
        %3818 = vmatprep.mubr.bf16.mxu0 0
        %3819 = vmatmul.mubr.bf16.gmra.mrb[0].mxu0 %v3662
        %v3820 = vpop.f32.mrb[0].mxu0
        %v3821 = vadd.f32 %v3728, %v3820
        %v3822 = vpop.f32.mrb[0].mxu0
        %v3823 = vadd.f32 %v3730, %v3822
        %v3824 = vpop.f32.mrb[0].mxu0
        %v3825 = vadd.f32 %v3732, %v3824
        %v3826 = vpop.f32.mrb[0].mxu0
        %v3827 = vadd.f32 %v3734, %v3826
        %3828 = vmatprep.mubr.bf16.mxu0 0
        %3829 = vmatmul.mubr.bf16.gmra.mrb[0].mxu0 %v3665
        %v3830 = vpop.f32.mrb[0].mxu0
        %v3831 = vadd.f32 %v3738, %v3830
        %v3832 = vpop.f32.mrb[0].mxu0
        %v3833 = vadd.f32 %v3740, %v3832
        %v3834 = vpop.f32.mrb[0].mxu0
        %v3835 = vadd.f32 %v3742, %v3834
        %v3836 = vpop.f32.mrb[0].mxu0
        %v3837 = vadd.f32 %v3744, %v3836
        %3838 = vmatprep.mubr.bf16.mxu0 0
        %3839 = vmatmul.mubr.bf16.gmra.mrb[0].mxu0 %v3668
        %v3840 = vpop.f32.mrb[0].mxu0
        %v3841 = vadd.f32 %v3748, %v3840
        %v3842 = vpop.f32.mrb[0].mxu0
        %v3843 = vadd.f32 %v3750, %v3842
        %v3844 = vpop.f32.mrb[0].mxu0
        %v3845 = vadd.f32 %v3752, %v3844
        %v3846 = vpop.f32.mrb[0].mxu0
        %v3847 = vadd.f32 %v3754, %v3846
        %3848 = vmatprep.mubr.bf16.mxu0 0
        %3849 = vmatmul.mubr.bf16.gmra.mrb[0].mxu0 %v3671
        %v3850 = vpop.f32.mrb[0].mxu0
        %v3851 = vadd.f32 %v3758, %v3850
        %v3852 = vpop.f32.mrb[0].mxu0
        %v3853 = vadd.f32 %v3760, %v3852
        %v3854 = vpop.f32.mrb[0].mxu0
        %v3855 = vadd.f32 %v3762, %v3854
        %v3856 = vpop.f32.mrb[0].mxu0
        %v3857 = vadd.f32 %v3764, %v3856
        %3858 = vdwg.mxu0
        %3859 = vmatprep.subr.bf16.mxu0 %v3442
        %3860 = vmatpush1.bf16.msra.mxu0 %v3441
        %3861 = vmatprep.subr.bf16.mxu0 %v3448
        %3862 = vmatpush1.bf16.msra.mxu0 %v3447
        %3863 = vmatprep.subr.bf16.mxu0 %v3454
        %3864 = vmatpush1.bf16.msra.mxu0 %v3453
        %3865 = vmatprep.subr.bf16.mxu0 %v3460
        %3866 = vmatpush1.bf16.msra.mxu0 %v3459
        %3867 = vmatprep.subr.bf16.mxu0 %v3466
        %3868 = vmatpush1.bf16.msra.mxu0 %v3465
        %3869 = vmatprep.subr.bf16.mxu0 %v3472
        %3870 = vmatpush1.bf16.msra.mxu0 %v3471
        %3871 = vmatprep.subr.bf16.mxu0 %v3478
        %3872 = vmatpush1.bf16.msra.mxu0 %v3477
        %3873 = vmatprep.subr.bf16.mxu0 %v3484
        %3874 = vmatpush1.bf16.msra.mxu0 %v3483
        %3875 = vmatprep.subr.bf16.mxu0 %v3490
        %3876 = vmatpush1.bf16.msra.mxu0 %v3489
        %3877 = vmatprep.subr.bf16.mxu0 %v3496
        %3878 = vmatpush1.bf16.msra.mxu0 %v3495
        %3879 = vmatprep.subr.bf16.mxu0 %v3502
        %3880 = vmatpush1.bf16.msra.mxu0 %v3501
        %3881 = vmatprep.subr.bf16.mxu0 %v3508
        %3882 = vmatpush1.bf16.msra.mxu0 %v3507
        %3883 = vmatprep.subr.bf16.mxu0 %v3514
        %3884 = vmatpush1.bf16.msra.mxu0 %v3513
        %3885 = vmatprep.subr.bf16.mxu0 %v3520
        %3886 = vmatpush1.bf16.msra.mxu0 %v3519
        %3887 = vmatprep.subr.bf16.mxu0 %v3526
        %3888 = vmatpush1.bf16.msra.mxu0 %v3525
        %3889 = vmatprep.subr.bf16.mxu0 %v3532
        %3890 = vmatpush1.bf16.msra.mxu0 %v3531
        %3891 = vmatprep.mubr.bf16.mxu0 %v3075
        %3892 = vmatmul.mubr.bf16.gmra.mrb[0].mxu0 %v3072
        %v3893 = vpop.f32.mrb[0].mxu0
        %v3894 = vadd.f32 0.0, %v3893
        %v3895 = vpop.f32.mrb[0].mxu0
        %v3896 = vadd.f32 0.0, %v3895
        %v3897 = vpop.f32.mrb[0].mxu0
        %v3898 = vadd.f32 0.0, %v3897
        %v3899 = vpop.f32.mrb[0].mxu0
        %v3900 = vadd.f32 0.0, %v3899
        %3901 = vmatprep.mubr.bf16.mxu0 %v3082
        %3902 = vmatmul.mubr.bf16.gmra.mrb[0].mxu0 %v3080
        %v3903 = vpop.f32.mrb[0].mxu0
        %v3904 = vadd.f32 0.0, %v3903
        %v3905 = vpop.f32.mrb[0].mxu0
        %v3906 = vadd.f32 0.0, %v3905
        %v3907 = vpop.f32.mrb[0].mxu0
        %v3908 = vadd.f32 0.0, %v3907
        %v3909 = vpop.f32.mrb[0].mxu0
        %v3910 = vadd.f32 0.0, %v3909
        %3911 = vmatprep.mubr.bf16.mxu0 %v3088
        %3912 = vmatmul.mubr.bf16.gmra.mrb[0].mxu0 %v3086
        %v3913 = vpop.f32.mrb[0].mxu0
        %v3914 = vadd.f32 0.0, %v3913
        %v3915 = vpop.f32.mrb[0].mxu0
        %v3916 = vadd.f32 0.0, %v3915
        %v3917 = vpop.f32.mrb[0].mxu0
        %v3918 = vadd.f32 0.0, %v3917
        %v3919 = vpop.f32.mrb[0].mxu0
        %v3920 = vadd.f32 0.0, %v3919
        %3921 = vmatprep.mubr.bf16.mxu0 %v3094
        %3922 = vmatmul.mubr.bf16.gmra.mrb[0].mxu0 %v3092
        %v3923 = vpop.f32.mrb[0].mxu0
        %v3924 = vadd.f32 0.0, %v3923
        %v3925 = vpop.f32.mrb[0].mxu0
        %v3926 = vadd.f32 0.0, %v3925
        %v3927 = vpop.f32.mrb[0].mxu0
        %v3928 = vadd.f32 0.0, %v3927
        %v3929 = vpop.f32.mrb[0].mxu0
        %v3930 = vadd.f32 0.0, %v3929
        %3931 = vmatprep.mubr.bf16.mxu0 %v3100
        %3932 = vmatmul.mubr.bf16.gmra.mrb[0].mxu0 %v3098
        %v3933 = vpop.f32.mrb[0].mxu0
        %v3934 = vadd.f32 0.0, %v3933
        %v3935 = vpop.f32.mrb[0].mxu0
        %v3936 = vadd.f32 0.0, %v3935
        %v3937 = vpop.f32.mrb[0].mxu0
        %v3938 = vadd.f32 0.0, %v3937
        %v3939 = vpop.f32.mrb[0].mxu0
        %v3940 = vadd.f32 0.0, %v3939
        %3941 = vmatprep.mubr.bf16.mxu0 %v3099
        %3942 = vmatmul.mubr.bf16.gmra.mrb[0].mxu0 %v3097
        %v3943 = vpop.f32.mrb[0].mxu0
        %v3944 = vadd.f32 0.0, %v3943
        %v3945 = vpop.f32.mrb[0].mxu0
        %v3946 = vadd.f32 0.0, %v3945
        %v3947 = vpop.f32.mrb[0].mxu0
        %v3948 = vadd.f32 0.0, %v3947
        %v3949 = vpop.f32.mrb[0].mxu0
        %v3950 = vadd.f32 0.0, %v3949
        %3951 = vdwg.mxu0
        %3952 = vmatprep.subr.bf16.mxu0 %v3538
        %3953 = vmatpush1.bf16.msra.mxu0 %v3537
        %3954 = vmatprep.subr.bf16.mxu0 %v3544
        %3955 = vmatpush1.bf16.msra.mxu0 %v3543
        %3956 = vmatprep.subr.bf16.mxu0 0
        %3957 = vmatpush1.bf16.msra.mxu0 0
        %3958 = vmatprep.subr.bf16.mxu0 0
        %3959 = vmatpush1.bf16.msra.mxu0 0
        %3960 = vmatprep.subr.bf16.mxu0 0
        %3961 = vmatpush1.bf16.msra.mxu0 0
        %3962 = vmatprep.subr.bf16.mxu0 0
        %3963 = vmatpush1.bf16.msra.mxu0 0
        %3964 = vmatprep.subr.bf16.mxu0 0
        %3965 = vmatpush1.bf16.msra.mxu0 0
        %3966 = vmatprep.subr.bf16.mxu0 0
        %3967 = vmatpush1.bf16.msra.mxu0 0
        %3968 = vmatprep.subr.bf16.mxu0 0
        %3969 = vmatpush1.bf16.msra.mxu0 0
        %3970 = vmatprep.subr.bf16.mxu0 0
        %3971 = vmatpush1.bf16.msra.mxu0 0
        %3972 = vmatprep.subr.bf16.mxu0 0
        %3973 = vmatpush1.bf16.msra.mxu0 0
        %3974 = vmatprep.subr.bf16.mxu0 0
        %3975 = vmatpush1.bf16.msra.mxu0 0
        %3976 = vmatprep.subr.bf16.mxu0 0
        %3977 = vmatpush1.bf16.msra.mxu0 0
        %3978 = vmatprep.subr.bf16.mxu0 0
        %3979 = vmatpush1.bf16.msra.mxu0 0
        %3980 = vmatprep.subr.bf16.mxu0 0
        %3981 = vmatpush1.bf16.msra.mxu0 0
        %3982 = vmatprep.subr.bf16.mxu0 0
        %3983 = vmatpush1.bf16.msra.mxu0 0
        %3984 = vmatprep.mubr.bf16.mxu0 0
        %3985 = vmatmul.mubr.bf16.gmra.mrb[0].mxu0 %v3656
        %v3986 = vpop.f32.mrb[0].mxu0
        %v3987 = vadd.f32 %v3894, %v3986
        %v3988 = vpop.f32.mrb[0].mxu0
        %v3989 = vadd.f32 %v3896, %v3988
        %v3990 = vpop.f32.mrb[0].mxu0
        %v3991 = vadd.f32 %v3898, %v3990
        %v3992 = vpop.f32.mrb[0].mxu0
        %v3993 = vadd.f32 %v3900, %v3992
        %3994 = vmatprep.mubr.bf16.mxu0 0
        %3995 = vmatmul.mubr.bf16.gmra.mrb[0].mxu0 %v3659
        %v3996 = vpop.f32.mrb[0].mxu0
        %v3997 = vadd.f32 %v3904, %v3996
        %v3998 = vpop.f32.mrb[0].mxu0
        %v3999 = vadd.f32 %v3906, %v3998
        %v4000 = vpop.f32.mrb[0].mxu0
        %v4001 = vadd.f32 %v3908, %v4000
        %v4002 = vpop.f32.mrb[0].mxu0
        %v4003 = vadd.f32 %v3910, %v4002
        %4004 = vmatprep.mubr.bf16.mxu0 0
        %4005 = vmatmul.mubr.bf16.gmra.mrb[0].mxu0 %v3662
        %v4006 = vpop.f32.mrb[0].mxu0
        %v4007 = vadd.f32 %v3914, %v4006
        %v4008 = vpop.f32.mrb[0].mxu0
        %v4009 = vadd.f32 %v3916, %v4008
        %v4010 = vpop.f32.mrb[0].mxu0
        %v4011 = vadd.f32 %v3918, %v4010
        %v4012 = vpop.f32.mrb[0].mxu0
        %v4013 = vadd.f32 %v3920, %v4012
        %4014 = vmatprep.mubr.bf16.mxu0 0
        %4015 = vmatmul.mubr.bf16.gmra.mrb[0].mxu0 %v3665
        %v4016 = vpop.f32.mrb[0].mxu0
        %v4017 = vadd.f32 %v3924, %v4016
        %v4018 = vpop.f32.mrb[0].mxu0
        %v4019 = vadd.f32 %v3926, %v4018
        %v4020 = vpop.f32.mrb[0].mxu0
        %v4021 = vadd.f32 %v3928, %v4020
        %v4022 = vpop.f32.mrb[0].mxu0
        %v4023 = vadd.f32 %v3930, %v4022
        %4024 = vmatprep.mubr.bf16.mxu0 0
        %4025 = vmatmul.mubr.bf16.gmra.mrb[0].mxu0 %v3668
        %v4026 = vpop.f32.mrb[0].mxu0
        %v4027 = vadd.f32 %v3934, %v4026
        %v4028 = vpop.f32.mrb[0].mxu0
        %v4029 = vadd.f32 %v3936, %v4028
        %v4030 = vpop.f32.mrb[0].mxu0
        %v4031 = vadd.f32 %v3938, %v4030
        %v4032 = vpop.f32.mrb[0].mxu0
        %v4033 = vadd.f32 %v3940, %v4032
        %4034 = vmatprep.mubr.bf16.mxu0 0
        %4035 = vmatmul.mubr.bf16.gmra.mrb[0].mxu0 %v3671
        %v4036 = vpop.f32.mrb[0].mxu0
        %v4037 = vadd.f32 %v3944, %v4036
        %v4038 = vpop.f32.mrb[0].mxu0
        %v4039 = vadd.f32 %v3946, %v4038
        %v4040 = vpop.f32.mrb[0].mxu0
        %v4041 = vadd.f32 %v3948, %v4040
        %v4042 = vpop.f32.mrb[0].mxu0
        %v4043 = vadd.f32 %v3950, %v4042
        %4044 = vdwg.mxu0
        %4045 = vmatprep.subr.bf16.mxu0 %v3444
        %4046 = vmatpush1.bf16.msra.mxu0 %v3443
        %4047 = vmatprep.subr.bf16.mxu0 %v3450
        %4048 = vmatpush1.bf16.msra.mxu0 %v3449
        %4049 = vmatprep.subr.bf16.mxu0 %v3456
        %4050 = vmatpush1.bf16.msra.mxu0 %v3455
        %4051 = vmatprep.subr.bf16.mxu0 %v3462
        %4052 = vmatpush1.bf16.msra.mxu0 %v3461
        %4053 = vmatprep.subr.bf16.mxu0 %v3468
        %4054 = vmatpush1.bf16.msra.mxu0 %v3467
        %4055 = vmatprep.subr.bf16.mxu0 %v3474
        %4056 = vmatpush1.bf16.msra.mxu0 %v3473
        %4057 = vmatprep.subr.bf16.mxu0 %v3480
        %4058 = vmatpush1.bf16.msra.mxu0 %v3479
        %4059 = vmatprep.subr.bf16.mxu0 %v3486
        %4060 = vmatpush1.bf16.msra.mxu0 %v3485
        %4061 = vmatprep.subr.bf16.mxu0 %v3492
        %4062 = vmatpush1.bf16.msra.mxu0 %v3491
        %4063 = vmatprep.subr.bf16.mxu0 %v3498
        %4064 = vmatpush1.bf16.msra.mxu0 %v3497
        %4065 = vmatprep.subr.bf16.mxu0 %v3504
        %4066 = vmatpush1.bf16.msra.mxu0 %v3503
        %4067 = vmatprep.subr.bf16.mxu0 %v3510
        %4068 = vmatpush1.bf16.msra.mxu0 %v3509
        %4069 = vmatprep.subr.bf16.mxu0 %v3516
        %4070 = vmatpush1.bf16.msra.mxu0 %v3515
        %4071 = vmatprep.subr.bf16.mxu0 %v3522
        %4072 = vmatpush1.bf16.msra.mxu0 %v3521
        %4073 = vmatprep.subr.bf16.mxu0 %v3528
        %4074 = vmatpush1.bf16.msra.mxu0 %v3527
        %4075 = vmatprep.subr.bf16.mxu0 %v3534
        %4076 = vmatpush1.bf16.msra.mxu0 %v3533
        %4077 = vmatprep.mubr.bf16.mxu0 %v3075
        %4078 = vmatmul.mubr.bf16.gmra.mrb[0].mxu0 %v3072
        %v4079 = vpop.f32.mrb[0].mxu0
        %v4080 = vadd.f32 0.0, %v4079
        %v4081 = vpop.f32.mrb[0].mxu0
        %v4082 = vadd.f32 0.0, %v4081
        %v4083 = vpop.f32.mrb[0].mxu0
        %v4084 = vadd.f32 0.0, %v4083
        %v4085 = vpop.f32.mrb[0].mxu0
        %v4086 = vadd.f32 0.0, %v4085
        %4087 = vmatprep.mubr.bf16.mxu0 %v3082
        %4088 = vmatmul.mubr.bf16.gmra.mrb[0].mxu0 %v3080
        %v4089 = vpop.f32.mrb[0].mxu0
        %v4090 = vadd.f32 0.0, %v4089
        %v4091 = vpop.f32.mrb[0].mxu0
        %v4092 = vadd.f32 0.0, %v4091
        %v4093 = vpop.f32.mrb[0].mxu0
        %v4094 = vadd.f32 0.0, %v4093
        %v4095 = vpop.f32.mrb[0].mxu0
        %v4096 = vadd.f32 0.0, %v4095
        %4097 = vmatprep.mubr.bf16.mxu0 %v3088
        %4098 = vmatmul.mubr.bf16.gmra.mrb[0].mxu0 %v3086
        %v4099 = vpop.f32.mrb[0].mxu0
        %v4100 = vadd.f32 0.0, %v4099
        %v4101 = vpop.f32.mrb[0].mxu0
        %v4102 = vadd.f32 0.0, %v4101
        %v4103 = vpop.f32.mrb[0].mxu0
        %v4104 = vadd.f32 0.0, %v4103
        %v4105 = vpop.f32.mrb[0].mxu0
        %v4106 = vadd.f32 0.0, %v4105
        %4107 = vmatprep.mubr.bf16.mxu0 %v3094
        %4108 = vmatmul.mubr.bf16.gmra.mrb[0].mxu0 %v3092
        %v4109 = vpop.f32.mrb[0].mxu0
        %v4110 = vadd.f32 0.0, %v4109
        %v4111 = vpop.f32.mrb[0].mxu0
        %v4112 = vadd.f32 0.0, %v4111
        %v4113 = vpop.f32.mrb[0].mxu0
        %v4114 = vadd.f32 0.0, %v4113
        %v4115 = vpop.f32.mrb[0].mxu0
        %v4116 = vadd.f32 0.0, %v4115
        %4117 = vmatprep.mubr.bf16.mxu0 %v3100
        %4118 = vmatmul.mubr.bf16.gmra.mrb[0].mxu0 %v3098
        %v4119 = vpop.f32.mrb[0].mxu0
        %v4120 = vadd.f32 0.0, %v4119
        %v4121 = vpop.f32.mrb[0].mxu0
        %v4122 = vadd.f32 0.0, %v4121
        %v4123 = vpop.f32.mrb[0].mxu0
        %v4124 = vadd.f32 0.0, %v4123
        %v4125 = vpop.f32.mrb[0].mxu0
        %v4126 = vadd.f32 0.0, %v4125
        %4127 = vmatprep.mubr.bf16.mxu0 %v3099
        %4128 = vmatmul.mubr.bf16.gmra.mrb[0].mxu0 %v3097
        %v4129 = vpop.f32.mrb[0].mxu0
        %v4130 = vadd.f32 0.0, %v4129
        %v4131 = vpop.f32.mrb[0].mxu0
        %v4132 = vadd.f32 0.0, %v4131
        %v4133 = vpop.f32.mrb[0].mxu0
        %v4134 = vadd.f32 0.0, %v4133
        %v4135 = vpop.f32.mrb[0].mxu0
        %v4136 = vadd.f32 0.0, %v4135
        %4137 = vdwg.mxu0
        %4138 = vmatprep.subr.bf16.mxu0 %v3540
        %4139 = vmatpush1.bf16.msra.mxu0 %v3539
        %4140 = vmatprep.subr.bf16.mxu0 %v3546
        %4141 = vmatpush1.bf16.msra.mxu0 %v3545
        %4142 = vmatprep.subr.bf16.mxu0 0
        %4143 = vmatpush1.bf16.msra.mxu0 0
        %4144 = vmatprep.subr.bf16.mxu0 0
        %4145 = vmatpush1.bf16.msra.mxu0 0
        %4146 = vmatprep.subr.bf16.mxu0 0
        %4147 = vmatpush1.bf16.msra.mxu0 0
        %4148 = vmatprep.subr.bf16.mxu0 0
        %4149 = vmatpush1.bf16.msra.mxu0 0
        %4150 = vmatprep.subr.bf16.mxu0 0
        %4151 = vmatpush1.bf16.msra.mxu0 0
        %4152 = vmatprep.subr.bf16.mxu0 0
        %4153 = vmatpush1.bf16.msra.mxu0 0
        %4154 = vmatprep.subr.bf16.mxu0 0
        %4155 = vmatpush1.bf16.msra.mxu0 0
        %4156 = vmatprep.subr.bf16.mxu0 0
        %4157 = vmatpush1.bf16.msra.mxu0 0
        %4158 = vmatprep.subr.bf16.mxu0 0
        %4159 = vmatpush1.bf16.msra.mxu0 0
        %4160 = vmatprep.subr.bf16.mxu0 0
        %4161 = vmatpush1.bf16.msra.mxu0 0
        %4162 = vmatprep.subr.bf16.mxu0 0
        %4163 = vmatpush1.bf16.msra.mxu0 0
        %4164 = vmatprep.subr.bf16.mxu0 0
        %4165 = vmatpush1.bf16.msra.mxu0 0
        %4166 = vmatprep.subr.bf16.mxu0 0
        %4167 = vmatpush1.bf16.msra.mxu0 0
        %4168 = vmatprep.subr.bf16.mxu0 0
        %4169 = vmatpush1.bf16.msra.mxu0 0
        %4170 = vmatprep.mubr.bf16.mxu0 0
        %4171 = vmatmul.mubr.bf16.gmra.mrb[0].mxu0 %v3656
        %v4172 = vpop.f32.mrb[0].mxu0
        %v4173 = vadd.f32 %v4080, %v4172
        %v4174 = vpop.f32.mrb[0].mxu0
        %v4175 = vadd.f32 %v4082, %v4174
        %v4176 = vpop.f32.mrb[0].mxu0
        %v4177 = vadd.f32 %v4084, %v4176
        %v4178 = vpop.f32.mrb[0].mxu0
        %v4179 = vadd.f32 %v4086, %v4178
        %4180 = vmatprep.mubr.bf16.mxu0 0
        %4181 = vmatmul.mubr.bf16.gmra.mrb[0].mxu0 %v3659
        %v4182 = vpop.f32.mrb[0].mxu0
        %v4183 = vadd.f32 %v4090, %v4182
        %v4184 = vpop.f32.mrb[0].mxu0
        %v4185 = vadd.f32 %v4092, %v4184
        %v4186 = vpop.f32.mrb[0].mxu0
        %v4187 = vadd.f32 %v4094, %v4186
        %v4188 = vpop.f32.mrb[0].mxu0
        %v4189 = vadd.f32 %v4096, %v4188
        %4190 = vmatprep.mubr.bf16.mxu0 0
        %4191 = vmatmul.mubr.bf16.gmra.mrb[0].mxu0 %v3662
        %v4192 = vpop.f32.mrb[0].mxu0
        %v4193 = vadd.f32 %v4100, %v4192
        %v4194 = vpop.f32.mrb[0].mxu0
        %v4195 = vadd.f32 %v4102, %v4194
        %v4196 = vpop.f32.mrb[0].mxu0
        %v4197 = vadd.f32 %v4104, %v4196
        %v4198 = vpop.f32.mrb[0].mxu0
        %v4199 = vadd.f32 %v4106, %v4198
        %4200 = vmatprep.mubr.bf16.mxu0 0
        %4201 = vmatmul.mubr.bf16.gmra.mrb[0].mxu0 %v3665
        %v4202 = vpop.f32.mrb[0].mxu0
        %v4203 = vadd.f32 %v4110, %v4202
        %v4204 = vpop.f32.mrb[0].mxu0
        %v4205 = vadd.f32 %v4112, %v4204
        %v4206 = vpop.f32.mrb[0].mxu0
        %v4207 = vadd.f32 %v4114, %v4206
        %v4208 = vpop.f32.mrb[0].mxu0
        %v4209 = vadd.f32 %v4116, %v4208
        %4210 = vmatprep.mubr.bf16.mxu0 0
        %4211 = vmatmul.mubr.bf16.gmra.mrb[0].mxu0 %v3668
        %v4212 = vpop.f32.mrb[0].mxu0
        %v4213 = vadd.f32 %v4120, %v4212
        %v4214 = vpop.f32.mrb[0].mxu0
        %v4215 = vadd.f32 %v4122, %v4214
        %v4216 = vpop.f32.mrb[0].mxu0
        %v4217 = vadd.f32 %v4124, %v4216
        %v4218 = vpop.f32.mrb[0].mxu0
        %v4219 = vadd.f32 %v4126, %v4218
        %4220 = vmatprep.mubr.bf16.mxu0 0
        %4221 = vmatmul.mubr.bf16.gmra.mrb[0].mxu0 %v3671
        %v4222 = vpop.f32.mrb[0].mxu0
        %v4223 = vadd.f32 %v4130, %v4222
        %v4224 = vpop.f32.mrb[0].mxu0
        %v4225 = vadd.f32 %v4132, %v4224
        %v4226 = vpop.f32.mrb[0].mxu0
        %v4227 = vadd.f32 %v4134, %v4226
        %v4228 = vpop.f32.mrb[0].mxu0
        %v4229 = vadd.f32 %v4136, %v4228
        %4230 = vdwg.mxu0
        %v4231 = vadd.f32 %v2520, %v3801
        %v4232 = vadd.f32 %v2522, %v3803
        %v4233 = vadd.f32 %v2706, %v3987
        %v4234 = vadd.f32 %v2708, %v3989
        %v4235 = vadd.f32 %v2892, %v4173
        %v4236 = vadd.f32 %v2894, %v4175
        %v4237 = vadd.f32 %v2524, %v3805
        %v4238 = vadd.f32 %v2526, %v3807
        %v4239 = vadd.f32 %v2710, %v3991
        %v4240 = vadd.f32 %v2712, %v3993
        %v4241 = vadd.f32 %v2896, %v4177
        %v4242 = vadd.f32 %v2898, %v4179
        %v4243 = vadd.f32 %v2530, %v3811
        %v4244 = vadd.f32 %v2532, %v3813
        %v4245 = vadd.f32 %v2716, %v3997
        %v4246 = vadd.f32 %v2718, %v3999
        %v4247 = vadd.f32 %v2902, %v4183
        %v4248 = vadd.f32 %v2904, %v4185
        %v4249 = vadd.f32 %v2534, %v3815
        %v4250 = vadd.f32 %v2536, %v3817
        %v4251 = vadd.f32 %v2720, %v4001
        %v4252 = vadd.f32 %v2722, %v4003
        %v4253 = vadd.f32 %v2906, %v4187
        %v4254 = vadd.f32 %v2908, %v4189
        %v4255 = vadd.f32 %v2540, %v3821
        %v4256 = vadd.f32 %v2542, %v3823
        %v4257 = vadd.f32 %v2726, %v4007
        %v4258 = vadd.f32 %v2728, %v4009
        %v4259 = vadd.f32 %v2912, %v4193
        %v4260 = vadd.f32 %v2914, %v4195
        %v4261 = vadd.f32 %v2544, %v3825
        %v4262 = vadd.f32 %v2546, %v3827
        %v4263 = vadd.f32 %v2730, %v4011
        %v4264 = vadd.f32 %v2732, %v4013
        %v4265 = vadd.f32 %v2916, %v4197
        %v4266 = vadd.f32 %v2918, %v4199
        %v4267 = vadd.f32 %v2550, %v3831
        %v4268 = vadd.f32 %v2552, %v3833
        %v4269 = vadd.f32 %v2736, %v4017
        %v4270 = vadd.f32 %v2738, %v4019
        %v4271 = vadd.f32 %v2922, %v4203
        %v4272 = vadd.f32 %v2924, %v4205
        %v4273 = vadd.f32 %v2554, %v3835
        %v4274 = vadd.f32 %v2556, %v3837
        %v4275 = vadd.f32 %v2740, %v4021
        %v4276 = vadd.f32 %v2742, %v4023
        %v4277 = vadd.f32 %v2926, %v4207
        %v4278 = vadd.f32 %v2928, %v4209
        %v4279 = vadd.f32 %v2560, %v3841
        %v4280 = vadd.f32 %v2562, %v3843
        %v4281 = vadd.f32 %v2746, %v4027
        %v4282 = vadd.f32 %v2748, %v4029
        %v4283 = vadd.f32 %v2932, %v4213
        %v4284 = vadd.f32 %v2934, %v4215
        %v4285 = vadd.f32 %v2564, %v3845
        %v4286 = vadd.f32 %v2566, %v3847
        %v4287 = vadd.f32 %v2750, %v4031
        %v4288 = vadd.f32 %v2752, %v4033
        %v4289 = vadd.f32 %v2936, %v4217
        %v4290 = vadd.f32 %v2938, %v4219
        %v4291 = vadd.f32 %v2570, %v3851
        %v4292 = vadd.f32 %v2572, %v3853
        %v4293 = vadd.f32 %v2756, %v4037
        %v4294 = vadd.f32 %v2758, %v4039
        %v4295 = vadd.f32 %v2942, %v4223
        %v4296 = vadd.f32 %v2944, %v4225
        %v4297 = vadd.f32 %v2574, %v3855
        %v4298 = vadd.f32 %v2576, %v3857
        %v4299 = vadd.f32 %v2760, %v4041
        %v4300 = vadd.f32 %v2762, %v4043
        %v4301 = vadd.f32 %v2946, %v4227
        %v4302 = vadd.f32 %v2948, %v4229
        %v4303 = vld [vmem:[#allocation4] sm:$0x3f]
        %v4305 = vlaneseq
        %v4306 = vshrl.u32 %v4305, 7
        %v4307 = vsub.s32 0, %v4306
        %v4308 = vrot.slane %v4303, %v4307
        %v4309 = vlaneseq
        %v4310 = vshrl.u32 %v4309, 7
        %v4311 = vsub.s32 1, %v4310
        %v4312 = vrot.slane %v4303, %v4311
        %v4313 = vlaneseq
        %v4314 = vshrl.u32 %v4313, 7
        %v4315 = vsub.s32 2, %v4314
        %v4316 = vrot.slane %v4303, %v4315
        %v4317 = vlaneseq
        %v4318 = vshrl.u32 %v4317, 7
        %v4319 = vsub.s32 3, %v4318
        %v4320 = vrot.slane %v4303, %v4319
        %v4321 = vlaneseq
        %v4322 = vshrl.u32 %v4321, 7
        %v4323 = vsub.s32 4, %v4322
        %v4324 = vrot.slane %v4303, %v4323
        %v4325 = vlaneseq
        %v4326 = vshrl.u32 %v4325, 7
        %v4327 = vsub.s32 5, %v4326
        %v4328 = vrot.slane %v4303, %v4327
        %v4335 = vadd.f32 %v4231, %v4308
        %v4336 = vadd.f32 %v4232, %v4312
        %v4337 = vadd.f32 %v4233, %v4316
        %v4338 = vadd.f32 %v4234, %v4320
        %v4339 = vadd.f32 %v4235, %v4324
        %v4340 = vadd.f32 %v4236, %v4328
        %v4341 = vadd.f32 %v4237, %v4308
        %v4342 = vadd.f32 %v4238, %v4312
        %v4343 = vadd.f32 %v4239, %v4316
        %v4344 = vadd.f32 %v4240, %v4320
        %v4345 = vadd.f32 %v4241, %v4324
        %v4346 = vadd.f32 %v4242, %v4328
        %v4347 = vadd.f32 %v4243, %v4308
        %v4348 = vadd.f32 %v4244, %v4312
        %v4349 = vadd.f32 %v4245, %v4316
        %v4350 = vadd.f32 %v4246, %v4320
        %v4351 = vadd.f32 %v4247, %v4324
        %v4352 = vadd.f32 %v4248, %v4328
        %v4353 = vadd.f32 %v4249, %v4308
        %v4354 = vadd.f32 %v4250, %v4312
        %v4355 = vadd.f32 %v4251, %v4316
        %v4356 = vadd.f32 %v4252, %v4320
        %v4357 = vadd.f32 %v4253, %v4324
        %v4358 = vadd.f32 %v4254, %v4328
        %v4359 = vadd.f32 %v4255, %v4308
        %v4360 = vadd.f32 %v4256, %v4312
        %v4361 = vadd.f32 %v4257, %v4316
        %v4362 = vadd.f32 %v4258, %v4320
        %v4363 = vadd.f32 %v4259, %v4324
        %v4364 = vadd.f32 %v4260, %v4328
        %v4365 = vadd.f32 %v4261, %v4308
        %v4366 = vadd.f32 %v4262, %v4312
        %v4367 = vadd.f32 %v4263, %v4316
        %v4368 = vadd.f32 %v4264, %v4320
        %v4369 = vadd.f32 %v4265, %v4324
        %v4370 = vadd.f32 %v4266, %v4328
        %v4371 = vadd.f32 %v4267, %v4308
        %v4372 = vadd.f32 %v4268, %v4312
        %v4373 = vadd.f32 %v4269, %v4316
        %v4374 = vadd.f32 %v4270, %v4320
        %v4375 = vadd.f32 %v4271, %v4324
        %v4376 = vadd.f32 %v4272, %v4328
        %v4377 = vadd.f32 %v4273, %v4308
        %v4378 = vadd.f32 %v4274, %v4312
        %v4379 = vadd.f32 %v4275, %v4316
        %v4380 = vadd.f32 %v4276, %v4320
        %v4381 = vadd.f32 %v4277, %v4324
        %v4382 = vadd.f32 %v4278, %v4328
        %v4383 = vadd.f32 %v4279, %v4308
        %v4384 = vadd.f32 %v4280, %v4312
        %v4385 = vadd.f32 %v4281, %v4316
        %v4386 = vadd.f32 %v4282, %v4320
        %v4387 = vadd.f32 %v4283, %v4324
        %v4388 = vadd.f32 %v4284, %v4328
        %v4389 = vadd.f32 %v4285, %v4308
        %v4390 = vadd.f32 %v4286, %v4312
        %v4391 = vadd.f32 %v4287, %v4316
        %v4392 = vadd.f32 %v4288, %v4320
        %v4393 = vadd.f32 %v4289, %v4324
        %v4394 = vadd.f32 %v4290, %v4328
        %v4395 = vadd.f32 %v4291, %v4308
        %v4396 = vadd.f32 %v4292, %v4312
        %v4397 = vadd.f32 %v4293, %v4316
        %v4398 = vadd.f32 %v4294, %v4320
        %v4399 = vadd.f32 %v4295, %v4324
        %v4400 = vadd.f32 %v4296, %v4328
        %v4401 = vadd.f32 %v4297, %v4308
        %v4402 = vadd.f32 %v4298, %v4312
        %v4403 = vadd.f32 %v4299, %v4316
        %v4404 = vadd.f32 %v4300, %v4320
        %v4405 = vadd.f32 %v4301, %v4324
        %v4406 = vadd.f32 %v4302, %v4328
        %v4407 = vmax.f32 %v4335, 0.0
        %v4408 = vmax.f32 %v4336, 0.0
        %v4409 = vmax.f32 %v4337, 0.0
        %v4410 = vmax.f32 %v4338, 0.0
        %v4411 = vmax.f32 %v4339, 0.0
        %v4412 = vmax.f32 %v4340, 0.0
        %v4413 = vmax.f32 %v4341, 0.0
        %v4414 = vmax.f32 %v4342, 0.0
        %v4415 = vmax.f32 %v4343, 0.0
        %v4416 = vmax.f32 %v4344, 0.0
        %v4417 = vmax.f32 %v4345, 0.0
        %v4418 = vmax.f32 %v4346, 0.0
        %v4419 = vmax.f32 %v4347, 0.0
        %v4420 = vmax.f32 %v4348, 0.0
        %v4421 = vmax.f32 %v4349, 0.0
        %v4422 = vmax.f32 %v4350, 0.0
        %v4423 = vmax.f32 %v4351, 0.0
        %v4424 = vmax.f32 %v4352, 0.0
        %v4425 = vmax.f32 %v4353, 0.0
        %v4426 = vmax.f32 %v4354, 0.0
        %v4427 = vmax.f32 %v4355, 0.0
        %v4428 = vmax.f32 %v4356, 0.0
        %v4429 = vmax.f32 %v4357, 0.0
        %v4430 = vmax.f32 %v4358, 0.0
        %v4431 = vmax.f32 %v4359, 0.0
        %v4432 = vmax.f32 %v4360, 0.0
        %v4433 = vmax.f32 %v4361, 0.0
        %v4434 = vmax.f32 %v4362, 0.0
        %v4435 = vmax.f32 %v4363, 0.0
        %v4436 = vmax.f32 %v4364, 0.0
        %v4437 = vmax.f32 %v4365, 0.0
        %v4438 = vmax.f32 %v4366, 0.0
        %v4439 = vmax.f32 %v4367, 0.0
        %v4440 = vmax.f32 %v4368, 0.0
        %v4441 = vmax.f32 %v4369, 0.0
        %v4442 = vmax.f32 %v4370, 0.0
        %v4443 = vmax.f32 %v4371, 0.0
        %v4444 = vmax.f32 %v4372, 0.0
        %v4445 = vmax.f32 %v4373, 0.0
        %v4446 = vmax.f32 %v4374, 0.0
        %v4447 = vmax.f32 %v4375, 0.0
        %v4448 = vmax.f32 %v4376, 0.0
        %v4449 = vmax.f32 %v4377, 0.0
        %v4450 = vmax.f32 %v4378, 0.0
        %v4451 = vmax.f32 %v4379, 0.0
        %v4452 = vmax.f32 %v4380, 0.0
        %v4453 = vmax.f32 %v4381, 0.0
        %v4454 = vmax.f32 %v4382, 0.0
        %v4455 = vmax.f32 %v4383, 0.0
        %v4456 = vmax.f32 %v4384, 0.0
        %v4457 = vmax.f32 %v4385, 0.0
        %v4458 = vmax.f32 %v4386, 0.0
        %v4459 = vmax.f32 %v4387, 0.0
        %v4460 = vmax.f32 %v4388, 0.0
        %v4461 = vmax.f32 %v4389, 0.0
        %v4462 = vmax.f32 %v4390, 0.0
        %v4463 = vmax.f32 %v4391, 0.0
        %v4464 = vmax.f32 %v4392, 0.0
        %v4465 = vmax.f32 %v4393, 0.0
        %v4466 = vmax.f32 %v4394, 0.0
        %v4467 = vmax.f32 %v4395, 0.0
        %v4468 = vmax.f32 %v4396, 0.0
        %v4469 = vmax.f32 %v4397, 0.0
        %v4470 = vmax.f32 %v4398, 0.0
        %v4471 = vmax.f32 %v4399, 0.0
        %v4472 = vmax.f32 %v4400, 0.0
        %v4473 = vmax.f32 %v4401, 0.0
        %v4474 = vmax.f32 %v4402, 0.0
        %v4475 = vmax.f32 %v4403, 0.0
        %v4476 = vmax.f32 %v4404, 0.0
        %v4477 = vmax.f32 %v4405, 0.0
        %v4478 = vmax.f32 %v4406, 0.0
        %v4479 = vmax.f32 %v4407, %v4410
        %v4480 = vmax.f32 %v4408, %v4411
        %v4481 = vmax.f32 %v4409, %v4412
        %v4482 = vmax.f32 %v4413, %v4416
        %v4483 = vmax.f32 %v4414, %v4417
        %v4484 = vmax.f32 %v4415, %v4418
        %v4485 = vmax.f32 %v4419, %v4422
        %v4486 = vmax.f32 %v4420, %v4423
        %v4487 = vmax.f32 %v4421, %v4424
        %v4488 = vmax.f32 %v4425, %v4428
        %v4489 = vmax.f32 %v4426, %v4429
        %v4490 = vmax.f32 %v4427, %v4430
        %v4491 = vmax.f32 %v4431, %v4434
        %v4492 = vmax.f32 %v4432, %v4435
        %v4493 = vmax.f32 %v4433, %v4436
        %v4494 = vmax.f32 %v4437, %v4440
        %v4495 = vmax.f32 %v4438, %v4441
        %v4496 = vmax.f32 %v4439, %v4442
        %v4497 = vmax.f32 %v4443, %v4446
        %v4498 = vmax.f32 %v4444, %v4447
        %v4499 = vmax.f32 %v4445, %v4448
        %v4500 = vmax.f32 %v4449, %v4452
        %v4501 = vmax.f32 %v4450, %v4453
        %v4502 = vmax.f32 %v4451, %v4454
        %v4503 = vmax.f32 %v4455, %v4458
        %v4504 = vmax.f32 %v4456, %v4459
        %v4505 = vmax.f32 %v4457, %v4460
        %v4506 = vmax.f32 %v4461, %v4464
        %v4507 = vmax.f32 %v4462, %v4465
        %v4508 = vmax.f32 %v4463, %v4466
        %v4509 = vmax.f32 %v4467, %v4470
        %v4510 = vmax.f32 %v4468, %v4471
        %v4511 = vmax.f32 %v4469, %v4472
        %v4512 = vmax.f32 %v4473, %v4476
        %v4513 = vmax.f32 %v4474, %v4477
        %v4514 = vmax.f32 %v4475, %v4478
        %v4515 = vpack.c.bf16 %v4482, %v4479
        %v4516 = vpack.c.bf16 %v4483, %v4480
        %v4517 = vpack.c.bf16 %v4484, %v4481
        %v4518 = vpack.c.bf16 %v4488, %v4485
        %v4519 = vpack.c.bf16 %v4489, %v4486
        %v4520 = vpack.c.bf16 %v4490, %v4487
        %v4521 = vpack.c.bf16 %v4494, %v4491
        %v4522 = vpack.c.bf16 %v4495, %v4492
        %v4523 = vpack.c.bf16 %v4496, %v4493
        %v4524 = vpack.c.bf16 %v4500, %v4497
        %v4525 = vpack.c.bf16 %v4501, %v4498
        %v4526 = vpack.c.bf16 %v4502, %v4499
        %v4527 = vpack.c.bf16 %v4506, %v4503
        %v4528 = vpack.c.bf16 %v4507, %v4504
        %v4529 = vpack.c.bf16 %v4508, %v4505
        %v4530 = vpack.c.bf16 %v4512, %v4509
        %v4531 = vpack.c.bf16 %v4513, %v4510
        %v4532 = vpack.c.bf16 %v4514, %v4511
        %v4533 = vld [vmem:[%s2] sm:$0xf]
        %v4534 = vld [vmem:[%s2 + $0x4] sm:$0xf]
        %v4535 = vld [vmem:[%s2 + $0x8] sm:$0xf]
        %v4536 = vld [vmem:[%s2 + $0xc] sm:$0xf]
        %v4537 = vld [vmem:[%s2 + $0x10] sm:$0xf]
        %v4538 = vld [vmem:[%s2 + $0x14] sm:$0xf]
        %v4545 = vunpack.c.l.b16 %v4533
        %v4546 = vunpack.c.l.b16 %v4534
        %v4547 = vunpack.c.l.b16 %v4535
        %v4548 = vunpack.c.l.b16 %v4536
        %v4549 = vunpack.c.l.b16 %v4537
        %v4550 = vunpack.c.l.b16 %v4538
        %v4551 = vpack.c.b16 %v4546, %v4545
        %v4552 = vpack.c.b16 %v4548, %v4547
        %v4553 = vpack.c.b16 %v4550, %v4549
        %vm4554 = vcmask 769024
        %v4556 = vsel %vm4554, %v4551, 0
        %v4559 = vsel %vm4554, %v4552, 0
        %v4562 = vsel %vm4554, %v4553, 0
        %vm4564 = vcmask 1046528
        %v4566 = vsel %vm4564, %v4530, 0
        %v4569 = vsel %vm4564, %v4531, 0
        %v4572 = vsel %vm4564, %v4532, 0
        %4574 = vmatprep.subr.bf16.mxu0 %v4516
        %4575 = vmatpush1.bf16.msra.mxu0 %v4515
        %4576 = vmatprep.subr.bf16.mxu0 %v4519
        %4577 = vmatpush1.bf16.msra.mxu0 %v4518
        %4578 = vmatprep.subr.bf16.mxu0 %v4522
        %4579 = vmatpush1.bf16.msra.mxu0 %v4521
        %4580 = vmatprep.subr.bf16.mxu0 %v4525
        %4581 = vmatpush1.bf16.msra.mxu0 %v4524
        %4582 = vmatprep.subr.bf16.mxu0 %v4528
        %4583 = vmatpush1.bf16.msra.mxu0 %v4527
        %4584 = vmatprep.subr.bf16.mxu0 %v4569
        %4585 = vmatpush1.bf16.msra.mxu0 %v4566
        %4586 = vmatprep.subr.bf16.mxu0 0
        %4587 = vmatpush1.bf16.msra.mxu0 0
        %4588 = vmatprep.subr.bf16.mxu0 0
        %4589 = vmatpush1.bf16.msra.mxu0 0
        %4590 = vmatprep.subr.bf16.mxu0 0
        %4591 = vmatpush1.bf16.msra.mxu0 0
        %4592 = vmatprep.subr.bf16.mxu0 0
        %4593 = vmatpush1.bf16.msra.mxu0 0
        %4594 = vmatprep.subr.bf16.mxu0 0
        %4595 = vmatpush1.bf16.msra.mxu0 0
        %4596 = vmatprep.subr.bf16.mxu0 0
        %4597 = vmatpush1.bf16.msra.mxu0 0
        %4598 = vmatprep.subr.bf16.mxu0 0
        %4599 = vmatpush1.bf16.msra.mxu0 0
        %4600 = vmatprep.subr.bf16.mxu0 0
        %4601 = vmatpush1.bf16.msra.mxu0 0
        %4602 = vmatprep.subr.bf16.mxu0 0
        %4603 = vmatpush1.bf16.msra.mxu0 0
        %4604 = vmatprep.subr.bf16.mxu0 0
        %4605 = vmatpush1.bf16.msra.mxu0 0
        %4606 = vmatprep.mubr.bf16.mxu0 0
        %4607 = vmatmul.mubr.bf16.gmra.mrb[0].mxu0 %v4556
        %v4608 = vpop.f32.mrb[0].mxu0
        %v4609 = vadd.f32 0.0, %v4608
        %v4610 = vpop.f32.mrb[0].mxu0
        %v4611 = vadd.f32 0.0, %v4610
        %v4612 = vpop.f32.mrb[0].mxu0
        %v4613 = vadd.f32 0.0, %v4612
        %v4614 = vpop.f32.mrb[0].mxu0
        %v4615 = vadd.f32 0.0, %v4614
        %4616 = vmatprep.mubr.bf16.mxu0 0
        %4617 = vmatmul.mubr.bf16.gmra.mrb[0].mxu0 %v4559
        %v4618 = vpop.f32.mrb[0].mxu0
        %v4619 = vadd.f32 0.0, %v4618
        %v4620 = vpop.f32.mrb[0].mxu0
        %v4621 = vadd.f32 0.0, %v4620
        %v4622 = vpop.f32.mrb[0].mxu0
        %v4623 = vadd.f32 0.0, %v4622
        %v4624 = vpop.f32.mrb[0].mxu0
        %v4625 = vadd.f32 0.0, %v4624
        %4626 = vmatprep.mubr.bf16.mxu0 0
        %4627 = vmatmul.mubr.bf16.gmra.mrb[0].mxu0 %v4562
        %v4628 = vpop.f32.mrb[0].mxu0
        %v4629 = vadd.f32 0.0, %v4628
        %v4630 = vpop.f32.mrb[0].mxu0
        %v4631 = vadd.f32 0.0, %v4630
        %v4632 = vpop.f32.mrb[0].mxu0
        %v4633 = vadd.f32 0.0, %v4632
        %v4634 = vpop.f32.mrb[0].mxu0
        %v4635 = vadd.f32 0.0, %v4634
        %4636 = vdwg.mxu0
        %4637 = vmatprep.subr.bf16.mxu0 0
        %4638 = vmatpush1.bf16.msra.mxu0 %v4517
        %4639 = vmatprep.subr.bf16.mxu0 0
        %4640 = vmatpush1.bf16.msra.mxu0 %v4520
        %4641 = vmatprep.subr.bf16.mxu0 0
        %4642 = vmatpush1.bf16.msra.mxu0 %v4523
        %4643 = vmatprep.subr.bf16.mxu0 0
        %4644 = vmatpush1.bf16.msra.mxu0 %v4526
        %4645 = vmatprep.subr.bf16.mxu0 0
        %4646 = vmatpush1.bf16.msra.mxu0 %v4529
        %4647 = vmatprep.subr.bf16.mxu0 0
        %4648 = vmatpush1.bf16.msra.mxu0 %v4572
        %4649 = vmatprep.subr.bf16.mxu0 0
        %4650 = vmatpush1.bf16.msra.mxu0 0
        %4651 = vmatprep.subr.bf16.mxu0 0
        %4652 = vmatpush1.bf16.msra.mxu0 0
        %4653 = vmatprep.subr.bf16.mxu0 0
        %4654 = vmatpush1.bf16.msra.mxu0 0
        %4655 = vmatprep.subr.bf16.mxu0 0
        %4656 = vmatpush1.bf16.msra.mxu0 0
        %4657 = vmatprep.subr.bf16.mxu0 0
        %4658 = vmatpush1.bf16.msra.mxu0 0
        %4659 = vmatprep.subr.bf16.mxu0 0
        %4660 = vmatpush1.bf16.msra.mxu0 0
        %4661 = vmatprep.subr.bf16.mxu0 0
        %4662 = vmatpush1.bf16.msra.mxu0 0
        %4663 = vmatprep.subr.bf16.mxu0 0
        %4664 = vmatpush1.bf16.msra.mxu0 0
        %4665 = vmatprep.subr.bf16.mxu0 0
        %4666 = vmatpush1.bf16.msra.mxu0 0
        %4667 = vmatprep.subr.bf16.mxu0 0
        %4668 = vmatpush1.bf16.msra.mxu0 0
        %4669 = vmatprep.mubr.bf16.mxu0 0
        %4670 = vmatmul.mubr.bf16.gmra.mrb[0].mxu0 %v4556
        %v4671 = vpop.f32.mrb[0].mxu0
        %v4672 = vadd.f32 0.0, %v4671
        %v4673 = vpop.f32.mrb[0].mxu0
        %v4674 = vpop.f32.mrb[0].mxu0
        %v4675 = vadd.f32 0.0, %v4674
        %v4676 = vpop.f32.mrb[0].mxu0
        %4677 = vmatprep.mubr.bf16.mxu0 0
        %4678 = vmatmul.mubr.bf16.gmra.mrb[0].mxu0 %v4559
        %v4679 = vpop.f32.mrb[0].mxu0
        %v4680 = vadd.f32 0.0, %v4679
        %v4681 = vpop.f32.mrb[0].mxu0
        %v4682 = vpop.f32.mrb[0].mxu0
        %v4683 = vadd.f32 0.0, %v4682
        %v4684 = vpop.f32.mrb[0].mxu0
        %4685 = vmatprep.mubr.bf16.mxu0 0
        %4686 = vmatmul.mubr.bf16.gmra.mrb[0].mxu0 %v4562
        %v4687 = vpop.f32.mrb[0].mxu0
        %v4688 = vadd.f32 0.0, %v4687
        %v4689 = vpop.f32.mrb[0].mxu0
        %v4690 = vpop.f32.mrb[0].mxu0
        %v4691 = vadd.f32 0.0, %v4690
        %v4692 = vpop.f32.mrb[0].mxu0
        %4693 = vdwg.mxu0
        %s4694 = scalar_lea.vmem %s2, 24
        %v4695 = vld [vmem:[%s4694] sm:$0xf]
        %v4696 = vld [vmem:[%s4694 + $0x4] sm:$0xf]
        %v4697 = vld [vmem:[%s4694 + $0x8] sm:$0xf]
        %v4698 = vld [vmem:[%s4694 + $0xc] sm:$0xf]
        %v4699 = vld [vmem:[%s4694 + $0x10] sm:$0xf]
        %v4700 = vld [vmem:[%s4694 + $0x14] sm:$0xf]
        %v4707 = vunpack.c.l.b16 %v4695
        %v4708 = vunpack.c.l.b16 %v4696
        %v4709 = vunpack.c.l.b16 %v4697
        %v4710 = vunpack.c.l.b16 %v4698
        %v4711 = vunpack.c.l.b16 %v4699
        %v4712 = vunpack.c.l.b16 %v4700
        %v4713 = vpack.c.b16 %v4708, %v4707
        %v4714 = vpack.c.b16 %v4710, %v4709
        %v4715 = vpack.c.b16 %v4712, %v4711
        %v4717 = vsel %vm4554, %v4713, 0
        %v4720 = vsel %vm4554, %v4714, 0
        %v4723 = vsel %vm4554, %v4715, 0
        %4725 = vmatprep.subr.bf16.mxu0 %v4516
        %4726 = vmatpush1.bf16.msra.mxu0 %v4515
        %4727 = vmatprep.subr.bf16.mxu0 %v4519
        %4728 = vmatpush1.bf16.msra.mxu0 %v4518
        %4729 = vmatprep.subr.bf16.mxu0 %v4522
        %4730 = vmatpush1.bf16.msra.mxu0 %v4521
        %4731 = vmatprep.subr.bf16.mxu0 %v4525
        %4732 = vmatpush1.bf16.msra.mxu0 %v4524
        %4733 = vmatprep.subr.bf16.mxu0 %v4528
        %4734 = vmatpush1.bf16.msra.mxu0 %v4527
        %4735 = vmatprep.subr.bf16.mxu0 %v4569
        %4736 = vmatpush1.bf16.msra.mxu0 %v4566
        %4737 = vmatprep.subr.bf16.mxu0 0
        %4738 = vmatpush1.bf16.msra.mxu0 0
        %4739 = vmatprep.subr.bf16.mxu0 0
        %4740 = vmatpush1.bf16.msra.mxu0 0
        %4741 = vmatprep.subr.bf16.mxu0 0
        %4742 = vmatpush1.bf16.msra.mxu0 0
        %4743 = vmatprep.subr.bf16.mxu0 0
        %4744 = vmatpush1.bf16.msra.mxu0 0
        %4745 = vmatprep.subr.bf16.mxu0 0
        %4746 = vmatpush1.bf16.msra.mxu0 0
        %4747 = vmatprep.subr.bf16.mxu0 0
        %4748 = vmatpush1.bf16.msra.mxu0 0
        %4749 = vmatprep.subr.bf16.mxu0 0
        %4750 = vmatpush1.bf16.msra.mxu0 0
        %4751 = vmatprep.subr.bf16.mxu0 0
        %4752 = vmatpush1.bf16.msra.mxu0 0
        %4753 = vmatprep.subr.bf16.mxu0 0
        %4754 = vmatpush1.bf16.msra.mxu0 0
        %4755 = vmatprep.subr.bf16.mxu0 0
        %4756 = vmatpush1.bf16.msra.mxu0 0
        %4757 = vmatprep.mubr.bf16.mxu0 0
        %4758 = vmatmul.mubr.bf16.gmra.mrb[0].mxu0 %v4717
        %v4759 = vpop.f32.mrb[0].mxu0
        %v4760 = vadd.f32 0.0, %v4759
        %v4761 = vpop.f32.mrb[0].mxu0
        %v4762 = vadd.f32 0.0, %v4761
        %v4763 = vpop.f32.mrb[0].mxu0
        %v4764 = vadd.f32 0.0, %v4763
        %v4765 = vpop.f32.mrb[0].mxu0
        %v4766 = vadd.f32 0.0, %v4765
        %4767 = vmatprep.mubr.bf16.mxu0 0
        %4768 = vmatmul.mubr.bf16.gmra.mrb[0].mxu0 %v4720
        %v4769 = vpop.f32.mrb[0].mxu0
        %v4770 = vadd.f32 0.0, %v4769
        %v4771 = vpop.f32.mrb[0].mxu0
        %v4772 = vadd.f32 0.0, %v4771
        %v4773 = vpop.f32.mrb[0].mxu0
        %v4774 = vadd.f32 0.0, %v4773
        %v4775 = vpop.f32.mrb[0].mxu0
        %v4776 = vadd.f32 0.0, %v4775
        %4777 = vmatprep.mubr.bf16.mxu0 0
        %4778 = vmatmul.mubr.bf16.gmra.mrb[0].mxu0 %v4723
        %v4779 = vpop.f32.mrb[0].mxu0
        %v4780 = vadd.f32 0.0, %v4779
        %v4781 = vpop.f32.mrb[0].mxu0
        %v4782 = vadd.f32 0.0, %v4781
        %v4783 = vpop.f32.mrb[0].mxu0
        %v4784 = vadd.f32 0.0, %v4783
        %v4785 = vpop.f32.mrb[0].mxu0
        %v4786 = vadd.f32 0.0, %v4785
        %4787 = vdwg.mxu0
        %4788 = vmatprep.subr.bf16.mxu0 0
        %4789 = vmatpush1.bf16.msra.mxu0 %v4517
        %4790 = vmatprep.subr.bf16.mxu0 0
        %4791 = vmatpush1.bf16.msra.mxu0 %v4520
        %4792 = vmatprep.subr.bf16.mxu0 0
        %4793 = vmatpush1.bf16.msra.mxu0 %v4523
        %4794 = vmatprep.subr.bf16.mxu0 0
        %4795 = vmatpush1.bf16.msra.mxu0 %v4526
        %4796 = vmatprep.subr.bf16.mxu0 0
        %4797 = vmatpush1.bf16.msra.mxu0 %v4529
        %4798 = vmatprep.subr.bf16.mxu0 0
        %4799 = vmatpush1.bf16.msra.mxu0 %v4572
        %4800 = vmatprep.subr.bf16.mxu0 0
        %4801 = vmatpush1.bf16.msra.mxu0 0
        %4802 = vmatprep.subr.bf16.mxu0 0
        %4803 = vmatpush1.bf16.msra.mxu0 0
        %4804 = vmatprep.subr.bf16.mxu0 0
        %4805 = vmatpush1.bf16.msra.mxu0 0
        %4806 = vmatprep.subr.bf16.mxu0 0
        %4807 = vmatpush1.bf16.msra.mxu0 0
        %4808 = vmatprep.subr.bf16.mxu0 0
        %4809 = vmatpush1.bf16.msra.mxu0 0
        %4810 = vmatprep.subr.bf16.mxu0 0
        %4811 = vmatpush1.bf16.msra.mxu0 0
        %4812 = vmatprep.subr.bf16.mxu0 0
        %4813 = vmatpush1.bf16.msra.mxu0 0
        %4814 = vmatprep.subr.bf16.mxu0 0
        %4815 = vmatpush1.bf16.msra.mxu0 0
        %4816 = vmatprep.subr.bf16.mxu0 0
        %4817 = vmatpush1.bf16.msra.mxu0 0
        %4818 = vmatprep.subr.bf16.mxu0 0
        %4819 = vmatpush1.bf16.msra.mxu0 0
        %4820 = vmatprep.mubr.bf16.mxu0 0
        %4821 = vmatmul.mubr.bf16.gmra.mrb[0].mxu0 %v4717
        %v4822 = vpop.f32.mrb[0].mxu0
        %v4823 = vadd.f32 0.0, %v4822
        %v4824 = vpop.f32.mrb[0].mxu0
        %v4825 = vpop.f32.mrb[0].mxu0
        %v4826 = vadd.f32 0.0, %v4825
        %v4827 = vpop.f32.mrb[0].mxu0
        %4828 = vmatprep.mubr.bf16.mxu0 0
        %4829 = vmatmul.mubr.bf16.gmra.mrb[0].mxu0 %v4720
        %v4830 = vpop.f32.mrb[0].mxu0
        %v4831 = vadd.f32 0.0, %v4830
        %v4832 = vpop.f32.mrb[0].mxu0
        %v4833 = vpop.f32.mrb[0].mxu0
        %v4834 = vadd.f32 0.0, %v4833
        %v4835 = vpop.f32.mrb[0].mxu0
        %4836 = vmatprep.mubr.bf16.mxu0 0
        %4837 = vmatmul.mubr.bf16.gmra.mrb[0].mxu0 %v4723
        %v4838 = vpop.f32.mrb[0].mxu0
        %v4839 = vadd.f32 0.0, %v4838
        %v4840 = vpop.f32.mrb[0].mxu0
        %v4841 = vpop.f32.mrb[0].mxu0
        %v4842 = vadd.f32 0.0, %v4841
        %v4843 = vpop.f32.mrb[0].mxu0
        %4844 = vdwg.mxu0
        %v4845 = vmax.f32 %v4609, %v4760
        %v4846 = vmax.f32 %v4611, %v4762
        %v4847 = vmax.f32 %v4672, %v4823
        %v4848 = vmax.f32 %v4613, %v4764
        %v4849 = vmax.f32 %v4615, %v4766
        %v4850 = vmax.f32 %v4675, %v4826
        %v4851 = vmax.f32 %v4619, %v4770
        %v4852 = vmax.f32 %v4621, %v4772
        %v4853 = vmax.f32 %v4680, %v4831
        %v4854 = vmax.f32 %v4623, %v4774
        %v4855 = vmax.f32 %v4625, %v4776
        %v4856 = vmax.f32 %v4683, %v4834
        %v4857 = vmax.f32 %v4629, %v4780
        %v4858 = vmax.f32 %v4631, %v4782
        %v4859 = vmax.f32 %v4688, %v4839
        %v4860 = vmax.f32 %v4633, %v4784
        %v4861 = vmax.f32 %v4635, %v4786
        %v4862 = vmax.f32 %v4691, %v4842
        %v4863 = vpack.c.bf16 %v4848, %v4845
        %v4864 = vpack.c.bf16 %v4849, %v4846
        %v4865 = vpack.c.bf16 %v4850, %v4847
        %v4866 = vpack.c.bf16 %v4854, %v4851
        %v4867 = vpack.c.bf16 %v4855, %v4852
        %v4868 = vpack.c.bf16 %v4856, %v4853
        %v4869 = vpack.c.bf16 %v4860, %v4857
        %v4870 = vpack.c.bf16 %v4861, %v4858
        %v4871 = vpack.c.bf16 %v4862, %v4859
        %v4881 = vunpack.c.l.b16 %v4863
        %v4882 = vunpack.c.l.b16 %v4864
        %v4883 = vunpack.c.l.b16 %v4865
        %v4884 = vunpack.c.h.b16 %v4863
        %v4885 = vunpack.c.h.b16 %v4864
        %v4886 = vunpack.c.h.b16 %v4865
        %v4887 = vunpack.c.l.b16 %v4866
        %v4888 = vunpack.c.l.b16 %v4867
        %v4889 = vunpack.c.l.b16 %v4868
        %v4890 = vunpack.c.h.b16 %v4866
        %v4891 = vunpack.c.h.b16 %v4867
        %v4892 = vunpack.c.h.b16 %v4868
        %v4893 = vunpack.c.l.b16 %v4869
        %v4894 = vunpack.c.l.b16 %v4870
        %v4895 = vunpack.c.l.b16 %v4871
        %v4896 = vunpack.c.h.b16 %v4869
        %v4897 = vunpack.c.h.b16 %v4870
        %v4898 = vunpack.c.h.b16 %v4871
        %v4899 = vpack.c.b16 %v4882, %v4881
        %v4900 = vpack.c.b16 %v4883, %v4883
        %v4901 = vpack.c.b16 %v4885, %v4884
        %v4902 = vpack.c.b16 %v4886, %v4886
        %v4903 = vpack.c.b16 %v4888, %v4887
        %v4904 = vpack.c.b16 %v4889, %v4889
        %v4905 = vpack.c.b16 %v4891, %v4890
        %v4906 = vpack.c.b16 %v4892, %v4892
        %v4907 = vpack.c.b16 %v4894, %v4893
        %v4908 = vpack.c.b16 %v4895, %v4895
        %v4909 = vpack.c.b16 %v4897, %v4896
        %v4910 = vpack.c.b16 %v4898, %v4898
        %4923 = vst [vmem:[%s225] sm:$0xff] %v4899
        %4924 = vst [vmem:[%s225 + $0x8] sm:$0xf] %v4900
        %4925 = vst [vmem:[%s225 + $0xc] sm:$0xff] %v4901
        %4926 = vst [vmem:[%s225 + $0x14] sm:$0xf] %v4902
        %4927 = vst [vmem:[%s225 + $0x18] sm:$0xff] %v4903
        %4928 = vst [vmem:[%s225 + $0x20] sm:$0xf] %v4904
        %4929 = vst [vmem:[%s225 + $0x24] sm:$0xff] %v4905
        %4930 = vst [vmem:[%s225 + $0x2c] sm:$0xf] %v4906
        %4931 = vst [vmem:[%s225 + $0x30] sm:$0xff] %v4907
        %4932 = vst [vmem:[%s225 + $0x38] sm:$0xf] %v4908
        %vm4933 = vcmask 1043456
        %vm4934 = vsmask.f32 3328
        %vm4935 = vmand %vm4933, %vm4934
        %vm4936 = vcmask 1047556
        %vm4937 = vmand %vm4936, %vm548
        %vm4938 = vmor %vm4937, %vm4935
        %v4939 = vld [vmem:[%s225 + $0x3c] sm:$0xff]
        %v4940 = vsel %vm4938, %v4909, %v4939
        %4941 = vst [vmem:[%s225 + $0x3c] sm:$0xff] %v4940
        %v4942 = vld [vmem:[%s225 + $0x44] sm:$0xf]
        %v4943 = vsel %vm4935, %v4910, %v4942
        %4944 = vst [vmem:[%s225 + $0x44] sm:$0xf] %v4943
        %p4945 = scmp.lt.s32.totalorder %s17, 1
        %s4946 = scalar_select %p4945, %s17, 1
        %s4947 = smul.addr %s4946, 18
        %s4948 = smul.addr %s4947, 4
        %s4949 = scalar_lea.vmem %s4, %s4948
        // Predicated region
        $region45: #{forward.6} parent=35 // pred_check
          %p4950 = pneg %p124
        $region46: #{forward.6} parent=35 // pred_check_branch
          %4952 = sbr.rel (%p4950) target = $region48
        $region47: #{forward.6} parent=35 // pred_region
          _
        $region48: #{forward.6} parent=35 // pred_fallthru
          _
      $region36: #{forward.6} parent=5 // pred_fallthru
        _
      %p4953 = scmp.le.s32.totalorder 2, %s12
      // Predicated region
      $region49: #{forward.6} parent=5 // pred_check
        %p4954 = pneg %p4953
      $region50: #{forward.6} parent=5 // pred_check_branch
        %4956 = sbr.rel (%p4954) target = $region52
      $region51: #{forward.6} parent=5 // pred_region
        %s4957 = ssub.s32 %s12, 2
        // Predicated region
        $region53: #{forward.6} parent=51 // pred_check
          %p4958 = pneg %p130
        $region54: #{forward.6} parent=51 // pred_check_branch
          %4960 = sbr.rel (%p4958) target = $region56
        $region55: #{forward.6} parent=51 // pred_region
          %p4961 = scmp.lt.s32.totalorder %s18, 1
          %s4962 = scalar_select %p4961, %s18, 1
          %s4963 = smul.addr %s4962, 18
          %s4964 = smul.addr %s4963, 4
          %s4965 = scalar_lea.vmem %s4, %s4964
        $region56: #{forward.6} parent=51 // pred_fallthru
          _
      $region52: #{forward.6} parent=5 // pred_fallthru
        _
    $region6: #{forward.6} parent=1 // loop_footer
      %s16 = sadd.s32 1, %s12
    $region7: #{forward.6} parent=1 // loop_footer_branch
      %11 = sbr.rel target = $region3
    $region8: #{forward.6} parent=1 // loop_exit
      _
    %4966 = vsyncpa [#allocation3], 1
    %s4967 = scalar_lea.sflag [#allocation3], 1
    %4968 = vsyncpa %s4967, 1
    %4969 = vsyncpa [#allocation5], 1

</llo_original>
